<compile_context>
chip_gen: v7x
topology: tpu7x:2x2x1
jax: 0.10.0
libtpu: 0.0.40
codegen_flags: <defaults>
</compile_context>

<pallas_src>
import functools

import jax
import jax.numpy as jnp
from jax.experimental import pallas as pl
from jax.experimental.pallas import tpu as pltpu


HP = 128  # per-gate lane padding for the GRU (one full vreg lane width)


def _default_row_tile():
    # v7x has 64 MiB VMEM / TensorCore -> keep row tiles modest; v5e/v6e have 128 MiB.
    try:
        kind = jax.devices()[0].device_kind.lower()
    except Exception:
        return 512
    if "v7" in kind or "7x" in kind:
        return 512
    return 1024


_MM_TILE_M = _default_row_tile()


# ----------------------------------------------------------------------------
# Generic fused (X @ W + b) [+ ReLU] kernel, M-tiled, bf16 operands, f32 accum.
# Weights/bias stay resident (constant block index); X / out are pipelined.
# ----------------------------------------------------------------------------
def _matmul_bias_kernel(x_ref, w_ref, b_ref, o_ref, *, relu):
    acc = jnp.dot(x_ref[...], w_ref[...], preferred_element_type=jnp.float32)
    acc = acc + b_ref[...]
    if relu:
        acc = jnp.maximum(acc, 0.0)
    o_ref[...] = acc.astype(o_ref.dtype)


def matmul_bias(x, w, b, relu=False, out_dtype=jnp.float32):
    M, K = x.shape
    K2, N = w.shape
    assert K == K2
    xb = x.astype(jnp.bfloat16)
    wb = w.astype(jnp.bfloat16)
    bb = b.reshape(1, N).astype(jnp.float32)

    tm = min(M, _MM_TILE_M)
    grid_m = pl.cdiv(M, tm)  # boundary block handled by the pipeline (no jnp.pad)

    return pl.pallas_call(
        functools.partial(_matmul_bias_kernel, relu=relu),
        out_shape=jax.ShapeDtypeStruct((M, N), out_dtype),
        grid_spec=pltpu.PrefetchScalarGridSpec(
            num_scalar_prefetch=0,
            grid=(grid_m,),
            in_specs=[
                pl.BlockSpec((tm, K), lambda i: (i, 0)),
                pl.BlockSpec((K, N), lambda i: (0, 0)),
                pl.BlockSpec((1, N), lambda i: (0, 0)),
            ],
            out_specs=pl.BlockSpec((tm, N), lambda i: (i, 0)),
        ),
        # Tile footprint is a few MiB at most -> default scoped VMEM limit is ample.
        compiler_params=pltpu.CompilerParams(dimension_semantics=("parallel",)),
    )(xb, wb, bb)


# ----------------------------------------------------------------------------
# Channels-last im2col (pure gather/reshape glue) + Pallas GEMM == Conv2d + ReLU.
# Activations stay NHWC + bf16 between conv stages so the (k*k)-inflated patch
# matrix is written at half the bytes.
# TODO(synk): move the patch extraction into the Pallas GEMM (BlockSpec over
# output-row tiles + in-kernel strided loads) to avoid materializing im2col in HBM.
# ----------------------------------------------------------------------------
def _im2col_nhwc(x, k, s):
    N, H, W, C = x.shape
    oh = (H - k) // s + 1
    ow = (W - k) // s + 1
    rows = (jnp.arange(oh) * s)[:, None] + jnp.arange(k)[None, :]      # (oh, k)
    cols = (jnp.arange(ow) * s)[:, None] + jnp.arange(k)[None, :]      # (ow, k)
    p = x[:, rows, :, :]                                               # (N,oh,k,W,C)
    p = p[:, :, :, cols, :]                                            # (N,oh,k,ow,k,C)
    p = p.transpose(0, 1, 3, 2, 4, 5).reshape(N * oh * ow, k * k * C)  # row=(kh,kw,C)
    return p, oh, ow


def conv2d_relu(x_nhwc, wm, b, k, stride, oc):
    # x_nhwc: (N, H, W, C) bf16; wm: (k*k*C, OC) bf16 (pre-flattened); b: (1, OC)
    N = x_nhwc.shape[0]
    patches, oh, ow = _im2col_nhwc(x_nhwc, k, stride)
    y = matmul_bias(patches, wm, b, relu=True, out_dtype=jnp.bfloat16)
    return y.reshape(N, oh, ow, oc)                                    # stays NHWC


# ----------------------------------------------------------------------------
# GRU recurrence kernel, grid = (batch blocks [parallel], time blocks [arbitrary]).
#   gx:  (T, B, 3*HP) f32   input-side gates incl. b_ih, each gate in its own
#                           128-lane block (lane offsets 0 / 128 / 256)
#   h0:  (B, HP)      f32   initial hidden state, lanes H..127 zero
#   whh: (HP, 3*HP)   bf16  weight_hh^T padded to the same gate layout
#   bhh: (1, 3*HP)    f32
# Outputs: hs (T, B, HP) f32 hidden states for every step, hn (B, HP) final state.
# Padded lanes stay exactly 0 through the recurrence (zero weights/biases/init).
# ----------------------------------------------------------------------------
def _gru_kernel(gx_ref, h0_ref, whh_ref, bhh_ref, hs_ref, hn_ref, h_scr,
                *, t_blk, unroll):
    @pl.when(pl.program_id(1) == 0)
    def _():
        h_scr[...] = h0_ref[...]

    whh = whh_ref[...]
    bhh = bhh_ref[...]

    def step(t, h):
        # One fused hidden-side matmul per timestep: (Bb, HP) @ (HP, 3*HP).
        gh = jnp.dot(h.astype(jnp.bfloat16), whh,
                     preferred_element_type=jnp.float32) + bhh          # (Bb, 3*HP)
        gx = gx_ref[t]                                                  # (Bb, 3*HP)
        r = jax.nn.sigmoid(gx[:, 0:HP] + gh[:, 0:HP])
        z = jax.nn.sigmoid(gx[:, HP:2 * HP] + gh[:, HP:2 * HP])
        n = jnp.tanh(gx[:, 2 * HP:3 * HP] + r * gh[:, 2 * HP:3 * HP])
        h_new = (1.0 - z) * n + z * h                                   # f32 gate math
        hs_ref[t] = h_new
        return h_new

    h_last = jax.lax.fori_loop(0, t_blk, step, h_scr[...], unroll=unroll)
    h_scr[...] = h_last
    hn_ref[...] = h_last


def _choose_t_block(T, max_blk=64):
    if T <= max_blk:
        return T
    for cand in range(max_blk, 0, -1):
        if T % cand == 0:
            return cand
    return T


def gru_forward(gx_tbh, h0_pad, whh_pad, bhh_pad):
    T, B, G = gx_tbh.shape
    assert G == 3 * HP

    # Batch split across both v7x TensorCores when the block stays sublane-aligned.
    if B % 16 == 0:
        grid_b, b_blk = 2, B // 2
    else:
        grid_b, b_blk = 1, B

    t_blk = _choose_t_block(T)       # always divides T (recurrence must not see OOB t)
    grid_t = T // t_blk

    kernel = functools.partial(_gru_kernel, t_blk=t_blk, unroll=min(4, t_blk))
    hs, hn = pl.pallas_call(
        kernel,
        out_shape=(jax.ShapeDtypeStruct((T, B, HP), jnp.float32),
                   jax.ShapeDtypeStruct((B, HP), jnp.float32)),
        grid_spec=pltpu.PrefetchScalarGridSpec(
            num_scalar_prefetch=0,
            grid=(grid_b, grid_t),
            in_specs=[
                pl.BlockSpec((t_blk, b_blk, G), lambda b, t: (t, b, 0)),
                pl.BlockSpec((b_blk, HP), lambda b, t: (b, 0)),
                pl.BlockSpec((HP, G), lambda b, t: (0, 0)),
                pl.BlockSpec((1, G), lambda b, t: (0, 0)),
            ],
            out_specs=[
                pl.BlockSpec((t_blk, b_blk, HP), lambda b, t: (t, b, 0)),
                pl.BlockSpec((b_blk, HP), lambda b, t: (b, 0)),
            ],
            scratch_shapes=[pltpu.VMEM((b_blk, HP), jnp.float32)],
        ),
        # Per-block footprint is well under the default scoped VMEM limit.
        compiler_params=pltpu.CompilerParams(
            dimension_semantics=("parallel", "arbitrary")),
    )(gx_tbh, h0_pad, whh_pad, bhh_pad)
    return hs, hn


# ----------------------------------------------------------------------------
# Parameter init (deterministic, PyTorch-like uniform(-1/sqrt(fan_in), +1/sqrt(fan_in)))
# ----------------------------------------------------------------------------
def init_params(key, in_ch, hidden, num_actions, feat_size):
    ks = jax.random.split(key, 12)

    def u(k, shape, fan_in):
        bound = 1.0 / jnp.sqrt(fan_in)
        return jax.random.uniform(k, shape, jnp.float32, -bound, bound)

    return {
        "conv1_w": u(ks[0], (32, in_ch, 8, 8), in_ch * 8 * 8),
        "conv1_b": u(ks[1], (32,), in_ch * 8 * 8),
        "conv2_w": u(ks[2], (64, 32, 4, 4), 32 * 4 * 4),
        "conv2_b": u(ks[3], (64,), 32 * 4 * 4),
        "conv3_w": u(ks[4], (64, 64, 3, 3), 64 * 3 * 3),
        "conv3_b": u(ks[5], (64,), 64 * 3 * 3),
        # GRU (PyTorch layout): weight_ih (3H, F) [r,z,n], weight_hh (3H, H)
        "gru_w_ih": u(ks[6], (3 * hidden, feat_size), hidden),
        "gru_w_hh": u(ks[7], (3 * hidden, hidden), hidden),
        "gru_b_ih": u(ks[8], (3 * hidden,), hidden),
        "gru_b_hh": u(ks[9], (3 * hidden,), hidden),
        "fc2_w": u(ks[10], (num_actions, hidden), hidden),
        "fc2_b": u(ks[11], (num_actions,), hidden),
    }


# ----------------------------------------------------------------------------
# One-time parameter preparation (hoisted out of the forward pass):
# conv weight flattening, GRU gate padding to 128-lane blocks, fc2 lane padding,
# bf16 casts of all MXU-side weights.
# ----------------------------------------------------------------------------
def prepare_drqn_params(params):
    H = params["gru_w_hh"].shape[1]
    A = params["fc2_w"].shape[0]
    A_pad = pl.cdiv(A, 128) * 128
    F = params["gru_w_ih"].shape[1]

    def conv_wm(w):
        oc, c, k, _ = w.shape
        return w.transpose(2, 3, 1, 0).reshape(k * k * c, oc).astype(jnp.bfloat16)

    conv_cfg = []
    conv_wms, conv_bs = [], []
    for name, stride in (("conv1", 4), ("conv2", 2), ("conv3", 1)):
        w = params[name + "_w"]
        oc, _, k, _ = w.shape
        conv_cfg.append((int(k), int(stride), int(oc)))
        conv_wms.append(conv_wm(w))
        conv_bs.append(params[name + "_b"].reshape(1, -1).astype(jnp.float32))

    # GRU gate padding: gate g lives at lane offsets [g*HP, g*HP + H).
    w_ih_t = params["gru_w_ih"].T                                        # (F, 3H)
    w_hh_t = params["gru_w_hh"].T                                        # (H, 3H)
    w_ih_pad = jnp.zeros((F, 3 * HP), jnp.float32)
    b_ih_pad = jnp.zeros((3 * HP,), jnp.float32)
    w_hh_pad = jnp.zeros((HP, 3 * HP), jnp.float32)
    b_hh_pad = jnp.zeros((1, 3 * HP), jnp.float32)
    for g in range(3):
        w_ih_pad = w_ih_pad.at[:, g * HP:g * HP + H].set(w_ih_t[:, g * H:(g + 1) * H])
        b_ih_pad = b_ih_pad.at[g * HP:g * HP + H].set(params["gru_b_ih"][g * H:(g + 1) * H])
        w_hh_pad = w_hh_pad.at[:H, g * HP:g * HP + H].set(w_hh_t[:, g * H:(g + 1) * H])
        b_hh_pad = b_hh_pad.at[:, g * HP:g * HP + H].set(params["gru_b_hh"][g * H:(g + 1) * H])

    wout_pad = jnp.zeros((HP, A_pad), jnp.bfloat16).at[:H, :A].set(
        params["fc2_w"].T.astype(jnp.bfloat16))
    bout_pad = jnp.zeros((1, A_pad), jnp.float32).at[:, :A].set(
        params["fc2_b"].astype(jnp.float32))

    cfg = {"hidden": int(H), "actions": int(A), "conv": conv_cfg}
    arrays = {
        "conv_wm": conv_wms,
        "conv_b": conv_bs,
        "w_ih_pad": w_ih_pad.astype(jnp.bfloat16),
        "b_ih_pad": b_ih_pad,
        "w_hh_pad": w_hh_pad.astype(jnp.bfloat16),
        "b_hh_pad": b_hh_pad,
        "wout_pad": wout_pad,
        "bout_pad": bout_pad,
    }
    return cfg, arrays


# ----------------------------------------------------------------------------
# DRQN forward (matches DRQN.forward: returns (q_values, hidden))
# ----------------------------------------------------------------------------
def drqn_forward(cfg, arrays, input_seq, hx=None):
    # input_seq: (B, T, C, H, W)
    B, T = input_seq.shape[:2]
    H = cfg["hidden"]
    A = cfg["actions"]

    frames = input_seq.reshape((B * T,) + input_seq.shape[2:])           # (BT, C, H, W)
    # NHWC once + bf16 BEFORE im2col -> the k*k-inflated patch matrix is half size.
    x = frames.transpose(0, 2, 3, 1).astype(jnp.bfloat16)

    for (k, s, oc), wm, b in zip(cfg["conv"], arrays["conv_wm"], arrays["conv_b"]):
        x = conv2d_relu(x, wm, b, k, s, oc)

    # PyTorch flattens NCHW; one cheap transpose back keeps feature ordering exact.
    feats = x.transpose(0, 3, 1, 2).reshape(B * T, -1)                   # (BT, F) bf16

    # Input-side GRU gates in one lane-dense Pallas GEMM: (BT, F) @ (F, 3*HP) + b_ih
    gx = matmul_bias(feats, arrays["w_ih_pad"], arrays["b_ih_pad"],
                     out_dtype=jnp.float32)                              # (BT, 3*HP)
    gx_tbh = gx.reshape(B, T, 3 * HP).transpose(1, 0, 2)                 # (T, B, 3*HP)

    h0 = jnp.zeros((B, HP), jnp.float32)
    if hx is not None:
        h0 = h0.at[:, :H].set(hx.reshape(B, H).astype(jnp.float32))

    hs, hn = gru_forward(gx_tbh, h0, arrays["w_hh_pad"], arrays["b_hh_pad"])

    # fc2 head hoisted out of the recurrence: one big lane-dense GEMM over all steps.
    q = matmul_bias(hs.reshape(T * B, HP), arrays["wout_pad"], arrays["bout_pad"],
                    out_dtype=jnp.float32)                               # (T*B, A_pad)
    q = q[:, :A].reshape(T, B, A).transpose(1, 0, 2)                     # (B, T, A)
    hidden = hn[:, :H].reshape(1, B, H)
    return q, hidden

    # TODO(synk): NoisyLinearLayer branch (params.noisyLinear=True) and sample_noise()
    # are not implemented; only the standard nn.Linear head is reproduced.


if __name__ == "__main__":
    # Small config: inputShape=(4, 64, 64), hiddenDimensions=32, numActions=6, B=2, T=4
    B, T = 2, 4
    C, HH, WW = 4, 64, 64
    HIDDEN, ACTIONS = 32, 6
    FEAT_SIZE = 64 * 4 * 4  # conv body output: 64 channels x 4 x 4 spatial

    key = jax.random.PRNGKey(0)
    pkey, xkey = jax.random.split(key)
    raw_params = init_params(pkey, C, HIDDEN, ACTIONS, FEAT_SIZE)
    cfg, arrays = prepare_drqn_params(raw_params)        # one-time weight prep
    input_seq = jax.random.normal(xkey, (B, T, C, HH, WW), jnp.float32)

    fwd = jax.jit(functools.partial(drqn_forward, cfg))  # cfg is static (closure)
    q, hidden = fwd(arrays, input_seq)
    q = jax.block_until_ready(q)
    hidden = jax.block_until_ready(hidden)

    assert q.shape == (B, T, ACTIONS), q.shape
    assert hidden.shape == (1, B, HIDDEN), hidden.shape
    assert bool(jnp.all(jnp.isfinite(q))) and bool(jnp.all(jnp.isfinite(hidden)))
    print("KERNEL_OK")
</pallas_src>

<mosaic_0001>
module attributes {stable_mosaic.version = 11 : i64} {
  func.func @_matmul_bias_kernel(%arg0: i32, %arg1: memref<1024x256xbf16, #tpu.memory_space<vmem>>, %arg2: memref<256x32xbf16, #tpu.memory_space<vmem>>, %arg3: memref<1x32xf32, #tpu.memory_space<vmem>>, %arg4: memref<1024x32xbf16, #tpu.memory_space<vmem>>) attributes {dimension_semantics = [#tpu.dimension_semantics<parallel>], iteration_bounds = array<i64: 2>, scalar_prefetch = 0 : i64, scratch_operands = 0 : i64, tpu.core_type = #tpu.core_type<tc>, window_params = [{transform_indices = @transform_0, window_bounds = array<i64: 1024, 256>}, {pipeline_mode = #tpu.pipeline_mode<synchronous>, transform_indices = @transform_1, window_bounds = array<i64: 256, 32>}, {pipeline_mode = #tpu.pipeline_mode<synchronous>, transform_indices = @transform_2, window_bounds = array<i64: 1, 32>}, {transform_indices = @transform_3, window_bounds = array<i64: 1024, 32>}]} {
    %c0 = arith.constant 0 : index
    %c0_0 = arith.constant 0 : index
    %0 = vector.load %arg1[%c0, %c0_0] : memref<1024x256xbf16, #tpu.memory_space<vmem>>, vector<1024x256xbf16>
    %c0_1 = arith.constant 0 : index
    %c0_2 = arith.constant 0 : index
    %1 = vector.load %arg2[%c0_1, %c0_2] : memref<256x32xbf16, #tpu.memory_space<vmem>>, vector<256x32xbf16>
    %cst = arith.constant dense<0.000000e+00> : vector<1024x32xf32>
    %2 = tpu.matmul %0, %1, %cst {dimension_numbers = #tpu.dot_dimension_numbers<[1], [0], [0], [1], [0, 0, 1, 1], [], []>} : vector<1024x256xbf16>, vector<256x32xbf16>, vector<1024x32xf32> -> vector<1024x32xf32>
    %c0_3 = arith.constant 0 : index
    %c0_4 = arith.constant 0 : index
    %3 = vector.load %arg3[%c0_3, %c0_4] : memref<1x32xf32, #tpu.memory_space<vmem>>, vector<1x32xf32>
    %4 = vector.broadcast %3 : vector<1x32xf32> to vector<1024x32xf32>
    %5 = arith.addf %2, %4 : vector<1024x32xf32>
    %cst_5 = arith.constant 0.000000e+00 : f32
    %6 = vector.broadcast %cst_5 : f32 to vector<1024x32xf32>
    %7 = arith.maximumf %5, %6 : vector<1024x32xf32>
    %8 = arith.truncf %7 : vector<1024x32xf32> to vector<1024x32xbf16>
    %c0_6 = arith.constant 0 : index
    %c0_7 = arith.constant 0 : index
    %9 = vector.load %arg4[%c0_6, %c0_7] : memref<1024x32xbf16, #tpu.memory_space<vmem>>, vector<1024x32xbf16>
    tpu.vector_store %arg4[%c0_6, %c0_7], %8 {strides = array<i32>} : memref<1024x32xbf16, #tpu.memory_space<vmem>>, vector<1024x32xbf16>,
    return
  }
  func.func @transform_0(%arg0: i32) -> (i32, i32) {
    %c0_i32 = arith.constant 0 : i32
    %c0_i32_0 = arith.constant 0 : i32
    return %arg0, %c0_i32 : i32, i32
  }
  func.func @transform_1(%arg0: i32) -> (i32, i32) {
    %c0_i32 = arith.constant 0 : i32
    %c0_i32_0 = arith.constant 0 : i32
    %c0_i32_1 = arith.constant 0 : i32
    return %c0_i32, %c0_i32_0 : i32, i32
  }
  func.func @transform_2(%arg0: i32) -> (i32, i32) {
    %c0_i32 = arith.constant 0 : i32
    %c0_i32_0 = arith.constant 0 : i32
    %c0_i32_1 = arith.constant 0 : i32
    return %c0_i32, %c0_i32_0 : i32, i32
  }
  func.func @transform_3(%arg0: i32) -> (i32, i32) {
    %c0_i32 = arith.constant 0 : i32
    %c0_i32_0 = arith.constant 0 : i32
    return %arg0, %c0_i32 : i32, i32
  }
}

module attributes {stable_mosaic.version = 11 : i64} {
  func.func @_matmul_bias_kernel(%arg0: i32, %arg1: memref<288x512xbf16, #tpu.memory_space<vmem>>, %arg2: memref<512x64xbf16, #tpu.memory_space<vmem>>, %arg3: memref<1x64xf32, #tpu.memory_space<vmem>>, %arg4: memref<288x64xbf16, #tpu.memory_space<vmem>>) attributes {dimension_semantics = [#tpu.dimension_semantics<parallel>], iteration_bounds = array<i64: 1>, scalar_prefetch = 0 : i64, scratch_operands = 0 : i64, tpu.core_type = #tpu.core_type<tc>, window_params = [{transform_indices = @transform_0, window_bounds = array<i64: 288, 512>}, {pipeline_mode = #tpu.pipeline_mode<synchronous>, transform_indices = @transform_1, window_bounds = array<i64: 512, 64>}, {pipeline_mode = #tpu.pipeline_mode<synchronous>, transform_indices = @transform_2, window_bounds = array<i64: 1, 64>}, {transform_indices = @transform_3, window_bounds = array<i64: 288, 64>}]} {
    %c0 = arith.constant 0 : index
    %c0_0 = arith.constant 0 : index
    %0 = vector.load %arg1[%c0, %c0_0] : memref<288x512xbf16, #tpu.memory_space<vmem>>, vector<288x512xbf16>
    %c0_1 = arith.constant 0 : index
    %c0_2 = arith.constant 0 : index
    %1 = vector.load %arg2[%c0_1, %c0_2] : memref<512x64xbf16, #tpu.memory_space<vmem>>, vector<512x64xbf16>
    %cst = arith.constant dense<0.000000e+00> : vector<288x64xf32>
    %2 = tpu.matmul %0, %1, %cst {dimension_numbers = #tpu.dot_dimension_numbers<[1], [0], [0], [1], [0, 0, 1, 1], [], []>} : vector<288x512xbf16>, vector<512x64xbf16>, vector<288x64xf32> -> vector<288x64xf32>
    %c0_3 = arith.constant 0 : index
    %c0_4 = arith.constant 0 : index
    %3 = vector.load %arg3[%c0_3, %c0_4] : memref<1x64xf32, #tpu.memory_space<vmem>>, vector<1x64xf32>
    %4 = vector.broadcast %3 : vector<1x64xf32> to vector<288x64xf32>
    %5 = arith.addf %2, %4 : vector<288x64xf32>
    %cst_5 = arith.constant 0.000000e+00 : f32
    %6 = vector.broadcast %cst_5 : f32 to vector<288x64xf32>
    %7 = arith.maximumf %5, %6 : vector<288x64xf32>
    %8 = arith.truncf %7 : vector<288x64xf32> to vector<288x64xbf16>
    %c0_6 = arith.constant 0 : index
    %c0_7 = arith.constant 0 : index
    %9 = vector.load %arg4[%c0_6, %c0_7] : memref<288x64xbf16, #tpu.memory_space<vmem>>, vector<288x64xbf16>
    tpu.vector_store %arg4[%c0_6, %c0_7], %8 {strides = array<i32>} : memref<288x64xbf16, #tpu.memory_space<vmem>>, vector<288x64xbf16>,
    return
  }
  func.func @transform_0(%arg0: i32) -> (i32, i32) {
    %c0_i32 = arith.constant 0 : i32
    %c0_i32_0 = arith.constant 0 : i32
    return %arg0, %c0_i32 : i32, i32
  }
  func.func @transform_1(%arg0: i32) -> (i32, i32) {
    %c0_i32 = arith.constant 0 : i32
    %c0_i32_0 = arith.constant 0 : i32
    %c0_i32_1 = arith.constant 0 : i32
    return %c0_i32, %c0_i32_0 : i32, i32
  }
  func.func @transform_2(%arg0: i32) -> (i32, i32) {
    %c0_i32 = arith.constant 0 : i32
    %c0_i32_0 = arith.constant 0 : i32
    %c0_i32_1 = arith.constant 0 : i32
    return %c0_i32, %c0_i32_0 : i32, i32
  }
  func.func @transform_3(%arg0: i32) -> (i32, i32) {
    %c0_i32 = arith.constant 0 : i32
    %c0_i32_0 = arith.constant 0 : i32
    return %arg0, %c0_i32 : i32, i32
  }
}

module attributes {stable_mosaic.version = 11 : i64} {
  func.func @_matmul_bias_kernel(%arg0: i32, %arg1: memref<128x576xbf16, #tpu.memory_space<vmem>>, %arg2: memref<576x64xbf16, #tpu.memory_space<vmem>>, %arg3: memref<1x64xf32, #tpu.memory_space<vmem>>, %arg4: memref<128x64xbf16, #tpu.memory_space<vmem>>) attributes {dimension_semantics = [#tpu.dimension_semantics<parallel>], iteration_bounds = array<i64: 1>, scalar_prefetch = 0 : i64, scratch_operands = 0 : i64, tpu.core_type = #tpu.core_type<tc>, window_params = [{transform_indices = @transform_0, window_bounds = array<i64: 128, 576>}, {pipeline_mode = #tpu.pipeline_mode<synchronous>, transform_indices = @transform_1, window_bounds = array<i64: 576, 64>}, {pipeline_mode = #tpu.pipeline_mode<synchronous>, transform_indices = @transform_2, window_bounds = array<i64: 1, 64>}, {transform_indices = @transform_3, window_bounds = array<i64: 128, 64>}]} {
    %c0 = arith.constant 0 : index
    %c0_0 = arith.constant 0 : index
    %0 = vector.load %arg1[%c0, %c0_0] : memref<128x576xbf16, #tpu.memory_space<vmem>>, vector<128x576xbf16>
    %c0_1 = arith.constant 0 : index
    %c0_2 = arith.constant 0 : index
    %1 = vector.load %arg2[%c0_1, %c0_2] : memref<576x64xbf16, #tpu.memory_space<vmem>>, vector<576x64xbf16>
    %cst = arith.constant dense<0.000000e+00> : vector<128x64xf32>
    %2 = tpu.matmul %0, %1, %cst {dimension_numbers = #tpu.dot_dimension_numbers<[1], [0], [0], [1], [0, 0, 1, 1], [], []>} : vector<128x576xbf16>, vector<576x64xbf16>, vector<128x64xf32> -> vector<128x64xf32>
    %c0_3 = arith.constant 0 : index
    %c0_4 = arith.constant 0 : index
    %3 = vector.load %arg3[%c0_3, %c0_4] : memref<1x64xf32, #tpu.memory_space<vmem>>, vector<1x64xf32>
    %4 = vector.broadcast %3 : vector<1x64xf32> to vector<128x64xf32>
    %5 = arith.addf %2, %4 : vector<128x64xf32>
    %cst_5 = arith.constant 0.000000e+00 : f32
    %6 = vector.broadcast %cst_5 : f32 to vector<128x64xf32>
    %7 = arith.maximumf %5, %6 : vector<128x64xf32>
    %8 = arith.truncf %7 : vector<128x64xf32> to vector<128x64xbf16>
    %c0_6 = arith.constant 0 : index
    %c0_7 = arith.constant 0 : index
    %9 = vector.load %arg4[%c0_6, %c0_7] : memref<128x64xbf16, #tpu.memory_space<vmem>>, vector<128x64xbf16>
    tpu.vector_store %arg4[%c0_6, %c0_7], %8 {strides = array<i32>} : memref<128x64xbf16, #tpu.memory_space<vmem>>, vector<128x64xbf16>,
    return
  }
  func.func @transform_0(%arg0: i32) -> (i32, i32) {
    %c0_i32 = arith.constant 0 : i32
    %c0_i32_0 = arith.constant 0 : i32
    return %arg0, %c0_i32 : i32, i32
  }
  func.func @transform_1(%arg0: i32) -> (i32, i32) {
    %c0_i32 = arith.constant 0 : i32
    %c0_i32_0 = arith.constant 0 : i32
    %c0_i32_1 = arith.constant 0 : i32
    return %c0_i32, %c0_i32_0 : i32, i32
  }
  func.func @transform_2(%arg0: i32) -> (i32, i32) {
    %c0_i32 = arith.constant 0 : i32
    %c0_i32_0 = arith.constant 0 : i32
    %c0_i32_1 = arith.constant 0 : i32
    return %c0_i32, %c0_i32_0 : i32, i32
  }
  func.func @transform_3(%arg0: i32) -> (i32, i32) {
    %c0_i32 = arith.constant 0 : i32
    %c0_i32_0 = arith.constant 0 : i32
    return %arg0, %c0_i32 : i32, i32
  }
}

module attributes {stable_mosaic.version = 11 : i64} {
  func.func @_matmul_bias_kernel(%arg0: i32, %arg1: memref<8x1024xbf16, #tpu.memory_space<vmem>>, %arg2: memref<1024x384xbf16, #tpu.memory_space<vmem>>, %arg3: memref<1x384xf32, #tpu.memory_space<vmem>>, %arg4: memref<8x384xf32, #tpu.memory_space<vmem>>) attributes {dimension_semantics = [#tpu.dimension_semantics<parallel>], iteration_bounds = array<i64: 1>, scalar_prefetch = 0 : i64, scratch_operands = 0 : i64, tpu.core_type = #tpu.core_type<tc>, window_params = [{transform_indices = @transform_0, window_bounds = array<i64: 8, 1024>}, {pipeline_mode = #tpu.pipeline_mode<synchronous>, transform_indices = @transform_1, window_bounds = array<i64: 1024, 384>}, {pipeline_mode = #tpu.pipeline_mode<synchronous>, transform_indices = @transform_2, window_bounds = array<i64: 1, 384>}, {transform_indices = @transform_3, window_bounds = array<i64: 8, 384>}]} {
    %c0 = arith.constant 0 : index
    %c0_0 = arith.constant 0 : index
    %0 = vector.load %arg1[%c0, %c0_0] : memref<8x1024xbf16, #tpu.memory_space<vmem>>, vector<8x1024xbf16>
    %c0_1 = arith.constant 0 : index
    %c0_2 = arith.constant 0 : index
    %1 = vector.load %arg2[%c0_1, %c0_2] : memref<1024x384xbf16, #tpu.memory_space<vmem>>, vector<1024x384xbf16>
    %cst = arith.constant dense<0.000000e+00> : vector<8x384xf32>
    %2 = tpu.matmul %0, %1, %cst {dimension_numbers = #tpu.dot_dimension_numbers<[1], [0], [0], [1], [0, 0, 1, 1], [], []>} : vector<8x1024xbf16>, vector<1024x384xbf16>, vector<8x384xf32> -> vector<8x384xf32>
    %c0_3 = arith.constant 0 : index
    %c0_4 = arith.constant 0 : index
    %3 = vector.load %arg3[%c0_3, %c0_4] : memref<1x384xf32, #tpu.memory_space<vmem>>, vector<1x384xf32>
    %4 = vector.broadcast %3 : vector<1x384xf32> to vector<8x384xf32>
    %5 = arith.addf %2, %4 : vector<8x384xf32>
    %c0_5 = arith.constant 0 : index
    %c0_6 = arith.constant 0 : index
    %6 = vector.load %arg4[%c0_5, %c0_6] : memref<8x384xf32, #tpu.memory_space<vmem>>, vector<8x384xf32>
    tpu.vector_store %arg4[%c0_5, %c0_6], %5 {strides = array<i32>} : memref<8x384xf32, #tpu.memory_space<vmem>>, vector<8x384xf32>,
    return
  }
  func.func @transform_0(%arg0: i32) -> (i32, i32) {
    %c0_i32 = arith.constant 0 : i32
    %c0_i32_0 = arith.constant 0 : i32
    return %arg0, %c0_i32 : i32, i32
  }
  func.func @transform_1(%arg0: i32) -> (i32, i32) {
    %c0_i32 = arith.constant 0 : i32
    %c0_i32_0 = arith.constant 0 : i32
    %c0_i32_1 = arith.constant 0 : i32
    return %c0_i32, %c0_i32_0 : i32, i32
  }
  func.func @transform_2(%arg0: i32) -> (i32, i32) {
    %c0_i32 = arith.constant 0 : i32
    %c0_i32_0 = arith.constant 0 : i32
    %c0_i32_1 = arith.constant 0 : i32
    return %c0_i32, %c0_i32_0 : i32, i32
  }
  func.func @transform_3(%arg0: i32) -> (i32, i32) {
    %c0_i32 = arith.constant 0 : i32
    %c0_i32_0 = arith.constant 0 : i32
    return %arg0, %c0_i32 : i32, i32
  }
}

module attributes {stable_mosaic.version = 11 : i64} {
  func.func @_gru_kernel(%arg0: i32, %arg1: i32, %arg2: memref<4x2x384xf32, #tpu.memory_space<vmem>>, %arg3: memref<2x128xf32, #tpu.memory_space<vmem>>, %arg4: memref<128x384xbf16, #tpu.memory_space<vmem>>, %arg5: memref<1x384xf32, #tpu.memory_space<vmem>>, %arg6: memref<4x2x128xf32, #tpu.memory_space<vmem>>, %arg7: memref<2x128xf32, #tpu.memory_space<vmem>>, %arg8: memref<2x128xf32, #tpu.memory_space<vmem>>) attributes {dimension_semantics = [#tpu.dimension_semantics<parallel>, #tpu.dimension_semantics<arbitrary>], iteration_bounds = array<i64: 1, 1>, scalar_prefetch = 0 : i64, scratch_operands = 1 : i64, tpu.core_type = #tpu.core_type<tc>, window_params = [{transform_indices = @transform_0, window_bounds = array<i64: 4, 2, 384>}, {transform_indices = @transform_1, window_bounds = array<i64: 2, 128>}, {pipeline_mode = #tpu.pipeline_mode<synchronous>, transform_indices = @transform_2, window_bounds = array<i64: 128, 384>}, {pipeline_mode = #tpu.pipeline_mode<synchronous>, transform_indices = @transform_3, window_bounds = array<i64: 1, 384>}, {transform_indices = @transform_4, window_bounds = array<i64: 4, 2, 128>}, {transform_indices = @transform_5, window_bounds = array<i64: 2, 128>}]} {
    %c0_i32 = arith.constant 0 : i32
    %0 = arith.cmpi eq, %arg1, %c0_i32 : i32
    %1 = arith.extui %0 : i1 to i32
    %c0_i32_0 = arith.constant 0 : i32
    %2 = arith.cmpi ne, %1, %c0_i32_0 : i32
    scf.if %2 {
      %c0_42 = arith.constant 0 : index
      %c0_43 = arith.constant 0 : index
      %156 = vector.load %arg3[%c0_42, %c0_43] : memref<2x128xf32, #tpu.memory_space<vmem>>, vector<2x128xf32>
      %c0_44 = arith.constant 0 : index
      %c0_45 = arith.constant 0 : index
      %157 = vector.load %arg8[%c0_44, %c0_45] : memref<2x128xf32, #tpu.memory_space<vmem>>, vector<2x128xf32>
      tpu.vector_store %arg8[%c0_44, %c0_45], %156 {strides = array<i32>} : memref<2x128xf32, #tpu.memory_space<vmem>>, vector<2x128xf32>,
    } else {
    }
    %c0 = arith.constant 0 : index
    %c0_1 = arith.constant 0 : index
    %3 = vector.load %arg4[%c0, %c0_1] : memref<128x384xbf16, #tpu.memory_space<vmem>>, vector<128x384xbf16>
    %c0_2 = arith.constant 0 : index
    %c0_3 = arith.constant 0 : index
    %4 = vector.load %arg5[%c0_2, %c0_3] : memref<1x384xf32, #tpu.memory_space<vmem>>, vector<1x384xf32>
    %c0_4 = arith.constant 0 : index
    %c0_5 = arith.constant 0 : index
    %5 = vector.load %arg8[%c0_4, %c0_5] : memref<2x128xf32, #tpu.memory_space<vmem>>, vector<2x128xf32>
    %c0_i32_6 = arith.constant 0 : i32
    %6 = arith.truncf %5 : vector<2x128xf32> to vector<2x128xbf16>
    %cst = arith.constant dense<0.000000e+00> : vector<2x384xf32>
    %7 = tpu.matmul %6, %3, %cst {dimension_numbers = #tpu.dot_dimension_numbers<[1], [0], [0], [1], [0, 0, 1, 1], [], []>} : vector<2x128xbf16>, vector<128x384xbf16>, vector<2x384xf32> -> vector<2x384xf32>
    %8 = vector.broadcast %4 : vector<1x384xf32> to vector<2x384xf32>
    %9 = arith.addf %7, %8 : vector<2x384xf32>
    %10 = arith.index_cast %c0_i32_6 : i32 to index
    %c0_7 = arith.constant 0 : index
    %c0_8 = arith.constant 0 : index
    %11 = vector.load %arg2[%10, %c0_7, %c0_8] : memref<4x2x384xf32, #tpu.memory_space<vmem>>, vector<1x2x384xf32>
    %12 = vector.shape_cast %11 : vector<1x2x384xf32> to vector<2x384xf32>
    %13 = vector.extract_strided_slice %12 {offsets = [0, 0], sizes = [2, 128], strides = [1, 1]} : vector<2x384xf32> to vector<2x128xf32>
    %14 = vector.extract_strided_slice %9 {offsets = [0, 0], sizes = [2, 128], strides = [1, 1]} : vector<2x384xf32> to vector<2x128xf32>
    %15 = arith.addf %13, %14 : vector<2x128xf32>
    %16 = arith.negf %15 : vector<2x128xf32>
    %17 = math.exp %16 : vector<2x128xf32>
    %cst_9 = arith.constant 1.000000e+00 : f32
    %18 = vector.broadcast %cst_9 : f32 to vector<2x128xf32>
    %19 = arith.addf %18, %17 : vector<2x128xf32>
    %20 = arith.divf %18, %19 : vector<2x128xf32>
    %21 = vector.extract_strided_slice %12 {offsets = [0, 128], sizes = [2, 128], strides = [1, 1]} : vector<2x384xf32> to vector<2x128xf32>
    %22 = vector.extract_strided_slice %9 {offsets = [0, 128], sizes = [2, 128], strides = [1, 1]} : vector<2x384xf32> to vector<2x128xf32>
    %23 = arith.addf %21, %22 : vector<2x128xf32>
    %24 = arith.negf %23 : vector<2x128xf32>
    %25 = math.exp %24 : vector<2x128xf32>
    %cst_10 = arith.constant 1.000000e+00 : f32
    %26 = vector.broadcast %cst_10 : f32 to vector<2x128xf32>
    %27 = arith.addf %26, %25 : vector<2x128xf32>
    %28 = arith.divf %26, %27 : vector<2x128xf32>
    %29 = vector.extract_strided_slice %12 {offsets = [0, 256], sizes = [2, 128], strides = [1, 1]} : vector<2x384xf32> to vector<2x128xf32>
    %30 = vector.extract_strided_slice %9 {offsets = [0, 256], sizes = [2, 128], strides = [1, 1]} : vector<2x384xf32> to vector<2x128xf32>
    %31 = arith.mulf %20, %30 : vector<2x128xf32>
    %32 = arith.addf %29, %31 : vector<2x128xf32>
    %33 = math.tanh %32 : vector<2x128xf32>
    %cst_11 = arith.constant 1.000000e+00 : f32
    %34 = vector.broadcast %cst_11 : f32 to vector<2x128xf32>
    %35 = arith.subf %34, %28 : vector<2x128xf32>
    %36 = arith.mulf %35, %33 : vector<2x128xf32>
    %37 = arith.mulf %28, %5 : vector<2x128xf32>
    %38 = arith.addf %36, %37 : vector<2x128xf32>
    %39 = arith.index_cast %c0_i32_6 : i32 to index
    %c0_12 = arith.constant 0 : index
    %c0_13 = arith.constant 0 : index
    %40 = vector.load %arg6[%39, %c0_12, %c0_13] : memref<4x2x128xf32, #tpu.memory_space<vmem>>, vector<1x2x128xf32>
    %41 = vector.shape_cast %40 : vector<1x2x128xf32> to vector<2x128xf32>
    %42 = vector.shape_cast %38 : vector<2x128xf32> to vector<1x2x128xf32>
    tpu.vector_store %arg6[%39, %c0_12, %c0_13], %42 {strides = array<i32>} : memref<4x2x128xf32, #tpu.memory_space<vmem>>, vector<1x2x128xf32>,
    %c1_i32 = arith.constant 1 : i32
    %43 = arith.truncf %38 : vector<2x128xf32> to vector<2x128xbf16>
    %cst_14 = arith.constant dense<0.000000e+00> : vector<2x384xf32>
    %44 = tpu.matmul %43, %3, %cst_14 {dimension_numbers = #tpu.dot_dimension_numbers<[1], [0], [0], [1], [0, 0, 1, 1], [], []>} : vector<2x128xbf16>, vector<128x384xbf16>, vector<2x384xf32> -> vector<2x384xf32>
    %45 = vector.broadcast %4 : vector<1x384xf32> to vector<2x384xf32>
    %46 = arith.addf %44, %45 : vector<2x384xf32>
    %47 = arith.index_cast %c1_i32 : i32 to index
    %c0_15 = arith.constant 0 : index
    %c0_16 = arith.constant 0 : index
    %48 = vector.load %arg2[%47, %c0_15, %c0_16] : memref<4x2x384xf32, #tpu.memory_space<vmem>>, vector<1x2x384xf32>
    %49 = vector.shape_cast %48 : vector<1x2x384xf32> to vector<2x384xf32>
    %50 = vector.extract_strided_slice %49 {offsets = [0, 0], sizes = [2, 128], strides = [1, 1]} : vector<2x384xf32> to vector<2x128xf32>
    %51 = vector.extract_strided_slice %46 {offsets = [0, 0], sizes = [2, 128], strides = [1, 1]} : vector<2x384xf32> to vector<2x128xf32>
    %52 = arith.addf %50, %51 : vector<2x128xf32>
    %53 = arith.negf %52 : vector<2x128xf32>
    %54 = math.exp %53 : vector<2x128xf32>
    %cst_17 = arith.constant 1.000000e+00 : f32
    %55 = vector.broadcast %cst_17 : f32 to vector<2x128xf32>
    %56 = arith.addf %55, %54 : vector<2x128xf32>
    %57 = arith.divf %55, %56 : vector<2x128xf32>
    %58 = vector.extract_strided_slice %49 {offsets = [0, 128], sizes = [2, 128], strides = [1, 1]} : vector<2x384xf32> to vector<2x128xf32>
    %59 = vector.extract_strided_slice %46 {offsets = [0, 128], sizes = [2, 128], strides = [1, 1]} : vector<2x384xf32> to vector<2x128xf32>
    %60 = arith.addf %58, %59 : vector<2x128xf32>
    %61 = arith.negf %60 : vector<2x128xf32>
    %62 = math.exp %61 : vector<2x128xf32>
    %cst_18 = arith.constant 1.000000e+00 : f32
    %63 = vector.broadcast %cst_18 : f32 to vector<2x128xf32>
    %64 = arith.addf %63, %62 : vector<2x128xf32>
    %65 = arith.divf %63, %64 : vector<2x128xf32>
    %66 = vector.extract_strided_slice %49 {offsets = [0, 256], sizes = [2, 128], strides = [1, 1]} : vector<2x384xf32> to vector<2x128xf32>
    %67 = vector.extract_strided_slice %46 {offsets = [0, 256], sizes = [2, 128], strides = [1, 1]} : vector<2x384xf32> to vector<2x128xf32>
    %68 = arith.mulf %57, %67 : vector<2x128xf32>
    %69 = arith.addf %66, %68 : vector<2x128xf32>
    %70 = math.tanh %69 : vector<2x128xf32>
    %cst_19 = arith.constant 1.000000e+00 : f32
    %71 = vector.broadcast %cst_19 : f32 to vector<2x128xf32>
    %72 = arith.subf %71, %65 : vector<2x128xf32>
    %73 = arith.mulf %72, %70 : vector<2x128xf32>
    %74 = arith.mulf %65, %38 : vector<2x128xf32>
    %75 = arith.addf %73, %74 : vector<2x128xf32>
    %76 = arith.index_cast %c1_i32 : i32 to index
    %c0_20 = arith.constant 0 : index
    %c0_21 = arith.constant 0 : index
    %77 = vector.load %arg6[%76, %c0_20, %c0_21] : memref<4x2x128xf32, #tpu.memory_space<vmem>>, vector<1x2x128xf32>
    %78 = vector.shape_cast %77 : vector<1x2x128xf32> to vector<2x128xf32>
    %79 = vector.shape_cast %75 : vector<2x128xf32> to vector<1x2x128xf32>
    tpu.vector_store %arg6[%76, %c0_20, %c0_21], %79 {strides = array<i32>} : memref<4x2x128xf32, #tpu.memory_space<vmem>>, vector<1x2x128xf32>,
    %c2_i32 = arith.constant 2 : i32
    %80 = arith.truncf %75 : vector<2x128xf32> to vector<2x128xbf16>
    %cst_22 = arith.constant dense<0.000000e+00> : vector<2x384xf32>
    %81 = tpu.matmul %80, %3, %cst_22 {dimension_numbers = #tpu.dot_dimension_numbers<[1], [0], [0], [1], [0, 0, 1, 1], [], []>} : vector<2x128xbf16>, vector<128x384xbf16>, vector<2x384xf32> -> vector<2x384xf32>
    %82 = vector.broadcast %4 : vector<1x384xf32> to vector<2x384xf32>
    %83 = arith.addf %81, %82 : vector<2x384xf32>
    %84 = arith.index_cast %c2_i32 : i32 to index
    %c0_23 = arith.constant 0 : index
    %c0_24 = arith.constant 0 : index
    %85 = vector.load %arg2[%84, %c0_23, %c0_24] : memref<4x2x384xf32, #tpu.memory_space<vmem>>, vector<1x2x384xf32>
    %86 = vector.shape_cast %85 : vector<1x2x384xf32> to vector<2x384xf32>
    %87 = vector.extract_strided_slice %86 {offsets = [0, 0], sizes = [2, 128], strides = [1, 1]} : vector<2x384xf32> to vector<2x128xf32>
    %88 = vector.extract_strided_slice %83 {offsets = [0, 0], sizes = [2, 128], strides = [1, 1]} : vector<2x384xf32> to vector<2x128xf32>
    %89 = arith.addf %87, %88 : vector<2x128xf32>
    %90 = arith.negf %89 : vector<2x128xf32>
    %91 = math.exp %90 : vector<2x128xf32>
    %cst_25 = arith.constant 1.000000e+00 : f32
    %92 = vector.broadcast %cst_25 : f32 to vector<2x128xf32>
    %93 = arith.addf %92, %91 : vector<2x128xf32>
    %94 = arith.divf %92, %93 : vector<2x128xf32>
    %95 = vector.extract_strided_slice %86 {offsets = [0, 128], sizes = [2, 128], strides = [1, 1]} : vector<2x384xf32> to vector<2x128xf32>
    %96 = vector.extract_strided_slice %83 {offsets = [0, 128], sizes = [2, 128], strides = [1, 1]} : vector<2x384xf32> to vector<2x128xf32>
    %97 = arith.addf %95, %96 : vector<2x128xf32>
    %98 = arith.negf %97 : vector<2x128xf32>
    %99 = math.exp %98 : vector<2x128xf32>
    %cst_26 = arith.constant 1.000000e+00 : f32
    %100 = vector.broadcast %cst_26 : f32 to vector<2x128xf32>
    %101 = arith.addf %100, %99 : vector<2x128xf32>
    %102 = arith.divf %100, %101 : vector<2x128xf32>
    %103 = vector.extract_strided_slice %86 {offsets = [0, 256], sizes = [2, 128], strides = [1, 1]} : vector<2x384xf32> to vector<2x128xf32>
    %104 = vector.extract_strided_slice %83 {offsets = [0, 256], sizes = [2, 128], strides = [1, 1]} : vector<2x384xf32> to vector<2x128xf32>
    %105 = arith.mulf %94, %104 : vector<2x128xf32>
    %106 = arith.addf %103, %105 : vector<2x128xf32>
    %107 = math.tanh %106 : vector<2x128xf32>
    %cst_27 = arith.constant 1.000000e+00 : f32
    %108 = vector.broadcast %cst_27 : f32 to vector<2x128xf32>
    %109 = arith.subf %108, %102 : vector<2x128xf32>
    %110 = arith.mulf %109, %107 : vector<2x128xf32>
    %111 = arith.mulf %102, %75 : vector<2x128xf32>
    %112 = arith.addf %110, %111 : vector<2x128xf32>
    %113 = arith.index_cast %c2_i32 : i32 to index
    %c0_28 = arith.constant 0 : index
    %c0_29 = arith.constant 0 : index
    %114 = vector.load %arg6[%113, %c0_28, %c0_29] : memref<4x2x128xf32, #tpu.memory_space<vmem>>, vector<1x2x128xf32>
    %115 = vector.shape_cast %114 : vector<1x2x128xf32> to vector<2x128xf32>
    %116 = vector.shape_cast %112 : vector<2x128xf32> to vector<1x2x128xf32>
    tpu.vector_store %arg6[%113, %c0_28, %c0_29], %116 {strides = array<i32>} : memref<4x2x128xf32, #tpu.memory_space<vmem>>, vector<1x2x128xf32>,
    %c3_i32 = arith.constant 3 : i32
    %117 = arith.truncf %112 : vector<2x128xf32> to vector<2x128xbf16>
    %cst_30 = arith.constant dense<0.000000e+00> : vector<2x384xf32>
    %118 = tpu.matmul %117, %3, %cst_30 {dimension_numbers = #tpu.dot_dimension_numbers<[1], [0], [0], [1], [0, 0, 1, 1], [], []>} : vector<2x128xbf16>, vector<128x384xbf16>, vector<2x384xf32> -> vector<2x384xf32>
    %119 = vector.broadcast %4 : vector<1x384xf32> to vector<2x384xf32>
    %120 = arith.addf %118, %119 : vector<2x384xf32>
    %121 = arith.index_cast %c3_i32 : i32 to index
    %c0_31 = arith.constant 0 : index
    %c0_32 = arith.constant 0 : index
    %122 = vector.load %arg2[%121, %c0_31, %c0_32] : memref<4x2x384xf32, #tpu.memory_space<vmem>>, vector<1x2x384xf32>
    %123 = vector.shape_cast %122 : vector<1x2x384xf32> to vector<2x384xf32>
    %124 = vector.extract_strided_slice %123 {offsets = [0, 0], sizes = [2, 128], strides = [1, 1]} : vector<2x384xf32> to vector<2x128xf32>
    %125 = vector.extract_strided_slice %120 {offsets = [0, 0], sizes = [2, 128], strides = [1, 1]} : vector<2x384xf32> to vector<2x128xf32>
    %126 = arith.addf %124, %125 : vector<2x128xf32>
    %127 = arith.negf %126 : vector<2x128xf32>
    %128 = math.exp %127 : vector<2x128xf32>
    %cst_33 = arith.constant 1.000000e+00 : f32
    %129 = vector.broadcast %cst_33 : f32 to vector<2x128xf32>
    %130 = arith.addf %129, %128 : vector<2x128xf32>
    %131 = arith.divf %129, %130 : vector<2x128xf32>
    %132 = vector.extract_strided_slice %123 {offsets = [0, 128], sizes = [2, 128], strides = [1, 1]} : vector<2x384xf32> to vector<2x128xf32>
    %133 = vector.extract_strided_slice %120 {offsets = [0, 128], sizes = [2, 128], strides = [1, 1]} : vector<2x384xf32> to vector<2x128xf32>
    %134 = arith.addf %132, %133 : vector<2x128xf32>
    %135 = arith.negf %134 : vector<2x128xf32>
    %136 = math.exp %135 : vector<2x128xf32>
    %cst_34 = arith.constant 1.000000e+00 : f32
    %137 = vector.broadcast %cst_34 : f32 to vector<2x128xf32>
    %138 = arith.addf %137, %136 : vector<2x128xf32>
    %139 = arith.divf %137, %138 : vector<2x128xf32>
    %140 = vector.extract_strided_slice %123 {offsets = [0, 256], sizes = [2, 128], strides = [1, 1]} : vector<2x384xf32> to vector<2x128xf32>
    %141 = vector.extract_strided_slice %120 {offsets = [0, 256], sizes = [2, 128], strides = [1, 1]} : vector<2x384xf32> to vector<2x128xf32>
    %142 = arith.mulf %131, %141 : vector<2x128xf32>
    %143 = arith.addf %140, %142 : vector<2x128xf32>
    %144 = math.tanh %143 : vector<2x128xf32>
    %cst_35 = arith.constant 1.000000e+00 : f32
    %145 = vector.broadcast %cst_35 : f32 to vector<2x128xf32>
    %146 = arith.subf %145, %139 : vector<2x128xf32>
    %147 = arith.mulf %146, %144 : vector<2x128xf32>
    %148 = arith.mulf %139, %112 : vector<2x128xf32>
    %149 = arith.addf %147, %148 : vector<2x128xf32>
    %150 = arith.index_cast %c3_i32 : i32 to index
    %c0_36 = arith.constant 0 : index
    %c0_37 = arith.constant 0 : index
    %151 = vector.load %arg6[%150, %c0_36, %c0_37] : memref<4x2x128xf32, #tpu.memory_space<vmem>>, vector<1x2x128xf32>
    %152 = vector.shape_cast %151 : vector<1x2x128xf32> to vector<2x128xf32>
    %153 = vector.shape_cast %149 : vector<2x128xf32> to vector<1x2x128xf32>
    tpu.vector_store %arg6[%150, %c0_36, %c0_37], %153 {strides = array<i32>} : memref<4x2x128xf32, #tpu.memory_space<vmem>>, vector<1x2x128xf32>,
    %c4_i32 = arith.constant 4 : i32
    %c0_38 = arith.constant 0 : index
    %c0_39 = arith.constant 0 : index
    %154 = vector.load %arg8[%c0_38, %c0_39] : memref<2x128xf32, #tpu.memory_space<vmem>>, vector<2x128xf32>
    tpu.vector_store %arg8[%c0_38, %c0_39], %149 {strides = array<i32>} : memref<2x128xf32, #tpu.memory_space<vmem>>, vector<2x128xf32>,
    %c0_40 = arith.constant 0 : index
    %c0_41 = arith.constant 0 : index
    %155 = vector.load %arg7[%c0_40, %c0_41] : memref<2x128xf32, #tpu.memory_space<vmem>>, vector<2x128xf32>
    tpu.vector_store %arg7[%c0_40, %c0_41], %149 {strides = array<i32>} : memref<2x128xf32, #tpu.memory_space<vmem>>, vector<2x128xf32>,
    return
  }
  func.func @transform_0(%arg0: i32, %arg1: i32) -> (i32, i32, i32) {
    %c0_i32 = arith.constant 0 : i32
    %c0_i32_0 = arith.constant 0 : i32
    return %arg1, %arg0, %c0_i32 : i32, i32, i32
  }
  func.func @transform_1(%arg0: i32, %arg1: i32) -> (i32, i32) {
    %c0_i32 = arith.constant 0 : i32
    %c0_i32_0 = arith.constant 0 : i32
    return %arg0, %c0_i32 : i32, i32
  }
  func.func @transform_2(%arg0: i32, %arg1: i32) -> (i32, i32) {
    %c0_i32 = arith.constant 0 : i32
    %c0_i32_0 = arith.constant 0 : i32
    %c0_i32_1 = arith.constant 0 : i32
    return %c0_i32, %c0_i32_0 : i32, i32
  }
  func.func @transform_3(%arg0: i32, %arg1: i32) -> (i32, i32) {
    %c0_i32 = arith.constant 0 : i32
    %c0_i32_0 = arith.constant 0 : i32
    %c0_i32_1 = arith.constant 0 : i32
    return %c0_i32, %c0_i32_0 : i32, i32
  }
  func.func @transform_4(%arg0: i32, %arg1: i32) -> (i32, i32, i32) {
    %c0_i32 = arith.constant 0 : i32
    %c0_i32_0 = arith.constant 0 : i32
    return %arg1, %arg0, %c0_i32 : i32, i32, i32
  }
  func.func @transform_5(%arg0: i32, %arg1: i32) -> (i32, i32) {
    %c0_i32 = arith.constant 0 : i32
    %c0_i32_0 = arith.constant 0 : i32
    return %arg0, %c0_i32 : i32, i32
  }
}

module attributes {stable_mosaic.version = 11 : i64} {
  func.func @_matmul_bias_kernel(%arg0: i32, %arg1: memref<8x128xbf16, #tpu.memory_space<vmem>>, %arg2: memref<128x128xbf16, #tpu.memory_space<vmem>>, %arg3: memref<1x128xf32, #tpu.memory_space<vmem>>, %arg4: memref<8x128xf32, #tpu.memory_space<vmem>>) attributes {dimension_semantics = [#tpu.dimension_semantics<parallel>], iteration_bounds = array<i64: 1>, scalar_prefetch = 0 : i64, scratch_operands = 0 : i64, tpu.core_type = #tpu.core_type<tc>, window_params = [{transform_indices = @transform_0, window_bounds = array<i64: 8, 128>}, {pipeline_mode = #tpu.pipeline_mode<synchronous>, transform_indices = @transform_1, window_bounds = array<i64: 128, 128>}, {pipeline_mode = #tpu.pipeline_mode<synchronous>, transform_indices = @transform_2, window_bounds = array<i64: 1, 128>}, {transform_indices = @transform_3, window_bounds = array<i64: 8, 128>}]} {
    %c0 = arith.constant 0 : index
    %c0_0 = arith.constant 0 : index
    %0 = vector.load %arg1[%c0, %c0_0] : memref<8x128xbf16, #tpu.memory_space<vmem>>, vector<8x128xbf16>
    %c0_1 = arith.constant 0 : index
    %c0_2 = arith.constant 0 : index
    %1 = vector.load %arg2[%c0_1, %c0_2] : memref<128x128xbf16, #tpu.memory_space<vmem>>, vector<128x128xbf16>
    %cst = arith.constant dense<0.000000e+00> : vector<8x128xf32>
    %2 = tpu.matmul %0, %1, %cst {dimension_numbers = #tpu.dot_dimension_numbers<[1], [0], [0], [1], [0, 0, 1, 1], [], []>} : vector<8x128xbf16>, vector<128x128xbf16>, vector<8x128xf32> -> vector<8x128xf32>
    %c0_3 = arith.constant 0 : index
    %c0_4 = arith.constant 0 : index
    %3 = vector.load %arg3[%c0_3, %c0_4] : memref<1x128xf32, #tpu.memory_space<vmem>>, vector<1x128xf32>
    %4 = vector.broadcast %3 : vector<1x128xf32> to vector<8x128xf32>
    %5 = arith.addf %2, %4 : vector<8x128xf32>
    %c0_5 = arith.constant 0 : index
    %c0_6 = arith.constant 0 : index
    %6 = vector.load %arg4[%c0_5, %c0_6] : memref<8x128xf32, #tpu.memory_space<vmem>>, vector<8x128xf32>
    tpu.vector_store %arg4[%c0_5, %c0_6], %5 {strides = array<i32>} : memref<8x128xf32, #tpu.memory_space<vmem>>, vector<8x128xf32>,
    return
  }
  func.func @transform_0(%arg0: i32) -> (i32, i32) {
    %c0_i32 = arith.constant 0 : i32
    %c0_i32_0 = arith.constant 0 : i32
    return %arg0, %c0_i32 : i32, i32
  }
  func.func @transform_1(%arg0: i32) -> (i32, i32) {
    %c0_i32 = arith.constant 0 : i32
    %c0_i32_0 = arith.constant 0 : i32
    %c0_i32_1 = arith.constant 0 : i32
    return %c0_i32, %c0_i32_0 : i32, i32
  }
  func.func @transform_2(%arg0: i32) -> (i32, i32) {
    %c0_i32 = arith.constant 0 : i32
    %c0_i32_0 = arith.constant 0 : i32
    %c0_i32_1 = arith.constant 0 : i32
    return %c0_i32, %c0_i32_0 : i32, i32
  }
  func.func @transform_3(%arg0: i32) -> (i32, i32) {
    %c0_i32 = arith.constant 0 : i32
    %c0_i32_0 = arith.constant 0 : i32
    return %arg0, %c0_i32 : i32, i32
  }
}

</mosaic_0001>

<llo_original>
// kernel: drqn_forward.6
$region0: #{drqn_forward.6}
  #allocation0 [shape = 'u32[]', space=smem, size = 0x4, offset = 0x4, fixed_abs, tag = 'smem constant byte address 0x4 - core index']
  #allocation1 [shape = 'u32[144,128]{1,0:T(1,128)}', space=vmem, size = 0x12000, scoped, tag = 'internal scratch']
  %s0 = inlined_call_operand.vmem [shape: bf16[1800,256], index: 0, kind: input, shape index: {}]
  %s1 = inlined_call_operand.vmem [shape: bf16[256,32], index: 1, kind: input, shape index: {}]
  %s2 = inlined_call_operand.vmem [shape: f32[1,32], index: 2, kind: input, shape index: {}]
  %s3 = inlined_call_operand.vmem [shape: bf16[1800,32], index: 3, kind: output, shape index: {}]
  %s4 = sld [smem:[#allocation0]]
  $region89: #{drqn_forward.6} parent=0
    _
  %s6 = ssub.s32 1, %s4
  %s7 = scalar_select 0, %s6, %s4
  $region1: #{drqn_forward.6} parent=0
    #allocation2 [shape = 'u8[524288]{0}', space=vmem, size = 0x80000, scoped, tag = 'output window, operand 0']
    loop: start=0, step=1, limit=4
    $region2: #{drqn_forward.6} parent=1 // loop_pre_header
      _
    $region3: #{drqn_forward.6} parent=1 // loop_header
      %s9 = sphi 0, %s13
      %p10 = scmp.ge.s32.totalorder %s9, 4
      %s19 = sphi 0, %s21
      %s22 = sphi 0, %s19
      %s23 = sphi 0, %s22
      %s39 = sphi 0, %s23
      %s43 = sphi 0, %s43
      %s45 = sphi 0, %s43
      %s46 = sphi 0, %s45
      %s60 = sphi 0, %s46
      %s64 = sphi 0, %s64
      %s66 = sphi 0, %s64
      %s67 = sphi 0, %s66
      %s81 = sphi 0, %s67
      %s87 = sphi 0, %s89
      %s90 = sphi 0, %s87
      %s91 = sphi 0, %s90
      %s107 = sphi 0, %s91
    $region4: #{drqn_forward.6} parent=1 // loop_header_branch
      %12 = sbr.rel (%p10) target = $region8
    $region5: #{drqn_forward.6} parent=1 // loop_body
      %s14 = ssub.s32 %s9, 1
      %s15 = ssub.s32 %s9, 2
      %s16 = sadd.s32 %s9, 1
      %s17 = ssub.s32 %s9, %s16
      %p18 = scmp.eq.s32.totalorder %s17, 0
      %s20 = sadd.s32 %s19, 1
      %s21 = scalar_select %p18, %s19, %s20
      %p24 = pneg %p18
      %p25 = scmp.eq.s32.totalorder %s9, 1
      %p26 = por %p24, %p25
      %p27 = scmp.ne.s32.totalorder %s19, %s22
      %p28 = scmp.eq.s32.totalorder %s9, 0
      %p29 = por %p27, %p28
      %p30 = scmp.ne.s32.totalorder %s19, %s22
      %p31 = scmp.eq.s32.totalorder %s14, 1
      %p32 = por %p30, %p31
      %p33 = scmp.ne.s32.totalorder %s22, %s23
      %p34 = scmp.eq.s32.totalorder %s14, 0
      %p35 = por %p33, %p34
      %p36 = scmp.ne.s32.totalorder %s22, %s23
      %p37 = scmp.eq.s32.totalorder %s15, 1
      %p38 = por %p36, %p37
      %p40 = scmp.ne.s32.totalorder %s23, %s39
      %p41 = scmp.eq.s32.totalorder %s15, 0
      %p42 = por %p40, %p41
      %s44 = sadd.s32 %s43, 1
      %p47 = scmp.eq.s32.totalorder %s9, 1
      %p48 = scmp.ne.s32.totalorder %s43, %s45
      %p49 = scmp.eq.s32.totalorder %s9, 0
      %p50 = por %p48, %p49
      %p51 = scmp.ne.s32.totalorder %s43, %s45
      %p52 = scmp.eq.s32.totalorder %s14, 1
      %p53 = por %p51, %p52
      %p54 = scmp.ne.s32.totalorder %s45, %s46
      %p55 = scmp.eq.s32.totalorder %s14, 0
      %p56 = por %p54, %p55
      %p57 = scmp.ne.s32.totalorder %s45, %s46
      %p58 = scmp.eq.s32.totalorder %s15, 1
      %p59 = por %p57, %p58
      %p61 = scmp.ne.s32.totalorder %s46, %s60
      %p62 = scmp.eq.s32.totalorder %s15, 0
      %p63 = por %p61, %p62
      %s65 = sadd.s32 %s64, 1
      %p68 = scmp.eq.s32.totalorder %s9, 1
      %p69 = scmp.ne.s32.totalorder %s64, %s66
      %p70 = scmp.eq.s32.totalorder %s9, 0
      %p71 = por %p69, %p70
      %p72 = scmp.ne.s32.totalorder %s64, %s66
      %p73 = scmp.eq.s32.totalorder %s14, 1
      %p74 = por %p72, %p73
      %p75 = scmp.ne.s32.totalorder %s66, %s67
      %p76 = scmp.eq.s32.totalorder %s14, 0
      %p77 = por %p75, %p76
      %p78 = scmp.ne.s32.totalorder %s66, %s67
      %p79 = scmp.eq.s32.totalorder %s15, 1
      %p80 = por %p78, %p79
      %p82 = scmp.ne.s32.totalorder %s67, %s81
      %p83 = scmp.eq.s32.totalorder %s15, 0
      %p84 = por %p82, %p83
      %s85 = ssub.s32 %s9, %s16
      %p86 = scmp.eq.s32.totalorder %s85, 0
      %s88 = sadd.s32 %s87, 1
      %s89 = scalar_select %p86, %s87, %s88
      %p92 = pneg %p86
      %p93 = scmp.eq.s32.totalorder %s9, 1
      %p94 = por %p92, %p93
      %p95 = scmp.ne.s32.totalorder %s87, %s90
      %p96 = scmp.eq.s32.totalorder %s9, 0
      %p97 = por %p95, %p96
      %p98 = scmp.ne.s32.totalorder %s87, %s90
      %p99 = scmp.eq.s32.totalorder %s14, 1
      %p100 = por %p98, %p99
      %p101 = scmp.ne.s32.totalorder %s90, %s91
      %p102 = scmp.eq.s32.totalorder %s14, 0
      %p103 = por %p101, %p102
      %p104 = scmp.ne.s32.totalorder %s90, %s91
      %p105 = scmp.eq.s32.totalorder %s15, 1
      %p106 = por %p104, %p105
      %p108 = scmp.ne.s32.totalorder %s91, %s107
      %p109 = scmp.eq.s32.totalorder %s15, 0
      %p110 = por %p108, %p109
      %p111 = scmp.le.s32.totalorder 1, %s9
      %p112 = scmp.lt.s32.totalorder %s9, 3
      %p113 = pnand %p111, %p112
      %p114 = pneg %p113
      // Predicated region
      $region9: #{drqn_forward.6} parent=5 // pred_check
        _
      $region10: #{drqn_forward.6} parent=5 // pred_check_branch
        %116 = sbr.rel (%p113) target = $region12
      $region11: #{drqn_forward.6} parent=5 // pred_region
        %s117 = ssub.s32 %s9, 1
        // Predicated region
        $region13: #{drqn_forward.6} parent=11 // pred_check
          %p118 = pneg %p56
        $region14: #{drqn_forward.6} parent=11 // pred_check_branch
          %120 = sbr.rel (%p118) target = $region16
        $region15: #{drqn_forward.6} parent=11 // pred_region
          _
        $region16: #{drqn_forward.6} parent=11 // pred_fallthru
          _
        // Predicated region
        $region17: #{drqn_forward.6} parent=11 // pred_check
          %p121 = pneg %p77
        $region18: #{drqn_forward.6} parent=11 // pred_check_branch
          %123 = sbr.rel (%p121) target = $region20
        $region19: #{drqn_forward.6} parent=11 // pred_region
          _
        $region20: #{drqn_forward.6} parent=11 // pred_fallthru
          _
      $region12: #{drqn_forward.6} parent=5 // pred_fallthru
        _
      %p124 = scmp.lt.s32.totalorder %s9, 2
      // Predicated region
      $region21: #{drqn_forward.6} parent=5 // pred_check
        %p125 = pneg %p124
      $region22: #{drqn_forward.6} parent=5 // pred_check_branch
        %127 = sbr.rel (%p125) target = $region24
      $region23: #{drqn_forward.6} parent=5 // pred_region
        // Predicated region
        $region25: #{drqn_forward.6} parent=23 // pred_check
          %p128 = pneg %p29
        $region26: #{drqn_forward.6} parent=23 // pred_check_branch
          %130 = sbr.rel (%p128) target = $region28
        $region27: #{drqn_forward.6} parent=23 // pred_region
          %s131 = smul.u32 128, %s9
          %s132 = ssub.s32 225, %s131
          %p133 = scmp.lt.s32.totalorder %s132, 128
          %s134 = scalar_select %p133, %s132, 128
          %s135 = smul.u32 64, %s134
          %s136 = smul.u32 %s135, 2
          %p137 = scmp.lt.s32.totalorder %s131, 224
          %s138 = scalar_select %p137, %s131, 224
          %s139 = smul.addr %s138, 2
          %s140 = smul.addr %s139, 4
          %s141 = scalar_lea.vmem %s0, %s140
          %s142 = smul.u32 128, %s9
          %s143 = ssub.s32 225, %s142
          %p144 = scmp.lt.s32.totalorder %s143, 128
          %s145 = scalar_select %p144, %s143, 128
          %s146 = smul.u32 64, %s145
          %s147 = smul.u32 %s146, 2
        $region28: #{drqn_forward.6} parent=23 // pred_fallthru
          _
      $region24: #{drqn_forward.6} parent=5 // pred_fallthru
        _
      %p148 = scmp.le.s32.totalorder 1, %s9
      %p149 = scmp.lt.s32.totalorder %s9, 3
      %p150 = pnand %p148, %p149
      %p151 = pneg %p150
      // Predicated region
      $region29: #{drqn_forward.6} parent=5 // pred_check
        _
      $region30: #{drqn_forward.6} parent=5 // pred_check_branch
        %153 = sbr.rel (%p150) target = $region32
      $region31: #{drqn_forward.6} parent=5 // pred_region
        %s154 = ssub.s32 %s9, 1
        %s155 = smul.u32 128, %s14
        %s156 = ssub.s32 225, %s155
        %p157 = scmp.lt.s32.totalorder %s156, 128
        %s158 = scalar_select %p157, %s156, 128
        %s159 = smul.u32 64, %s158
        %s160 = smul.u32 %s159, 2
        %p161 = scmp.lt.s32.totalorder %s155, 224
        %s162 = scalar_select %p161, %s155, 224
        %s163 = smul.addr %s162, 2
        %s164 = smul.addr %s163, 4
        %s165 = scalar_lea.vmem %s0, %s164
        %p166 = pneg %p35
        %p167 = pneg %p32
        %p168 = pneg %p56
        %p169 = pneg %p53
        %p170 = pneg %p77
        %p171 = pneg %p74
        %p172 = pneg %p103
        %p173 = pneg %p100
        %s174 = sand.u32 %s90, 1
        %s175 = sand.u32 %s90, 1
        %s176 = smul.addr %s175, 512
        %s177 = scalar_lea.vmem [#allocation2], %s176
        %s178 = smul.u32 128, %s14
        %s179 = ssub.s32 225, %s178
        %p180 = scmp.lt.s32.totalorder %s179, 128
        %s181 = scalar_select %p180, %s179, 128
        %s182 = smul.u32 64, %s181
        %s183 = smul.u32 %s182, 2
        %p184 = scmp.lt.s32.totalorder %s178, 224
        %s185 = scalar_select %p184, %s178, 224
        %s186 = smul.addr %s185, 2
        %s187 = smul.addr %s186, 4
        %s188 = scalar_lea.vmem %s0, %s187
        %s189 = smul.u32 128, %s14
        %s190 = ssub.s32 225, %s189
        %p191 = scmp.lt.s32.totalorder %s190, 128
        %s192 = scalar_select %p191, %s190, 128
        %s193 = smul.u32 64, %s192
        %s194 = smul.u32 %s193, 2
        %s195 = smul.u32 128, %s14
        %s196 = ssub.s32 225, %s195
        %p197 = scmp.lt.s32.totalorder %s196, 128
        %s198 = scalar_select %p197, %s196, 128
        %s199 = smul.u32 64, %s198
        %v201 = vld [vmem:[%s188] sm:$0xff]
        %v202 = vld [vmem:[%s188 + $0x8] sm:$0xff]
        %v203 = vld [vmem:[%s188 + $0x10] sm:$0xff]
        %v204 = vld [vmem:[%s188 + $0x18] sm:$0xff]
        %v205 = vld [vmem:[%s188 + $0x20] sm:$0xff]
        %v206 = vld [vmem:[%s188 + $0x28] sm:$0xff]
        %v207 = vld [vmem:[%s188 + $0x30] sm:$0xff]
        %v208 = vld [vmem:[%s188 + $0x38] sm:$0xff]
        %v209 = vld [vmem:[%s188 + $0x40] sm:$0xff]
        %v210 = vld [vmem:[%s188 + $0x48] sm:$0xff]
        %v211 = vld [vmem:[%s188 + $0x50] sm:$0xff]
        %v212 = vld [vmem:[%s188 + $0x58] sm:$0xff]
        %v213 = vld [vmem:[%s188 + $0x60] sm:$0xff]
        %v214 = vld [vmem:[%s188 + $0x68] sm:$0xff]
        %v215 = vld [vmem:[%s188 + $0x70] sm:$0xff]
        %v216 = vld [vmem:[%s188 + $0x78] sm:$0xff]
        %v217 = vld [vmem:[%s188 + $0x80] sm:$0xff]
        %v218 = vld [vmem:[%s188 + $0x88] sm:$0xff]
        %v219 = vld [vmem:[%s188 + $0x90] sm:$0xff]
        %v220 = vld [vmem:[%s188 + $0x98] sm:$0xff]
        %v221 = vld [vmem:[%s188 + $0xa0] sm:$0xff]
        %v222 = vld [vmem:[%s188 + $0xa8] sm:$0xff]
        %v223 = vld [vmem:[%s188 + $0xb0] sm:$0xff]
        %v224 = vld [vmem:[%s188 + $0xb8] sm:$0xff]
        %v225 = vld [vmem:[%s188 + $0xc0] sm:$0xff]
        %v226 = vld [vmem:[%s188 + $0xc8] sm:$0xff]
        %v227 = vld [vmem:[%s188 + $0xd0] sm:$0xff]
        %v228 = vld [vmem:[%s188 + $0xd8] sm:$0xff]
        %v229 = vld [vmem:[%s188 + $0xe0] sm:$0xff]
        %v230 = vld [vmem:[%s188 + $0xe8] sm:$0xff]
        %v231 = vld [vmem:[%s188 + $0xf0] sm:$0xff]
        %v232 = vld [vmem:[%s188 + $0xf8] sm:$0xff]
        %v233 = vld [vmem:[%s188 + $0x100] sm:$0xff]
        %v234 = vld [vmem:[%s188 + $0x108] sm:$0xff]
        %v235 = vld [vmem:[%s188 + $0x110] sm:$0xff]
        %v236 = vld [vmem:[%s188 + $0x118] sm:$0xff]
        %v237 = vld [vmem:[%s188 + $0x120] sm:$0xff]
        %v238 = vld [vmem:[%s188 + $0x128] sm:$0xff]
        %v239 = vld [vmem:[%s188 + $0x130] sm:$0xff]
        %v240 = vld [vmem:[%s188 + $0x138] sm:$0xff]
        %v241 = vld [vmem:[%s188 + $0x140] sm:$0xff]
        %v242 = vld [vmem:[%s188 + $0x148] sm:$0xff]
        %v243 = vld [vmem:[%s188 + $0x150] sm:$0xff]
        %v244 = vld [vmem:[%s188 + $0x158] sm:$0xff]
        %v245 = vld [vmem:[%s188 + $0x160] sm:$0xff]
        %v246 = vld [vmem:[%s188 + $0x168] sm:$0xff]
        %v247 = vld [vmem:[%s188 + $0x170] sm:$0xff]
        %v248 = vld [vmem:[%s188 + $0x178] sm:$0xff]
        %v249 = vld [vmem:[%s188 + $0x180] sm:$0xff]
        %v250 = vld [vmem:[%s188 + $0x188] sm:$0xff]
        %v251 = vld [vmem:[%s188 + $0x190] sm:$0xff]
        %v252 = vld [vmem:[%s188 + $0x198] sm:$0xff]
        %v253 = vld [vmem:[%s188 + $0x1a0] sm:$0xff]
        %v254 = vld [vmem:[%s188 + $0x1a8] sm:$0xff]
        %v255 = vld [vmem:[%s188 + $0x1b0] sm:$0xff]
        %v256 = vld [vmem:[%s188 + $0x1b8] sm:$0xff]
        %v257 = vld [vmem:[%s188 + $0x1c0] sm:$0xff]
        %v258 = vld [vmem:[%s188 + $0x1c8] sm:$0xff]
        %v259 = vld [vmem:[%s188 + $0x1d0] sm:$0xff]
        %v260 = vld [vmem:[%s188 + $0x1d8] sm:$0xff]
        %v261 = vld [vmem:[%s188 + $0x1e0] sm:$0xff]
        %v262 = vld [vmem:[%s188 + $0x1e8] sm:$0xff]
        %v263 = vld [vmem:[%s188 + $0x1f0] sm:$0xff]
        %v264 = vld [vmem:[%s188 + $0x1f8] sm:$0xff]
        %v265 = vld [vmem:[%s188 + $0x200] sm:$0xff]
        %v266 = vld [vmem:[%s188 + $0x208] sm:$0xff]
        %v267 = vld [vmem:[%s188 + $0x210] sm:$0xff]
        %v268 = vld [vmem:[%s188 + $0x218] sm:$0xff]
        %v269 = vld [vmem:[%s188 + $0x220] sm:$0xff]
        %v270 = vld [vmem:[%s188 + $0x228] sm:$0xff]
        %v271 = vld [vmem:[%s188 + $0x230] sm:$0xff]
        %v272 = vld [vmem:[%s188 + $0x238] sm:$0xff]
        %v273 = vld [vmem:[%s188 + $0x240] sm:$0xff]
        %v274 = vld [vmem:[%s188 + $0x248] sm:$0xff]
        %v275 = vld [vmem:[%s188 + $0x250] sm:$0xff]
        %v276 = vld [vmem:[%s188 + $0x258] sm:$0xff]
        %v277 = vld [vmem:[%s188 + $0x260] sm:$0xff]
        %v278 = vld [vmem:[%s188 + $0x268] sm:$0xff]
        %v279 = vld [vmem:[%s188 + $0x270] sm:$0xff]
        %v280 = vld [vmem:[%s188 + $0x278] sm:$0xff]
        %v281 = vld [vmem:[%s188 + $0x280] sm:$0xff]
        %v282 = vld [vmem:[%s188 + $0x288] sm:$0xff]
        %v283 = vld [vmem:[%s188 + $0x290] sm:$0xff]
        %v284 = vld [vmem:[%s188 + $0x298] sm:$0xff]
        %v285 = vld [vmem:[%s188 + $0x2a0] sm:$0xff]
        %v286 = vld [vmem:[%s188 + $0x2a8] sm:$0xff]
        %v287 = vld [vmem:[%s188 + $0x2b0] sm:$0xff]
        %v288 = vld [vmem:[%s188 + $0x2b8] sm:$0xff]
        %v289 = vld [vmem:[%s188 + $0x2c0] sm:$0xff]
        %v290 = vld [vmem:[%s188 + $0x2c8] sm:$0xff]
        %v291 = vld [vmem:[%s188 + $0x2d0] sm:$0xff]
        %v292 = vld [vmem:[%s188 + $0x2d8] sm:$0xff]
        %v293 = vld [vmem:[%s188 + $0x2e0] sm:$0xff]
        %v294 = vld [vmem:[%s188 + $0x2e8] sm:$0xff]
        %v295 = vld [vmem:[%s188 + $0x2f0] sm:$0xff]
        %v296 = vld [vmem:[%s188 + $0x2f8] sm:$0xff]
        %v297 = vld [vmem:[%s188 + $0x300] sm:$0xff]
        %v298 = vld [vmem:[%s188 + $0x308] sm:$0xff]
        %v299 = vld [vmem:[%s188 + $0x310] sm:$0xff]
        %v300 = vld [vmem:[%s188 + $0x318] sm:$0xff]
        %v301 = vld [vmem:[%s188 + $0x320] sm:$0xff]
        %v302 = vld [vmem:[%s188 + $0x328] sm:$0xff]
        %v303 = vld [vmem:[%s188 + $0x330] sm:$0xff]
        %v304 = vld [vmem:[%s188 + $0x338] sm:$0xff]
        %v305 = vld [vmem:[%s188 + $0x340] sm:$0xff]
        %v306 = vld [vmem:[%s188 + $0x348] sm:$0xff]
        %v307 = vld [vmem:[%s188 + $0x350] sm:$0xff]
        %v308 = vld [vmem:[%s188 + $0x358] sm:$0xff]
        %v309 = vld [vmem:[%s188 + $0x360] sm:$0xff]
        %v310 = vld [vmem:[%s188 + $0x368] sm:$0xff]
        %v311 = vld [vmem:[%s188 + $0x370] sm:$0xff]
        %v312 = vld [vmem:[%s188 + $0x378] sm:$0xff]
        %v313 = vld [vmem:[%s188 + $0x380] sm:$0xff]
        %v314 = vld [vmem:[%s188 + $0x388] sm:$0xff]
        %v315 = vld [vmem:[%s188 + $0x390] sm:$0xff]
        %v316 = vld [vmem:[%s188 + $0x398] sm:$0xff]
        %v317 = vld [vmem:[%s188 + $0x3a0] sm:$0xff]
        %v318 = vld [vmem:[%s188 + $0x3a8] sm:$0xff]
        %v319 = vld [vmem:[%s188 + $0x3b0] sm:$0xff]
        %v320 = vld [vmem:[%s188 + $0x3b8] sm:$0xff]
        %v321 = vld [vmem:[%s188 + $0x3c0] sm:$0xff]
        %v322 = vld [vmem:[%s188 + $0x3c8] sm:$0xff]
        %v323 = vld [vmem:[%s188 + $0x3d0] sm:$0xff]
        %v324 = vld [vmem:[%s188 + $0x3d8] sm:$0xff]
        %v325 = vld [vmem:[%s188 + $0x3e0] sm:$0xff]
        %v326 = vld [vmem:[%s188 + $0x3e8] sm:$0xff]
        %v327 = vld [vmem:[%s188 + $0x3f0] sm:$0xff]
        %v328 = vld [vmem:[%s188 + $0x3f8] sm:$0xff]
        %v329 = vld [vmem:[%s1] sm:$0xf]
        %v330 = vld [vmem:[%s1 + $0x4] sm:$0xf]
        %v331 = vld [vmem:[%s1 + $0x8] sm:$0xf]
        %v332 = vld [vmem:[%s1 + $0xc] sm:$0xf]
        %v333 = vld [vmem:[%s1 + $0x10] sm:$0xf]
        %v334 = vld [vmem:[%s1 + $0x14] sm:$0xf]
        %v335 = vld [vmem:[%s1 + $0x18] sm:$0xf]
        %v336 = vld [vmem:[%s1 + $0x1c] sm:$0xf]
        %v337 = vld [vmem:[%s1 + $0x20] sm:$0xf]
        %v338 = vld [vmem:[%s1 + $0x24] sm:$0xf]
        %v339 = vld [vmem:[%s1 + $0x28] sm:$0xf]
        %v340 = vld [vmem:[%s1 + $0x2c] sm:$0xf]
        %v341 = vld [vmem:[%s1 + $0x30] sm:$0xf]
        %v342 = vld [vmem:[%s1 + $0x34] sm:$0xf]
        %v343 = vld [vmem:[%s1 + $0x38] sm:$0xf]
        %v344 = vld [vmem:[%s1 + $0x3c] sm:$0xf]
        %v345 = vld [vmem:[%s1 + $0x40] sm:$0xf]
        %v346 = vld [vmem:[%s1 + $0x44] sm:$0xf]
        %v347 = vld [vmem:[%s1 + $0x48] sm:$0xf]
        %v348 = vld [vmem:[%s1 + $0x4c] sm:$0xf]
        %v349 = vld [vmem:[%s1 + $0x50] sm:$0xf]
        %v350 = vld [vmem:[%s1 + $0x54] sm:$0xf]
        %v351 = vld [vmem:[%s1 + $0x58] sm:$0xf]
        %v352 = vld [vmem:[%s1 + $0x5c] sm:$0xf]
        %v353 = vld [vmem:[%s1 + $0x60] sm:$0xf]
        %v354 = vld [vmem:[%s1 + $0x64] sm:$0xf]
        %v355 = vld [vmem:[%s1 + $0x68] sm:$0xf]
        %v356 = vld [vmem:[%s1 + $0x6c] sm:$0xf]
        %v357 = vld [vmem:[%s1 + $0x70] sm:$0xf]
        %v358 = vld [vmem:[%s1 + $0x74] sm:$0xf]
        %v359 = vld [vmem:[%s1 + $0x78] sm:$0xf]
        %v360 = vld [vmem:[%s1 + $0x7c] sm:$0xf]
        %v361 = vld [vmem:[%s2] sm:$0x1]
        %v363 = vlaneseq
        %v364 = vshrl.u32 %v363, 7
        %v365 = vsub.s32 0, %v364
        %v366 = vrot.slane %v361, %v365
        %v496 = vunpack.c.l.b16 %v201
        %v497 = vunpack.c.h.b16 %v201
        %v498 = vunpack.c.l.b16 %v202
        %v499 = vunpack.c.h.b16 %v202
        %v500 = vunpack.c.l.b16 %v203
        %v501 = vunpack.c.h.b16 %v203
        %v502 = vunpack.c.l.b16 %v204
        %v503 = vunpack.c.h.b16 %v204
        %v504 = vunpack.c.l.b16 %v205
        %v505 = vunpack.c.h.b16 %v205
        %v506 = vunpack.c.l.b16 %v206
        %v507 = vunpack.c.h.b16 %v206
        %v508 = vunpack.c.l.b16 %v207
        %v509 = vunpack.c.h.b16 %v207
        %v510 = vunpack.c.l.b16 %v208
        %v511 = vunpack.c.h.b16 %v208
        %v512 = vunpack.c.l.b16 %v209
        %v513 = vunpack.c.h.b16 %v209
        %v514 = vunpack.c.l.b16 %v210
        %v515 = vunpack.c.h.b16 %v210
        %v516 = vunpack.c.l.b16 %v211
        %v517 = vunpack.c.h.b16 %v211
        %v518 = vunpack.c.l.b16 %v212
        %v519 = vunpack.c.h.b16 %v212
        %v520 = vunpack.c.l.b16 %v213
        %v521 = vunpack.c.h.b16 %v213
        %v522 = vunpack.c.l.b16 %v214
        %v523 = vunpack.c.h.b16 %v214
        %v524 = vunpack.c.l.b16 %v215
        %v525 = vunpack.c.h.b16 %v215
        %v526 = vunpack.c.l.b16 %v216
        %v527 = vunpack.c.h.b16 %v216
        %v528 = vunpack.c.l.b16 %v217
        %v529 = vunpack.c.h.b16 %v217
        %v530 = vunpack.c.l.b16 %v218
        %v531 = vunpack.c.h.b16 %v218
        %v532 = vunpack.c.l.b16 %v219
        %v533 = vunpack.c.h.b16 %v219
        %v534 = vunpack.c.l.b16 %v220
        %v535 = vunpack.c.h.b16 %v220
        %v536 = vunpack.c.l.b16 %v221
        %v537 = vunpack.c.h.b16 %v221
        %v538 = vunpack.c.l.b16 %v222
        %v539 = vunpack.c.h.b16 %v222
        %v540 = vunpack.c.l.b16 %v223
        %v541 = vunpack.c.h.b16 %v223
        %v542 = vunpack.c.l.b16 %v224
        %v543 = vunpack.c.h.b16 %v224
        %v544 = vunpack.c.l.b16 %v225
        %v545 = vunpack.c.h.b16 %v225
        %v546 = vunpack.c.l.b16 %v226
        %v547 = vunpack.c.h.b16 %v226
        %v548 = vunpack.c.l.b16 %v227
        %v549 = vunpack.c.h.b16 %v227
        %v550 = vunpack.c.l.b16 %v228
        %v551 = vunpack.c.h.b16 %v228
        %v552 = vunpack.c.l.b16 %v229
        %v553 = vunpack.c.h.b16 %v229
        %v554 = vunpack.c.l.b16 %v230
        %v555 = vunpack.c.h.b16 %v230
        %v556 = vunpack.c.l.b16 %v231
        %v557 = vunpack.c.h.b16 %v231
        %v558 = vunpack.c.l.b16 %v232
        %v559 = vunpack.c.h.b16 %v232
        %v560 = vunpack.c.l.b16 %v233
        %v561 = vunpack.c.h.b16 %v233
        %v562 = vunpack.c.l.b16 %v234
        %v563 = vunpack.c.h.b16 %v234
        %v564 = vunpack.c.l.b16 %v235
        %v565 = vunpack.c.h.b16 %v235
        %v566 = vunpack.c.l.b16 %v236
        %v567 = vunpack.c.h.b16 %v236
        %v568 = vunpack.c.l.b16 %v237
        %v569 = vunpack.c.h.b16 %v237
        %v570 = vunpack.c.l.b16 %v238
        %v571 = vunpack.c.h.b16 %v238
        %v572 = vunpack.c.l.b16 %v239
        %v573 = vunpack.c.h.b16 %v239
        %v574 = vunpack.c.l.b16 %v240
        %v575 = vunpack.c.h.b16 %v240
        %v576 = vunpack.c.l.b16 %v241
        %v577 = vunpack.c.h.b16 %v241
        %v578 = vunpack.c.l.b16 %v242
        %v579 = vunpack.c.h.b16 %v242
        %v580 = vunpack.c.l.b16 %v243
        %v581 = vunpack.c.h.b16 %v243
        %v582 = vunpack.c.l.b16 %v244
        %v583 = vunpack.c.h.b16 %v244
        %v584 = vunpack.c.l.b16 %v245
        %v585 = vunpack.c.h.b16 %v245
        %v586 = vunpack.c.l.b16 %v246
        %v587 = vunpack.c.h.b16 %v246
        %v588 = vunpack.c.l.b16 %v247
        %v589 = vunpack.c.h.b16 %v247
        %v590 = vunpack.c.l.b16 %v248
        %v591 = vunpack.c.h.b16 %v248
        %v592 = vunpack.c.l.b16 %v249
        %v593 = vunpack.c.h.b16 %v249
        %v594 = vunpack.c.l.b16 %v250
        %v595 = vunpack.c.h.b16 %v250
        %v596 = vunpack.c.l.b16 %v251
        %v597 = vunpack.c.h.b16 %v251
        %v598 = vunpack.c.l.b16 %v252
        %v599 = vunpack.c.h.b16 %v252
        %v600 = vunpack.c.l.b16 %v253
        %v601 = vunpack.c.h.b16 %v253
        %v602 = vunpack.c.l.b16 %v254
        %v603 = vunpack.c.h.b16 %v254
        %v604 = vunpack.c.l.b16 %v255
        %v605 = vunpack.c.h.b16 %v255
        %v606 = vunpack.c.l.b16 %v256
        %v607 = vunpack.c.h.b16 %v256
        %v608 = vunpack.c.l.b16 %v257
        %v609 = vunpack.c.h.b16 %v257
        %v610 = vunpack.c.l.b16 %v258
        %v611 = vunpack.c.h.b16 %v258
        %v612 = vunpack.c.l.b16 %v259
        %v613 = vunpack.c.h.b16 %v259
        %v614 = vunpack.c.l.b16 %v260
        %v615 = vunpack.c.h.b16 %v260
        %v616 = vunpack.c.l.b16 %v261
        %v617 = vunpack.c.h.b16 %v261
        %v618 = vunpack.c.l.b16 %v262
        %v619 = vunpack.c.h.b16 %v262
        %v620 = vunpack.c.l.b16 %v263
        %v621 = vunpack.c.h.b16 %v263
        %v622 = vunpack.c.l.b16 %v264
        %v623 = vunpack.c.h.b16 %v264
        %v624 = vunpack.c.l.b16 %v265
        %v625 = vunpack.c.h.b16 %v265
        %v626 = vunpack.c.l.b16 %v266
        %v627 = vunpack.c.h.b16 %v266
        %v628 = vunpack.c.l.b16 %v267
        %v629 = vunpack.c.h.b16 %v267
        %v630 = vunpack.c.l.b16 %v268
        %v631 = vunpack.c.h.b16 %v268
        %v632 = vunpack.c.l.b16 %v269
        %v633 = vunpack.c.h.b16 %v269
        %v634 = vunpack.c.l.b16 %v270
        %v635 = vunpack.c.h.b16 %v270
        %v636 = vunpack.c.l.b16 %v271
        %v637 = vunpack.c.h.b16 %v271
        %v638 = vunpack.c.l.b16 %v272
        %v639 = vunpack.c.h.b16 %v272
        %v640 = vunpack.c.l.b16 %v273
        %v641 = vunpack.c.h.b16 %v273
        %v642 = vunpack.c.l.b16 %v274
        %v643 = vunpack.c.h.b16 %v274
        %v644 = vunpack.c.l.b16 %v275
        %v645 = vunpack.c.h.b16 %v275
        %v646 = vunpack.c.l.b16 %v276
        %v647 = vunpack.c.h.b16 %v276
        %v648 = vunpack.c.l.b16 %v277
        %v649 = vunpack.c.h.b16 %v277
        %v650 = vunpack.c.l.b16 %v278
        %v651 = vunpack.c.h.b16 %v278
        %v652 = vunpack.c.l.b16 %v279
        %v653 = vunpack.c.h.b16 %v279
        %v654 = vunpack.c.l.b16 %v280
        %v655 = vunpack.c.h.b16 %v280
        %v656 = vunpack.c.l.b16 %v281
        %v657 = vunpack.c.h.b16 %v281
        %v658 = vunpack.c.l.b16 %v282
        %v659 = vunpack.c.h.b16 %v282
        %v660 = vunpack.c.l.b16 %v283
        %v661 = vunpack.c.h.b16 %v283
        %v662 = vunpack.c.l.b16 %v284
        %v663 = vunpack.c.h.b16 %v284
        %v664 = vunpack.c.l.b16 %v285
        %v665 = vunpack.c.h.b16 %v285
        %v666 = vunpack.c.l.b16 %v286
        %v667 = vunpack.c.h.b16 %v286
        %v668 = vunpack.c.l.b16 %v287
        %v669 = vunpack.c.h.b16 %v287
        %v670 = vunpack.c.l.b16 %v288
        %v671 = vunpack.c.h.b16 %v288
        %v672 = vunpack.c.l.b16 %v289
        %v673 = vunpack.c.h.b16 %v289
        %v674 = vunpack.c.l.b16 %v290
        %v675 = vunpack.c.h.b16 %v290
        %v676 = vunpack.c.l.b16 %v291
        %v677 = vunpack.c.h.b16 %v291
        %v678 = vunpack.c.l.b16 %v292
        %v679 = vunpack.c.h.b16 %v292
        %v680 = vunpack.c.l.b16 %v293
        %v681 = vunpack.c.h.b16 %v293
        %v682 = vunpack.c.l.b16 %v294
        %v683 = vunpack.c.h.b16 %v294
        %v684 = vunpack.c.l.b16 %v295
        %v685 = vunpack.c.h.b16 %v295
        %v686 = vunpack.c.l.b16 %v296
        %v687 = vunpack.c.h.b16 %v296
        %v688 = vunpack.c.l.b16 %v297
        %v689 = vunpack.c.h.b16 %v297
        %v690 = vunpack.c.l.b16 %v298
        %v691 = vunpack.c.h.b16 %v298
        %v692 = vunpack.c.l.b16 %v299
        %v693 = vunpack.c.h.b16 %v299
        %v694 = vunpack.c.l.b16 %v300
        %v695 = vunpack.c.h.b16 %v300
        %v696 = vunpack.c.l.b16 %v301
        %v697 = vunpack.c.h.b16 %v301
        %v698 = vunpack.c.l.b16 %v302
        %v699 = vunpack.c.h.b16 %v302
        %v700 = vunpack.c.l.b16 %v303
        %v701 = vunpack.c.h.b16 %v303
        %v702 = vunpack.c.l.b16 %v304
        %v703 = vunpack.c.h.b16 %v304
        %v704 = vunpack.c.l.b16 %v305
        %v705 = vunpack.c.h.b16 %v305
        %v706 = vunpack.c.l.b16 %v306
        %v707 = vunpack.c.h.b16 %v306
        %v708 = vunpack.c.l.b16 %v307
        %v709 = vunpack.c.h.b16 %v307
        %v710 = vunpack.c.l.b16 %v308
        %v711 = vunpack.c.h.b16 %v308
        %v712 = vunpack.c.l.b16 %v309
        %v713 = vunpack.c.h.b16 %v309
        %v714 = vunpack.c.l.b16 %v310
        %v715 = vunpack.c.h.b16 %v310
        %v716 = vunpack.c.l.b16 %v311
        %v717 = vunpack.c.h.b16 %v311
        %v718 = vunpack.c.l.b16 %v312
        %v719 = vunpack.c.h.b16 %v312
        %v720 = vunpack.c.l.b16 %v313
        %v721 = vunpack.c.h.b16 %v313
        %v722 = vunpack.c.l.b16 %v314
        %v723 = vunpack.c.h.b16 %v314
        %v724 = vunpack.c.l.b16 %v315
        %v725 = vunpack.c.h.b16 %v315
        %v726 = vunpack.c.l.b16 %v316
        %v727 = vunpack.c.h.b16 %v316
        %v728 = vunpack.c.l.b16 %v317
        %v729 = vunpack.c.h.b16 %v317
        %v730 = vunpack.c.l.b16 %v318
        %v731 = vunpack.c.h.b16 %v318
        %v732 = vunpack.c.l.b16 %v319
        %v733 = vunpack.c.h.b16 %v319
        %v734 = vunpack.c.l.b16 %v320
        %v735 = vunpack.c.h.b16 %v320
        %v736 = vunpack.c.l.b16 %v321
        %v737 = vunpack.c.h.b16 %v321
        %v738 = vunpack.c.l.b16 %v322
        %v739 = vunpack.c.h.b16 %v322
        %v740 = vunpack.c.l.b16 %v323
        %v741 = vunpack.c.h.b16 %v323
        %v742 = vunpack.c.l.b16 %v324
        %v743 = vunpack.c.h.b16 %v324
        %v744 = vunpack.c.l.b16 %v325
        %v745 = vunpack.c.h.b16 %v325
        %v746 = vunpack.c.l.b16 %v326
        %v747 = vunpack.c.h.b16 %v326
        %v748 = vunpack.c.l.b16 %v327
        %v749 = vunpack.c.h.b16 %v327
        %v750 = vunpack.c.l.b16 %v328
        %v751 = vunpack.c.h.b16 %v328
        %v752 = vpack.c.b16 %v498, %v496
        %v753 = vpack.c.b16 %v499, %v497
        %v754 = vpack.c.b16 %v502, %v500
        %v755 = vpack.c.b16 %v503, %v501
        %v756 = vpack.c.b16 %v506, %v504
        %v757 = vpack.c.b16 %v507, %v505
        %v758 = vpack.c.b16 %v510, %v508
        %v759 = vpack.c.b16 %v511, %v509
        %v760 = vpack.c.b16 %v514, %v512
        %v761 = vpack.c.b16 %v515, %v513
        %v762 = vpack.c.b16 %v518, %v516
        %v763 = vpack.c.b16 %v519, %v517
        %v764 = vpack.c.b16 %v522, %v520
        %v765 = vpack.c.b16 %v523, %v521
        %v766 = vpack.c.b16 %v526, %v524
        %v767 = vpack.c.b16 %v527, %v525
        %v768 = vpack.c.b16 %v530, %v528
        %v769 = vpack.c.b16 %v531, %v529
        %v770 = vpack.c.b16 %v534, %v532
        %v771 = vpack.c.b16 %v535, %v533
        %v772 = vpack.c.b16 %v538, %v536
        %v773 = vpack.c.b16 %v539, %v537
        %v774 = vpack.c.b16 %v542, %v540
        %v775 = vpack.c.b16 %v543, %v541
        %v776 = vpack.c.b16 %v546, %v544
        %v777 = vpack.c.b16 %v547, %v545
        %v778 = vpack.c.b16 %v550, %v548
        %v779 = vpack.c.b16 %v551, %v549
        %v780 = vpack.c.b16 %v554, %v552
        %v781 = vpack.c.b16 %v555, %v553
        %v782 = vpack.c.b16 %v558, %v556
        %v783 = vpack.c.b16 %v559, %v557
        %v784 = vpack.c.b16 %v562, %v560
        %v785 = vpack.c.b16 %v563, %v561
        %v786 = vpack.c.b16 %v566, %v564
        %v787 = vpack.c.b16 %v567, %v565
        %v788 = vpack.c.b16 %v570, %v568
        %v789 = vpack.c.b16 %v571, %v569
        %v790 = vpack.c.b16 %v574, %v572
        %v791 = vpack.c.b16 %v575, %v573
        %v792 = vpack.c.b16 %v578, %v576
        %v793 = vpack.c.b16 %v579, %v577
        %v794 = vpack.c.b16 %v582, %v580
        %v795 = vpack.c.b16 %v583, %v581
        %v796 = vpack.c.b16 %v586, %v584
        %v797 = vpack.c.b16 %v587, %v585
        %v798 = vpack.c.b16 %v590, %v588
        %v799 = vpack.c.b16 %v591, %v589
        %v800 = vpack.c.b16 %v594, %v592
        %v801 = vpack.c.b16 %v595, %v593
        %v802 = vpack.c.b16 %v598, %v596
        %v803 = vpack.c.b16 %v599, %v597
        %v804 = vpack.c.b16 %v602, %v600
        %v805 = vpack.c.b16 %v603, %v601
        %v806 = vpack.c.b16 %v606, %v604
        %v807 = vpack.c.b16 %v607, %v605
        %v808 = vpack.c.b16 %v610, %v608
        %v809 = vpack.c.b16 %v611, %v609
        %v810 = vpack.c.b16 %v614, %v612
        %v811 = vpack.c.b16 %v615, %v613
        %v812 = vpack.c.b16 %v618, %v616
        %v813 = vpack.c.b16 %v619, %v617
        %v814 = vpack.c.b16 %v622, %v620
        %v815 = vpack.c.b16 %v623, %v621
        %v816 = vpack.c.b16 %v626, %v624
        %v817 = vpack.c.b16 %v627, %v625
        %v818 = vpack.c.b16 %v630, %v628
        %v819 = vpack.c.b16 %v631, %v629
        %v820 = vpack.c.b16 %v634, %v632
        %v821 = vpack.c.b16 %v635, %v633
        %v822 = vpack.c.b16 %v638, %v636
        %v823 = vpack.c.b16 %v639, %v637
        %v824 = vpack.c.b16 %v642, %v640
        %v825 = vpack.c.b16 %v643, %v641
        %v826 = vpack.c.b16 %v646, %v644
        %v827 = vpack.c.b16 %v647, %v645
        %v828 = vpack.c.b16 %v650, %v648
        %v829 = vpack.c.b16 %v651, %v649
        %v830 = vpack.c.b16 %v654, %v652
        %v831 = vpack.c.b16 %v655, %v653
        %v832 = vpack.c.b16 %v658, %v656
        %v833 = vpack.c.b16 %v659, %v657
        %v834 = vpack.c.b16 %v662, %v660
        %v835 = vpack.c.b16 %v663, %v661
        %v836 = vpack.c.b16 %v666, %v664
        %v837 = vpack.c.b16 %v667, %v665
        %v838 = vpack.c.b16 %v670, %v668
        %v839 = vpack.c.b16 %v671, %v669
        %v840 = vpack.c.b16 %v674, %v672
        %v841 = vpack.c.b16 %v675, %v673
        %v842 = vpack.c.b16 %v678, %v676
        %v843 = vpack.c.b16 %v679, %v677
        %v844 = vpack.c.b16 %v682, %v680
        %v845 = vpack.c.b16 %v683, %v681
        %v846 = vpack.c.b16 %v686, %v684
        %v847 = vpack.c.b16 %v687, %v685
        %v848 = vpack.c.b16 %v690, %v688
        %v849 = vpack.c.b16 %v691, %v689
        %v850 = vpack.c.b16 %v694, %v692
        %v851 = vpack.c.b16 %v695, %v693
        %v852 = vpack.c.b16 %v698, %v696
        %v853 = vpack.c.b16 %v699, %v697
        %v854 = vpack.c.b16 %v702, %v700
        %v855 = vpack.c.b16 %v703, %v701
        %v856 = vpack.c.b16 %v706, %v704
        %v857 = vpack.c.b16 %v707, %v705
        %v858 = vpack.c.b16 %v710, %v708
        %v859 = vpack.c.b16 %v711, %v709
        %v860 = vpack.c.b16 %v714, %v712
        %v861 = vpack.c.b16 %v715, %v713
        %v862 = vpack.c.b16 %v718, %v716
        %v863 = vpack.c.b16 %v719, %v717
        %v864 = vpack.c.b16 %v722, %v720
        %v865 = vpack.c.b16 %v723, %v721
        %v866 = vpack.c.b16 %v726, %v724
        %v867 = vpack.c.b16 %v727, %v725
        %v868 = vpack.c.b16 %v730, %v728
        %v869 = vpack.c.b16 %v731, %v729
        %v870 = vpack.c.b16 %v734, %v732
        %v871 = vpack.c.b16 %v735, %v733
        %v872 = vpack.c.b16 %v738, %v736
        %v873 = vpack.c.b16 %v739, %v737
        %v874 = vpack.c.b16 %v742, %v740
        %v875 = vpack.c.b16 %v743, %v741
        %v876 = vpack.c.b16 %v746, %v744
        %v877 = vpack.c.b16 %v747, %v745
        %v878 = vpack.c.b16 %v750, %v748
        %v879 = vpack.c.b16 %v751, %v749
        %v1040 = vunpack.c.l.b16 %v329
        %v1041 = vunpack.c.l.b16 %v330
        %v1042 = vunpack.c.l.b16 %v331
        %v1043 = vunpack.c.l.b16 %v332
        %v1044 = vunpack.c.l.b16 %v333
        %v1045 = vunpack.c.l.b16 %v334
        %v1046 = vunpack.c.l.b16 %v335
        %v1047 = vunpack.c.l.b16 %v336
        %v1048 = vunpack.c.l.b16 %v337
        %v1049 = vunpack.c.l.b16 %v338
        %v1050 = vunpack.c.l.b16 %v339
        %v1051 = vunpack.c.l.b16 %v340
        %v1052 = vunpack.c.l.b16 %v341
        %v1053 = vunpack.c.l.b16 %v342
        %v1054 = vunpack.c.l.b16 %v343
        %v1055 = vunpack.c.l.b16 %v344
        %v1056 = vunpack.c.l.b16 %v345
        %v1057 = vunpack.c.l.b16 %v346
        %v1058 = vunpack.c.l.b16 %v347
        %v1059 = vunpack.c.l.b16 %v348
        %v1060 = vunpack.c.l.b16 %v349
        %v1061 = vunpack.c.l.b16 %v350
        %v1062 = vunpack.c.l.b16 %v351
        %v1063 = vunpack.c.l.b16 %v352
        %v1064 = vunpack.c.l.b16 %v353
        %v1065 = vunpack.c.l.b16 %v354
        %v1066 = vunpack.c.l.b16 %v355
        %v1067 = vunpack.c.l.b16 %v356
        %v1068 = vunpack.c.l.b16 %v357
        %v1069 = vunpack.c.l.b16 %v358
        %v1070 = vunpack.c.l.b16 %v359
        %v1071 = vunpack.c.l.b16 %v360
        %v1072 = vpack.c.b16 %v1041, %v1040
        %v1073 = vpack.c.b16 %v1043, %v1042
        %v1074 = vpack.c.b16 %v1045, %v1044
        %v1075 = vpack.c.b16 %v1047, %v1046
        %v1076 = vpack.c.b16 %v1049, %v1048
        %v1077 = vpack.c.b16 %v1051, %v1050
        %v1078 = vpack.c.b16 %v1053, %v1052
        %v1079 = vpack.c.b16 %v1055, %v1054
        %v1080 = vpack.c.b16 %v1057, %v1056
        %v1081 = vpack.c.b16 %v1059, %v1058
        %v1082 = vpack.c.b16 %v1061, %v1060
        %v1083 = vpack.c.b16 %v1063, %v1062
        %v1084 = vpack.c.b16 %v1065, %v1064
        %v1085 = vpack.c.b16 %v1067, %v1066
        %v1086 = vpack.c.b16 %v1069, %v1068
        %v1087 = vpack.c.b16 %v1071, %v1070
        %1104 = vmatprep.subr.bf16.mxu0 0
        %1105 = vmatpush1.bf16.msra.mxu0 %v1072
        %1106 = vmatprep.subr.bf16.mxu0 0
        %1107 = vmatpush1.bf16.msra.mxu0 %v1073
        %1108 = vmatprep.subr.bf16.mxu0 0
        %1109 = vmatpush1.bf16.msra.mxu0 %v1074
        %1110 = vmatprep.subr.bf16.mxu0 0
        %1111 = vmatpush1.bf16.msra.mxu0 %v1075
        %1112 = vmatprep.subr.bf16.mxu0 0
        %1113 = vmatpush1.bf16.msra.mxu0 %v1076
        %1114 = vmatprep.subr.bf16.mxu0 0
        %1115 = vmatpush1.bf16.msra.mxu0 %v1077
        %1116 = vmatprep.subr.bf16.mxu0 0
        %1117 = vmatpush1.bf16.msra.mxu0 %v1078
        %1118 = vmatprep.subr.bf16.mxu0 0
        %1119 = vmatpush1.bf16.msra.mxu0 %v1079
        %1120 = vmatprep.subr.bf16.mxu0 0
        %1121 = vmatpush1.bf16.msra.mxu0 %v1080
        %1122 = vmatprep.subr.bf16.mxu0 0
        %1123 = vmatpush1.bf16.msra.mxu0 %v1081
        %1124 = vmatprep.subr.bf16.mxu0 0
        %1125 = vmatpush1.bf16.msra.mxu0 %v1082
        %1126 = vmatprep.subr.bf16.mxu0 0
        %1127 = vmatpush1.bf16.msra.mxu0 %v1083
        %1128 = vmatprep.subr.bf16.mxu0 0
        %1129 = vmatpush1.bf16.msra.mxu0 %v1084
        %1130 = vmatprep.subr.bf16.mxu0 0
        %1131 = vmatpush1.bf16.msra.mxu0 %v1085
        %1132 = vmatprep.subr.bf16.mxu0 0
        %1133 = vmatpush1.bf16.msra.mxu0 %v1086
        %1134 = vmatprep.subr.bf16.mxu0 0
        %1135 = vmatpush1.bf16.msra.mxu0 %v1087
        %1136 = vmatprep.mubr.bf16.mxu0 %v753
        %1137 = vmatmul.mubr.bf16.gmra.mrb[0].mxu0 %v752
        %v1138 = vpop.f32.mrb[0].mxu0
        %v1139 = vadd.f32 %v366, %v1138
        %v1140 = vpop.f32.mrb[0].mxu0
        %v1141 = vpop.f32.mrb[0].mxu0
        %v1142 = vadd.f32 %v366, %v1141
        %v1143 = vpop.f32.mrb[0].mxu0
        %1144 = vmatprep.mubr.bf16.mxu0 %v755
        %1145 = vmatmul.mubr.bf16.gmra.mrb[0].mxu0 %v754
        %v1146 = vpop.f32.mrb[0].mxu0
        %v1147 = vadd.f32 %v366, %v1146
        %v1148 = vpop.f32.mrb[0].mxu0
        %v1149 = vpop.f32.mrb[0].mxu0
        %v1150 = vadd.f32 %v366, %v1149
        %v1151 = vpop.f32.mrb[0].mxu0
        %1152 = vmatprep.mubr.bf16.mxu0 %v757
        %1153 = vmatmul.mubr.bf16.gmra.mrb[0].mxu0 %v756
        %v1154 = vpop.f32.mrb[0].mxu0
        %v1155 = vadd.f32 %v366, %v1154
        %v1156 = vpop.f32.mrb[0].mxu0
        %v1157 = vpop.f32.mrb[0].mxu0
        %v1158 = vadd.f32 %v366, %v1157
        %v1159 = vpop.f32.mrb[0].mxu0
        %1160 = vmatprep.mubr.bf16.mxu0 %v759
        %1161 = vmatmul.mubr.bf16.gmra.mrb[0].mxu0 %v758
        %v1162 = vpop.f32.mrb[0].mxu0
        %v1163 = vadd.f32 %v366, %v1162
        %v1164 = vpop.f32.mrb[0].mxu0
        %v1165 = vpop.f32.mrb[0].mxu0
        %v1166 = vadd.f32 %v366, %v1165
        %v1167 = vpop.f32.mrb[0].mxu0
        %1168 = vmatprep.mubr.bf16.mxu0 %v761
        %1169 = vmatmul.mubr.bf16.gmra.mrb[0].mxu0 %v760
        %v1170 = vpop.f32.mrb[0].mxu0
        %v1171 = vadd.f32 %v366, %v1170
        %v1172 = vpop.f32.mrb[0].mxu0
        %v1173 = vpop.f32.mrb[0].mxu0
        %v1174 = vadd.f32 %v366, %v1173
        %v1175 = vpop.f32.mrb[0].mxu0
        %1176 = vmatprep.mubr.bf16.mxu0 %v763
        %1177 = vmatmul.mubr.bf16.gmra.mrb[0].mxu0 %v762
        %v1178 = vpop.f32.mrb[0].mxu0
        %v1179 = vadd.f32 %v366, %v1178
        %v1180 = vpop.f32.mrb[0].mxu0
        %v1181 = vpop.f32.mrb[0].mxu0
        %v1182 = vadd.f32 %v366, %v1181
        %v1183 = vpop.f32.mrb[0].mxu0
        %1184 = vmatprep.mubr.bf16.mxu0 %v765
        %1185 = vmatmul.mubr.bf16.gmra.mrb[0].mxu0 %v764
        %v1186 = vpop.f32.mrb[0].mxu0
        %v1187 = vadd.f32 %v366, %v1186
        %v1188 = vpop.f32.mrb[0].mxu0
        %v1189 = vpop.f32.mrb[0].mxu0
        %v1190 = vadd.f32 %v366, %v1189
        %v1191 = vpop.f32.mrb[0].mxu0
        %1192 = vmatprep.mubr.bf16.mxu0 %v767
        %1193 = vmatmul.mubr.bf16.gmra.mrb[0].mxu0 %v766
        %v1194 = vpop.f32.mrb[0].mxu0
        %v1195 = vadd.f32 %v366, %v1194
        %v1196 = vpop.f32.mrb[0].mxu0
        %v1197 = vpop.f32.mrb[0].mxu0
        %v1198 = vadd.f32 %v366, %v1197
        %v1199 = vpop.f32.mrb[0].mxu0
        %1200 = vmatprep.mubr.bf16.mxu0 %v769
        %1201 = vmatmul.mubr.bf16.gmra.mrb[0].mxu0 %v768
        %v1202 = vpop.f32.mrb[0].mxu0
        %v1203 = vadd.f32 %v366, %v1202
        %v1204 = vpop.f32.mrb[0].mxu0
        %v1205 = vpop.f32.mrb[0].mxu0
        %v1206 = vadd.f32 %v366, %v1205
        %v1207 = vpop.f32.mrb[0].mxu0
        %1208 = vmatprep.mubr.bf16.mxu0 %v771
        %1209 = vmatmul.mubr.bf16.gmra.mrb[0].mxu0 %v770
        %v1210 = vpop.f32.mrb[0].mxu0
        %v1211 = vadd.f32 %v366, %v1210
        %v1212 = vpop.f32.mrb[0].mxu0
        %v1213 = vpop.f32.mrb[0].mxu0
        %v1214 = vadd.f32 %v366, %v1213
        %v1215 = vpop.f32.mrb[0].mxu0
        %1216 = vmatprep.mubr.bf16.mxu0 %v773
        %1217 = vmatmul.mubr.bf16.gmra.mrb[0].mxu0 %v772
        %v1218 = vpop.f32.mrb[0].mxu0
        %v1219 = vadd.f32 %v366, %v1218
        %v1220 = vpop.f32.mrb[0].mxu0
        %v1221 = vpop.f32.mrb[0].mxu0
        %v1222 = vadd.f32 %v366, %v1221
        %v1223 = vpop.f32.mrb[0].mxu0
        %1224 = vmatprep.mubr.bf16.mxu0 %v775
        %1225 = vmatmul.mubr.bf16.gmra.mrb[0].mxu0 %v774
        %v1226 = vpop.f32.mrb[0].mxu0
        %v1227 = vadd.f32 %v366, %v1226
        %v1228 = vpop.f32.mrb[0].mxu0
        %v1229 = vpop.f32.mrb[0].mxu0
        %v1230 = vadd.f32 %v366, %v1229
        %v1231 = vpop.f32.mrb[0].mxu0
        %1232 = vmatprep.mubr.bf16.mxu0 %v777
        %1233 = vmatmul.mubr.bf16.gmra.mrb[0].mxu0 %v776
        %v1234 = vpop.f32.mrb[0].mxu0
        %v1235 = vadd.f32 %v366, %v1234
        %v1236 = vpop.f32.mrb[0].mxu0
        %v1237 = vpop.f32.mrb[0].mxu0
        %v1238 = vadd.f32 %v366, %v1237
        %v1239 = vpop.f32.mrb[0].mxu0
        %1240 = vmatprep.mubr.bf16.mxu0 %v779
        %1241 = vmatmul.mubr.bf16.gmra.mrb[0].mxu0 %v778
        %v1242 = vpop.f32.mrb[0].mxu0
        %v1243 = vadd.f32 %v366, %v1242
        %v1244 = vpop.f32.mrb[0].mxu0
        %v1245 = vpop.f32.mrb[0].mxu0
        %v1246 = vadd.f32 %v366, %v1245
        %v1247 = vpop.f32.mrb[0].mxu0
        %1248 = vmatprep.mubr.bf16.mxu0 %v781
        %1249 = vmatmul.mubr.bf16.gmra.mrb[0].mxu0 %v780
        %v1250 = vpop.f32.mrb[0].mxu0
        %v1251 = vadd.f32 %v366, %v1250
        %v1252 = vpop.f32.mrb[0].mxu0
        %v1253 = vpop.f32.mrb[0].mxu0
        %v1254 = vadd.f32 %v366, %v1253
        %v1255 = vpop.f32.mrb[0].mxu0
        %1256 = vmatprep.mubr.bf16.mxu0 %v783
        %1257 = vmatmul.mubr.bf16.gmra.mrb[0].mxu0 %v782
        %v1258 = vpop.f32.mrb[0].mxu0
        %v1259 = vadd.f32 %v366, %v1258
        %v1260 = vpop.f32.mrb[0].mxu0
        %v1261 = vpop.f32.mrb[0].mxu0
        %v1262 = vadd.f32 %v366, %v1261
        %v1263 = vpop.f32.mrb[0].mxu0
        %1264 = vmatprep.mubr.bf16.mxu0 %v785
        %1265 = vmatmul.mubr.bf16.gmra.mrb[0].mxu0 %v784
        %v1266 = vpop.f32.mrb[0].mxu0
        %v1267 = vadd.f32 %v366, %v1266
        %v1268 = vpop.f32.mrb[0].mxu0
        %v1269 = vpop.f32.mrb[0].mxu0
        %v1270 = vadd.f32 %v366, %v1269
        %v1271 = vpop.f32.mrb[0].mxu0
        %1272 = vmatprep.mubr.bf16.mxu0 %v787
        %1273 = vmatmul.mubr.bf16.gmra.mrb[0].mxu0 %v786
        %v1274 = vpop.f32.mrb[0].mxu0
        %v1275 = vadd.f32 %v366, %v1274
        %v1276 = vpop.f32.mrb[0].mxu0
        %v1277 = vpop.f32.mrb[0].mxu0
        %v1278 = vadd.f32 %v366, %v1277
        %v1279 = vpop.f32.mrb[0].mxu0
        %1280 = vmatprep.mubr.bf16.mxu0 %v789
        %1281 = vmatmul.mubr.bf16.gmra.mrb[0].mxu0 %v788
        %v1282 = vpop.f32.mrb[0].mxu0
        %v1283 = vadd.f32 %v366, %v1282
        %v1284 = vpop.f32.mrb[0].mxu0
        %v1285 = vpop.f32.mrb[0].mxu0
        %v1286 = vadd.f32 %v366, %v1285
        %v1287 = vpop.f32.mrb[0].mxu0
        %1288 = vmatprep.mubr.bf16.mxu0 %v791
        %1289 = vmatmul.mubr.bf16.gmra.mrb[0].mxu0 %v790
        %v1290 = vpop.f32.mrb[0].mxu0
        %v1291 = vadd.f32 %v366, %v1290
        %v1292 = vpop.f32.mrb[0].mxu0
        %v1293 = vpop.f32.mrb[0].mxu0
        %v1294 = vadd.f32 %v366, %v1293
        %v1295 = vpop.f32.mrb[0].mxu0
        %1296 = vmatprep.mubr.bf16.mxu0 %v793
        %1297 = vmatmul.mubr.bf16.gmra.mrb[0].mxu0 %v792
        %v1298 = vpop.f32.mrb[0].mxu0
        %v1299 = vadd.f32 %v366, %v1298
        %v1300 = vpop.f32.mrb[0].mxu0
        %v1301 = vpop.f32.mrb[0].mxu0
        %v1302 = vadd.f32 %v366, %v1301
        %v1303 = vpop.f32.mrb[0].mxu0
        %1304 = vmatprep.mubr.bf16.mxu0 %v795
        %1305 = vmatmul.mubr.bf16.gmra.mrb[0].mxu0 %v794
        %v1306 = vpop.f32.mrb[0].mxu0
        %v1307 = vadd.f32 %v366, %v1306
        %v1308 = vpop.f32.mrb[0].mxu0
        %v1309 = vpop.f32.mrb[0].mxu0
        %v1310 = vadd.f32 %v366, %v1309
        %v1311 = vpop.f32.mrb[0].mxu0
        %1312 = vmatprep.mubr.bf16.mxu0 %v797
        %1313 = vmatmul.mubr.bf16.gmra.mrb[0].mxu0 %v796
        %v1314 = vpop.f32.mrb[0].mxu0
        %v1315 = vadd.f32 %v366, %v1314
        %v1316 = vpop.f32.mrb[0].mxu0
        %v1317 = vpop.f32.mrb[0].mxu0
        %v1318 = vadd.f32 %v366, %v1317
        %v1319 = vpop.f32.mrb[0].mxu0
        %1320 = vmatprep.mubr.bf16.mxu0 %v799
        %1321 = vmatmul.mubr.bf16.gmra.mrb[0].mxu0 %v798
        %v1322 = vpop.f32.mrb[0].mxu0
        %v1323 = vadd.f32 %v366, %v1322
        %v1324 = vpop.f32.mrb[0].mxu0
        %v1325 = vpop.f32.mrb[0].mxu0
        %v1326 = vadd.f32 %v366, %v1325
        %v1327 = vpop.f32.mrb[0].mxu0
        %1328 = vmatprep.mubr.bf16.mxu0 %v801
        %1329 = vmatmul.mubr.bf16.gmra.mrb[0].mxu0 %v800
        %v1330 = vpop.f32.mrb[0].mxu0
        %v1331 = vadd.f32 %v366, %v1330
        %v1332 = vpop.f32.mrb[0].mxu0
        %v1333 = vpop.f32.mrb[0].mxu0
        %v1334 = vadd.f32 %v366, %v1333
        %v1335 = vpop.f32.mrb[0].mxu0
        %1336 = vmatprep.mubr.bf16.mxu0 %v803
        %1337 = vmatmul.mubr.bf16.gmra.mrb[0].mxu0 %v802
        %v1338 = vpop.f32.mrb[0].mxu0
        %v1339 = vadd.f32 %v366, %v1338
        %v1340 = vpop.f32.mrb[0].mxu0
        %v1341 = vpop.f32.mrb[0].mxu0
        %v1342 = vadd.f32 %v366, %v1341
        %v1343 = vpop.f32.mrb[0].mxu0
        %1344 = vmatprep.mubr.bf16.mxu0 %v805
        %1345 = vmatmul.mubr.bf16.gmra.mrb[0].mxu0 %v804
        %v1346 = vpop.f32.mrb[0].mxu0
        %v1347 = vadd.f32 %v366, %v1346
        %v1348 = vpop.f32.mrb[0].mxu0
        %v1349 = vpop.f32.mrb[0].mxu0
        %v1350 = vadd.f32 %v366, %v1349
        %v1351 = vpop.f32.mrb[0].mxu0
        %1352 = vmatprep.mubr.bf16.mxu0 %v807
        %1353 = vmatmul.mubr.bf16.gmra.mrb[0].mxu0 %v806
        %v1354 = vpop.f32.mrb[0].mxu0
        %v1355 = vadd.f32 %v366, %v1354
        %v1356 = vpop.f32.mrb[0].mxu0
        %v1357 = vpop.f32.mrb[0].mxu0
        %v1358 = vadd.f32 %v366, %v1357
        %v1359 = vpop.f32.mrb[0].mxu0
        %1360 = vmatprep.mubr.bf16.mxu0 %v809
        %1361 = vmatmul.mubr.bf16.gmra.mrb[0].mxu0 %v808
        %v1362 = vpop.f32.mrb[0].mxu0
        %v1363 = vadd.f32 %v366, %v1362
        %v1364 = vpop.f32.mrb[0].mxu0
        %v1365 = vpop.f32.mrb[0].mxu0
        %v1366 = vadd.f32 %v366, %v1365
        %v1367 = vpop.f32.mrb[0].mxu0
        %1368 = vmatprep.mubr.bf16.mxu0 %v811
        %1369 = vmatmul.mubr.bf16.gmra.mrb[0].mxu0 %v810
        %v1370 = vpop.f32.mrb[0].mxu0
        %v1371 = vadd.f32 %v366, %v1370
        %v1372 = vpop.f32.mrb[0].mxu0
        %v1373 = vpop.f32.mrb[0].mxu0
        %v1374 = vadd.f32 %v366, %v1373
        %v1375 = vpop.f32.mrb[0].mxu0
        %1376 = vmatprep.mubr.bf16.mxu0 %v813
        %1377 = vmatmul.mubr.bf16.gmra.mrb[0].mxu0 %v812
        %v1378 = vpop.f32.mrb[0].mxu0
        %v1379 = vadd.f32 %v366, %v1378
        %v1380 = vpop.f32.mrb[0].mxu0
        %v1381 = vpop.f32.mrb[0].mxu0
        %v1382 = vadd.f32 %v366, %v1381
        %v1383 = vpop.f32.mrb[0].mxu0
        %1384 = vmatprep.mubr.bf16.mxu0 %v815
        %1385 = vmatmul.mubr.bf16.gmra.mrb[0].mxu0 %v814
        %v1386 = vpop.f32.mrb[0].mxu0
        %v1387 = vadd.f32 %v366, %v1386
        %v1388 = vpop.f32.mrb[0].mxu0
        %v1389 = vpop.f32.mrb[0].mxu0
        %v1390 = vadd.f32 %v366, %v1389
        %v1391 = vpop.f32.mrb[0].mxu0
        %1392 = vmatprep.mubr.bf16.mxu0 %v817
        %1393 = vmatmul.mubr.bf16.gmra.mrb[0].mxu0 %v816
        %v1394 = vpop.f32.mrb[0].mxu0
        %v1395 = vadd.f32 %v366, %v1394
        %v1396 = vpop.f32.mrb[0].mxu0
        %v1397 = vpop.f32.mrb[0].mxu0
        %v1398 = vadd.f32 %v366, %v1397
        %v1399 = vpop.f32.mrb[0].mxu0
        %1400 = vmatprep.mubr.bf16.mxu0 %v819
        %1401 = vmatmul.mubr.bf16.gmra.mrb[0].mxu0 %v818
        %v1402 = vpop.f32.mrb[0].mxu0
        %v1403 = vadd.f32 %v366, %v1402
        %v1404 = vpop.f32.mrb[0].mxu0
        %v1405 = vpop.f32.mrb[0].mxu0
        %v1406 = vadd.f32 %v366, %v1405
        %v1407 = vpop.f32.mrb[0].mxu0
        %1408 = vmatprep.mubr.bf16.mxu0 %v821
        %1409 = vmatmul.mubr.bf16.gmra.mrb[0].mxu0 %v820
        %v1410 = vpop.f32.mrb[0].mxu0
        %v1411 = vadd.f32 %v366, %v1410
        %v1412 = vpop.f32.mrb[0].mxu0
        %v1413 = vpop.f32.mrb[0].mxu0
        %v1414 = vadd.f32 %v366, %v1413
        %v1415 = vpop.f32.mrb[0].mxu0
        %1416 = vmatprep.mubr.bf16.mxu0 %v823
        %1417 = vmatmul.mubr.bf16.gmra.mrb[0].mxu0 %v822
        %v1418 = vpop.f32.mrb[0].mxu0
        %v1419 = vadd.f32 %v366, %v1418
        %v1420 = vpop.f32.mrb[0].mxu0
        %v1421 = vpop.f32.mrb[0].mxu0
        %v1422 = vadd.f32 %v366, %v1421
        %v1423 = vpop.f32.mrb[0].mxu0
        %1424 = vmatprep.mubr.bf16.mxu0 %v825
        %1425 = vmatmul.mubr.bf16.gmra.mrb[0].mxu0 %v824
        %v1426 = vpop.f32.mrb[0].mxu0
        %v1427 = vadd.f32 %v366, %v1426
        %v1428 = vpop.f32.mrb[0].mxu0
        %v1429 = vpop.f32.mrb[0].mxu0
        %v1430 = vadd.f32 %v366, %v1429
        %v1431 = vpop.f32.mrb[0].mxu0
        %1432 = vmatprep.mubr.bf16.mxu0 %v827
        %1433 = vmatmul.mubr.bf16.gmra.mrb[0].mxu0 %v826
        %v1434 = vpop.f32.mrb[0].mxu0
        %v1435 = vadd.f32 %v366, %v1434
        %v1436 = vpop.f32.mrb[0].mxu0
        %v1437 = vpop.f32.mrb[0].mxu0
        %v1438 = vadd.f32 %v366, %v1437
        %v1439 = vpop.f32.mrb[0].mxu0
        %1440 = vmatprep.mubr.bf16.mxu0 %v829
        %1441 = vmatmul.mubr.bf16.gmra.mrb[0].mxu0 %v828
        %v1442 = vpop.f32.mrb[0].mxu0
        %v1443 = vadd.f32 %v366, %v1442
        %v1444 = vpop.f32.mrb[0].mxu0
        %v1445 = vpop.f32.mrb[0].mxu0
        %v1446 = vadd.f32 %v366, %v1445
        %v1447 = vpop.f32.mrb[0].mxu0
        %1448 = vmatprep.mubr.bf16.mxu0 %v831
        %1449 = vmatmul.mubr.bf16.gmra.mrb[0].mxu0 %v830
        %v1450 = vpop.f32.mrb[0].mxu0
        %v1451 = vadd.f32 %v366, %v1450
        %v1452 = vpop.f32.mrb[0].mxu0
        %v1453 = vpop.f32.mrb[0].mxu0
        %v1454 = vadd.f32 %v366, %v1453
        %v1455 = vpop.f32.mrb[0].mxu0
        %1456 = vmatprep.mubr.bf16.mxu0 %v833
        %1457 = vmatmul.mubr.bf16.gmra.mrb[0].mxu0 %v832
        %v1458 = vpop.f32.mrb[0].mxu0
        %v1459 = vadd.f32 %v366, %v1458
        %v1460 = vpop.f32.mrb[0].mxu0
        %v1461 = vpop.f32.mrb[0].mxu0
        %v1462 = vadd.f32 %v366, %v1461
        %v1463 = vpop.f32.mrb[0].mxu0
        %1464 = vmatprep.mubr.bf16.mxu0 %v835
        %1465 = vmatmul.mubr.bf16.gmra.mrb[0].mxu0 %v834
        %v1466 = vpop.f32.mrb[0].mxu0
        %v1467 = vadd.f32 %v366, %v1466
        %v1468 = vpop.f32.mrb[0].mxu0
        %v1469 = vpop.f32.mrb[0].mxu0
        %v1470 = vadd.f32 %v366, %v1469
        %v1471 = vpop.f32.mrb[0].mxu0
        %1472 = vmatprep.mubr.bf16.mxu0 %v837
        %1473 = vmatmul.mubr.bf16.gmra.mrb[0].mxu0 %v836
        %v1474 = vpop.f32.mrb[0].mxu0
        %v1475 = vadd.f32 %v366, %v1474
        %v1476 = vpop.f32.mrb[0].mxu0
        %v1477 = vpop.f32.mrb[0].mxu0
        %v1478 = vadd.f32 %v366, %v1477
        %v1479 = vpop.f32.mrb[0].mxu0
        %1480 = vmatprep.mubr.bf16.mxu0 %v839
        %1481 = vmatmul.mubr.bf16.gmra.mrb[0].mxu0 %v838
        %v1482 = vpop.f32.mrb[0].mxu0
        %v1483 = vadd.f32 %v366, %v1482
        %v1484 = vpop.f32.mrb[0].mxu0
        %v1485 = vpop.f32.mrb[0].mxu0
        %v1486 = vadd.f32 %v366, %v1485
        %v1487 = vpop.f32.mrb[0].mxu0
        %1488 = vmatprep.mubr.bf16.mxu0 %v841
        %1489 = vmatmul.mubr.bf16.gmra.mrb[0].mxu0 %v840
        %v1490 = vpop.f32.mrb[0].mxu0
        %v1491 = vadd.f32 %v366, %v1490
        %v1492 = vpop.f32.mrb[0].mxu0
        %v1493 = vpop.f32.mrb[0].mxu0
        %v1494 = vadd.f32 %v366, %v1493
        %v1495 = vpop.f32.mrb[0].mxu0
        %1496 = vmatprep.mubr.bf16.mxu0 %v843
        %1497 = vmatmul.mubr.bf16.gmra.mrb[0].mxu0 %v842
        %v1498 = vpop.f32.mrb[0].mxu0
        %v1499 = vadd.f32 %v366, %v1498
        %v1500 = vpop.f32.mrb[0].mxu0
        %v1501 = vpop.f32.mrb[0].mxu0
        %v1502 = vadd.f32 %v366, %v1501
        %v1503 = vpop.f32.mrb[0].mxu0
        %1504 = vmatprep.mubr.bf16.mxu0 %v845
        %1505 = vmatmul.mubr.bf16.gmra.mrb[0].mxu0 %v844
        %v1506 = vpop.f32.mrb[0].mxu0
        %v1507 = vadd.f32 %v366, %v1506
        %v1508 = vpop.f32.mrb[0].mxu0
        %v1509 = vpop.f32.mrb[0].mxu0
        %v1510 = vadd.f32 %v366, %v1509
        %v1511 = vpop.f32.mrb[0].mxu0
        %1512 = vmatprep.mubr.bf16.mxu0 %v847
        %1513 = vmatmul.mubr.bf16.gmra.mrb[0].mxu0 %v846
        %v1514 = vpop.f32.mrb[0].mxu0
        %v1515 = vadd.f32 %v366, %v1514
        %v1516 = vpop.f32.mrb[0].mxu0
        %v1517 = vpop.f32.mrb[0].mxu0
        %v1518 = vadd.f32 %v366, %v1517
        %v1519 = vpop.f32.mrb[0].mxu0
        %1520 = vmatprep.mubr.bf16.mxu0 %v849
        %1521 = vmatmul.mubr.bf16.gmra.mrb[0].mxu0 %v848
        %v1522 = vpop.f32.mrb[0].mxu0
        %v1523 = vadd.f32 %v366, %v1522
        %v1524 = vpop.f32.mrb[0].mxu0
        %v1525 = vpop.f32.mrb[0].mxu0
        %v1526 = vadd.f32 %v366, %v1525
        %v1527 = vpop.f32.mrb[0].mxu0
        %1528 = vmatprep.mubr.bf16.mxu0 %v851
        %1529 = vmatmul.mubr.bf16.gmra.mrb[0].mxu0 %v850
        %v1530 = vpop.f32.mrb[0].mxu0
        %v1531 = vadd.f32 %v366, %v1530
        %v1532 = vpop.f32.mrb[0].mxu0
        %v1533 = vpop.f32.mrb[0].mxu0
        %v1534 = vadd.f32 %v366, %v1533
        %v1535 = vpop.f32.mrb[0].mxu0
        %1536 = vmatprep.mubr.bf16.mxu0 %v853
        %1537 = vmatmul.mubr.bf16.gmra.mrb[0].mxu0 %v852
        %v1538 = vpop.f32.mrb[0].mxu0
        %v1539 = vadd.f32 %v366, %v1538
        %v1540 = vpop.f32.mrb[0].mxu0
        %v1541 = vpop.f32.mrb[0].mxu0
        %v1542 = vadd.f32 %v366, %v1541
        %v1543 = vpop.f32.mrb[0].mxu0
        %1544 = vmatprep.mubr.bf16.mxu0 %v855
        %1545 = vmatmul.mubr.bf16.gmra.mrb[0].mxu0 %v854
        %v1546 = vpop.f32.mrb[0].mxu0
        %v1547 = vadd.f32 %v366, %v1546
        %v1548 = vpop.f32.mrb[0].mxu0
        %v1549 = vpop.f32.mrb[0].mxu0
        %v1550 = vadd.f32 %v366, %v1549
        %v1551 = vpop.f32.mrb[0].mxu0
        %1552 = vmatprep.mubr.bf16.mxu0 %v857
        %1553 = vmatmul.mubr.bf16.gmra.mrb[0].mxu0 %v856
        %v1554 = vpop.f32.mrb[0].mxu0
        %v1555 = vadd.f32 %v366, %v1554
        %v1556 = vpop.f32.mrb[0].mxu0
        %v1557 = vpop.f32.mrb[0].mxu0
        %v1558 = vadd.f32 %v366, %v1557
        %v1559 = vpop.f32.mrb[0].mxu0
        %1560 = vmatprep.mubr.bf16.mxu0 %v859
        %1561 = vmatmul.mubr.bf16.gmra.mrb[0].mxu0 %v858
        %v1562 = vpop.f32.mrb[0].mxu0
        %v1563 = vadd.f32 %v366, %v1562
        %v1564 = vpop.f32.mrb[0].mxu0
        %v1565 = vpop.f32.mrb[0].mxu0
        %v1566 = vadd.f32 %v366, %v1565
        %v1567 = vpop.f32.mrb[0].mxu0
        %1568 = vmatprep.mubr.bf16.mxu0 %v861
        %1569 = vmatmul.mubr.bf16.gmra.mrb[0].mxu0 %v860
        %v1570 = vpop.f32.mrb[0].mxu0
        %v1571 = vadd.f32 %v366, %v1570
        %v1572 = vpop.f32.mrb[0].mxu0
        %v1573 = vpop.f32.mrb[0].mxu0
        %v1574 = vadd.f32 %v366, %v1573
        %v1575 = vpop.f32.mrb[0].mxu0
        %1576 = vmatprep.mubr.bf16.mxu0 %v863
        %1577 = vmatmul.mubr.bf16.gmra.mrb[0].mxu0 %v862
        %v1578 = vpop.f32.mrb[0].mxu0
        %v1579 = vadd.f32 %v366, %v1578
        %v1580 = vpop.f32.mrb[0].mxu0
        %v1581 = vpop.f32.mrb[0].mxu0
        %v1582 = vadd.f32 %v366, %v1581
        %v1583 = vpop.f32.mrb[0].mxu0
        %1584 = vmatprep.mubr.bf16.mxu0 %v865
        %1585 = vmatmul.mubr.bf16.gmra.mrb[0].mxu0 %v864
        %v1586 = vpop.f32.mrb[0].mxu0
        %v1587 = vadd.f32 %v366, %v1586
        %v1588 = vpop.f32.mrb[0].mxu0
        %v1589 = vpop.f32.mrb[0].mxu0
        %v1590 = vadd.f32 %v366, %v1589
        %v1591 = vpop.f32.mrb[0].mxu0
        %1592 = vmatprep.mubr.bf16.mxu0 %v867
        %1593 = vmatmul.mubr.bf16.gmra.mrb[0].mxu0 %v866
        %v1594 = vpop.f32.mrb[0].mxu0
        %v1595 = vadd.f32 %v366, %v1594
        %v1596 = vpop.f32.mrb[0].mxu0
        %v1597 = vpop.f32.mrb[0].mxu0
        %v1598 = vadd.f32 %v366, %v1597
        %v1599 = vpop.f32.mrb[0].mxu0
        %1600 = vmatprep.mubr.bf16.mxu0 %v869
        %1601 = vmatmul.mubr.bf16.gmra.mrb[0].mxu0 %v868
        %v1602 = vpop.f32.mrb[0].mxu0
        %v1603 = vadd.f32 %v366, %v1602
        %v1604 = vpop.f32.mrb[0].mxu0
        %v1605 = vpop.f32.mrb[0].mxu0
        %v1606 = vadd.f32 %v366, %v1605
        %v1607 = vpop.f32.mrb[0].mxu0
        %1608 = vmatprep.mubr.bf16.mxu0 %v871
        %1609 = vmatmul.mubr.bf16.gmra.mrb[0].mxu0 %v870
        %v1610 = vpop.f32.mrb[0].mxu0
        %v1611 = vadd.f32 %v366, %v1610
        %v1612 = vpop.f32.mrb[0].mxu0
        %v1613 = vpop.f32.mrb[0].mxu0
        %v1614 = vadd.f32 %v366, %v1613
        %v1615 = vpop.f32.mrb[0].mxu0
        %1616 = vmatprep.mubr.bf16.mxu0 %v873
        %1617 = vmatmul.mubr.bf16.gmra.mrb[0].mxu0 %v872
        %v1618 = vpop.f32.mrb[0].mxu0
        %v1619 = vadd.f32 %v366, %v1618
        %v1620 = vpop.f32.mrb[0].mxu0
        %v1621 = vpop.f32.mrb[0].mxu0
        %v1622 = vadd.f32 %v366, %v1621
        %v1623 = vpop.f32.mrb[0].mxu0
        %1624 = vmatprep.mubr.bf16.mxu0 %v875
        %1625 = vmatmul.mubr.bf16.gmra.mrb[0].mxu0 %v874
        %v1626 = vpop.f32.mrb[0].mxu0
        %v1627 = vadd.f32 %v366, %v1626
        %v1628 = vpop.f32.mrb[0].mxu0
        %v1629 = vpop.f32.mrb[0].mxu0
        %v1630 = vadd.f32 %v366, %v1629
        %v1631 = vpop.f32.mrb[0].mxu0
        %1632 = vmatprep.mubr.bf16.mxu0 %v877
        %1633 = vmatmul.mubr.bf16.gmra.mrb[0].mxu0 %v876
        %v1634 = vpop.f32.mrb[0].mxu0
        %v1635 = vadd.f32 %v366, %v1634
        %v1636 = vpop.f32.mrb[0].mxu0
        %v1637 = vpop.f32.mrb[0].mxu0
        %v1638 = vadd.f32 %v366, %v1637
        %v1639 = vpop.f32.mrb[0].mxu0
        %1640 = vmatprep.mubr.bf16.mxu0 %v879
        %1641 = vmatmul.mubr.bf16.gmra.mrb[0].mxu0 %v878
        %v1642 = vpop.f32.mrb[0].mxu0
        %v1643 = vadd.f32 %v366, %v1642
        %v1644 = vpop.f32.mrb[0].mxu0
        %v1645 = vpop.f32.mrb[0].mxu0
        %v1646 = vadd.f32 %v366, %v1645
        %v1647 = vpop.f32.mrb[0].mxu0
        %1648 = vdwg.mxu0
        %v1649 = vmax.f32 %v1139, 0.0
        %v1650 = vmax.f32 %v1142, 0.0
        %v1651 = vmax.f32 %v1147, 0.0
        %v1652 = vmax.f32 %v1150, 0.0
        %v1653 = vmax.f32 %v1155, 0.0
        %v1654 = vmax.f32 %v1158, 0.0
        %v1655 = vmax.f32 %v1163, 0.0
        %v1656 = vmax.f32 %v1166, 0.0
        %v1657 = vmax.f32 %v1171, 0.0
        %v1658 = vmax.f32 %v1174, 0.0
        %v1659 = vmax.f32 %v1179, 0.0
        %v1660 = vmax.f32 %v1182, 0.0
        %v1661 = vmax.f32 %v1187, 0.0
        %v1662 = vmax.f32 %v1190, 0.0
        %v1663 = vmax.f32 %v1195, 0.0
        %v1664 = vmax.f32 %v1198, 0.0
        %v1665 = vmax.f32 %v1203, 0.0
        %v1666 = vmax.f32 %v1206, 0.0
        %v1667 = vmax.f32 %v1211, 0.0
        %v1668 = vmax.f32 %v1214, 0.0
        %v1669 = vmax.f32 %v1219, 0.0
        %v1670 = vmax.f32 %v1222, 0.0
        %v1671 = vmax.f32 %v1227, 0.0
        %v1672 = vmax.f32 %v1230, 0.0
        %v1673 = vmax.f32 %v1235, 0.0
        %v1674 = vmax.f32 %v1238, 0.0
        %v1675 = vmax.f32 %v1243, 0.0
        %v1676 = vmax.f32 %v1246, 0.0
        %v1677 = vmax.f32 %v1251, 0.0
        %v1678 = vmax.f32 %v1254, 0.0
        %v1679 = vmax.f32 %v1259, 0.0
        %v1680 = vmax.f32 %v1262, 0.0
        %v1681 = vmax.f32 %v1267, 0.0
        %v1682 = vmax.f32 %v1270, 0.0
        %v1683 = vmax.f32 %v1275, 0.0
        %v1684 = vmax.f32 %v1278, 0.0
        %v1685 = vmax.f32 %v1283, 0.0
        %v1686 = vmax.f32 %v1286, 0.0
        %v1687 = vmax.f32 %v1291, 0.0
        %v1688 = vmax.f32 %v1294, 0.0
        %v1689 = vmax.f32 %v1299, 0.0
        %v1690 = vmax.f32 %v1302, 0.0
        %v1691 = vmax.f32 %v1307, 0.0
        %v1692 = vmax.f32 %v1310, 0.0
        %v1693 = vmax.f32 %v1315, 0.0
        %v1694 = vmax.f32 %v1318, 0.0
        %v1695 = vmax.f32 %v1323, 0.0
        %v1696 = vmax.f32 %v1326, 0.0
        %v1697 = vmax.f32 %v1331, 0.0
        %v1698 = vmax.f32 %v1334, 0.0
        %v1699 = vmax.f32 %v1339, 0.0
        %v1700 = vmax.f32 %v1342, 0.0
        %v1701 = vmax.f32 %v1347, 0.0
        %v1702 = vmax.f32 %v1350, 0.0
        %v1703 = vmax.f32 %v1355, 0.0
        %v1704 = vmax.f32 %v1358, 0.0
        %v1705 = vmax.f32 %v1363, 0.0
        %v1706 = vmax.f32 %v1366, 0.0
        %v1707 = vmax.f32 %v1371, 0.0
        %v1708 = vmax.f32 %v1374, 0.0
        %v1709 = vmax.f32 %v1379, 0.0
        %v1710 = vmax.f32 %v1382, 0.0
        %v1711 = vmax.f32 %v1387, 0.0
        %v1712 = vmax.f32 %v1390, 0.0
        %v1713 = vmax.f32 %v1395, 0.0
        %v1714 = vmax.f32 %v1398, 0.0
        %v1715 = vmax.f32 %v1403, 0.0
        %v1716 = vmax.f32 %v1406, 0.0
        %v1717 = vmax.f32 %v1411, 0.0
        %v1718 = vmax.f32 %v1414, 0.0
        %v1719 = vmax.f32 %v1419, 0.0
        %v1720 = vmax.f32 %v1422, 0.0
        %v1721 = vmax.f32 %v1427, 0.0
        %v1722 = vmax.f32 %v1430, 0.0
        %v1723 = vmax.f32 %v1435, 0.0
        %v1724 = vmax.f32 %v1438, 0.0
        %v1725 = vmax.f32 %v1443, 0.0
        %v1726 = vmax.f32 %v1446, 0.0
        %v1727 = vmax.f32 %v1451, 0.0
        %v1728 = vmax.f32 %v1454, 0.0
        %v1729 = vmax.f32 %v1459, 0.0
        %v1730 = vmax.f32 %v1462, 0.0
        %v1731 = vmax.f32 %v1467, 0.0
        %v1732 = vmax.f32 %v1470, 0.0
        %v1733 = vmax.f32 %v1475, 0.0
        %v1734 = vmax.f32 %v1478, 0.0
        %v1735 = vmax.f32 %v1483, 0.0
        %v1736 = vmax.f32 %v1486, 0.0
        %v1737 = vmax.f32 %v1491, 0.0
        %v1738 = vmax.f32 %v1494, 0.0
        %v1739 = vmax.f32 %v1499, 0.0
        %v1740 = vmax.f32 %v1502, 0.0
        %v1741 = vmax.f32 %v1507, 0.0
        %v1742 = vmax.f32 %v1510, 0.0
        %v1743 = vmax.f32 %v1515, 0.0
        %v1744 = vmax.f32 %v1518, 0.0
        %v1745 = vmax.f32 %v1523, 0.0
        %v1746 = vmax.f32 %v1526, 0.0
        %v1747 = vmax.f32 %v1531, 0.0
        %v1748 = vmax.f32 %v1534, 0.0
        %v1749 = vmax.f32 %v1539, 0.0
        %v1750 = vmax.f32 %v1542, 0.0
        %v1751 = vmax.f32 %v1547, 0.0
        %v1752 = vmax.f32 %v1550, 0.0
        %v1753 = vmax.f32 %v1555, 0.0
        %v1754 = vmax.f32 %v1558, 0.0
        %v1755 = vmax.f32 %v1563, 0.0
        %v1756 = vmax.f32 %v1566, 0.0
        %v1757 = vmax.f32 %v1571, 0.0
        %v1758 = vmax.f32 %v1574, 0.0
        %v1759 = vmax.f32 %v1579, 0.0
        %v1760 = vmax.f32 %v1582, 0.0
        %v1761 = vmax.f32 %v1587, 0.0
        %v1762 = vmax.f32 %v1590, 0.0
        %v1763 = vmax.f32 %v1595, 0.0
        %v1764 = vmax.f32 %v1598, 0.0
        %v1765 = vmax.f32 %v1603, 0.0
        %v1766 = vmax.f32 %v1606, 0.0
        %v1767 = vmax.f32 %v1611, 0.0
        %v1768 = vmax.f32 %v1614, 0.0
        %v1769 = vmax.f32 %v1619, 0.0
        %v1770 = vmax.f32 %v1622, 0.0
        %v1771 = vmax.f32 %v1627, 0.0
        %v1772 = vmax.f32 %v1630, 0.0
        %v1773 = vmax.f32 %v1635, 0.0
        %v1774 = vmax.f32 %v1638, 0.0
        %v1775 = vmax.f32 %v1643, 0.0
        %v1776 = vmax.f32 %v1646, 0.0
        %v1777 = vpack.c.bf16 %v1650, %v1649
        %v1778 = vpack.c.bf16 %v1652, %v1651
        %v1779 = vpack.c.bf16 %v1654, %v1653
        %v1780 = vpack.c.bf16 %v1656, %v1655
        %v1781 = vpack.c.bf16 %v1658, %v1657
        %v1782 = vpack.c.bf16 %v1660, %v1659
        %v1783 = vpack.c.bf16 %v1662, %v1661
        %v1784 = vpack.c.bf16 %v1664, %v1663
        %v1785 = vpack.c.bf16 %v1666, %v1665
        %v1786 = vpack.c.bf16 %v1668, %v1667
        %v1787 = vpack.c.bf16 %v1670, %v1669
        %v1788 = vpack.c.bf16 %v1672, %v1671
        %v1789 = vpack.c.bf16 %v1674, %v1673
        %v1790 = vpack.c.bf16 %v1676, %v1675
        %v1791 = vpack.c.bf16 %v1678, %v1677
        %v1792 = vpack.c.bf16 %v1680, %v1679
        %v1793 = vpack.c.bf16 %v1682, %v1681
        %v1794 = vpack.c.bf16 %v1684, %v1683
        %v1795 = vpack.c.bf16 %v1686, %v1685
        %v1796 = vpack.c.bf16 %v1688, %v1687
        %v1797 = vpack.c.bf16 %v1690, %v1689
        %v1798 = vpack.c.bf16 %v1692, %v1691
        %v1799 = vpack.c.bf16 %v1694, %v1693
        %v1800 = vpack.c.bf16 %v1696, %v1695
        %v1801 = vpack.c.bf16 %v1698, %v1697
        %v1802 = vpack.c.bf16 %v1700, %v1699
        %v1803 = vpack.c.bf16 %v1702, %v1701
        %v1804 = vpack.c.bf16 %v1704, %v1703
        %v1805 = vpack.c.bf16 %v1706, %v1705
        %v1806 = vpack.c.bf16 %v1708, %v1707
        %v1807 = vpack.c.bf16 %v1710, %v1709
        %v1808 = vpack.c.bf16 %v1712, %v1711
        %v1809 = vpack.c.bf16 %v1714, %v1713
        %v1810 = vpack.c.bf16 %v1716, %v1715
        %v1811 = vpack.c.bf16 %v1718, %v1717
        %v1812 = vpack.c.bf16 %v1720, %v1719
        %v1813 = vpack.c.bf16 %v1722, %v1721
        %v1814 = vpack.c.bf16 %v1724, %v1723
        %v1815 = vpack.c.bf16 %v1726, %v1725
        %v1816 = vpack.c.bf16 %v1728, %v1727
        %v1817 = vpack.c.bf16 %v1730, %v1729
        %v1818 = vpack.c.bf16 %v1732, %v1731
        %v1819 = vpack.c.bf16 %v1734, %v1733
        %v1820 = vpack.c.bf16 %v1736, %v1735
        %v1821 = vpack.c.bf16 %v1738, %v1737
        %v1822 = vpack.c.bf16 %v1740, %v1739
        %v1823 = vpack.c.bf16 %v1742, %v1741
        %v1824 = vpack.c.bf16 %v1744, %v1743
        %v1825 = vpack.c.bf16 %v1746, %v1745
        %v1826 = vpack.c.bf16 %v1748, %v1747
        %v1827 = vpack.c.bf16 %v1750, %v1749
        %v1828 = vpack.c.bf16 %v1752, %v1751
        %v1829 = vpack.c.bf16 %v1754, %v1753
        %v1830 = vpack.c.bf16 %v1756, %v1755
        %v1831 = vpack.c.bf16 %v1758, %v1757
        %v1832 = vpack.c.bf16 %v1760, %v1759
        %v1833 = vpack.c.bf16 %v1762, %v1761
        %v1834 = vpack.c.bf16 %v1764, %v1763
        %v1835 = vpack.c.bf16 %v1766, %v1765
        %v1836 = vpack.c.bf16 %v1768, %v1767
        %v1837 = vpack.c.bf16 %v1770, %v1769
        %v1838 = vpack.c.bf16 %v1772, %v1771
        %v1839 = vpack.c.bf16 %v1774, %v1773
        %v1840 = vpack.c.bf16 %v1776, %v1775
        %v1905 = vunpack.c.l.b16 %v1777
        %v1906 = vunpack.c.h.b16 %v1777
        %v1907 = vunpack.c.l.b16 %v1778
        %v1908 = vunpack.c.h.b16 %v1778
        %v1909 = vunpack.c.l.b16 %v1779
        %v1910 = vunpack.c.h.b16 %v1779
        %v1911 = vunpack.c.l.b16 %v1780
        %v1912 = vunpack.c.h.b16 %v1780
        %v1913 = vunpack.c.l.b16 %v1781
        %v1914 = vunpack.c.h.b16 %v1781
        %v1915 = vunpack.c.l.b16 %v1782
        %v1916 = vunpack.c.h.b16 %v1782
        %v1917 = vunpack.c.l.b16 %v1783
        %v1918 = vunpack.c.h.b16 %v1783
        %v1919 = vunpack.c.l.b16 %v1784
        %v1920 = vunpack.c.h.b16 %v1784
        %v1921 = vunpack.c.l.b16 %v1785
        %v1922 = vunpack.c.h.b16 %v1785
        %v1923 = vunpack.c.l.b16 %v1786
        %v1924 = vunpack.c.h.b16 %v1786
        %v1925 = vunpack.c.l.b16 %v1787
        %v1926 = vunpack.c.h.b16 %v1787
        %v1927 = vunpack.c.l.b16 %v1788
        %v1928 = vunpack.c.h.b16 %v1788
        %v1929 = vunpack.c.l.b16 %v1789
        %v1930 = vunpack.c.h.b16 %v1789
        %v1931 = vunpack.c.l.b16 %v1790
        %v1932 = vunpack.c.h.b16 %v1790
        %v1933 = vunpack.c.l.b16 %v1791
        %v1934 = vunpack.c.h.b16 %v1791
        %v1935 = vunpack.c.l.b16 %v1792
        %v1936 = vunpack.c.h.b16 %v1792
        %v1937 = vunpack.c.l.b16 %v1793
        %v1938 = vunpack.c.h.b16 %v1793
        %v1939 = vunpack.c.l.b16 %v1794
        %v1940 = vunpack.c.h.b16 %v1794
        %v1941 = vunpack.c.l.b16 %v1795
        %v1942 = vunpack.c.h.b16 %v1795
        %v1943 = vunpack.c.l.b16 %v1796
        %v1944 = vunpack.c.h.b16 %v1796
        %v1945 = vunpack.c.l.b16 %v1797
        %v1946 = vunpack.c.h.b16 %v1797
        %v1947 = vunpack.c.l.b16 %v1798
        %v1948 = vunpack.c.h.b16 %v1798
        %v1949 = vunpack.c.l.b16 %v1799
        %v1950 = vunpack.c.h.b16 %v1799
        %v1951 = vunpack.c.l.b16 %v1800
        %v1952 = vunpack.c.h.b16 %v1800
        %v1953 = vunpack.c.l.b16 %v1801
        %v1954 = vunpack.c.h.b16 %v1801
        %v1955 = vunpack.c.l.b16 %v1802
        %v1956 = vunpack.c.h.b16 %v1802
        %v1957 = vunpack.c.l.b16 %v1803
        %v1958 = vunpack.c.h.b16 %v1803
        %v1959 = vunpack.c.l.b16 %v1804
        %v1960 = vunpack.c.h.b16 %v1804
        %v1961 = vunpack.c.l.b16 %v1805
        %v1962 = vunpack.c.h.b16 %v1805
        %v1963 = vunpack.c.l.b16 %v1806
        %v1964 = vunpack.c.h.b16 %v1806
        %v1965 = vunpack.c.l.b16 %v1807
        %v1966 = vunpack.c.h.b16 %v1807
        %v1967 = vunpack.c.l.b16 %v1808
        %v1968 = vunpack.c.h.b16 %v1808
        %v1969 = vunpack.c.l.b16 %v1809
        %v1970 = vunpack.c.h.b16 %v1809
        %v1971 = vunpack.c.l.b16 %v1810
        %v1972 = vunpack.c.h.b16 %v1810
        %v1973 = vunpack.c.l.b16 %v1811
        %v1974 = vunpack.c.h.b16 %v1811
        %v1975 = vunpack.c.l.b16 %v1812
        %v1976 = vunpack.c.h.b16 %v1812
        %v1977 = vunpack.c.l.b16 %v1813
        %v1978 = vunpack.c.h.b16 %v1813
        %v1979 = vunpack.c.l.b16 %v1814
        %v1980 = vunpack.c.h.b16 %v1814
        %v1981 = vunpack.c.l.b16 %v1815
        %v1982 = vunpack.c.h.b16 %v1815
        %v1983 = vunpack.c.l.b16 %v1816
        %v1984 = vunpack.c.h.b16 %v1816
        %v1985 = vunpack.c.l.b16 %v1817
        %v1986 = vunpack.c.h.b16 %v1817
        %v1987 = vunpack.c.l.b16 %v1818
        %v1988 = vunpack.c.h.b16 %v1818
        %v1989 = vunpack.c.l.b16 %v1819
        %v1990 = vunpack.c.h.b16 %v1819
        %v1991 = vunpack.c.l.b16 %v1820
        %v1992 = vunpack.c.h.b16 %v1820
        %v1993 = vunpack.c.l.b16 %v1821
        %v1994 = vunpack.c.h.b16 %v1821
        %v1995 = vunpack.c.l.b16 %v1822
        %v1996 = vunpack.c.h.b16 %v1822
        %v1997 = vunpack.c.l.b16 %v1823
        %v1998 = vunpack.c.h.b16 %v1823
        %v1999 = vunpack.c.l.b16 %v1824
        %v2000 = vunpack.c.h.b16 %v1824
        %v2001 = vunpack.c.l.b16 %v1825
        %v2002 = vunpack.c.h.b16 %v1825
        %v2003 = vunpack.c.l.b16 %v1826
        %v2004 = vunpack.c.h.b16 %v1826
        %v2005 = vunpack.c.l.b16 %v1827
        %v2006 = vunpack.c.h.b16 %v1827
        %v2007 = vunpack.c.l.b16 %v1828
        %v2008 = vunpack.c.h.b16 %v1828
        %v2009 = vunpack.c.l.b16 %v1829
        %v2010 = vunpack.c.h.b16 %v1829
        %v2011 = vunpack.c.l.b16 %v1830
        %v2012 = vunpack.c.h.b16 %v1830
        %v2013 = vunpack.c.l.b16 %v1831
        %v2014 = vunpack.c.h.b16 %v1831
        %v2015 = vunpack.c.l.b16 %v1832
        %v2016 = vunpack.c.h.b16 %v1832
        %v2017 = vunpack.c.l.b16 %v1833
        %v2018 = vunpack.c.h.b16 %v1833
        %v2019 = vunpack.c.l.b16 %v1834
        %v2020 = vunpack.c.h.b16 %v1834
        %v2021 = vunpack.c.l.b16 %v1835
        %v2022 = vunpack.c.h.b16 %v1835
        %v2023 = vunpack.c.l.b16 %v1836
        %v2024 = vunpack.c.h.b16 %v1836
        %v2025 = vunpack.c.l.b16 %v1837
        %v2026 = vunpack.c.h.b16 %v1837
        %v2027 = vunpack.c.l.b16 %v1838
        %v2028 = vunpack.c.h.b16 %v1838
        %v2029 = vunpack.c.l.b16 %v1839
        %v2030 = vunpack.c.h.b16 %v1839
        %v2031 = vunpack.c.l.b16 %v1840
        %v2032 = vunpack.c.h.b16 %v1840
        %v2033 = vpack.c.b16 %v1905, %v1905
        %v2034 = vpack.c.b16 %v1906, %v1906
        %v2035 = vpack.c.b16 %v1907, %v1907
        %v2036 = vpack.c.b16 %v1908, %v1908
        %v2037 = vpack.c.b16 %v1909, %v1909
        %v2038 = vpack.c.b16 %v1910, %v1910
        %v2039 = vpack.c.b16 %v1911, %v1911
        %v2040 = vpack.c.b16 %v1912, %v1912
        %v2041 = vpack.c.b16 %v1913, %v1913
        %v2042 = vpack.c.b16 %v1914, %v1914
        %v2043 = vpack.c.b16 %v1915, %v1915
        %v2044 = vpack.c.b16 %v1916, %v1916
        %v2045 = vpack.c.b16 %v1917, %v1917
        %v2046 = vpack.c.b16 %v1918, %v1918
        %v2047 = vpack.c.b16 %v1919, %v1919
        %v2048 = vpack.c.b16 %v1920, %v1920
        %v2049 = vpack.c.b16 %v1921, %v1921
        %v2050 = vpack.c.b16 %v1922, %v1922
        %v2051 = vpack.c.b16 %v1923, %v1923
        %v2052 = vpack.c.b16 %v1924, %v1924
        %v2053 = vpack.c.b16 %v1925, %v1925
        %v2054 = vpack.c.b16 %v1926, %v1926
        %v2055 = vpack.c.b16 %v1927, %v1927
        %v2056 = vpack.c.b16 %v1928, %v1928
        %v2057 = vpack.c.b16 %v1929, %v1929
        %v2058 = vpack.c.b16 %v1930, %v1930
        %v2059 = vpack.c.b16 %v1931, %v1931
        %v2060 = vpack.c.b16 %v1932, %v1932
        %v2061 = vpack.c.b16 %v1933, %v1933
        %v2062 = vpack.c.b16 %v1934, %v1934
        %v2063 = vpack.c.b16 %v1935, %v1935
        %v2064 = vpack.c.b16 %v1936, %v1936
        %v2065 = vpack.c.b16 %v1937, %v1937
        %v2066 = vpack.c.b16 %v1938, %v1938
        %v2067 = vpack.c.b16 %v1939, %v1939
        %v2068 = vpack.c.b16 %v1940, %v1940
        %v2069 = vpack.c.b16 %v1941, %v1941
        %v2070 = vpack.c.b16 %v1942, %v1942
        %v2071 = vpack.c.b16 %v1943, %v1943
        %v2072 = vpack.c.b16 %v1944, %v1944
        %v2073 = vpack.c.b16 %v1945, %v1945
        %v2074 = vpack.c.b16 %v1946, %v1946
        %v2075 = vpack.c.b16 %v1947, %v1947
        %v2076 = vpack.c.b16 %v1948, %v1948
        %v2077 = vpack.c.b16 %v1949, %v1949
        %v2078 = vpack.c.b16 %v1950, %v1950
        %v2079 = vpack.c.b16 %v1951, %v1951
        %v2080 = vpack.c.b16 %v1952, %v1952
        %v2081 = vpack.c.b16 %v1953, %v1953
        %v2082 = vpack.c.b16 %v1954, %v1954
        %v2083 = vpack.c.b16 %v1955, %v1955
        %v2084 = vpack.c.b16 %v1956, %v1956
        %v2085 = vpack.c.b16 %v1957, %v1957
        %v2086 = vpack.c.b16 %v1958, %v1958
        %v2087 = vpack.c.b16 %v1959, %v1959
        %v2088 = vpack.c.b16 %v1960, %v1960
        %v2089 = vpack.c.b16 %v1961, %v1961
        %v2090 = vpack.c.b16 %v1962, %v1962
        %v2091 = vpack.c.b16 %v1963, %v1963
        %v2092 = vpack.c.b16 %v1964, %v1964
        %v2093 = vpack.c.b16 %v1965, %v1965
        %v2094 = vpack.c.b16 %v1966, %v1966
        %v2095 = vpack.c.b16 %v1967, %v1967
        %v2096 = vpack.c.b16 %v1968, %v1968
        %v2097 = vpack.c.b16 %v1969, %v1969
        %v2098 = vpack.c.b16 %v1970, %v1970
        %v2099 = vpack.c.b16 %v1971, %v1971
        %v2100 = vpack.c.b16 %v1972, %v1972
        %v2101 = vpack.c.b16 %v1973, %v1973
        %v2102 = vpack.c.b16 %v1974, %v1974
        %v2103 = vpack.c.b16 %v1975, %v1975
        %v2104 = vpack.c.b16 %v1976, %v1976
        %v2105 = vpack.c.b16 %v1977, %v1977
        %v2106 = vpack.c.b16 %v1978, %v1978
        %v2107 = vpack.c.b16 %v1979, %v1979
        %v2108 = vpack.c.b16 %v1980, %v1980
        %v2109 = vpack.c.b16 %v1981, %v1981
        %v2110 = vpack.c.b16 %v1982, %v1982
        %v2111 = vpack.c.b16 %v1983, %v1983
        %v2112 = vpack.c.b16 %v1984, %v1984
        %v2113 = vpack.c.b16 %v1985, %v1985
        %v2114 = vpack.c.b16 %v1986, %v1986
        %v2115 = vpack.c.b16 %v1987, %v1987
        %v2116 = vpack.c.b16 %v1988, %v1988
        %v2117 = vpack.c.b16 %v1989, %v1989
        %v2118 = vpack.c.b16 %v1990, %v1990
        %v2119 = vpack.c.b16 %v1991, %v1991
        %v2120 = vpack.c.b16 %v1992, %v1992
        %v2121 = vpack.c.b16 %v1993, %v1993
        %v2122 = vpack.c.b16 %v1994, %v1994
        %v2123 = vpack.c.b16 %v1995, %v1995
        %v2124 = vpack.c.b16 %v1996, %v1996
        %v2125 = vpack.c.b16 %v1997, %v1997
        %v2126 = vpack.c.b16 %v1998, %v1998
        %v2127 = vpack.c.b16 %v1999, %v1999
        %v2128 = vpack.c.b16 %v2000, %v2000
        %v2129 = vpack.c.b16 %v2001, %v2001
        %v2130 = vpack.c.b16 %v2002, %v2002
        %v2131 = vpack.c.b16 %v2003, %v2003
        %v2132 = vpack.c.b16 %v2004, %v2004
        %v2133 = vpack.c.b16 %v2005, %v2005
        %v2134 = vpack.c.b16 %v2006, %v2006
        %v2135 = vpack.c.b16 %v2007, %v2007
        %v2136 = vpack.c.b16 %v2008, %v2008
        %v2137 = vpack.c.b16 %v2009, %v2009
        %v2138 = vpack.c.b16 %v2010, %v2010
        %v2139 = vpack.c.b16 %v2011, %v2011
        %v2140 = vpack.c.b16 %v2012, %v2012
        %v2141 = vpack.c.b16 %v2013, %v2013
        %v2142 = vpack.c.b16 %v2014, %v2014
        %v2143 = vpack.c.b16 %v2015, %v2015
        %v2144 = vpack.c.b16 %v2016, %v2016
        %v2145 = vpack.c.b16 %v2017, %v2017
        %v2146 = vpack.c.b16 %v2018, %v2018
        %v2147 = vpack.c.b16 %v2019, %v2019
        %v2148 = vpack.c.b16 %v2020, %v2020
        %v2149 = vpack.c.b16 %v2021, %v2021
        %v2150 = vpack.c.b16 %v2022, %v2022
        %v2151 = vpack.c.b16 %v2023, %v2023
        %v2152 = vpack.c.b16 %v2024, %v2024
        %v2153 = vpack.c.b16 %v2025, %v2025
        %v2154 = vpack.c.b16 %v2026, %v2026
        %v2155 = vpack.c.b16 %v2027, %v2027
        %v2156 = vpack.c.b16 %v2028, %v2028
        %v2157 = vpack.c.b16 %v2029, %v2029
        %v2158 = vpack.c.b16 %v2030, %v2030
        %v2159 = vpack.c.b16 %v2031, %v2031
        %v2160 = vpack.c.b16 %v2032, %v2032
        %vm2289 = vcmask 257024
        %2290 = vst.msk [vmem:[%s177] sm:$0xf] %vm2289, %v2033
        %2291 = vst.msk [vmem:[%s177 + $0x4] sm:$0xf] %vm2289, %v2034
        %2292 = vst.msk [vmem:[%s177 + $0x8] sm:$0xf] %vm2289, %v2035
        %2293 = vst.msk [vmem:[%s177 + $0xc] sm:$0xf] %vm2289, %v2036
        %2294 = vst.msk [vmem:[%s177 + $0x10] sm:$0xf] %vm2289, %v2037
        %2295 = vst.msk [vmem:[%s177 + $0x14] sm:$0xf] %vm2289, %v2038
        %2296 = vst.msk [vmem:[%s177 + $0x18] sm:$0xf] %vm2289, %v2039
        %2297 = vst.msk [vmem:[%s177 + $0x1c] sm:$0xf] %vm2289, %v2040
        %2298 = vst.msk [vmem:[%s177 + $0x20] sm:$0xf] %vm2289, %v2041
        %2299 = vst.msk [vmem:[%s177 + $0x24] sm:$0xf] %vm2289, %v2042
        %2300 = vst.msk [vmem:[%s177 + $0x28] sm:$0xf] %vm2289, %v2043
        %2301 = vst.msk [vmem:[%s177 + $0x2c] sm:$0xf] %vm2289, %v2044
        %2302 = vst.msk [vmem:[%s177 + $0x30] sm:$0xf] %vm2289, %v2045
        %2303 = vst.msk [vmem:[%s177 + $0x34] sm:$0xf] %vm2289, %v2046
        %2304 = vst.msk [vmem:[%s177 + $0x38] sm:$0xf] %vm2289, %v2047
        %2305 = vst.msk [vmem:[%s177 + $0x3c] sm:$0xf] %vm2289, %v2048
        %2306 = vst.msk [vmem:[%s177 + $0x40] sm:$0xf] %vm2289, %v2049
        %2307 = vst.msk [vmem:[%s177 + $0x44] sm:$0xf] %vm2289, %v2050
        %2308 = vst.msk [vmem:[%s177 + $0x48] sm:$0xf] %vm2289, %v2051
        %2309 = vst.msk [vmem:[%s177 + $0x4c] sm:$0xf] %vm2289, %v2052
        %2310 = vst.msk [vmem:[%s177 + $0x50] sm:$0xf] %vm2289, %v2053
        %2311 = vst.msk [vmem:[%s177 + $0x54] sm:$0xf] %vm2289, %v2054
        %2312 = vst.msk [vmem:[%s177 + $0x58] sm:$0xf] %vm2289, %v2055
        %2313 = vst.msk [vmem:[%s177 + $0x5c] sm:$0xf] %vm2289, %v2056
        %2314 = vst.msk [vmem:[%s177 + $0x60] sm:$0xf] %vm2289, %v2057
        %2315 = vst.msk [vmem:[%s177 + $0x64] sm:$0xf] %vm2289, %v2058
        %2316 = vst.msk [vmem:[%s177 + $0x68] sm:$0xf] %vm2289, %v2059
        %2317 = vst.msk [vmem:[%s177 + $0x6c] sm:$0xf] %vm2289, %v2060
        %2318 = vst.msk [vmem:[%s177 + $0x70] sm:$0xf] %vm2289, %v2061
        %2319 = vst.msk [vmem:[%s177 + $0x74] sm:$0xf] %vm2289, %v2062
        %2320 = vst.msk [vmem:[%s177 + $0x78] sm:$0xf] %vm2289, %v2063
        %2321 = vst.msk [vmem:[%s177 + $0x7c] sm:$0xf] %vm2289, %v2064
        %2322 = vst.msk [vmem:[%s177 + $0x80] sm:$0xf] %vm2289, %v2065
        %2323 = vst.msk [vmem:[%s177 + $0x84] sm:$0xf] %vm2289, %v2066
        %2324 = vst.msk [vmem:[%s177 + $0x88] sm:$0xf] %vm2289, %v2067
        %2325 = vst.msk [vmem:[%s177 + $0x8c] sm:$0xf] %vm2289, %v2068
        %2326 = vst.msk [vmem:[%s177 + $0x90] sm:$0xf] %vm2289, %v2069
        %2327 = vst.msk [vmem:[%s177 + $0x94] sm:$0xf] %vm2289, %v2070
        %2328 = vst.msk [vmem:[%s177 + $0x98] sm:$0xf] %vm2289, %v2071
        %2329 = vst.msk [vmem:[%s177 + $0x9c] sm:$0xf] %vm2289, %v2072
        %2330 = vst.msk [vmem:[%s177 + $0xa0] sm:$0xf] %vm2289, %v2073
        %2331 = vst.msk [vmem:[%s177 + $0xa4] sm:$0xf] %vm2289, %v2074
        %2332 = vst.msk [vmem:[%s177 + $0xa8] sm:$0xf] %vm2289, %v2075
        %2333 = vst.msk [vmem:[%s177 + $0xac] sm:$0xf] %vm2289, %v2076
        %2334 = vst.msk [vmem:[%s177 + $0xb0] sm:$0xf] %vm2289, %v2077
        %2335 = vst.msk [vmem:[%s177 + $0xb4] sm:$0xf] %vm2289, %v2078
        %2336 = vst.msk [vmem:[%s177 + $0xb8] sm:$0xf] %vm2289, %v2079
        %2337 = vst.msk [vmem:[%s177 + $0xbc] sm:$0xf] %vm2289, %v2080
        %2338 = vst.msk [vmem:[%s177 + $0xc0] sm:$0xf] %vm2289, %v2081
        %2339 = vst.msk [vmem:[%s177 + $0xc4] sm:$0xf] %vm2289, %v2082
        %2340 = vst.msk [vmem:[%s177 + $0xc8] sm:$0xf] %vm2289, %v2083
        %2341 = vst.msk [vmem:[%s177 + $0xcc] sm:$0xf] %vm2289, %v2084
        %2342 = vst.msk [vmem:[%s177 + $0xd0] sm:$0xf] %vm2289, %v2085
        %2343 = vst.msk [vmem:[%s177 + $0xd4] sm:$0xf] %vm2289, %v2086
        %2344 = vst.msk [vmem:[%s177 + $0xd8] sm:$0xf] %vm2289, %v2087
        %2345 = vst.msk [vmem:[%s177 + $0xdc] sm:$0xf] %vm2289, %v2088
        %2346 = vst.msk [vmem:[%s177 + $0xe0] sm:$0xf] %vm2289, %v2089
        %2347 = vst.msk [vmem:[%s177 + $0xe4] sm:$0xf] %vm2289, %v2090
        %2348 = vst.msk [vmem:[%s177 + $0xe8] sm:$0xf] %vm2289, %v2091
        %2349 = vst.msk [vmem:[%s177 + $0xec] sm:$0xf] %vm2289, %v2092
        %2350 = vst.msk [vmem:[%s177 + $0xf0] sm:$0xf] %vm2289, %v2093
        %2351 = vst.msk [vmem:[%s177 + $0xf4] sm:$0xf] %vm2289, %v2094
        %2352 = vst.msk [vmem:[%s177 + $0xf8] sm:$0xf] %vm2289, %v2095
        %2353 = vst.msk [vmem:[%s177 + $0xfc] sm:$0xf] %vm2289, %v2096
        %2354 = vst.msk [vmem:[%s177 + $0x100] sm:$0xf] %vm2289, %v2097
        %2355 = vst.msk [vmem:[%s177 + $0x104] sm:$0xf] %vm2289, %v2098
        %2356 = vst.msk [vmem:[%s177 + $0x108] sm:$0xf] %vm2289, %v2099
        %2357 = vst.msk [vmem:[%s177 + $0x10c] sm:$0xf] %vm2289, %v2100
        %2358 = vst.msk [vmem:[%s177 + $0x110] sm:$0xf] %vm2289, %v2101
        %2359 = vst.msk [vmem:[%s177 + $0x114] sm:$0xf] %vm2289, %v2102
        %2360 = vst.msk [vmem:[%s177 + $0x118] sm:$0xf] %vm2289, %v2103
        %2361 = vst.msk [vmem:[%s177 + $0x11c] sm:$0xf] %vm2289, %v2104
        %2362 = vst.msk [vmem:[%s177 + $0x120] sm:$0xf] %vm2289, %v2105
        %2363 = vst.msk [vmem:[%s177 + $0x124] sm:$0xf] %vm2289, %v2106
        %2364 = vst.msk [vmem:[%s177 + $0x128] sm:$0xf] %vm2289, %v2107
        %2365 = vst.msk [vmem:[%s177 + $0x12c] sm:$0xf] %vm2289, %v2108
        %2366 = vst.msk [vmem:[%s177 + $0x130] sm:$0xf] %vm2289, %v2109
        %2367 = vst.msk [vmem:[%s177 + $0x134] sm:$0xf] %vm2289, %v2110
        %2368 = vst.msk [vmem:[%s177 + $0x138] sm:$0xf] %vm2289, %v2111
        %2369 = vst.msk [vmem:[%s177 + $0x13c] sm:$0xf] %vm2289, %v2112
        %2370 = vst.msk [vmem:[%s177 + $0x140] sm:$0xf] %vm2289, %v2113
        %2371 = vst.msk [vmem:[%s177 + $0x144] sm:$0xf] %vm2289, %v2114
        %2372 = vst.msk [vmem:[%s177 + $0x148] sm:$0xf] %vm2289, %v2115
        %2373 = vst.msk [vmem:[%s177 + $0x14c] sm:$0xf] %vm2289, %v2116
        %2374 = vst.msk [vmem:[%s177 + $0x150] sm:$0xf] %vm2289, %v2117
        %2375 = vst.msk [vmem:[%s177 + $0x154] sm:$0xf] %vm2289, %v2118
        %2376 = vst.msk [vmem:[%s177 + $0x158] sm:$0xf] %vm2289, %v2119
        %2377 = vst.msk [vmem:[%s177 + $0x15c] sm:$0xf] %vm2289, %v2120
        %2378 = vst.msk [vmem:[%s177 + $0x160] sm:$0xf] %vm2289, %v2121
        %2379 = vst.msk [vmem:[%s177 + $0x164] sm:$0xf] %vm2289, %v2122
        %2380 = vst.msk [vmem:[%s177 + $0x168] sm:$0xf] %vm2289, %v2123
        %2381 = vst.msk [vmem:[%s177 + $0x16c] sm:$0xf] %vm2289, %v2124
        %2382 = vst.msk [vmem:[%s177 + $0x170] sm:$0xf] %vm2289, %v2125
        %2383 = vst.msk [vmem:[%s177 + $0x174] sm:$0xf] %vm2289, %v2126
        %2384 = vst.msk [vmem:[%s177 + $0x178] sm:$0xf] %vm2289, %v2127
        %2385 = vst.msk [vmem:[%s177 + $0x17c] sm:$0xf] %vm2289, %v2128
        %2386 = vst.msk [vmem:[%s177 + $0x180] sm:$0xf] %vm2289, %v2129
        %2387 = vst.msk [vmem:[%s177 + $0x184] sm:$0xf] %vm2289, %v2130
        %2388 = vst.msk [vmem:[%s177 + $0x188] sm:$0xf] %vm2289, %v2131
        %2389 = vst.msk [vmem:[%s177 + $0x18c] sm:$0xf] %vm2289, %v2132
        %2390 = vst.msk [vmem:[%s177 + $0x190] sm:$0xf] %vm2289, %v2133
        %2391 = vst.msk [vmem:[%s177 + $0x194] sm:$0xf] %vm2289, %v2134
        %2392 = vst.msk [vmem:[%s177 + $0x198] sm:$0xf] %vm2289, %v2135
        %2393 = vst.msk [vmem:[%s177 + $0x19c] sm:$0xf] %vm2289, %v2136
        %2394 = vst.msk [vmem:[%s177 + $0x1a0] sm:$0xf] %vm2289, %v2137
        %2395 = vst.msk [vmem:[%s177 + $0x1a4] sm:$0xf] %vm2289, %v2138
        %2396 = vst.msk [vmem:[%s177 + $0x1a8] sm:$0xf] %vm2289, %v2139
        %2397 = vst.msk [vmem:[%s177 + $0x1ac] sm:$0xf] %vm2289, %v2140
        %2398 = vst.msk [vmem:[%s177 + $0x1b0] sm:$0xf] %vm2289, %v2141
        %2399 = vst.msk [vmem:[%s177 + $0x1b4] sm:$0xf] %vm2289, %v2142
        %2400 = vst.msk [vmem:[%s177 + $0x1b8] sm:$0xf] %vm2289, %v2143
        %2401 = vst.msk [vmem:[%s177 + $0x1bc] sm:$0xf] %vm2289, %v2144
        %2402 = vst.msk [vmem:[%s177 + $0x1c0] sm:$0xf] %vm2289, %v2145
        %2403 = vst.msk [vmem:[%s177 + $0x1c4] sm:$0xf] %vm2289, %v2146
        %2404 = vst.msk [vmem:[%s177 + $0x1c8] sm:$0xf] %vm2289, %v2147
        %2405 = vst.msk [vmem:[%s177 + $0x1cc] sm:$0xf] %vm2289, %v2148
        %2406 = vst.msk [vmem:[%s177 + $0x1d0] sm:$0xf] %vm2289, %v2149
        %2407 = vst.msk [vmem:[%s177 + $0x1d4] sm:$0xf] %vm2289, %v2150
        %2408 = vst.msk [vmem:[%s177 + $0x1d8] sm:$0xf] %vm2289, %v2151
        %2409 = vst.msk [vmem:[%s177 + $0x1dc] sm:$0xf] %vm2289, %v2152
        %2410 = vst.msk [vmem:[%s177 + $0x1e0] sm:$0xf] %vm2289, %v2153
        %2411 = vst.msk [vmem:[%s177 + $0x1e4] sm:$0xf] %vm2289, %v2154
        %2412 = vst.msk [vmem:[%s177 + $0x1e8] sm:$0xf] %vm2289, %v2155
        %2413 = vst.msk [vmem:[%s177 + $0x1ec] sm:$0xf] %vm2289, %v2156
        %2414 = vst.msk [vmem:[%s177 + $0x1f0] sm:$0xf] %vm2289, %v2157
        %2415 = vst.msk [vmem:[%s177 + $0x1f4] sm:$0xf] %vm2289, %v2158
        %2416 = vst.msk [vmem:[%s177 + $0x1f8] sm:$0xf] %vm2289, %v2159
        %2417 = vst.msk [vmem:[%s177 + $0x1fc] sm:$0xf] %vm2289, %v2160
        %s2418 = sand.u32 %s90, 1
        %s2419 = sand.u32 %s90, 1
        %s2420 = smul.addr %s2419, 512
        %s2421 = scalar_lea.vmem [#allocation2], %s2420
        // Predicated region
        $region33: #{drqn_forward.6} parent=31 // pred_check
          %p2422 = pneg %p100
        $region34: #{drqn_forward.6} parent=31 // pred_check_branch
          %2424 = sbr.rel (%p2422) target = $region36
        $region35: #{drqn_forward.6} parent=31 // pred_region
          %s2425 = smul.u32 128, %s14
          %s2426 = ssub.s32 225, %s2425
          %p2427 = scmp.lt.s32.totalorder %s2426, 128
          %s2428 = scalar_select %p2427, %s2426, 128
          %s2429 = smul.u32 64, %s2428
          %p2430 = scmp.ne.s32.totalorder 0, %s2429
          %s2431 = smul.addr %s2425, 4
          %s2432 = scalar_lea.vmem %s3, %s2431
          // Predicated region
          $region37: #{drqn_forward.6} parent=35 // pred_check
            %p2433 = pneg %p2430
          $region38: #{drqn_forward.6} parent=35 // pred_check_branch
            %2435 = sbr.rel (%p2433) target = $region40
          $region39: #{drqn_forward.6} parent=35 // pred_region
            // Predicated region
            $region41: #{drqn_forward.6} parent=39 // pred_check
              _
            $region42: #{drqn_forward.6} parent=39 // pred_check_branch
              %2437 = sbr.rel target = $region44
            $region43: #{drqn_forward.6} parent=39 // pred_region
              // Predicated region
              $region63: #{drqn_forward.6} parent=43 // pred_check
                _
              $region64: #{drqn_forward.6} parent=43 // pred_check_branch
                %2612 = sbr.rel (0) target = $region66
              $region65: #{drqn_forward.6} parent=43 // pred_region
                %s2614 = sshrl.u32 %s2428, 6
                // While loop
                $region67: #{drqn_forward.6} parent=65 // loop_pre_header
                  _
                $region68: #{drqn_forward.6} parent=65 // loop_header
                  %s2616 = sphi 0, %s2618
                  %p2617 = scmp.ge.s32.totalorder %s2616, %s2614
                  %s2621 = sphi 0, %s2754
                  %s2622 = sphi %s2421, %s2757
                  %s2623 = sphi %s2432, %s2758
                $region69: #{drqn_forward.6} parent=65 // loop_header_branch
                  %2620 = sbr.rel (%p2617) target = $region73
                $region70: #{drqn_forward.6} parent=65 // loop_body
                  %v2624 = vld [vmem:[%s2622] sm:$0xf]
                  %2625 = vst [vmem:[%s2623] sm:$0xf] %v2624
                  %v2626 = vld [vmem:[%s2622 + $0x4] sm:$0xf]
                  %2627 = vst [vmem:[%s2623 + $0x4] sm:$0xf] %v2626
                  %v2628 = vld [vmem:[%s2622 + $0x8] sm:$0xf]
                  %2629 = vst [vmem:[%s2623 + $0x8] sm:$0xf] %v2628
                  %v2630 = vld [vmem:[%s2622 + $0xc] sm:$0xf]
                  %2631 = vst [vmem:[%s2623 + $0xc] sm:$0xf] %v2630
                  %v2632 = vld [vmem:[%s2622 + $0x10] sm:$0xf]
                  %2633 = vst [vmem:[%s2623 + $0x10] sm:$0xf] %v2632
                  %v2634 = vld [vmem:[%s2622 + $0x14] sm:$0xf]
                  %2635 = vst [vmem:[%s2623 + $0x14] sm:$0xf] %v2634
                  %v2636 = vld [vmem:[%s2622 + $0x18] sm:$0xf]
                  %2637 = vst [vmem:[%s2623 + $0x18] sm:$0xf] %v2636
                  %v2638 = vld [vmem:[%s2622 + $0x1c] sm:$0xf]
                  %2639 = vst [vmem:[%s2623 + $0x1c] sm:$0xf] %v2638
                  %v2640 = vld [vmem:[%s2622 + $0x20] sm:$0xf]
                  %2641 = vst [vmem:[%s2623 + $0x20] sm:$0xf] %v2640
                  %v2642 = vld [vmem:[%s2622 + $0x24] sm:$0xf]
                  %2643 = vst [vmem:[%s2623 + $0x24] sm:$0xf] %v2642
                  %v2644 = vld [vmem:[%s2622 + $0x28] sm:$0xf]
                  %2645 = vst [vmem:[%s2623 + $0x28] sm:$0xf] %v2644
                  %v2646 = vld [vmem:[%s2622 + $0x2c] sm:$0xf]
                  %2647 = vst [vmem:[%s2623 + $0x2c] sm:$0xf] %v2646
                  %v2648 = vld [vmem:[%s2622 + $0x30] sm:$0xf]
                  %2649 = vst [vmem:[%s2623 + $0x30] sm:$0xf] %v2648
                  %v2650 = vld [vmem:[%s2622 + $0x34] sm:$0xf]
                  %2651 = vst [vmem:[%s2623 + $0x34] sm:$0xf] %v2650
                  %v2652 = vld [vmem:[%s2622 + $0x38] sm:$0xf]
                  %2653 = vst [vmem:[%s2623 + $0x38] sm:$0xf] %v2652
                  %v2654 = vld [vmem:[%s2622 + $0x3c] sm:$0xf]
                  %2655 = vst [vmem:[%s2623 + $0x3c] sm:$0xf] %v2654
                  %v2656 = vld [vmem:[%s2622 + $0x40] sm:$0xf]
                  %2657 = vst [vmem:[%s2623 + $0x40] sm:$0xf] %v2656
                  %v2658 = vld [vmem:[%s2622 + $0x44] sm:$0xf]
                  %2659 = vst [vmem:[%s2623 + $0x44] sm:$0xf] %v2658
                  %v2660 = vld [vmem:[%s2622 + $0x48] sm:$0xf]
                  %2661 = vst [vmem:[%s2623 + $0x48] sm:$0xf] %v2660
                  %v2662 = vld [vmem:[%s2622 + $0x4c] sm:$0xf]
                  %2663 = vst [vmem:[%s2623 + $0x4c] sm:$0xf] %v2662
                  %v2664 = vld [vmem:[%s2622 + $0x50] sm:$0xf]
                  %2665 = vst [vmem:[%s2623 + $0x50] sm:$0xf] %v2664
                  %v2666 = vld [vmem:[%s2622 + $0x54] sm:$0xf]
                  %2667 = vst [vmem:[%s2623 + $0x54] sm:$0xf] %v2666
                  %v2668 = vld [vmem:[%s2622 + $0x58] sm:$0xf]
                  %2669 = vst [vmem:[%s2623 + $0x58] sm:$0xf] %v2668
                  %v2670 = vld [vmem:[%s2622 + $0x5c] sm:$0xf]
                  %2671 = vst [vmem:[%s2623 + $0x5c] sm:$0xf] %v2670
                  %v2672 = vld [vmem:[%s2622 + $0x60] sm:$0xf]
                  %2673 = vst [vmem:[%s2623 + $0x60] sm:$0xf] %v2672
                  %v2674 = vld [vmem:[%s2622 + $0x64] sm:$0xf]
                  %2675 = vst [vmem:[%s2623 + $0x64] sm:$0xf] %v2674
                  %v2676 = vld [vmem:[%s2622 + $0x68] sm:$0xf]
                  %2677 = vst [vmem:[%s2623 + $0x68] sm:$0xf] %v2676
                  %v2678 = vld [vmem:[%s2622 + $0x6c] sm:$0xf]
                  %2679 = vst [vmem:[%s2623 + $0x6c] sm:$0xf] %v2678
                  %v2680 = vld [vmem:[%s2622 + $0x70] sm:$0xf]
                  %2681 = vst [vmem:[%s2623 + $0x70] sm:$0xf] %v2680
                  %v2682 = vld [vmem:[%s2622 + $0x74] sm:$0xf]
                  %2683 = vst [vmem:[%s2623 + $0x74] sm:$0xf] %v2682
                  %v2684 = vld [vmem:[%s2622 + $0x78] sm:$0xf]
                  %2685 = vst [vmem:[%s2623 + $0x78] sm:$0xf] %v2684
                  %v2686 = vld [vmem:[%s2622 + $0x7c] sm:$0xf]
                  %2687 = vst [vmem:[%s2623 + $0x7c] sm:$0xf] %v2686
                  %v2688 = vld [vmem:[%s2622 + $0x80] sm:$0xf]
                  %2689 = vst [vmem:[%s2623 + $0x80] sm:$0xf] %v2688
                  %v2690 = vld [vmem:[%s2622 + $0x84] sm:$0xf]
                  %2691 = vst [vmem:[%s2623 + $0x84] sm:$0xf] %v2690
                  %v2692 = vld [vmem:[%s2622 + $0x88] sm:$0xf]
                  %2693 = vst [vmem:[%s2623 + $0x88] sm:$0xf] %v2692
                  %v2694 = vld [vmem:[%s2622 + $0x8c] sm:$0xf]
                  %2695 = vst [vmem:[%s2623 + $0x8c] sm:$0xf] %v2694
                  %v2696 = vld [vmem:[%s2622 + $0x90] sm:$0xf]
                  %2697 = vst [vmem:[%s2623 + $0x90] sm:$0xf] %v2696
                  %v2698 = vld [vmem:[%s2622 + $0x94] sm:$0xf]
                  %2699 = vst [vmem:[%s2623 + $0x94] sm:$0xf] %v2698
                  %v2700 = vld [vmem:[%s2622 + $0x98] sm:$0xf]
                  %2701 = vst [vmem:[%s2623 + $0x98] sm:$0xf] %v2700
                  %v2702 = vld [vmem:[%s2622 + $0x9c] sm:$0xf]
                  %2703 = vst [vmem:[%s2623 + $0x9c] sm:$0xf] %v2702
                  %v2704 = vld [vmem:[%s2622 + $0xa0] sm:$0xf]
                  %2705 = vst [vmem:[%s2623 + $0xa0] sm:$0xf] %v2704
                  %v2706 = vld [vmem:[%s2622 + $0xa4] sm:$0xf]
                  %2707 = vst [vmem:[%s2623 + $0xa4] sm:$0xf] %v2706
                  %v2708 = vld [vmem:[%s2622 + $0xa8] sm:$0xf]
                  %2709 = vst [vmem:[%s2623 + $0xa8] sm:$0xf] %v2708
                  %v2710 = vld [vmem:[%s2622 + $0xac] sm:$0xf]
                  %2711 = vst [vmem:[%s2623 + $0xac] sm:$0xf] %v2710
                  %v2712 = vld [vmem:[%s2622 + $0xb0] sm:$0xf]
                  %2713 = vst [vmem:[%s2623 + $0xb0] sm:$0xf] %v2712
                  %v2714 = vld [vmem:[%s2622 + $0xb4] sm:$0xf]
                  %2715 = vst [vmem:[%s2623 + $0xb4] sm:$0xf] %v2714
                  %v2716 = vld [vmem:[%s2622 + $0xb8] sm:$0xf]
                  %2717 = vst [vmem:[%s2623 + $0xb8] sm:$0xf] %v2716
                  %v2718 = vld [vmem:[%s2622 + $0xbc] sm:$0xf]
                  %2719 = vst [vmem:[%s2623 + $0xbc] sm:$0xf] %v2718
                  %v2720 = vld [vmem:[%s2622 + $0xc0] sm:$0xf]
                  %2721 = vst [vmem:[%s2623 + $0xc0] sm:$0xf] %v2720
                  %v2722 = vld [vmem:[%s2622 + $0xc4] sm:$0xf]
                  %2723 = vst [vmem:[%s2623 + $0xc4] sm:$0xf] %v2722
                  %v2724 = vld [vmem:[%s2622 + $0xc8] sm:$0xf]
                  %2725 = vst [vmem:[%s2623 + $0xc8] sm:$0xf] %v2724
                  %v2726 = vld [vmem:[%s2622 + $0xcc] sm:$0xf]
                  %2727 = vst [vmem:[%s2623 + $0xcc] sm:$0xf] %v2726
                  %v2728 = vld [vmem:[%s2622 + $0xd0] sm:$0xf]
                  %2729 = vst [vmem:[%s2623 + $0xd0] sm:$0xf] %v2728
                  %v2730 = vld [vmem:[%s2622 + $0xd4] sm:$0xf]
                  %2731 = vst [vmem:[%s2623 + $0xd4] sm:$0xf] %v2730
                  %v2732 = vld [vmem:[%s2622 + $0xd8] sm:$0xf]
                  %2733 = vst [vmem:[%s2623 + $0xd8] sm:$0xf] %v2732
                  %v2734 = vld [vmem:[%s2622 + $0xdc] sm:$0xf]
                  %2735 = vst [vmem:[%s2623 + $0xdc] sm:$0xf] %v2734
                  %v2736 = vld [vmem:[%s2622 + $0xe0] sm:$0xf]
                  %2737 = vst [vmem:[%s2623 + $0xe0] sm:$0xf] %v2736
                  %v2738 = vld [vmem:[%s2622 + $0xe4] sm:$0xf]
                  %2739 = vst [vmem:[%s2623 + $0xe4] sm:$0xf] %v2738
                  %v2740 = vld [vmem:[%s2622 + $0xe8] sm:$0xf]
                  %2741 = vst [vmem:[%s2623 + $0xe8] sm:$0xf] %v2740
                  %v2742 = vld [vmem:[%s2622 + $0xec] sm:$0xf]
                  %2743 = vst [vmem:[%s2623 + $0xec] sm:$0xf] %v2742
                  %v2744 = vld [vmem:[%s2622 + $0xf0] sm:$0xf]
                  %2745 = vst [vmem:[%s2623 + $0xf0] sm:$0xf] %v2744
                  %v2746 = vld [vmem:[%s2622 + $0xf4] sm:$0xf]
                  %2747 = vst [vmem:[%s2623 + $0xf4] sm:$0xf] %v2746
                  %v2748 = vld [vmem:[%s2622 + $0xf8] sm:$0xf]
                  %2749 = vst [vmem:[%s2623 + $0xf8] sm:$0xf] %v2748
                  %v2750 = vld [vmem:[%s2622 + $0xfc] sm:$0xf]
                  %2751 = vst [vmem:[%s2623 + $0xfc] sm:$0xf] %v2750
                  %s2752 = sadd.s32 1, %s2621
                  %p2753 = scmp.ge.s32.totalorder %s2752, %s2614
                  %s2754 = scalar_select %p2753, 0, %s2752
                  %s2755 = smul.u32 %s2754, 256
                  %s2756 = smul.u32 %s2754, 256
                  %s2757 = scalar_lea.vmem %s2421, %s2755 [#allocation2]
                  %s2758 = scalar_lea.vmem %s2432, %s2756
                $region71: #{drqn_forward.6} parent=65 // loop_footer
                  %s2618 = sadd.s32 %s2616, 1
                $region72: #{drqn_forward.6} parent=65 // loop_footer_branch
                  %2615 = sbr.rel target = $region68
                $region73: #{drqn_forward.6} parent=65 // loop_exit
                  _
                %s2759 = sshrl.u32 %s2428, 6
                %s2760 = sand.u32 %s2428, 63
                %s2761 = smul.u32 %s2759, 64
                %s2762 = smul.u32 4, %s2761
                %s2763 = scalar_lea.vmem %s2421, %s2762 [#allocation2]
                %s2764 = smul.u32 4, %s2761
                %s2765 = scalar_lea.vmem %s2432, %s2764
                // While loop
                $region74: #{drqn_forward.6} parent=65 // loop_pre_header
                  _
                $region75: #{drqn_forward.6} parent=65 // loop_header
                  %s2767 = sphi 0, %s2769
                  %p2768 = scmp.ge.s32.totalorder %s2767, %s2760
                  %s2772 = sphi 0, %s2779
                  %s2773 = sphi %s2763, %s2782
                  %s2774 = sphi %s2765, %s2783
                $region76: #{drqn_forward.6} parent=65 // loop_header_branch
                  %2771 = sbr.rel (%p2768) target = $region80
                $region77: #{drqn_forward.6} parent=65 // loop_body
                  %v2775 = vld [vmem:[%s2773] sm:$0xf]
                  %2776 = vst [vmem:[%s2774] sm:$0xf] %v2775
                  %s2777 = sadd.s32 1, %s2772
                  %p2778 = scmp.ge.s32.totalorder %s2777, %s2760
                  %s2779 = scalar_select %p2778, 0, %s2777
                  %s2780 = smul.u32 %s2779, 4
                  %s2781 = smul.u32 %s2779, 4
                  %s2782 = scalar_lea.vmem %s2763, %s2780 [#allocation2]
                  %s2783 = scalar_lea.vmem %s2765, %s2781
                $region78: #{drqn_forward.6} parent=65 // loop_footer
                  %s2769 = sadd.s32 %s2767, 1
                $region79: #{drqn_forward.6} parent=65 // loop_footer_branch
                  %2766 = sbr.rel target = $region75
                $region80: #{drqn_forward.6} parent=65 // loop_exit
                  _
              $region66: #{drqn_forward.6} parent=43 // pred_fallthru
                _
            $region44: #{drqn_forward.6} parent=39 // pred_fallthru
              _
            // Predicated region
            $region45: #{drqn_forward.6} parent=39 // pred_check
              _
            $region46: #{drqn_forward.6} parent=39 // pred_check_branch
              %2439 = sbr.rel (0) target = $region48
            $region47: #{drqn_forward.6} parent=39 // pred_region
              %s2441 = sshrl.u32 %s2428, 6
              // While loop
              $region49: #{drqn_forward.6} parent=47 // loop_pre_header
                _
              $region50: #{drqn_forward.6} parent=47 // loop_header
                %s2443 = sphi 0, %s2445
                %p2444 = scmp.ge.s32.totalorder %s2443, %s2441
                %s2448 = sphi 0, %s2581
                %s2449 = sphi %s2421, %s2584
                %s2450 = sphi %s2432, %s2585
              $region51: #{drqn_forward.6} parent=47 // loop_header_branch
                %2447 = sbr.rel (%p2444) target = $region55
              $region52: #{drqn_forward.6} parent=47 // loop_body
                %v2451 = vld [vmem:[%s2449] sm:$0xf]
                %2452 = vst [vmem:[%s2450] sm:$0xf] %v2451
                %v2453 = vld [vmem:[%s2449 + $0x4] sm:$0xf]
                %2454 = vst [vmem:[%s2450 + $0x4] sm:$0xf] %v2453
                %v2455 = vld [vmem:[%s2449 + $0x8] sm:$0xf]
                %2456 = vst [vmem:[%s2450 + $0x8] sm:$0xf] %v2455
                %v2457 = vld [vmem:[%s2449 + $0xc] sm:$0xf]
                %2458 = vst [vmem:[%s2450 + $0xc] sm:$0xf] %v2457
                %v2459 = vld [vmem:[%s2449 + $0x10] sm:$0xf]
                %2460 = vst [vmem:[%s2450 + $0x10] sm:$0xf] %v2459
                %v2461 = vld [vmem:[%s2449 + $0x14] sm:$0xf]
                %2462 = vst [vmem:[%s2450 + $0x14] sm:$0xf] %v2461
                %v2463 = vld [vmem:[%s2449 + $0x18] sm:$0xf]
                %2464 = vst [vmem:[%s2450 + $0x18] sm:$0xf] %v2463
                %v2465 = vld [vmem:[%s2449 + $0x1c] sm:$0xf]
                %2466 = vst [vmem:[%s2450 + $0x1c] sm:$0xf] %v2465
                %v2467 = vld [vmem:[%s2449 + $0x20] sm:$0xf]
                %2468 = vst [vmem:[%s2450 + $0x20] sm:$0xf] %v2467
                %v2469 = vld [vmem:[%s2449 + $0x24] sm:$0xf]
                %2470 = vst [vmem:[%s2450 + $0x24] sm:$0xf] %v2469
                %v2471 = vld [vmem:[%s2449 + $0x28] sm:$0xf]
                %2472 = vst [vmem:[%s2450 + $0x28] sm:$0xf] %v2471
                %v2473 = vld [vmem:[%s2449 + $0x2c] sm:$0xf]
                %2474 = vst [vmem:[%s2450 + $0x2c] sm:$0xf] %v2473
                %v2475 = vld [vmem:[%s2449 + $0x30] sm:$0xf]
                %2476 = vst [vmem:[%s2450 + $0x30] sm:$0xf] %v2475
                %v2477 = vld [vmem:[%s2449 + $0x34] sm:$0xf]
                %2478 = vst [vmem:[%s2450 + $0x34] sm:$0xf] %v2477
                %v2479 = vld [vmem:[%s2449 + $0x38] sm:$0xf]
                %2480 = vst [vmem:[%s2450 + $0x38] sm:$0xf] %v2479
                %v2481 = vld [vmem:[%s2449 + $0x3c] sm:$0xf]
                %2482 = vst [vmem:[%s2450 + $0x3c] sm:$0xf] %v2481
                %v2483 = vld [vmem:[%s2449 + $0x40] sm:$0xf]
                %2484 = vst [vmem:[%s2450 + $0x40] sm:$0xf] %v2483
                %v2485 = vld [vmem:[%s2449 + $0x44] sm:$0xf]
                %2486 = vst [vmem:[%s2450 + $0x44] sm:$0xf] %v2485
                %v2487 = vld [vmem:[%s2449 + $0x48] sm:$0xf]
                %2488 = vst [vmem:[%s2450 + $0x48] sm:$0xf] %v2487
                %v2489 = vld [vmem:[%s2449 + $0x4c] sm:$0xf]
                %2490 = vst [vmem:[%s2450 + $0x4c] sm:$0xf] %v2489
                %v2491 = vld [vmem:[%s2449 + $0x50] sm:$0xf]
                %2492 = vst [vmem:[%s2450 + $0x50] sm:$0xf] %v2491
                %v2493 = vld [vmem:[%s2449 + $0x54] sm:$0xf]
                %2494 = vst [vmem:[%s2450 + $0x54] sm:$0xf] %v2493
                %v2495 = vld [vmem:[%s2449 + $0x58] sm:$0xf]
                %2496 = vst [vmem:[%s2450 + $0x58] sm:$0xf] %v2495
                %v2497 = vld [vmem:[%s2449 + $0x5c] sm:$0xf]
                %2498 = vst [vmem:[%s2450 + $0x5c] sm:$0xf] %v2497
                %v2499 = vld [vmem:[%s2449 + $0x60] sm:$0xf]
                %2500 = vst [vmem:[%s2450 + $0x60] sm:$0xf] %v2499
                %v2501 = vld [vmem:[%s2449 + $0x64] sm:$0xf]
                %2502 = vst [vmem:[%s2450 + $0x64] sm:$0xf] %v2501
                %v2503 = vld [vmem:[%s2449 + $0x68] sm:$0xf]
                %2504 = vst [vmem:[%s2450 + $0x68] sm:$0xf] %v2503
                %v2505 = vld [vmem:[%s2449 + $0x6c] sm:$0xf]
                %2506 = vst [vmem:[%s2450 + $0x6c] sm:$0xf] %v2505
                %v2507 = vld [vmem:[%s2449 + $0x70] sm:$0xf]
                %2508 = vst [vmem:[%s2450 + $0x70] sm:$0xf] %v2507
                %v2509 = vld [vmem:[%s2449 + $0x74] sm:$0xf]
                %2510 = vst [vmem:[%s2450 + $0x74] sm:$0xf] %v2509
                %v2511 = vld [vmem:[%s2449 + $0x78] sm:$0xf]
                %2512 = vst [vmem:[%s2450 + $0x78] sm:$0xf] %v2511
                %v2513 = vld [vmem:[%s2449 + $0x7c] sm:$0xf]
                %2514 = vst [vmem:[%s2450 + $0x7c] sm:$0xf] %v2513
                %v2515 = vld [vmem:[%s2449 + $0x80] sm:$0xf]
                %2516 = vst [vmem:[%s2450 + $0x80] sm:$0xf] %v2515
                %v2517 = vld [vmem:[%s2449 + $0x84] sm:$0xf]
                %2518 = vst [vmem:[%s2450 + $0x84] sm:$0xf] %v2517
                %v2519 = vld [vmem:[%s2449 + $0x88] sm:$0xf]
                %2520 = vst [vmem:[%s2450 + $0x88] sm:$0xf] %v2519
                %v2521 = vld [vmem:[%s2449 + $0x8c] sm:$0xf]
                %2522 = vst [vmem:[%s2450 + $0x8c] sm:$0xf] %v2521
                %v2523 = vld [vmem:[%s2449 + $0x90] sm:$0xf]
                %2524 = vst [vmem:[%s2450 + $0x90] sm:$0xf] %v2523
                %v2525 = vld [vmem:[%s2449 + $0x94] sm:$0xf]
                %2526 = vst [vmem:[%s2450 + $0x94] sm:$0xf] %v2525
                %v2527 = vld [vmem:[%s2449 + $0x98] sm:$0xf]
                %2528 = vst [vmem:[%s2450 + $0x98] sm:$0xf] %v2527
                %v2529 = vld [vmem:[%s2449 + $0x9c] sm:$0xf]
                %2530 = vst [vmem:[%s2450 + $0x9c] sm:$0xf] %v2529
                %v2531 = vld [vmem:[%s2449 + $0xa0] sm:$0xf]
                %2532 = vst [vmem:[%s2450 + $0xa0] sm:$0xf] %v2531
                %v2533 = vld [vmem:[%s2449 + $0xa4] sm:$0xf]
                %2534 = vst [vmem:[%s2450 + $0xa4] sm:$0xf] %v2533
                %v2535 = vld [vmem:[%s2449 + $0xa8] sm:$0xf]
                %2536 = vst [vmem:[%s2450 + $0xa8] sm:$0xf] %v2535
                %v2537 = vld [vmem:[%s2449 + $0xac] sm:$0xf]
                %2538 = vst [vmem:[%s2450 + $0xac] sm:$0xf] %v2537
                %v2539 = vld [vmem:[%s2449 + $0xb0] sm:$0xf]
                %2540 = vst [vmem:[%s2450 + $0xb0] sm:$0xf] %v2539
                %v2541 = vld [vmem:[%s2449 + $0xb4] sm:$0xf]
                %2542 = vst [vmem:[%s2450 + $0xb4] sm:$0xf] %v2541
                %v2543 = vld [vmem:[%s2449 + $0xb8] sm:$0xf]
                %2544 = vst [vmem:[%s2450 + $0xb8] sm:$0xf] %v2543
                %v2545 = vld [vmem:[%s2449 + $0xbc] sm:$0xf]
                %2546 = vst [vmem:[%s2450 + $0xbc] sm:$0xf] %v2545
                %v2547 = vld [vmem:[%s2449 + $0xc0] sm:$0xf]
                %2548 = vst [vmem:[%s2450 + $0xc0] sm:$0xf] %v2547
                %v2549 = vld [vmem:[%s2449 + $0xc4] sm:$0xf]
                %2550 = vst [vmem:[%s2450 + $0xc4] sm:$0xf] %v2549
                %v2551 = vld [vmem:[%s2449 + $0xc8] sm:$0xf]
                %2552 = vst [vmem:[%s2450 + $0xc8] sm:$0xf] %v2551
                %v2553 = vld [vmem:[%s2449 + $0xcc] sm:$0xf]
                %2554 = vst [vmem:[%s2450 + $0xcc] sm:$0xf] %v2553
                %v2555 = vld [vmem:[%s2449 + $0xd0] sm:$0xf]
                %2556 = vst [vmem:[%s2450 + $0xd0] sm:$0xf] %v2555
                %v2557 = vld [vmem:[%s2449 + $0xd4] sm:$0xf]
                %2558 = vst [vmem:[%s2450 + $0xd4] sm:$0xf] %v2557
                %v2559 = vld [vmem:[%s2449 + $0xd8] sm:$0xf]
                %2560 = vst [vmem:[%s2450 + $0xd8] sm:$0xf] %v2559
                %v2561 = vld [vmem:[%s2449 + $0xdc] sm:$0xf]
                %2562 = vst [vmem:[%s2450 + $0xdc] sm:$0xf] %v2561
                %v2563 = vld [vmem:[%s2449 + $0xe0] sm:$0xf]
                %2564 = vst [vmem:[%s2450 + $0xe0] sm:$0xf] %v2563
                %v2565 = vld [vmem:[%s2449 + $0xe4] sm:$0xf]
                %2566 = vst [vmem:[%s2450 + $0xe4] sm:$0xf] %v2565
                %v2567 = vld [vmem:[%s2449 + $0xe8] sm:$0xf]
                %2568 = vst [vmem:[%s2450 + $0xe8] sm:$0xf] %v2567
                %v2569 = vld [vmem:[%s2449 + $0xec] sm:$0xf]
                %2570 = vst [vmem:[%s2450 + $0xec] sm:$0xf] %v2569
                %v2571 = vld [vmem:[%s2449 + $0xf0] sm:$0xf]
                %2572 = vst [vmem:[%s2450 + $0xf0] sm:$0xf] %v2571
                %v2573 = vld [vmem:[%s2449 + $0xf4] sm:$0xf]
                %2574 = vst [vmem:[%s2450 + $0xf4] sm:$0xf] %v2573
                %v2575 = vld [vmem:[%s2449 + $0xf8] sm:$0xf]
                %2576 = vst [vmem:[%s2450 + $0xf8] sm:$0xf] %v2575
                %v2577 = vld [vmem:[%s2449 + $0xfc] sm:$0xf]
                %2578 = vst [vmem:[%s2450 + $0xfc] sm:$0xf] %v2577
                %s2579 = sadd.s32 1, %s2448
                %p2580 = scmp.ge.s32.totalorder %s2579, %s2441
                %s2581 = scalar_select %p2580, 0, %s2579
                %s2582 = smul.u32 %s2581, 256
                %s2583 = smul.u32 %s2581, 256
                %s2584 = scalar_lea.vmem %s2421, %s2582 [#allocation2]
                %s2585 = scalar_lea.vmem %s2432, %s2583
              $region53: #{drqn_forward.6} parent=47 // loop_footer
                %s2445 = sadd.s32 %s2443, 1
              $region54: #{drqn_forward.6} parent=47 // loop_footer_branch
                %2442 = sbr.rel target = $region50
              $region55: #{drqn_forward.6} parent=47 // loop_exit
                _
              %s2586 = sshrl.u32 %s2428, 6
              %s2587 = sand.u32 %s2428, 63
              %s2588 = smul.u32 %s2586, 64
              %s2589 = smul.u32 4, %s2588
              %s2590 = scalar_lea.vmem %s2421, %s2589 [#allocation2]
              %s2591 = smul.u32 4, %s2588
              %s2592 = scalar_lea.vmem %s2432, %s2591
              // While loop
              $region56: #{drqn_forward.6} parent=47 // loop_pre_header
                _
              $region57: #{drqn_forward.6} parent=47 // loop_header
                %s2594 = sphi 0, %s2596
                %p2595 = scmp.ge.s32.totalorder %s2594, %s2587
                %s2599 = sphi 0, %s2606
                %s2600 = sphi %s2590, %s2609
                %s2601 = sphi %s2592, %s2610
              $region58: #{drqn_forward.6} parent=47 // loop_header_branch
                %2598 = sbr.rel (%p2595) target = $region62
              $region59: #{drqn_forward.6} parent=47 // loop_body
                %v2602 = vld [vmem:[%s2600] sm:$0xf]
                %2603 = vst [vmem:[%s2601] sm:$0xf] %v2602
                %s2604 = sadd.s32 1, %s2599
                %p2605 = scmp.ge.s32.totalorder %s2604, %s2587
                %s2606 = scalar_select %p2605, 0, %s2604
                %s2607 = smul.u32 %s2606, 4
                %s2608 = smul.u32 %s2606, 4
                %s2609 = scalar_lea.vmem %s2590, %s2607 [#allocation2]
                %s2610 = scalar_lea.vmem %s2592, %s2608
              $region60: #{drqn_forward.6} parent=47 // loop_footer
                %s2596 = sadd.s32 %s2594, 1
              $region61: #{drqn_forward.6} parent=47 // loop_footer_branch
                %2593 = sbr.rel target = $region57
              $region62: #{drqn_forward.6} parent=47 // loop_exit
                _
            $region48: #{drqn_forward.6} parent=39 // pred_fallthru
              _
          $region40: #{drqn_forward.6} parent=35 // pred_fallthru
            _
          %2784 = vnop
        $region36: #{drqn_forward.6} parent=31 // pred_fallthru
          _
      $region32: #{drqn_forward.6} parent=5 // pred_fallthru
        _
      %p2785 = scmp.le.s32.totalorder 2, %s9
      // Predicated region
      $region81: #{drqn_forward.6} parent=5 // pred_check
        %p2786 = pneg %p2785
      $region82: #{drqn_forward.6} parent=5 // pred_check_branch
        %2788 = sbr.rel (%p2786) target = $region84
      $region83: #{drqn_forward.6} parent=5 // pred_region
        %s2789 = ssub.s32 %s9, 2
        // Predicated region
        $region85: #{drqn_forward.6} parent=83 // pred_check
          %p2790 = pneg %p106
        $region86: #{drqn_forward.6} parent=83 // pred_check_branch
          %2792 = sbr.rel (%p2790) target = $region88
        $region87: #{drqn_forward.6} parent=83 // pred_region
          %s2793 = sand.u32 %s91, 1
          %s2794 = sand.u32 %s91, 1
          %s2795 = smul.addr %s2794, 512
          %s2796 = scalar_lea.vmem [#allocation2], %s2795
        $region88: #{drqn_forward.6} parent=83 // pred_fallthru
          _
      $region84: #{drqn_forward.6} parent=5 // pred_fallthru
        _
    $region6: #{drqn_forward.6} parent=1 // loop_footer
      %s13 = sadd.s32 1, %s9
    $region7: #{drqn_forward.6} parent=1 // loop_footer_branch
      %8 = sbr.rel target = $region3
    $region8: #{drqn_forward.6} parent=1 // loop_exit
      _

// kernel: drqn_forward.7
$region0: #{drqn_forward.7}
  #allocation0 [shape = 'u32[]', space=smem, size = 0x4, offset = 0x4, fixed_abs, tag = 'smem constant byte address 0x4 - core index']
  #allocation1 [shape = 'u32[144,128]{1,0:T(1,128)}', space=vmem, size = 0x12000, scoped, tag = 'internal scratch']
  %s0 = inlined_call_operand.vmem [shape: bf16[288,512], index: 0, kind: input, shape index: {}]
  %s1 = inlined_call_operand.vmem [shape: bf16[512,64], index: 1, kind: input, shape index: {}]
  %s2 = inlined_call_operand.vmem [shape: f32[1,64], index: 2, kind: input, shape index: {}]
  %s3 = inlined_call_operand.vmem [shape: bf16[288,64], index: 3, kind: output, shape index: {}]
  %s4 = sld [smem:[#allocation0]]
  $region22: #{drqn_forward.7} parent=0
    _
  %s6 = ssub.s32 1, %s4
  %s7 = scalar_select 0, %s6, %s4
  // Predicated region
  $region2: #{drqn_forward.7} parent=0 // pred_check
    _
  $region3: #{drqn_forward.7} parent=0 // pred_check_branch
    %9 = sbr.rel (0) target = $region5
  $region4: #{drqn_forward.7} parent=0 // pred_region
    _
  $region5: #{drqn_forward.7} parent=0 // pred_fallthru
    _
  // Predicated region
  $region6: #{drqn_forward.7} parent=0 // pred_check
    _
  $region7: #{drqn_forward.7} parent=0 // pred_check_branch
    %11 = sbr.rel (0) target = $region9
  $region8: #{drqn_forward.7} parent=0 // pred_region
    _
  $region9: #{drqn_forward.7} parent=0 // pred_fallthru
    _
  // Predicated region
  $region10: #{drqn_forward.7} parent=0 // pred_check
    _
  $region11: #{drqn_forward.7} parent=0 // pred_check_branch
    %13 = sbr.rel (0) target = $region13
  $region12: #{drqn_forward.7} parent=0 // pred_region
    _
  $region13: #{drqn_forward.7} parent=0 // pred_fallthru
    _
  %v15 = vld [vmem:[%s0] sm:$0xff]
  %v16 = vld [vmem:[%s0 + $0x8] sm:$0xff]
  %v17 = vld [vmem:[%s0 + $0x10] sm:$0xff]
  %v18 = vld [vmem:[%s0 + $0x18] sm:$0xff]
  %v19 = vld [vmem:[%s0 + $0x20] sm:$0xff]
  %v20 = vld [vmem:[%s0 + $0x28] sm:$0xff]
  %v21 = vld [vmem:[%s0 + $0x30] sm:$0xff]
  %v22 = vld [vmem:[%s0 + $0x38] sm:$0xff]
  %v23 = vld [vmem:[%s0 + $0x40] sm:$0xff]
  %v24 = vld [vmem:[%s0 + $0x48] sm:$0xff]
  %v25 = vld [vmem:[%s0 + $0x50] sm:$0xff]
  %v26 = vld [vmem:[%s0 + $0x58] sm:$0xff]
  %v27 = vld [vmem:[%s0 + $0x60] sm:$0xff]
  %v28 = vld [vmem:[%s0 + $0x68] sm:$0xff]
  %v29 = vld [vmem:[%s0 + $0x70] sm:$0xff]
  %v30 = vld [vmem:[%s0 + $0x78] sm:$0xff]
  %v31 = vld [vmem:[%s0 + $0x80] sm:$0xff]
  %v32 = vld [vmem:[%s0 + $0x88] sm:$0xff]
  %v33 = vld [vmem:[%s0 + $0x90] sm:$0xff]
  %v34 = vld [vmem:[%s0 + $0x98] sm:$0xff]
  %v35 = vld [vmem:[%s0 + $0xa0] sm:$0xff]
  %v36 = vld [vmem:[%s0 + $0xa8] sm:$0xff]
  %v37 = vld [vmem:[%s0 + $0xb0] sm:$0xff]
  %v38 = vld [vmem:[%s0 + $0xb8] sm:$0xff]
  %v39 = vld [vmem:[%s0 + $0xc0] sm:$0xff]
  %v40 = vld [vmem:[%s0 + $0xc8] sm:$0xff]
  %v41 = vld [vmem:[%s0 + $0xd0] sm:$0xff]
  %v42 = vld [vmem:[%s0 + $0xd8] sm:$0xff]
  %v43 = vld [vmem:[%s0 + $0xe0] sm:$0xff]
  %v44 = vld [vmem:[%s0 + $0xe8] sm:$0xff]
  %v45 = vld [vmem:[%s0 + $0xf0] sm:$0xff]
  %v46 = vld [vmem:[%s0 + $0xf8] sm:$0xff]
  %v47 = vld [vmem:[%s0 + $0x100] sm:$0xff]
  %v48 = vld [vmem:[%s0 + $0x108] sm:$0xff]
  %v49 = vld [vmem:[%s0 + $0x110] sm:$0xff]
  %v50 = vld [vmem:[%s0 + $0x118] sm:$0xff]
  %v51 = vld [vmem:[%s0 + $0x120] sm:$0xff]
  %v52 = vld [vmem:[%s0 + $0x128] sm:$0xff]
  %v53 = vld [vmem:[%s0 + $0x130] sm:$0xff]
  %v54 = vld [vmem:[%s0 + $0x138] sm:$0xff]
  %v55 = vld [vmem:[%s0 + $0x140] sm:$0xff]
  %v56 = vld [vmem:[%s0 + $0x148] sm:$0xff]
  %v57 = vld [vmem:[%s0 + $0x150] sm:$0xff]
  %v58 = vld [vmem:[%s0 + $0x158] sm:$0xff]
  %v59 = vld [vmem:[%s0 + $0x160] sm:$0xff]
  %v60 = vld [vmem:[%s0 + $0x168] sm:$0xff]
  %v61 = vld [vmem:[%s0 + $0x170] sm:$0xff]
  %v62 = vld [vmem:[%s0 + $0x178] sm:$0xff]
  %v63 = vld [vmem:[%s0 + $0x180] sm:$0xff]
  %v64 = vld [vmem:[%s0 + $0x188] sm:$0xff]
  %v65 = vld [vmem:[%s0 + $0x190] sm:$0xff]
  %v66 = vld [vmem:[%s0 + $0x198] sm:$0xff]
  %v67 = vld [vmem:[%s0 + $0x1a0] sm:$0xff]
  %v68 = vld [vmem:[%s0 + $0x1a8] sm:$0xff]
  %v69 = vld [vmem:[%s0 + $0x1b0] sm:$0xff]
  %v70 = vld [vmem:[%s0 + $0x1b8] sm:$0xff]
  %v71 = vld [vmem:[%s0 + $0x1c0] sm:$0xff]
  %v72 = vld [vmem:[%s0 + $0x1c8] sm:$0xff]
  %v73 = vld [vmem:[%s0 + $0x1d0] sm:$0xff]
  %v74 = vld [vmem:[%s0 + $0x1d8] sm:$0xff]
  %v75 = vld [vmem:[%s0 + $0x1e0] sm:$0xff]
  %v76 = vld [vmem:[%s0 + $0x1e8] sm:$0xff]
  %v77 = vld [vmem:[%s0 + $0x1f0] sm:$0xff]
  %v78 = vld [vmem:[%s0 + $0x1f8] sm:$0xff]
  %v79 = vld [vmem:[%s0 + $0x200] sm:$0xff]
  %v80 = vld [vmem:[%s0 + $0x208] sm:$0xff]
  %v81 = vld [vmem:[%s0 + $0x210] sm:$0xff]
  %v82 = vld [vmem:[%s0 + $0x218] sm:$0xff]
  %v83 = vld [vmem:[%s0 + $0x220] sm:$0xff]
  %v84 = vld [vmem:[%s0 + $0x228] sm:$0xff]
  %v85 = vld [vmem:[%s0 + $0x230] sm:$0xff]
  %v86 = vld [vmem:[%s0 + $0x238] sm:$0xff]
  %v87 = vld [vmem:[%s1] sm:$0xf]
  %v88 = vld [vmem:[%s1 + $0x4] sm:$0xf]
  %v89 = vld [vmem:[%s1 + $0x8] sm:$0xf]
  %v90 = vld [vmem:[%s1 + $0xc] sm:$0xf]
  %v91 = vld [vmem:[%s1 + $0x10] sm:$0xf]
  %v92 = vld [vmem:[%s1 + $0x14] sm:$0xf]
  %v93 = vld [vmem:[%s1 + $0x18] sm:$0xf]
  %v94 = vld [vmem:[%s1 + $0x1c] sm:$0xf]
  %v95 = vld [vmem:[%s1 + $0x20] sm:$0xf]
  %v96 = vld [vmem:[%s1 + $0x24] sm:$0xf]
  %v97 = vld [vmem:[%s1 + $0x28] sm:$0xf]
  %v98 = vld [vmem:[%s1 + $0x2c] sm:$0xf]
  %v99 = vld [vmem:[%s1 + $0x30] sm:$0xf]
  %v100 = vld [vmem:[%s1 + $0x34] sm:$0xf]
  %v101 = vld [vmem:[%s1 + $0x38] sm:$0xf]
  %v102 = vld [vmem:[%s1 + $0x3c] sm:$0xf]
  %v103 = vld [vmem:[%s1 + $0x40] sm:$0xf]
  %v104 = vld [vmem:[%s1 + $0x44] sm:$0xf]
  %v105 = vld [vmem:[%s1 + $0x48] sm:$0xf]
  %v106 = vld [vmem:[%s1 + $0x4c] sm:$0xf]
  %v107 = vld [vmem:[%s1 + $0x50] sm:$0xf]
  %v108 = vld [vmem:[%s1 + $0x54] sm:$0xf]
  %v109 = vld [vmem:[%s1 + $0x58] sm:$0xf]
  %v110 = vld [vmem:[%s1 + $0x5c] sm:$0xf]
  %v111 = vld [vmem:[%s1 + $0x60] sm:$0xf]
  %v112 = vld [vmem:[%s1 + $0x64] sm:$0xf]
  %v113 = vld [vmem:[%s1 + $0x68] sm:$0xf]
  %v114 = vld [vmem:[%s1 + $0x6c] sm:$0xf]
  %v115 = vld [vmem:[%s1 + $0x70] sm:$0xf]
  %v116 = vld [vmem:[%s1 + $0x74] sm:$0xf]
  %v117 = vld [vmem:[%s1 + $0x78] sm:$0xf]
  %v118 = vld [vmem:[%s1 + $0x7c] sm:$0xf]
  %v119 = vld [vmem:[%s1 + $0x80] sm:$0xf]
  %v120 = vld [vmem:[%s1 + $0x84] sm:$0xf]
  %v121 = vld [vmem:[%s1 + $0x88] sm:$0xf]
  %v122 = vld [vmem:[%s1 + $0x8c] sm:$0xf]
  %v123 = vld [vmem:[%s1 + $0x90] sm:$0xf]
  %v124 = vld [vmem:[%s1 + $0x94] sm:$0xf]
  %v125 = vld [vmem:[%s1 + $0x98] sm:$0xf]
  %v126 = vld [vmem:[%s1 + $0x9c] sm:$0xf]
  %v127 = vld [vmem:[%s1 + $0xa0] sm:$0xf]
  %v128 = vld [vmem:[%s1 + $0xa4] sm:$0xf]
  %v129 = vld [vmem:[%s1 + $0xa8] sm:$0xf]
  %v130 = vld [vmem:[%s1 + $0xac] sm:$0xf]
  %v131 = vld [vmem:[%s1 + $0xb0] sm:$0xf]
  %v132 = vld [vmem:[%s1 + $0xb4] sm:$0xf]
  %v133 = vld [vmem:[%s1 + $0xb8] sm:$0xf]
  %v134 = vld [vmem:[%s1 + $0xbc] sm:$0xf]
  %v135 = vld [vmem:[%s1 + $0xc0] sm:$0xf]
  %v136 = vld [vmem:[%s1 + $0xc4] sm:$0xf]
  %v137 = vld [vmem:[%s1 + $0xc8] sm:$0xf]
  %v138 = vld [vmem:[%s1 + $0xcc] sm:$0xf]
  %v139 = vld [vmem:[%s1 + $0xd0] sm:$0xf]
  %v140 = vld [vmem:[%s1 + $0xd4] sm:$0xf]
  %v141 = vld [vmem:[%s1 + $0xd8] sm:$0xf]
  %v142 = vld [vmem:[%s1 + $0xdc] sm:$0xf]
  %v143 = vld [vmem:[%s1 + $0xe0] sm:$0xf]
  %v144 = vld [vmem:[%s1 + $0xe4] sm:$0xf]
  %v145 = vld [vmem:[%s1 + $0xe8] sm:$0xf]
  %v146 = vld [vmem:[%s1 + $0xec] sm:$0xf]
  %v147 = vld [vmem:[%s1 + $0xf0] sm:$0xf]
  %v148 = vld [vmem:[%s1 + $0xf4] sm:$0xf]
  %v149 = vld [vmem:[%s1 + $0xf8] sm:$0xf]
  %v150 = vld [vmem:[%s1 + $0xfc] sm:$0xf]
  %v151 = vld [vmem:[%s2] sm:$0x1]
  %v153 = vlaneseq
  %v154 = vshrl.u32 %v153, 7
  %v155 = vsub.s32 0, %v154
  %v156 = vrot.slane %v151, %v155
  %v230 = vunpack.c.l.b16 %v15
  %v231 = vunpack.c.h.b16 %v15
  %v232 = vunpack.c.l.b16 %v16
  %v233 = vunpack.c.h.b16 %v16
  %v234 = vunpack.c.l.b16 %v17
  %v235 = vunpack.c.h.b16 %v17
  %v236 = vunpack.c.l.b16 %v18
  %v237 = vunpack.c.h.b16 %v18
  %v238 = vunpack.c.l.b16 %v19
  %v239 = vunpack.c.h.b16 %v19
  %v240 = vunpack.c.l.b16 %v20
  %v241 = vunpack.c.h.b16 %v20
  %v242 = vunpack.c.l.b16 %v21
  %v243 = vunpack.c.h.b16 %v21
  %v244 = vunpack.c.l.b16 %v22
  %v245 = vunpack.c.h.b16 %v22
  %v246 = vunpack.c.l.b16 %v23
  %v247 = vunpack.c.h.b16 %v23
  %v248 = vunpack.c.l.b16 %v24
  %v249 = vunpack.c.h.b16 %v24
  %v250 = vunpack.c.l.b16 %v25
  %v251 = vunpack.c.h.b16 %v25
  %v252 = vunpack.c.l.b16 %v26
  %v253 = vunpack.c.h.b16 %v26
  %v254 = vunpack.c.l.b16 %v27
  %v255 = vunpack.c.h.b16 %v27
  %v256 = vunpack.c.l.b16 %v28
  %v257 = vunpack.c.h.b16 %v28
  %v258 = vunpack.c.l.b16 %v29
  %v259 = vunpack.c.h.b16 %v29
  %v260 = vunpack.c.l.b16 %v30
  %v261 = vunpack.c.h.b16 %v30
  %v262 = vunpack.c.l.b16 %v31
  %v263 = vunpack.c.h.b16 %v31
  %v264 = vunpack.c.l.b16 %v32
  %v265 = vunpack.c.h.b16 %v32
  %v266 = vunpack.c.l.b16 %v33
  %v267 = vunpack.c.h.b16 %v33
  %v268 = vunpack.c.l.b16 %v34
  %v269 = vunpack.c.h.b16 %v34
  %v270 = vunpack.c.l.b16 %v35
  %v271 = vunpack.c.h.b16 %v35
  %v272 = vunpack.c.l.b16 %v36
  %v273 = vunpack.c.h.b16 %v36
  %v274 = vunpack.c.l.b16 %v37
  %v275 = vunpack.c.h.b16 %v37
  %v276 = vunpack.c.l.b16 %v38
  %v277 = vunpack.c.h.b16 %v38
  %v278 = vunpack.c.l.b16 %v39
  %v279 = vunpack.c.h.b16 %v39
  %v280 = vunpack.c.l.b16 %v40
  %v281 = vunpack.c.h.b16 %v40
  %v282 = vunpack.c.l.b16 %v41
  %v283 = vunpack.c.h.b16 %v41
  %v284 = vunpack.c.l.b16 %v42
  %v285 = vunpack.c.h.b16 %v42
  %v286 = vunpack.c.l.b16 %v43
  %v287 = vunpack.c.h.b16 %v43
  %v288 = vunpack.c.l.b16 %v44
  %v289 = vunpack.c.h.b16 %v44
  %v290 = vunpack.c.l.b16 %v45
  %v291 = vunpack.c.h.b16 %v45
  %v292 = vunpack.c.l.b16 %v46
  %v293 = vunpack.c.h.b16 %v46
  %v294 = vunpack.c.l.b16 %v47
  %v295 = vunpack.c.h.b16 %v47
  %v296 = vunpack.c.l.b16 %v48
  %v297 = vunpack.c.h.b16 %v48
  %v298 = vunpack.c.l.b16 %v49
  %v299 = vunpack.c.h.b16 %v49
  %v300 = vunpack.c.l.b16 %v50
  %v301 = vunpack.c.h.b16 %v50
  %v302 = vunpack.c.l.b16 %v51
  %v303 = vunpack.c.h.b16 %v51
  %v304 = vunpack.c.l.b16 %v52
  %v305 = vunpack.c.h.b16 %v52
  %v306 = vunpack.c.l.b16 %v53
  %v307 = vunpack.c.h.b16 %v53
  %v308 = vunpack.c.l.b16 %v54
  %v309 = vunpack.c.h.b16 %v54
  %v310 = vunpack.c.l.b16 %v55
  %v311 = vunpack.c.h.b16 %v55
  %v312 = vunpack.c.l.b16 %v56
  %v313 = vunpack.c.h.b16 %v56
  %v314 = vunpack.c.l.b16 %v57
  %v315 = vunpack.c.h.b16 %v57
  %v316 = vunpack.c.l.b16 %v58
  %v317 = vunpack.c.h.b16 %v58
  %v318 = vunpack.c.l.b16 %v59
  %v319 = vunpack.c.h.b16 %v59
  %v320 = vunpack.c.l.b16 %v60
  %v321 = vunpack.c.h.b16 %v60
  %v322 = vunpack.c.l.b16 %v61
  %v323 = vunpack.c.h.b16 %v61
  %v324 = vunpack.c.l.b16 %v62
  %v325 = vunpack.c.h.b16 %v62
  %v326 = vunpack.c.l.b16 %v63
  %v327 = vunpack.c.h.b16 %v63
  %v328 = vunpack.c.l.b16 %v64
  %v329 = vunpack.c.h.b16 %v64
  %v330 = vunpack.c.l.b16 %v65
  %v331 = vunpack.c.h.b16 %v65
  %v332 = vunpack.c.l.b16 %v66
  %v333 = vunpack.c.h.b16 %v66
  %v334 = vunpack.c.l.b16 %v67
  %v335 = vunpack.c.h.b16 %v67
  %v336 = vunpack.c.l.b16 %v68
  %v337 = vunpack.c.h.b16 %v68
  %v338 = vunpack.c.l.b16 %v69
  %v339 = vunpack.c.h.b16 %v69
  %v340 = vunpack.c.l.b16 %v70
  %v341 = vunpack.c.h.b16 %v70
  %v342 = vunpack.c.l.b16 %v71
  %v343 = vunpack.c.h.b16 %v71
  %v344 = vunpack.c.l.b16 %v72
  %v345 = vunpack.c.h.b16 %v72
  %v346 = vunpack.c.l.b16 %v73
  %v347 = vunpack.c.h.b16 %v73
  %v348 = vunpack.c.l.b16 %v74
  %v349 = vunpack.c.h.b16 %v74
  %v350 = vunpack.c.l.b16 %v75
  %v351 = vunpack.c.h.b16 %v75
  %v352 = vunpack.c.l.b16 %v76
  %v353 = vunpack.c.h.b16 %v76
  %v354 = vunpack.c.l.b16 %v77
  %v355 = vunpack.c.h.b16 %v77
  %v356 = vunpack.c.l.b16 %v78
  %v357 = vunpack.c.h.b16 %v78
  %v358 = vunpack.c.l.b16 %v79
  %v359 = vunpack.c.h.b16 %v79
  %v360 = vunpack.c.l.b16 %v80
  %v361 = vunpack.c.h.b16 %v80
  %v362 = vunpack.c.l.b16 %v81
  %v363 = vunpack.c.h.b16 %v81
  %v364 = vunpack.c.l.b16 %v82
  %v365 = vunpack.c.h.b16 %v82
  %v366 = vunpack.c.l.b16 %v83
  %v367 = vunpack.c.h.b16 %v83
  %v368 = vunpack.c.l.b16 %v84
  %v369 = vunpack.c.h.b16 %v84
  %v370 = vunpack.c.l.b16 %v85
  %v371 = vunpack.c.h.b16 %v85
  %v372 = vunpack.c.l.b16 %v86
  %v373 = vunpack.c.h.b16 %v86
  %v374 = vpack.c.b16 %v234, %v230
  %v375 = vpack.c.b16 %v235, %v231
  %v376 = vpack.c.b16 %v236, %v232
  %v377 = vpack.c.b16 %v237, %v233
  %v378 = vpack.c.b16 %v242, %v238
  %v379 = vpack.c.b16 %v243, %v239
  %v380 = vpack.c.b16 %v244, %v240
  %v381 = vpack.c.b16 %v245, %v241
  %v382 = vpack.c.b16 %v250, %v246
  %v383 = vpack.c.b16 %v251, %v247
  %v384 = vpack.c.b16 %v252, %v248
  %v385 = vpack.c.b16 %v253, %v249
  %v386 = vpack.c.b16 %v258, %v254
  %v387 = vpack.c.b16 %v259, %v255
  %v388 = vpack.c.b16 %v260, %v256
  %v389 = vpack.c.b16 %v261, %v257
  %v390 = vpack.c.b16 %v266, %v262
  %v391 = vpack.c.b16 %v267, %v263
  %v392 = vpack.c.b16 %v268, %v264
  %v393 = vpack.c.b16 %v269, %v265
  %v394 = vpack.c.b16 %v274, %v270
  %v395 = vpack.c.b16 %v275, %v271
  %v396 = vpack.c.b16 %v276, %v272
  %v397 = vpack.c.b16 %v277, %v273
  %v398 = vpack.c.b16 %v282, %v278
  %v399 = vpack.c.b16 %v283, %v279
  %v400 = vpack.c.b16 %v284, %v280
  %v401 = vpack.c.b16 %v285, %v281
  %v402 = vpack.c.b16 %v290, %v286
  %v403 = vpack.c.b16 %v291, %v287
  %v404 = vpack.c.b16 %v292, %v288
  %v405 = vpack.c.b16 %v293, %v289
  %v406 = vpack.c.b16 %v298, %v294
  %v407 = vpack.c.b16 %v299, %v295
  %v408 = vpack.c.b16 %v300, %v296
  %v409 = vpack.c.b16 %v301, %v297
  %v410 = vpack.c.b16 %v306, %v302
  %v411 = vpack.c.b16 %v307, %v303
  %v412 = vpack.c.b16 %v308, %v304
  %v413 = vpack.c.b16 %v309, %v305
  %v414 = vpack.c.b16 %v314, %v310
  %v415 = vpack.c.b16 %v315, %v311
  %v416 = vpack.c.b16 %v316, %v312
  %v417 = vpack.c.b16 %v317, %v313
  %v418 = vpack.c.b16 %v322, %v318
  %v419 = vpack.c.b16 %v323, %v319
  %v420 = vpack.c.b16 %v324, %v320
  %v421 = vpack.c.b16 %v325, %v321
  %v422 = vpack.c.b16 %v330, %v326
  %v423 = vpack.c.b16 %v331, %v327
  %v424 = vpack.c.b16 %v332, %v328
  %v425 = vpack.c.b16 %v333, %v329
  %v426 = vpack.c.b16 %v338, %v334
  %v427 = vpack.c.b16 %v339, %v335
  %v428 = vpack.c.b16 %v340, %v336
  %v429 = vpack.c.b16 %v341, %v337
  %v430 = vpack.c.b16 %v346, %v342
  %v431 = vpack.c.b16 %v347, %v343
  %v432 = vpack.c.b16 %v348, %v344
  %v433 = vpack.c.b16 %v349, %v345
  %v434 = vpack.c.b16 %v354, %v350
  %v435 = vpack.c.b16 %v355, %v351
  %v436 = vpack.c.b16 %v356, %v352
  %v437 = vpack.c.b16 %v357, %v353
  %v438 = vpack.c.b16 %v362, %v358
  %v439 = vpack.c.b16 %v363, %v359
  %v440 = vpack.c.b16 %v364, %v360
  %v441 = vpack.c.b16 %v365, %v361
  %v442 = vpack.c.b16 %v370, %v366
  %v443 = vpack.c.b16 %v371, %v367
  %v444 = vpack.c.b16 %v372, %v368
  %v445 = vpack.c.b16 %v373, %v369
  %v582 = vunpack.c.l.b16 %v87
  %v583 = vunpack.c.l.b16 %v88
  %v584 = vunpack.c.l.b16 %v89
  %v585 = vunpack.c.l.b16 %v90
  %v586 = vunpack.c.l.b16 %v91
  %v587 = vunpack.c.l.b16 %v92
  %v588 = vunpack.c.l.b16 %v93
  %v589 = vunpack.c.l.b16 %v94
  %v590 = vunpack.c.l.b16 %v95
  %v591 = vunpack.c.l.b16 %v96
  %v592 = vunpack.c.l.b16 %v97
  %v593 = vunpack.c.l.b16 %v98
  %v594 = vunpack.c.l.b16 %v99
  %v595 = vunpack.c.l.b16 %v100
  %v596 = vunpack.c.l.b16 %v101
  %v597 = vunpack.c.l.b16 %v102
  %v598 = vunpack.c.l.b16 %v103
  %v599 = vunpack.c.l.b16 %v104
  %v600 = vunpack.c.l.b16 %v105
  %v601 = vunpack.c.l.b16 %v106
  %v602 = vunpack.c.l.b16 %v107
  %v603 = vunpack.c.l.b16 %v108
  %v604 = vunpack.c.l.b16 %v109
  %v605 = vunpack.c.l.b16 %v110
  %v606 = vunpack.c.l.b16 %v111
  %v607 = vunpack.c.l.b16 %v112
  %v608 = vunpack.c.l.b16 %v113
  %v609 = vunpack.c.l.b16 %v114
  %v610 = vunpack.c.l.b16 %v115
  %v611 = vunpack.c.l.b16 %v116
  %v612 = vunpack.c.l.b16 %v117
  %v613 = vunpack.c.l.b16 %v118
  %v614 = vunpack.c.l.b16 %v119
  %v615 = vunpack.c.l.b16 %v120
  %v616 = vunpack.c.l.b16 %v121
  %v617 = vunpack.c.l.b16 %v122
  %v618 = vunpack.c.l.b16 %v123
  %v619 = vunpack.c.l.b16 %v124
  %v620 = vunpack.c.l.b16 %v125
  %v621 = vunpack.c.l.b16 %v126
  %v622 = vunpack.c.l.b16 %v127
  %v623 = vunpack.c.l.b16 %v128
  %v624 = vunpack.c.l.b16 %v129
  %v625 = vunpack.c.l.b16 %v130
  %v626 = vunpack.c.l.b16 %v131
  %v627 = vunpack.c.l.b16 %v132
  %v628 = vunpack.c.l.b16 %v133
  %v629 = vunpack.c.l.b16 %v134
  %v630 = vunpack.c.l.b16 %v135
  %v631 = vunpack.c.l.b16 %v136
  %v632 = vunpack.c.l.b16 %v137
  %v633 = vunpack.c.l.b16 %v138
  %v634 = vunpack.c.l.b16 %v139
  %v635 = vunpack.c.l.b16 %v140
  %v636 = vunpack.c.l.b16 %v141
  %v637 = vunpack.c.l.b16 %v142
  %v638 = vunpack.c.l.b16 %v143
  %v639 = vunpack.c.l.b16 %v144
  %v640 = vunpack.c.l.b16 %v145
  %v641 = vunpack.c.l.b16 %v146
  %v642 = vunpack.c.l.b16 %v147
  %v643 = vunpack.c.l.b16 %v148
  %v644 = vunpack.c.l.b16 %v149
  %v645 = vunpack.c.l.b16 %v150
  %v646 = vpack.c.b16 %v583, %v582
  %v647 = vpack.c.b16 %v585, %v584
  %v648 = vpack.c.b16 %v587, %v586
  %v649 = vpack.c.b16 %v589, %v588
  %v650 = vpack.c.b16 %v591, %v590
  %v651 = vpack.c.b16 %v593, %v592
  %v652 = vpack.c.b16 %v595, %v594
  %v653 = vpack.c.b16 %v597, %v596
  %v654 = vpack.c.b16 %v599, %v598
  %v655 = vpack.c.b16 %v601, %v600
  %v656 = vpack.c.b16 %v603, %v602
  %v657 = vpack.c.b16 %v605, %v604
  %v658 = vpack.c.b16 %v607, %v606
  %v659 = vpack.c.b16 %v609, %v608
  %v660 = vpack.c.b16 %v611, %v610
  %v661 = vpack.c.b16 %v613, %v612
  %v662 = vpack.c.b16 %v615, %v614
  %v663 = vpack.c.b16 %v617, %v616
  %v664 = vpack.c.b16 %v619, %v618
  %v665 = vpack.c.b16 %v621, %v620
  %v666 = vpack.c.b16 %v623, %v622
  %v667 = vpack.c.b16 %v625, %v624
  %v668 = vpack.c.b16 %v627, %v626
  %v669 = vpack.c.b16 %v629, %v628
  %v670 = vpack.c.b16 %v631, %v630
  %v671 = vpack.c.b16 %v633, %v632
  %v672 = vpack.c.b16 %v635, %v634
  %v673 = vpack.c.b16 %v637, %v636
  %v674 = vpack.c.b16 %v639, %v638
  %v675 = vpack.c.b16 %v641, %v640
  %v676 = vpack.c.b16 %v643, %v642
  %v677 = vpack.c.b16 %v645, %v644
  %710 = vmatprep.subr.bf16.mxu0 0
  %711 = vmatpush1.bf16.msra.mxu0 %v646
  %712 = vmatprep.subr.bf16.mxu0 0
  %713 = vmatpush1.bf16.msra.mxu0 %v647
  %714 = vmatprep.subr.bf16.mxu0 0
  %715 = vmatpush1.bf16.msra.mxu0 %v648
  %716 = vmatprep.subr.bf16.mxu0 0
  %717 = vmatpush1.bf16.msra.mxu0 %v649
  %718 = vmatprep.subr.bf16.mxu0 0
  %719 = vmatpush1.bf16.msra.mxu0 %v650
  %720 = vmatprep.subr.bf16.mxu0 0
  %721 = vmatpush1.bf16.msra.mxu0 %v651
  %722 = vmatprep.subr.bf16.mxu0 0
  %723 = vmatpush1.bf16.msra.mxu0 %v652
  %724 = vmatprep.subr.bf16.mxu0 0
  %725 = vmatpush1.bf16.msra.mxu0 %v653
  %726 = vmatprep.subr.bf16.mxu0 0
  %727 = vmatpush1.bf16.msra.mxu0 %v654
  %728 = vmatprep.subr.bf16.mxu0 0
  %729 = vmatpush1.bf16.msra.mxu0 %v655
  %730 = vmatprep.subr.bf16.mxu0 0
  %731 = vmatpush1.bf16.msra.mxu0 %v656
  %732 = vmatprep.subr.bf16.mxu0 0
  %733 = vmatpush1.bf16.msra.mxu0 %v657
  %734 = vmatprep.subr.bf16.mxu0 0
  %735 = vmatpush1.bf16.msra.mxu0 %v658
  %736 = vmatprep.subr.bf16.mxu0 0
  %737 = vmatpush1.bf16.msra.mxu0 %v659
  %738 = vmatprep.subr.bf16.mxu0 0
  %739 = vmatpush1.bf16.msra.mxu0 %v660
  %740 = vmatprep.subr.bf16.mxu0 0
  %741 = vmatpush1.bf16.msra.mxu0 %v661
  %742 = vmatprep.mubr.bf16.mxu0 %v375
  %743 = vmatmul.mubr.bf16.gmra.mrb[0].mxu0 %v374
  %v744 = vpop.f32.mrb[0].mxu0
  %v745 = vadd.f32 %v156, %v744
  %v746 = vpop.f32.mrb[0].mxu0
  %v747 = vpop.f32.mrb[0].mxu0
  %v748 = vadd.f32 %v156, %v747
  %v749 = vpop.f32.mrb[0].mxu0
  %750 = vmatprep.mubr.bf16.mxu0 %v379
  %751 = vmatmul.mubr.bf16.gmra.mrb[0].mxu0 %v378
  %v752 = vpop.f32.mrb[0].mxu0
  %v753 = vadd.f32 %v156, %v752
  %v754 = vpop.f32.mrb[0].mxu0
  %v755 = vpop.f32.mrb[0].mxu0
  %v756 = vadd.f32 %v156, %v755
  %v757 = vpop.f32.mrb[0].mxu0
  %758 = vmatprep.mubr.bf16.mxu0 %v383
  %759 = vmatmul.mubr.bf16.gmra.mrb[0].mxu0 %v382
  %v760 = vpop.f32.mrb[0].mxu0
  %v761 = vadd.f32 %v156, %v760
  %v762 = vpop.f32.mrb[0].mxu0
  %v763 = vpop.f32.mrb[0].mxu0
  %v764 = vadd.f32 %v156, %v763
  %v765 = vpop.f32.mrb[0].mxu0
  %766 = vmatprep.mubr.bf16.mxu0 %v387
  %767 = vmatmul.mubr.bf16.gmra.mrb[0].mxu0 %v386
  %v768 = vpop.f32.mrb[0].mxu0
  %v769 = vadd.f32 %v156, %v768
  %v770 = vpop.f32.mrb[0].mxu0
  %v771 = vpop.f32.mrb[0].mxu0
  %v772 = vadd.f32 %v156, %v771
  %v773 = vpop.f32.mrb[0].mxu0
  %774 = vmatprep.mubr.bf16.mxu0 %v391
  %775 = vmatmul.mubr.bf16.gmra.mrb[0].mxu0 %v390
  %v776 = vpop.f32.mrb[0].mxu0
  %v777 = vadd.f32 %v156, %v776
  %v778 = vpop.f32.mrb[0].mxu0
  %v779 = vpop.f32.mrb[0].mxu0
  %v780 = vadd.f32 %v156, %v779
  %v781 = vpop.f32.mrb[0].mxu0
  %782 = vmatprep.mubr.bf16.mxu0 %v395
  %783 = vmatmul.mubr.bf16.gmra.mrb[0].mxu0 %v394
  %v784 = vpop.f32.mrb[0].mxu0
  %v785 = vadd.f32 %v156, %v784
  %v786 = vpop.f32.mrb[0].mxu0
  %v787 = vpop.f32.mrb[0].mxu0
  %v788 = vadd.f32 %v156, %v787
  %v789 = vpop.f32.mrb[0].mxu0
  %790 = vmatprep.mubr.bf16.mxu0 %v399
  %791 = vmatmul.mubr.bf16.gmra.mrb[0].mxu0 %v398
  %v792 = vpop.f32.mrb[0].mxu0
  %v793 = vadd.f32 %v156, %v792
  %v794 = vpop.f32.mrb[0].mxu0
  %v795 = vpop.f32.mrb[0].mxu0
  %v796 = vadd.f32 %v156, %v795
  %v797 = vpop.f32.mrb[0].mxu0
  %798 = vmatprep.mubr.bf16.mxu0 %v403
  %799 = vmatmul.mubr.bf16.gmra.mrb[0].mxu0 %v402
  %v800 = vpop.f32.mrb[0].mxu0
  %v801 = vadd.f32 %v156, %v800
  %v802 = vpop.f32.mrb[0].mxu0
  %v803 = vpop.f32.mrb[0].mxu0
  %v804 = vadd.f32 %v156, %v803
  %v805 = vpop.f32.mrb[0].mxu0
  %806 = vmatprep.mubr.bf16.mxu0 %v407
  %807 = vmatmul.mubr.bf16.gmra.mrb[0].mxu0 %v406
  %v808 = vpop.f32.mrb[0].mxu0
  %v809 = vadd.f32 %v156, %v808
  %v810 = vpop.f32.mrb[0].mxu0
  %v811 = vpop.f32.mrb[0].mxu0
  %v812 = vadd.f32 %v156, %v811
  %v813 = vpop.f32.mrb[0].mxu0
  %814 = vmatprep.mubr.bf16.mxu0 %v411
  %815 = vmatmul.mubr.bf16.gmra.mrb[0].mxu0 %v410
  %v816 = vpop.f32.mrb[0].mxu0
  %v817 = vadd.f32 %v156, %v816
  %v818 = vpop.f32.mrb[0].mxu0
  %v819 = vpop.f32.mrb[0].mxu0
  %v820 = vadd.f32 %v156, %v819
  %v821 = vpop.f32.mrb[0].mxu0
  %822 = vmatprep.mubr.bf16.mxu0 %v415
  %823 = vmatmul.mubr.bf16.gmra.mrb[0].mxu0 %v414
  %v824 = vpop.f32.mrb[0].mxu0
  %v825 = vadd.f32 %v156, %v824
  %v826 = vpop.f32.mrb[0].mxu0
  %v827 = vpop.f32.mrb[0].mxu0
  %v828 = vadd.f32 %v156, %v827
  %v829 = vpop.f32.mrb[0].mxu0
  %830 = vmatprep.mubr.bf16.mxu0 %v419
  %831 = vmatmul.mubr.bf16.gmra.mrb[0].mxu0 %v418
  %v832 = vpop.f32.mrb[0].mxu0
  %v833 = vadd.f32 %v156, %v832
  %v834 = vpop.f32.mrb[0].mxu0
  %v835 = vpop.f32.mrb[0].mxu0
  %v836 = vadd.f32 %v156, %v835
  %v837 = vpop.f32.mrb[0].mxu0
  %838 = vmatprep.mubr.bf16.mxu0 %v423
  %839 = vmatmul.mubr.bf16.gmra.mrb[0].mxu0 %v422
  %v840 = vpop.f32.mrb[0].mxu0
  %v841 = vadd.f32 %v156, %v840
  %v842 = vpop.f32.mrb[0].mxu0
  %v843 = vpop.f32.mrb[0].mxu0
  %v844 = vadd.f32 %v156, %v843
  %v845 = vpop.f32.mrb[0].mxu0
  %846 = vmatprep.mubr.bf16.mxu0 %v427
  %847 = vmatmul.mubr.bf16.gmra.mrb[0].mxu0 %v426
  %v848 = vpop.f32.mrb[0].mxu0
  %v849 = vadd.f32 %v156, %v848
  %v850 = vpop.f32.mrb[0].mxu0
  %v851 = vpop.f32.mrb[0].mxu0
  %v852 = vadd.f32 %v156, %v851
  %v853 = vpop.f32.mrb[0].mxu0
  %854 = vmatprep.mubr.bf16.mxu0 %v431
  %855 = vmatmul.mubr.bf16.gmra.mrb[0].mxu0 %v430
  %v856 = vpop.f32.mrb[0].mxu0
  %v857 = vadd.f32 %v156, %v856
  %v858 = vpop.f32.mrb[0].mxu0
  %v859 = vpop.f32.mrb[0].mxu0
  %v860 = vadd.f32 %v156, %v859
  %v861 = vpop.f32.mrb[0].mxu0
  %862 = vmatprep.mubr.bf16.mxu0 %v435
  %863 = vmatmul.mubr.bf16.gmra.mrb[0].mxu0 %v434
  %v864 = vpop.f32.mrb[0].mxu0
  %v865 = vadd.f32 %v156, %v864
  %v866 = vpop.f32.mrb[0].mxu0
  %v867 = vpop.f32.mrb[0].mxu0
  %v868 = vadd.f32 %v156, %v867
  %v869 = vpop.f32.mrb[0].mxu0
  %870 = vmatprep.mubr.bf16.mxu0 %v439
  %871 = vmatmul.mubr.bf16.gmra.mrb[0].mxu0 %v438
  %v872 = vpop.f32.mrb[0].mxu0
  %v873 = vadd.f32 %v156, %v872
  %v874 = vpop.f32.mrb[0].mxu0
  %v875 = vpop.f32.mrb[0].mxu0
  %v876 = vadd.f32 %v156, %v875
  %v877 = vpop.f32.mrb[0].mxu0
  %878 = vmatprep.mubr.bf16.mxu0 %v443
  %879 = vmatmul.mubr.bf16.gmra.mrb[0].mxu0 %v442
  %v880 = vpop.f32.mrb[0].mxu0
  %v881 = vadd.f32 %v156, %v880
  %v882 = vpop.f32.mrb[0].mxu0
  %v883 = vpop.f32.mrb[0].mxu0
  %v884 = vadd.f32 %v156, %v883
  %v885 = vpop.f32.mrb[0].mxu0
  %886 = vdwg.mxu0
  %887 = vmatprep.subr.bf16.mxu0 0
  %888 = vmatpush1.bf16.msra.mxu0 %v662
  %889 = vmatprep.subr.bf16.mxu0 0
  %890 = vmatpush1.bf16.msra.mxu0 %v663
  %891 = vmatprep.subr.bf16.mxu0 0
  %892 = vmatpush1.bf16.msra.mxu0 %v664
  %893 = vmatprep.subr.bf16.mxu0 0
  %894 = vmatpush1.bf16.msra.mxu0 %v665
  %895 = vmatprep.subr.bf16.mxu0 0
  %896 = vmatpush1.bf16.msra.mxu0 %v666
  %897 = vmatprep.subr.bf16.mxu0 0
  %898 = vmatpush1.bf16.msra.mxu0 %v667
  %899 = vmatprep.subr.bf16.mxu0 0
  %900 = vmatpush1.bf16.msra.mxu0 %v668
  %901 = vmatprep.subr.bf16.mxu0 0
  %902 = vmatpush1.bf16.msra.mxu0 %v669
  %903 = vmatprep.subr.bf16.mxu0 0
  %904 = vmatpush1.bf16.msra.mxu0 %v670
  %905 = vmatprep.subr.bf16.mxu0 0
  %906 = vmatpush1.bf16.msra.mxu0 %v671
  %907 = vmatprep.subr.bf16.mxu0 0
  %908 = vmatpush1.bf16.msra.mxu0 %v672
  %909 = vmatprep.subr.bf16.mxu0 0
  %910 = vmatpush1.bf16.msra.mxu0 %v673
  %911 = vmatprep.subr.bf16.mxu0 0
  %912 = vmatpush1.bf16.msra.mxu0 %v674
  %913 = vmatprep.subr.bf16.mxu0 0
  %914 = vmatpush1.bf16.msra.mxu0 %v675
  %915 = vmatprep.subr.bf16.mxu0 0
  %916 = vmatpush1.bf16.msra.mxu0 %v676
  %917 = vmatprep.subr.bf16.mxu0 0
  %918 = vmatpush1.bf16.msra.mxu0 %v677
  %919 = vmatprep.mubr.bf16.mxu0 %v377
  %920 = vmatmul.mubr.bf16.gmra.mrb[0].mxu0 %v376
  %v921 = vpop.f32.mrb[0].mxu0
  %v922 = vadd.f32 %v745, %v921
  %v923 = vpop.f32.mrb[0].mxu0
  %v924 = vpop.f32.mrb[0].mxu0
  %v925 = vadd.f32 %v748, %v924
  %v926 = vpop.f32.mrb[0].mxu0
  %927 = vmatprep.mubr.bf16.mxu0 %v381
  %928 = vmatmul.mubr.bf16.gmra.mrb[0].mxu0 %v380
  %v929 = vpop.f32.mrb[0].mxu0
  %v930 = vadd.f32 %v753, %v929
  %v931 = vpop.f32.mrb[0].mxu0
  %v932 = vpop.f32.mrb[0].mxu0
  %v933 = vadd.f32 %v756, %v932
  %v934 = vpop.f32.mrb[0].mxu0
  %935 = vmatprep.mubr.bf16.mxu0 %v385
  %936 = vmatmul.mubr.bf16.gmra.mrb[0].mxu0 %v384
  %v937 = vpop.f32.mrb[0].mxu0
  %v938 = vadd.f32 %v761, %v937
  %v939 = vpop.f32.mrb[0].mxu0
  %v940 = vpop.f32.mrb[0].mxu0
  %v941 = vadd.f32 %v764, %v940
  %v942 = vpop.f32.mrb[0].mxu0
  %943 = vmatprep.mubr.bf16.mxu0 %v389
  %944 = vmatmul.mubr.bf16.gmra.mrb[0].mxu0 %v388
  %v945 = vpop.f32.mrb[0].mxu0
  %v946 = vadd.f32 %v769, %v945
  %v947 = vpop.f32.mrb[0].mxu0
  %v948 = vpop.f32.mrb[0].mxu0
  %v949 = vadd.f32 %v772, %v948
  %v950 = vpop.f32.mrb[0].mxu0
  %951 = vmatprep.mubr.bf16.mxu0 %v393
  %952 = vmatmul.mubr.bf16.gmra.mrb[0].mxu0 %v392
  %v953 = vpop.f32.mrb[0].mxu0
  %v954 = vadd.f32 %v777, %v953
  %v955 = vpop.f32.mrb[0].mxu0
  %v956 = vpop.f32.mrb[0].mxu0
  %v957 = vadd.f32 %v780, %v956
  %v958 = vpop.f32.mrb[0].mxu0
  %959 = vmatprep.mubr.bf16.mxu0 %v397
  %960 = vmatmul.mubr.bf16.gmra.mrb[0].mxu0 %v396
  %v961 = vpop.f32.mrb[0].mxu0
  %v962 = vadd.f32 %v785, %v961
  %v963 = vpop.f32.mrb[0].mxu0
  %v964 = vpop.f32.mrb[0].mxu0
  %v965 = vadd.f32 %v788, %v964
  %v966 = vpop.f32.mrb[0].mxu0
  %967 = vmatprep.mubr.bf16.mxu0 %v401
  %968 = vmatmul.mubr.bf16.gmra.mrb[0].mxu0 %v400
  %v969 = vpop.f32.mrb[0].mxu0
  %v970 = vadd.f32 %v793, %v969
  %v971 = vpop.f32.mrb[0].mxu0
  %v972 = vpop.f32.mrb[0].mxu0
  %v973 = vadd.f32 %v796, %v972
  %v974 = vpop.f32.mrb[0].mxu0
  %975 = vmatprep.mubr.bf16.mxu0 %v405
  %976 = vmatmul.mubr.bf16.gmra.mrb[0].mxu0 %v404
  %v977 = vpop.f32.mrb[0].mxu0
  %v978 = vadd.f32 %v801, %v977
  %v979 = vpop.f32.mrb[0].mxu0
  %v980 = vpop.f32.mrb[0].mxu0
  %v981 = vadd.f32 %v804, %v980
  %v982 = vpop.f32.mrb[0].mxu0
  %983 = vmatprep.mubr.bf16.mxu0 %v409
  %984 = vmatmul.mubr.bf16.gmra.mrb[0].mxu0 %v408
  %v985 = vpop.f32.mrb[0].mxu0
  %v986 = vadd.f32 %v809, %v985
  %v987 = vpop.f32.mrb[0].mxu0
  %v988 = vpop.f32.mrb[0].mxu0
  %v989 = vadd.f32 %v812, %v988
  %v990 = vpop.f32.mrb[0].mxu0
  %991 = vmatprep.mubr.bf16.mxu0 %v413
  %992 = vmatmul.mubr.bf16.gmra.mrb[0].mxu0 %v412
  %v993 = vpop.f32.mrb[0].mxu0
  %v994 = vadd.f32 %v817, %v993
  %v995 = vpop.f32.mrb[0].mxu0
  %v996 = vpop.f32.mrb[0].mxu0
  %v997 = vadd.f32 %v820, %v996
  %v998 = vpop.f32.mrb[0].mxu0
  %999 = vmatprep.mubr.bf16.mxu0 %v417
  %1000 = vmatmul.mubr.bf16.gmra.mrb[0].mxu0 %v416
  %v1001 = vpop.f32.mrb[0].mxu0
  %v1002 = vadd.f32 %v825, %v1001
  %v1003 = vpop.f32.mrb[0].mxu0
  %v1004 = vpop.f32.mrb[0].mxu0
  %v1005 = vadd.f32 %v828, %v1004
  %v1006 = vpop.f32.mrb[0].mxu0
  %1007 = vmatprep.mubr.bf16.mxu0 %v421
  %1008 = vmatmul.mubr.bf16.gmra.mrb[0].mxu0 %v420
  %v1009 = vpop.f32.mrb[0].mxu0
  %v1010 = vadd.f32 %v833, %v1009
  %v1011 = vpop.f32.mrb[0].mxu0
  %v1012 = vpop.f32.mrb[0].mxu0
  %v1013 = vadd.f32 %v836, %v1012
  %v1014 = vpop.f32.mrb[0].mxu0
  %1015 = vmatprep.mubr.bf16.mxu0 %v425
  %1016 = vmatmul.mubr.bf16.gmra.mrb[0].mxu0 %v424
  %v1017 = vpop.f32.mrb[0].mxu0
  %v1018 = vadd.f32 %v841, %v1017
  %v1019 = vpop.f32.mrb[0].mxu0
  %v1020 = vpop.f32.mrb[0].mxu0
  %v1021 = vadd.f32 %v844, %v1020
  %v1022 = vpop.f32.mrb[0].mxu0
  %1023 = vmatprep.mubr.bf16.mxu0 %v429
  %1024 = vmatmul.mubr.bf16.gmra.mrb[0].mxu0 %v428
  %v1025 = vpop.f32.mrb[0].mxu0
  %v1026 = vadd.f32 %v849, %v1025
  %v1027 = vpop.f32.mrb[0].mxu0
  %v1028 = vpop.f32.mrb[0].mxu0
  %v1029 = vadd.f32 %v852, %v1028
  %v1030 = vpop.f32.mrb[0].mxu0
  %1031 = vmatprep.mubr.bf16.mxu0 %v433
  %1032 = vmatmul.mubr.bf16.gmra.mrb[0].mxu0 %v432
  %v1033 = vpop.f32.mrb[0].mxu0
  %v1034 = vadd.f32 %v857, %v1033
  %v1035 = vpop.f32.mrb[0].mxu0
  %v1036 = vpop.f32.mrb[0].mxu0
  %v1037 = vadd.f32 %v860, %v1036
  %v1038 = vpop.f32.mrb[0].mxu0
  %1039 = vmatprep.mubr.bf16.mxu0 %v437
  %1040 = vmatmul.mubr.bf16.gmra.mrb[0].mxu0 %v436
  %v1041 = vpop.f32.mrb[0].mxu0
  %v1042 = vadd.f32 %v865, %v1041
  %v1043 = vpop.f32.mrb[0].mxu0
  %v1044 = vpop.f32.mrb[0].mxu0
  %v1045 = vadd.f32 %v868, %v1044
  %v1046 = vpop.f32.mrb[0].mxu0
  %1047 = vmatprep.mubr.bf16.mxu0 %v441
  %1048 = vmatmul.mubr.bf16.gmra.mrb[0].mxu0 %v440
  %v1049 = vpop.f32.mrb[0].mxu0
  %v1050 = vadd.f32 %v873, %v1049
  %v1051 = vpop.f32.mrb[0].mxu0
  %v1052 = vpop.f32.mrb[0].mxu0
  %v1053 = vadd.f32 %v876, %v1052
  %v1054 = vpop.f32.mrb[0].mxu0
  %1055 = vmatprep.mubr.bf16.mxu0 %v445
  %1056 = vmatmul.mubr.bf16.gmra.mrb[0].mxu0 %v444
  %v1057 = vpop.f32.mrb[0].mxu0
  %v1058 = vadd.f32 %v881, %v1057
  %v1059 = vpop.f32.mrb[0].mxu0
  %v1060 = vpop.f32.mrb[0].mxu0
  %v1061 = vadd.f32 %v884, %v1060
  %v1062 = vpop.f32.mrb[0].mxu0
  %1063 = vdwg.mxu0
  %v1064 = vmax.f32 %v922, 0.0
  %v1065 = vmax.f32 %v925, 0.0
  %v1066 = vmax.f32 %v930, 0.0
  %v1067 = vmax.f32 %v933, 0.0
  %v1068 = vmax.f32 %v938, 0.0
  %v1069 = vmax.f32 %v941, 0.0
  %v1070 = vmax.f32 %v946, 0.0
  %v1071 = vmax.f32 %v949, 0.0
  %v1072 = vmax.f32 %v954, 0.0
  %v1073 = vmax.f32 %v957, 0.0
  %v1074 = vmax.f32 %v962, 0.0
  %v1075 = vmax.f32 %v965, 0.0
  %v1076 = vmax.f32 %v970, 0.0
  %v1077 = vmax.f32 %v973, 0.0
  %v1078 = vmax.f32 %v978, 0.0
  %v1079 = vmax.f32 %v981, 0.0
  %v1080 = vmax.f32 %v986, 0.0
  %v1081 = vmax.f32 %v989, 0.0
  %v1082 = vmax.f32 %v994, 0.0
  %v1083 = vmax.f32 %v997, 0.0
  %v1084 = vmax.f32 %v1002, 0.0
  %v1085 = vmax.f32 %v1005, 0.0
  %v1086 = vmax.f32 %v1010, 0.0
  %v1087 = vmax.f32 %v1013, 0.0
  %v1088 = vmax.f32 %v1018, 0.0
  %v1089 = vmax.f32 %v1021, 0.0
  %v1090 = vmax.f32 %v1026, 0.0
  %v1091 = vmax.f32 %v1029, 0.0
  %v1092 = vmax.f32 %v1034, 0.0
  %v1093 = vmax.f32 %v1037, 0.0
  %v1094 = vmax.f32 %v1042, 0.0
  %v1095 = vmax.f32 %v1045, 0.0
  %v1096 = vmax.f32 %v1050, 0.0
  %v1097 = vmax.f32 %v1053, 0.0
  %v1098 = vmax.f32 %v1058, 0.0
  %v1099 = vmax.f32 %v1061, 0.0
  %v1100 = vpack.c.bf16 %v1065, %v1064
  %v1101 = vpack.c.bf16 %v1067, %v1066
  %v1102 = vpack.c.bf16 %v1069, %v1068
  %v1103 = vpack.c.bf16 %v1071, %v1070
  %v1104 = vpack.c.bf16 %v1073, %v1072
  %v1105 = vpack.c.bf16 %v1075, %v1074
  %v1106 = vpack.c.bf16 %v1077, %v1076
  %v1107 = vpack.c.bf16 %v1079, %v1078
  %v1108 = vpack.c.bf16 %v1081, %v1080
  %v1109 = vpack.c.bf16 %v1083, %v1082
  %v1110 = vpack.c.bf16 %v1085, %v1084
  %v1111 = vpack.c.bf16 %v1087, %v1086
  %v1112 = vpack.c.bf16 %v1089, %v1088
  %v1113 = vpack.c.bf16 %v1091, %v1090
  %v1114 = vpack.c.bf16 %v1093, %v1092
  %v1115 = vpack.c.bf16 %v1095, %v1094
  %v1116 = vpack.c.bf16 %v1097, %v1096
  %v1117 = vpack.c.bf16 %v1099, %v1098
  %v1136 = vunpack.c.l.b16 %v1100
  %v1137 = vunpack.c.h.b16 %v1100
  %v1138 = vunpack.c.l.b16 %v1101
  %v1139 = vunpack.c.h.b16 %v1101
  %v1140 = vunpack.c.l.b16 %v1102
  %v1141 = vunpack.c.h.b16 %v1102
  %v1142 = vunpack.c.l.b16 %v1103
  %v1143 = vunpack.c.h.b16 %v1103
  %v1144 = vunpack.c.l.b16 %v1104
  %v1145 = vunpack.c.h.b16 %v1104
  %v1146 = vunpack.c.l.b16 %v1105
  %v1147 = vunpack.c.h.b16 %v1105
  %v1148 = vunpack.c.l.b16 %v1106
  %v1149 = vunpack.c.h.b16 %v1106
  %v1150 = vunpack.c.l.b16 %v1107
  %v1151 = vunpack.c.h.b16 %v1107
  %v1152 = vunpack.c.l.b16 %v1108
  %v1153 = vunpack.c.h.b16 %v1108
  %v1154 = vunpack.c.l.b16 %v1109
  %v1155 = vunpack.c.h.b16 %v1109
  %v1156 = vunpack.c.l.b16 %v1110
  %v1157 = vunpack.c.h.b16 %v1110
  %v1158 = vunpack.c.l.b16 %v1111
  %v1159 = vunpack.c.h.b16 %v1111
  %v1160 = vunpack.c.l.b16 %v1112
  %v1161 = vunpack.c.h.b16 %v1112
  %v1162 = vunpack.c.l.b16 %v1113
  %v1163 = vunpack.c.h.b16 %v1113
  %v1164 = vunpack.c.l.b16 %v1114
  %v1165 = vunpack.c.h.b16 %v1114
  %v1166 = vunpack.c.l.b16 %v1115
  %v1167 = vunpack.c.h.b16 %v1115
  %v1168 = vunpack.c.l.b16 %v1116
  %v1169 = vunpack.c.h.b16 %v1116
  %v1170 = vunpack.c.l.b16 %v1117
  %v1171 = vunpack.c.h.b16 %v1117
  %v1172 = vpack.c.b16 %v1136, %v1136
  %v1173 = vpack.c.b16 %v1137, %v1137
  %v1174 = vpack.c.b16 %v1138, %v1138
  %v1175 = vpack.c.b16 %v1139, %v1139
  %v1176 = vpack.c.b16 %v1140, %v1140
  %v1177 = vpack.c.b16 %v1141, %v1141
  %v1178 = vpack.c.b16 %v1142, %v1142
  %v1179 = vpack.c.b16 %v1143, %v1143
  %v1180 = vpack.c.b16 %v1144, %v1144
  %v1181 = vpack.c.b16 %v1145, %v1145
  %v1182 = vpack.c.b16 %v1146, %v1146
  %v1183 = vpack.c.b16 %v1147, %v1147
  %v1184 = vpack.c.b16 %v1148, %v1148
  %v1185 = vpack.c.b16 %v1149, %v1149
  %v1186 = vpack.c.b16 %v1150, %v1150
  %v1187 = vpack.c.b16 %v1151, %v1151
  %v1188 = vpack.c.b16 %v1152, %v1152
  %v1189 = vpack.c.b16 %v1153, %v1153
  %v1190 = vpack.c.b16 %v1154, %v1154
  %v1191 = vpack.c.b16 %v1155, %v1155
  %v1192 = vpack.c.b16 %v1156, %v1156
  %v1193 = vpack.c.b16 %v1157, %v1157
  %v1194 = vpack.c.b16 %v1158, %v1158
  %v1195 = vpack.c.b16 %v1159, %v1159
  %v1196 = vpack.c.b16 %v1160, %v1160
  %v1197 = vpack.c.b16 %v1161, %v1161
  %v1198 = vpack.c.b16 %v1162, %v1162
  %v1199 = vpack.c.b16 %v1163, %v1163
  %v1200 = vpack.c.b16 %v1164, %v1164
  %v1201 = vpack.c.b16 %v1165, %v1165
  %v1202 = vpack.c.b16 %v1166, %v1166
  %v1203 = vpack.c.b16 %v1167, %v1167
  %v1204 = vpack.c.b16 %v1168, %v1168
  %v1205 = vpack.c.b16 %v1169, %v1169
  %v1206 = vpack.c.b16 %v1170, %v1170
  %v1207 = vpack.c.b16 %v1171, %v1171
  %vm1244 = vcmask 519168
  %1245 = vst.msk [vmem:[%s3] sm:$0xf] %vm1244, %v1172
  %1246 = vst.msk [vmem:[%s3 + $0x4] sm:$0xf] %vm1244, %v1173
  %1247 = vst.msk [vmem:[%s3 + $0x8] sm:$0xf] %vm1244, %v1174
  %1248 = vst.msk [vmem:[%s3 + $0xc] sm:$0xf] %vm1244, %v1175
  %1249 = vst.msk [vmem:[%s3 + $0x10] sm:$0xf] %vm1244, %v1176
  %1250 = vst.msk [vmem:[%s3 + $0x14] sm:$0xf] %vm1244, %v1177
  %1251 = vst.msk [vmem:[%s3 + $0x18] sm:$0xf] %vm1244, %v1178
  %1252 = vst.msk [vmem:[%s3 + $0x1c] sm:$0xf] %vm1244, %v1179
  %1253 = vst.msk [vmem:[%s3 + $0x20] sm:$0xf] %vm1244, %v1180
  %1254 = vst.msk [vmem:[%s3 + $0x24] sm:$0xf] %vm1244, %v1181
  %1255 = vst.msk [vmem:[%s3 + $0x28] sm:$0xf] %vm1244, %v1182
  %1256 = vst.msk [vmem:[%s3 + $0x2c] sm:$0xf] %vm1244, %v1183
  %1257 = vst.msk [vmem:[%s3 + $0x30] sm:$0xf] %vm1244, %v1184
  %1258 = vst.msk [vmem:[%s3 + $0x34] sm:$0xf] %vm1244, %v1185
  %1259 = vst.msk [vmem:[%s3 + $0x38] sm:$0xf] %vm1244, %v1186
  %1260 = vst.msk [vmem:[%s3 + $0x3c] sm:$0xf] %vm1244, %v1187
  %1261 = vst.msk [vmem:[%s3 + $0x40] sm:$0xf] %vm1244, %v1188
  %1262 = vst.msk [vmem:[%s3 + $0x44] sm:$0xf] %vm1244, %v1189
  %1263 = vst.msk [vmem:[%s3 + $0x48] sm:$0xf] %vm1244, %v1190
  %1264 = vst.msk [vmem:[%s3 + $0x4c] sm:$0xf] %vm1244, %v1191
  %1265 = vst.msk [vmem:[%s3 + $0x50] sm:$0xf] %vm1244, %v1192
  %1266 = vst.msk [vmem:[%s3 + $0x54] sm:$0xf] %vm1244, %v1193
  %1267 = vst.msk [vmem:[%s3 + $0x58] sm:$0xf] %vm1244, %v1194
  %1268 = vst.msk [vmem:[%s3 + $0x5c] sm:$0xf] %vm1244, %v1195
  %1269 = vst.msk [vmem:[%s3 + $0x60] sm:$0xf] %vm1244, %v1196
  %1270 = vst.msk [vmem:[%s3 + $0x64] sm:$0xf] %vm1244, %v1197
  %1271 = vst.msk [vmem:[%s3 + $0x68] sm:$0xf] %vm1244, %v1198
  %1272 = vst.msk [vmem:[%s3 + $0x6c] sm:$0xf] %vm1244, %v1199
  %1273 = vst.msk [vmem:[%s3 + $0x70] sm:$0xf] %vm1244, %v1200
  %1274 = vst.msk [vmem:[%s3 + $0x74] sm:$0xf] %vm1244, %v1201
  %1275 = vst.msk [vmem:[%s3 + $0x78] sm:$0xf] %vm1244, %v1202
  %1276 = vst.msk [vmem:[%s3 + $0x7c] sm:$0xf] %vm1244, %v1203
  %1277 = vst.msk [vmem:[%s3 + $0x80] sm:$0xf] %vm1244, %v1204
  %1278 = vst.msk [vmem:[%s3 + $0x84] sm:$0xf] %vm1244, %v1205
  %1279 = vst.msk [vmem:[%s3 + $0x88] sm:$0xf] %vm1244, %v1206
  %1280 = vst.msk [vmem:[%s3 + $0x8c] sm:$0xf] %vm1244, %v1207
  // Predicated region
  $region14: #{drqn_forward.7} parent=0 // pred_check
    _
  $region15: #{drqn_forward.7} parent=0 // pred_check_branch
    %1282 = sbr.rel (0) target = $region17
  $region16: #{drqn_forward.7} parent=0 // pred_region
    _
  $region17: #{drqn_forward.7} parent=0 // pred_fallthru
    _
  // Predicated region
  $region18: #{drqn_forward.7} parent=0 // pred_check
    _
  $region19: #{drqn_forward.7} parent=0 // pred_check_branch
    %1284 = sbr.rel (0) target = $region21
  $region20: #{drqn_forward.7} parent=0 // pred_region
    _
  $region21: #{drqn_forward.7} parent=0 // pred_fallthru
    _

// kernel: drqn_forward.8
$region0: #{drqn_forward.8}
  #allocation0 [shape = 'u32[]', space=smem, size = 0x4, offset = 0x4, fixed_abs, tag = 'smem constant byte address 0x4 - core index']
  #allocation1 [shape = 'u32[144,128]{1,0:T(1,128)}', space=vmem, size = 0x12000, scoped, tag = 'internal scratch']
  %s0 = inlined_call_operand.vmem [shape: bf16[128,576], index: 0, kind: input, shape index: {}]
  %s1 = inlined_call_operand.vmem [shape: bf16[576,64], index: 1, kind: input, shape index: {}]
  %s2 = inlined_call_operand.vmem [shape: f32[1,64], index: 2, kind: input, shape index: {}]
  %s3 = inlined_call_operand.vmem [shape: bf16[128,64], index: 3, kind: output, shape index: {}]
  %s4 = sld [smem:[#allocation0]]
  $region22: #{drqn_forward.8} parent=0
    _
  %s6 = ssub.s32 1, %s4
  %s7 = scalar_select 0, %s6, %s4
  // Predicated region
  $region2: #{drqn_forward.8} parent=0 // pred_check
    _
  $region3: #{drqn_forward.8} parent=0 // pred_check_branch
    %9 = sbr.rel (0) target = $region5
  $region4: #{drqn_forward.8} parent=0 // pred_region
    _
  $region5: #{drqn_forward.8} parent=0 // pred_fallthru
    _
  // Predicated region
  $region6: #{drqn_forward.8} parent=0 // pred_check
    _
  $region7: #{drqn_forward.8} parent=0 // pred_check_branch
    %11 = sbr.rel (0) target = $region9
  $region8: #{drqn_forward.8} parent=0 // pred_region
    _
  $region9: #{drqn_forward.8} parent=0 // pred_fallthru
    _
  // Predicated region
  $region10: #{drqn_forward.8} parent=0 // pred_check
    _
  $region11: #{drqn_forward.8} parent=0 // pred_check_branch
    %13 = sbr.rel (0) target = $region13
  $region12: #{drqn_forward.8} parent=0 // pred_region
    _
  $region13: #{drqn_forward.8} parent=0 // pred_fallthru
    _
  %v15 = vld [vmem:[%s0] sm:$0xff]
  %v16 = vld [vmem:[%s0 + $0x8] sm:$0xff]
  %v17 = vld [vmem:[%s0 + $0x10] sm:$0xf]
  %v18 = vld [vmem:[%s0 + $0x14] sm:$0xff]
  %v19 = vld [vmem:[%s0 + $0x1c] sm:$0xff]
  %v20 = vld [vmem:[%s0 + $0x24] sm:$0xf]
  %v21 = vld [vmem:[%s0 + $0x28] sm:$0xff]
  %v22 = vld [vmem:[%s0 + $0x30] sm:$0xff]
  %v23 = vld [vmem:[%s0 + $0x38] sm:$0xf]
  %v24 = vld [vmem:[%s0 + $0x3c] sm:$0xff]
  %v25 = vld [vmem:[%s0 + $0x44] sm:$0xff]
  %v26 = vld [vmem:[%s0 + $0x4c] sm:$0xf]
  %v27 = vld [vmem:[%s0 + $0x50] sm:$0xff]
  %v28 = vld [vmem:[%s0 + $0x58] sm:$0xff]
  %v29 = vld [vmem:[%s0 + $0x60] sm:$0xf]
  %v30 = vld [vmem:[%s0 + $0x64] sm:$0xff]
  %v31 = vld [vmem:[%s0 + $0x6c] sm:$0xff]
  %v32 = vld [vmem:[%s0 + $0x74] sm:$0xf]
  %v33 = vld [vmem:[%s0 + $0x78] sm:$0xff]
  %v34 = vld [vmem:[%s0 + $0x80] sm:$0xff]
  %v35 = vld [vmem:[%s0 + $0x88] sm:$0xf]
  %v36 = vld [vmem:[%s0 + $0x8c] sm:$0xff]
  %v37 = vld [vmem:[%s0 + $0x94] sm:$0xff]
  %v38 = vld [vmem:[%s0 + $0x9c] sm:$0xf]
  %v39 = vld [vmem:[%s0 + $0xa0] sm:$0xff]
  %v40 = vld [vmem:[%s0 + $0xa8] sm:$0xff]
  %v41 = vld [vmem:[%s0 + $0xb0] sm:$0xf]
  %v42 = vld [vmem:[%s0 + $0xb4] sm:$0xff]
  %v43 = vld [vmem:[%s0 + $0xbc] sm:$0xff]
  %v44 = vld [vmem:[%s0 + $0xc4] sm:$0xf]
  %v45 = vld [vmem:[%s0 + $0xc8] sm:$0xff]
  %v46 = vld [vmem:[%s0 + $0xd0] sm:$0xff]
  %v47 = vld [vmem:[%s0 + $0xd8] sm:$0xf]
  %v48 = vld [vmem:[%s0 + $0xdc] sm:$0xff]
  %v49 = vld [vmem:[%s0 + $0xe4] sm:$0xff]
  %v50 = vld [vmem:[%s0 + $0xec] sm:$0xf]
  %v51 = vld [vmem:[%s0 + $0xf0] sm:$0xff]
  %v52 = vld [vmem:[%s0 + $0xf8] sm:$0xff]
  %v53 = vld [vmem:[%s0 + $0x100] sm:$0xf]
  %v54 = vld [vmem:[%s0 + $0x104] sm:$0xff]
  %v55 = vld [vmem:[%s0 + $0x10c] sm:$0xff]
  %v56 = vld [vmem:[%s0 + $0x114] sm:$0xf]
  %v57 = vld [vmem:[%s0 + $0x118] sm:$0xff]
  %v58 = vld [vmem:[%s0 + $0x120] sm:$0xff]
  %v59 = vld [vmem:[%s0 + $0x128] sm:$0xf]
  %v60 = vld [vmem:[%s0 + $0x12c] sm:$0xff]
  %v61 = vld [vmem:[%s0 + $0x134] sm:$0xff]
  %v62 = vld [vmem:[%s0 + $0x13c] sm:$0xf]
  %v63 = vld [vmem:[%s1] sm:$0xf]
  %v64 = vld [vmem:[%s1 + $0x4] sm:$0xf]
  %v65 = vld [vmem:[%s1 + $0x8] sm:$0xf]
  %v66 = vld [vmem:[%s1 + $0xc] sm:$0xf]
  %v67 = vld [vmem:[%s1 + $0x10] sm:$0xf]
  %v68 = vld [vmem:[%s1 + $0x14] sm:$0xf]
  %v69 = vld [vmem:[%s1 + $0x18] sm:$0xf]
  %v70 = vld [vmem:[%s1 + $0x1c] sm:$0xf]
  %v71 = vld [vmem:[%s1 + $0x20] sm:$0xf]
  %v72 = vld [vmem:[%s1 + $0x24] sm:$0xf]
  %v73 = vld [vmem:[%s1 + $0x28] sm:$0xf]
  %v74 = vld [vmem:[%s1 + $0x2c] sm:$0xf]
  %v75 = vld [vmem:[%s1 + $0x30] sm:$0xf]
  %v76 = vld [vmem:[%s1 + $0x34] sm:$0xf]
  %v77 = vld [vmem:[%s1 + $0x38] sm:$0xf]
  %v78 = vld [vmem:[%s1 + $0x3c] sm:$0xf]
  %v79 = vld [vmem:[%s1 + $0x40] sm:$0xf]
  %v80 = vld [vmem:[%s1 + $0x44] sm:$0xf]
  %v81 = vld [vmem:[%s1 + $0x48] sm:$0xf]
  %v82 = vld [vmem:[%s1 + $0x4c] sm:$0xf]
  %v83 = vld [vmem:[%s1 + $0x50] sm:$0xf]
  %v84 = vld [vmem:[%s1 + $0x54] sm:$0xf]
  %v85 = vld [vmem:[%s1 + $0x58] sm:$0xf]
  %v86 = vld [vmem:[%s1 + $0x5c] sm:$0xf]
  %v87 = vld [vmem:[%s1 + $0x60] sm:$0xf]
  %v88 = vld [vmem:[%s1 + $0x64] sm:$0xf]
  %v89 = vld [vmem:[%s1 + $0x68] sm:$0xf]
  %v90 = vld [vmem:[%s1 + $0x6c] sm:$0xf]
  %v91 = vld [vmem:[%s1 + $0x70] sm:$0xf]
  %v92 = vld [vmem:[%s1 + $0x74] sm:$0xf]
  %v93 = vld [vmem:[%s1 + $0x78] sm:$0xf]
  %v94 = vld [vmem:[%s1 + $0x7c] sm:$0xf]
  %v95 = vld [vmem:[%s1 + $0x80] sm:$0xf]
  %v96 = vld [vmem:[%s1 + $0x84] sm:$0xf]
  %v97 = vld [vmem:[%s1 + $0x88] sm:$0xf]
  %v98 = vld [vmem:[%s1 + $0x8c] sm:$0xf]
  %v99 = vld [vmem:[%s1 + $0x90] sm:$0xf]
  %v100 = vld [vmem:[%s1 + $0x94] sm:$0xf]
  %v101 = vld [vmem:[%s1 + $0x98] sm:$0xf]
  %v102 = vld [vmem:[%s1 + $0x9c] sm:$0xf]
  %v103 = vld [vmem:[%s1 + $0xa0] sm:$0xf]
  %v104 = vld [vmem:[%s1 + $0xa4] sm:$0xf]
  %v105 = vld [vmem:[%s1 + $0xa8] sm:$0xf]
  %v106 = vld [vmem:[%s1 + $0xac] sm:$0xf]
  %v107 = vld [vmem:[%s1 + $0xb0] sm:$0xf]
  %v108 = vld [vmem:[%s1 + $0xb4] sm:$0xf]
  %v109 = vld [vmem:[%s1 + $0xb8] sm:$0xf]
  %v110 = vld [vmem:[%s1 + $0xbc] sm:$0xf]
  %v111 = vld [vmem:[%s1 + $0xc0] sm:$0xf]
  %v112 = vld [vmem:[%s1 + $0xc4] sm:$0xf]
  %v113 = vld [vmem:[%s1 + $0xc8] sm:$0xf]
  %v114 = vld [vmem:[%s1 + $0xcc] sm:$0xf]
  %v115 = vld [vmem:[%s1 + $0xd0] sm:$0xf]
  %v116 = vld [vmem:[%s1 + $0xd4] sm:$0xf]
  %v117 = vld [vmem:[%s1 + $0xd8] sm:$0xf]
  %v118 = vld [vmem:[%s1 + $0xdc] sm:$0xf]
  %v119 = vld [vmem:[%s1 + $0xe0] sm:$0xf]
  %v120 = vld [vmem:[%s1 + $0xe4] sm:$0xf]
  %v121 = vld [vmem:[%s1 + $0xe8] sm:$0xf]
  %v122 = vld [vmem:[%s1 + $0xec] sm:$0xf]
  %v123 = vld [vmem:[%s1 + $0xf0] sm:$0xf]
  %v124 = vld [vmem:[%s1 + $0xf4] sm:$0xf]
  %v125 = vld [vmem:[%s1 + $0xf8] sm:$0xf]
  %v126 = vld [vmem:[%s1 + $0xfc] sm:$0xf]
  %v127 = vld [vmem:[%s1 + $0x100] sm:$0xf]
  %v128 = vld [vmem:[%s1 + $0x104] sm:$0xf]
  %v129 = vld [vmem:[%s1 + $0x108] sm:$0xf]
  %v130 = vld [vmem:[%s1 + $0x10c] sm:$0xf]
  %v131 = vld [vmem:[%s1 + $0x110] sm:$0xf]
  %v132 = vld [vmem:[%s1 + $0x114] sm:$0xf]
  %v133 = vld [vmem:[%s1 + $0x118] sm:$0xf]
  %v134 = vld [vmem:[%s1 + $0x11c] sm:$0xf]
  %v135 = vld [vmem:[%s2] sm:$0x1]
  %v137 = vlaneseq
  %v138 = vshrl.u32 %v137, 7
  %v139 = vsub.s32 0, %v138
  %v140 = vrot.slane %v135, %v139
  %v190 = vunpack.c.l.b16 %v15
  %v191 = vunpack.c.h.b16 %v15
  %v192 = vunpack.c.l.b16 %v16
  %v193 = vunpack.c.h.b16 %v16
  %v194 = vunpack.c.l.b16 %v17
  %v195 = vunpack.c.l.b16 %v18
  %v196 = vunpack.c.h.b16 %v18
  %v197 = vunpack.c.l.b16 %v19
  %v198 = vunpack.c.h.b16 %v19
  %v199 = vunpack.c.l.b16 %v20
  %v200 = vunpack.c.l.b16 %v21
  %v201 = vunpack.c.h.b16 %v21
  %v202 = vunpack.c.l.b16 %v22
  %v203 = vunpack.c.h.b16 %v22
  %v204 = vunpack.c.l.b16 %v23
  %v205 = vunpack.c.l.b16 %v24
  %v206 = vunpack.c.h.b16 %v24
  %v207 = vunpack.c.l.b16 %v25
  %v208 = vunpack.c.h.b16 %v25
  %v209 = vunpack.c.l.b16 %v26
  %v210 = vunpack.c.l.b16 %v27
  %v211 = vunpack.c.h.b16 %v27
  %v212 = vunpack.c.l.b16 %v28
  %v213 = vunpack.c.h.b16 %v28
  %v214 = vunpack.c.l.b16 %v29
  %v215 = vunpack.c.l.b16 %v30
  %v216 = vunpack.c.h.b16 %v30
  %v217 = vunpack.c.l.b16 %v31
  %v218 = vunpack.c.h.b16 %v31
  %v219 = vunpack.c.l.b16 %v32
  %v220 = vunpack.c.l.b16 %v33
  %v221 = vunpack.c.h.b16 %v33
  %v222 = vunpack.c.l.b16 %v34
  %v223 = vunpack.c.h.b16 %v34
  %v224 = vunpack.c.l.b16 %v35
  %v225 = vunpack.c.l.b16 %v36
  %v226 = vunpack.c.h.b16 %v36
  %v227 = vunpack.c.l.b16 %v37
  %v228 = vunpack.c.h.b16 %v37
  %v229 = vunpack.c.l.b16 %v38
  %v230 = vunpack.c.l.b16 %v39
  %v231 = vunpack.c.h.b16 %v39
  %v232 = vunpack.c.l.b16 %v40
  %v233 = vunpack.c.h.b16 %v40
  %v234 = vunpack.c.l.b16 %v41
  %v235 = vunpack.c.l.b16 %v42
  %v236 = vunpack.c.h.b16 %v42
  %v237 = vunpack.c.l.b16 %v43
  %v238 = vunpack.c.h.b16 %v43
  %v239 = vunpack.c.l.b16 %v44
  %v240 = vunpack.c.l.b16 %v45
  %v241 = vunpack.c.h.b16 %v45
  %v242 = vunpack.c.l.b16 %v46
  %v243 = vunpack.c.h.b16 %v46
  %v244 = vunpack.c.l.b16 %v47
  %v245 = vunpack.c.l.b16 %v48
  %v246 = vunpack.c.h.b16 %v48
  %v247 = vunpack.c.l.b16 %v49
  %v248 = vunpack.c.h.b16 %v49
  %v249 = vunpack.c.l.b16 %v50
  %v250 = vunpack.c.l.b16 %v51
  %v251 = vunpack.c.h.b16 %v51
  %v252 = vunpack.c.l.b16 %v52
  %v253 = vunpack.c.h.b16 %v52
  %v254 = vunpack.c.l.b16 %v53
  %v255 = vunpack.c.l.b16 %v54
  %v256 = vunpack.c.h.b16 %v54
  %v257 = vunpack.c.l.b16 %v55
  %v258 = vunpack.c.h.b16 %v55
  %v259 = vunpack.c.l.b16 %v56
  %v260 = vunpack.c.l.b16 %v57
  %v261 = vunpack.c.h.b16 %v57
  %v262 = vunpack.c.l.b16 %v58
  %v263 = vunpack.c.h.b16 %v58
  %v264 = vunpack.c.l.b16 %v59
  %v265 = vunpack.c.l.b16 %v60
  %v266 = vunpack.c.h.b16 %v60
  %v267 = vunpack.c.l.b16 %v61
  %v268 = vunpack.c.h.b16 %v61
  %v269 = vunpack.c.l.b16 %v62
  %v270 = vpack.c.b16 %v195, %v190
  %v271 = vpack.c.b16 %v196, %v191
  %v272 = vpack.c.b16 %v197, %v192
  %v273 = vpack.c.b16 %v198, %v193
  %v274 = vpack.c.b16 %v199, %v194
  %v275 = vpack.c.b16 %v205, %v200
  %v276 = vpack.c.b16 %v206, %v201
  %v277 = vpack.c.b16 %v207, %v202
  %v278 = vpack.c.b16 %v208, %v203
  %v279 = vpack.c.b16 %v209, %v204
  %v280 = vpack.c.b16 %v215, %v210
  %v281 = vpack.c.b16 %v216, %v211
  %v282 = vpack.c.b16 %v217, %v212
  %v283 = vpack.c.b16 %v218, %v213
  %v284 = vpack.c.b16 %v219, %v214
  %v285 = vpack.c.b16 %v225, %v220
  %v286 = vpack.c.b16 %v226, %v221
  %v287 = vpack.c.b16 %v227, %v222
  %v288 = vpack.c.b16 %v228, %v223
  %v289 = vpack.c.b16 %v229, %v224
  %v290 = vpack.c.b16 %v235, %v230
  %v291 = vpack.c.b16 %v236, %v231
  %v292 = vpack.c.b16 %v237, %v232
  %v293 = vpack.c.b16 %v238, %v233
  %v294 = vpack.c.b16 %v239, %v234
  %v295 = vpack.c.b16 %v245, %v240
  %v296 = vpack.c.b16 %v246, %v241
  %v297 = vpack.c.b16 %v247, %v242
  %v298 = vpack.c.b16 %v248, %v243
  %v299 = vpack.c.b16 %v249, %v244
  %v300 = vpack.c.b16 %v255, %v250
  %v301 = vpack.c.b16 %v256, %v251
  %v302 = vpack.c.b16 %v257, %v252
  %v303 = vpack.c.b16 %v258, %v253
  %v304 = vpack.c.b16 %v259, %v254
  %v305 = vpack.c.b16 %v265, %v260
  %v306 = vpack.c.b16 %v266, %v261
  %v307 = vpack.c.b16 %v267, %v262
  %v308 = vpack.c.b16 %v268, %v263
  %v309 = vpack.c.b16 %v269, %v264
  %v414 = vunpack.c.l.b16 %v63
  %v415 = vunpack.c.l.b16 %v64
  %v416 = vunpack.c.l.b16 %v65
  %v417 = vunpack.c.l.b16 %v66
  %v418 = vunpack.c.l.b16 %v67
  %v419 = vunpack.c.l.b16 %v68
  %v420 = vunpack.c.l.b16 %v69
  %v421 = vunpack.c.l.b16 %v70
  %v422 = vunpack.c.l.b16 %v71
  %v423 = vunpack.c.l.b16 %v72
  %v424 = vunpack.c.l.b16 %v73
  %v425 = vunpack.c.l.b16 %v74
  %v426 = vunpack.c.l.b16 %v75
  %v427 = vunpack.c.l.b16 %v76
  %v428 = vunpack.c.l.b16 %v77
  %v429 = vunpack.c.l.b16 %v78
  %v430 = vunpack.c.l.b16 %v79
  %v431 = vunpack.c.l.b16 %v80
  %v432 = vunpack.c.l.b16 %v81
  %v433 = vunpack.c.l.b16 %v82
  %v434 = vunpack.c.l.b16 %v83
  %v435 = vunpack.c.l.b16 %v84
  %v436 = vunpack.c.l.b16 %v85
  %v437 = vunpack.c.l.b16 %v86
  %v438 = vunpack.c.l.b16 %v87
  %v439 = vunpack.c.l.b16 %v88
  %v440 = vunpack.c.l.b16 %v89
  %v441 = vunpack.c.l.b16 %v90
  %v442 = vunpack.c.l.b16 %v91
  %v443 = vunpack.c.l.b16 %v92
  %v444 = vunpack.c.l.b16 %v93
  %v445 = vunpack.c.l.b16 %v94
  %v446 = vunpack.c.l.b16 %v95
  %v447 = vunpack.c.l.b16 %v96
  %v448 = vunpack.c.l.b16 %v97
  %v449 = vunpack.c.l.b16 %v98
  %v450 = vunpack.c.l.b16 %v99
  %v451 = vunpack.c.l.b16 %v100
  %v452 = vunpack.c.l.b16 %v101
  %v453 = vunpack.c.l.b16 %v102
  %v454 = vunpack.c.l.b16 %v103
  %v455 = vunpack.c.l.b16 %v104
  %v456 = vunpack.c.l.b16 %v105
  %v457 = vunpack.c.l.b16 %v106
  %v458 = vunpack.c.l.b16 %v107
  %v459 = vunpack.c.l.b16 %v108
  %v460 = vunpack.c.l.b16 %v109
  %v461 = vunpack.c.l.b16 %v110
  %v462 = vunpack.c.l.b16 %v111
  %v463 = vunpack.c.l.b16 %v112
  %v464 = vunpack.c.l.b16 %v113
  %v465 = vunpack.c.l.b16 %v114
  %v466 = vunpack.c.l.b16 %v115
  %v467 = vunpack.c.l.b16 %v116
  %v468 = vunpack.c.l.b16 %v117
  %v469 = vunpack.c.l.b16 %v118
  %v470 = vunpack.c.l.b16 %v119
  %v471 = vunpack.c.l.b16 %v120
  %v472 = vunpack.c.l.b16 %v121
  %v473 = vunpack.c.l.b16 %v122
  %v474 = vunpack.c.l.b16 %v123
  %v475 = vunpack.c.l.b16 %v124
  %v476 = vunpack.c.l.b16 %v125
  %v477 = vunpack.c.l.b16 %v126
  %v478 = vunpack.c.l.b16 %v127
  %v479 = vunpack.c.l.b16 %v128
  %v480 = vunpack.c.l.b16 %v129
  %v481 = vunpack.c.l.b16 %v130
  %v482 = vunpack.c.l.b16 %v131
  %v483 = vunpack.c.l.b16 %v132
  %v484 = vunpack.c.l.b16 %v133
  %v485 = vunpack.c.l.b16 %v134
  %v486 = vpack.c.b16 %v415, %v414
  %v487 = vpack.c.b16 %v417, %v416
  %v488 = vpack.c.b16 %v419, %v418
  %v489 = vpack.c.b16 %v421, %v420
  %v490 = vpack.c.b16 %v423, %v422
  %v491 = vpack.c.b16 %v425, %v424
  %v492 = vpack.c.b16 %v427, %v426
  %v493 = vpack.c.b16 %v429, %v428
  %v494 = vpack.c.b16 %v431, %v430
  %v495 = vpack.c.b16 %v433, %v432
  %v496 = vpack.c.b16 %v435, %v434
  %v497 = vpack.c.b16 %v437, %v436
  %v498 = vpack.c.b16 %v439, %v438
  %v499 = vpack.c.b16 %v441, %v440
  %v500 = vpack.c.b16 %v443, %v442
  %v501 = vpack.c.b16 %v445, %v444
  %v502 = vpack.c.b16 %v447, %v446
  %v503 = vpack.c.b16 %v449, %v448
  %v504 = vpack.c.b16 %v451, %v450
  %v505 = vpack.c.b16 %v453, %v452
  %v506 = vpack.c.b16 %v455, %v454
  %v507 = vpack.c.b16 %v457, %v456
  %v508 = vpack.c.b16 %v459, %v458
  %v509 = vpack.c.b16 %v461, %v460
  %v510 = vpack.c.b16 %v463, %v462
  %v511 = vpack.c.b16 %v465, %v464
  %v512 = vpack.c.b16 %v467, %v466
  %v513 = vpack.c.b16 %v469, %v468
  %v514 = vpack.c.b16 %v471, %v470
  %v515 = vpack.c.b16 %v473, %v472
  %v516 = vpack.c.b16 %v475, %v474
  %v517 = vpack.c.b16 %v477, %v476
  %v518 = vpack.c.b16 %v479, %v478
  %v519 = vpack.c.b16 %v481, %v480
  %v520 = vpack.c.b16 %v483, %v482
  %v521 = vpack.c.b16 %v485, %v484
  %vm558 = vcmask 523264
  %v560 = vsel %vm558, %v274, 0
  %v563 = vsel %vm558, %v279, 0
  %v566 = vsel %vm558, %v284, 0
  %v569 = vsel %vm558, %v289, 0
  %v572 = vsel %vm558, %v294, 0
  %v575 = vsel %vm558, %v299, 0
  %v578 = vsel %vm558, %v304, 0
  %v581 = vsel %vm558, %v309, 0
  %583 = vmatprep.subr.bf16.mxu0 0
  %584 = vmatpush1.bf16.msra.mxu0 %v486
  %585 = vmatprep.subr.bf16.mxu0 0
  %586 = vmatpush1.bf16.msra.mxu0 %v487
  %587 = vmatprep.subr.bf16.mxu0 0
  %588 = vmatpush1.bf16.msra.mxu0 %v488
  %589 = vmatprep.subr.bf16.mxu0 0
  %590 = vmatpush1.bf16.msra.mxu0 %v489
  %591 = vmatprep.subr.bf16.mxu0 0
  %592 = vmatpush1.bf16.msra.mxu0 %v490
  %593 = vmatprep.subr.bf16.mxu0 0
  %594 = vmatpush1.bf16.msra.mxu0 %v491
  %595 = vmatprep.subr.bf16.mxu0 0
  %596 = vmatpush1.bf16.msra.mxu0 %v492
  %597 = vmatprep.subr.bf16.mxu0 0
  %598 = vmatpush1.bf16.msra.mxu0 %v493
  %599 = vmatprep.subr.bf16.mxu0 0
  %600 = vmatpush1.bf16.msra.mxu0 %v494
  %601 = vmatprep.subr.bf16.mxu0 0
  %602 = vmatpush1.bf16.msra.mxu0 %v495
  %603 = vmatprep.subr.bf16.mxu0 0
  %604 = vmatpush1.bf16.msra.mxu0 %v496
  %605 = vmatprep.subr.bf16.mxu0 0
  %606 = vmatpush1.bf16.msra.mxu0 %v497
  %607 = vmatprep.subr.bf16.mxu0 0
  %608 = vmatpush1.bf16.msra.mxu0 %v498
  %609 = vmatprep.subr.bf16.mxu0 0
  %610 = vmatpush1.bf16.msra.mxu0 %v499
  %611 = vmatprep.subr.bf16.mxu0 0
  %612 = vmatpush1.bf16.msra.mxu0 %v500
  %613 = vmatprep.subr.bf16.mxu0 0
  %614 = vmatpush1.bf16.msra.mxu0 %v501
  %615 = vmatprep.mubr.bf16.mxu0 %v271
  %616 = vmatmul.mubr.bf16.gmra.mrb[0].mxu0 %v270
  %v617 = vpop.f32.mrb[0].mxu0
  %v618 = vadd.f32 %v140, %v617
  %v619 = vpop.f32.mrb[0].mxu0
  %v620 = vpop.f32.mrb[0].mxu0
  %v621 = vadd.f32 %v140, %v620
  %v622 = vpop.f32.mrb[0].mxu0
  %623 = vmatprep.mubr.bf16.mxu0 %v276
  %624 = vmatmul.mubr.bf16.gmra.mrb[0].mxu0 %v275
  %v625 = vpop.f32.mrb[0].mxu0
  %v626 = vadd.f32 %v140, %v625
  %v627 = vpop.f32.mrb[0].mxu0
  %v628 = vpop.f32.mrb[0].mxu0
  %v629 = vadd.f32 %v140, %v628
  %v630 = vpop.f32.mrb[0].mxu0
  %631 = vmatprep.mubr.bf16.mxu0 %v281
  %632 = vmatmul.mubr.bf16.gmra.mrb[0].mxu0 %v280
  %v633 = vpop.f32.mrb[0].mxu0
  %v634 = vadd.f32 %v140, %v633
  %v635 = vpop.f32.mrb[0].mxu0
  %v636 = vpop.f32.mrb[0].mxu0
  %v637 = vadd.f32 %v140, %v636
  %v638 = vpop.f32.mrb[0].mxu0
  %639 = vmatprep.mubr.bf16.mxu0 %v286
  %640 = vmatmul.mubr.bf16.gmra.mrb[0].mxu0 %v285
  %v641 = vpop.f32.mrb[0].mxu0
  %v642 = vadd.f32 %v140, %v641
  %v643 = vpop.f32.mrb[0].mxu0
  %v644 = vpop.f32.mrb[0].mxu0
  %v645 = vadd.f32 %v140, %v644
  %v646 = vpop.f32.mrb[0].mxu0
  %647 = vmatprep.mubr.bf16.mxu0 %v291
  %648 = vmatmul.mubr.bf16.gmra.mrb[0].mxu0 %v290
  %v649 = vpop.f32.mrb[0].mxu0
  %v650 = vadd.f32 %v140, %v649
  %v651 = vpop.f32.mrb[0].mxu0
  %v652 = vpop.f32.mrb[0].mxu0
  %v653 = vadd.f32 %v140, %v652
  %v654 = vpop.f32.mrb[0].mxu0
  %655 = vmatprep.mubr.bf16.mxu0 %v296
  %656 = vmatmul.mubr.bf16.gmra.mrb[0].mxu0 %v295
  %v657 = vpop.f32.mrb[0].mxu0
  %v658 = vadd.f32 %v140, %v657
  %v659 = vpop.f32.mrb[0].mxu0
  %v660 = vpop.f32.mrb[0].mxu0
  %v661 = vadd.f32 %v140, %v660
  %v662 = vpop.f32.mrb[0].mxu0
  %663 = vmatprep.mubr.bf16.mxu0 %v301
  %664 = vmatmul.mubr.bf16.gmra.mrb[0].mxu0 %v300
  %v665 = vpop.f32.mrb[0].mxu0
  %v666 = vadd.f32 %v140, %v665
  %v667 = vpop.f32.mrb[0].mxu0
  %v668 = vpop.f32.mrb[0].mxu0
  %v669 = vadd.f32 %v140, %v668
  %v670 = vpop.f32.mrb[0].mxu0
  %671 = vmatprep.mubr.bf16.mxu0 %v306
  %672 = vmatmul.mubr.bf16.gmra.mrb[0].mxu0 %v305
  %v673 = vpop.f32.mrb[0].mxu0
  %v674 = vadd.f32 %v140, %v673
  %v675 = vpop.f32.mrb[0].mxu0
  %v676 = vpop.f32.mrb[0].mxu0
  %v677 = vadd.f32 %v140, %v676
  %v678 = vpop.f32.mrb[0].mxu0
  %679 = vdwg.mxu0
  %680 = vmatprep.subr.bf16.mxu0 0
  %681 = vmatpush1.bf16.msra.mxu0 %v502
  %682 = vmatprep.subr.bf16.mxu0 0
  %683 = vmatpush1.bf16.msra.mxu0 %v503
  %684 = vmatprep.subr.bf16.mxu0 0
  %685 = vmatpush1.bf16.msra.mxu0 %v504
  %686 = vmatprep.subr.bf16.mxu0 0
  %687 = vmatpush1.bf16.msra.mxu0 %v505
  %688 = vmatprep.subr.bf16.mxu0 0
  %689 = vmatpush1.bf16.msra.mxu0 %v506
  %690 = vmatprep.subr.bf16.mxu0 0
  %691 = vmatpush1.bf16.msra.mxu0 %v507
  %692 = vmatprep.subr.bf16.mxu0 0
  %693 = vmatpush1.bf16.msra.mxu0 %v508
  %694 = vmatprep.subr.bf16.mxu0 0
  %695 = vmatpush1.bf16.msra.mxu0 %v509
  %696 = vmatprep.subr.bf16.mxu0 0
  %697 = vmatpush1.bf16.msra.mxu0 %v510
  %698 = vmatprep.subr.bf16.mxu0 0
  %699 = vmatpush1.bf16.msra.mxu0 %v511
  %700 = vmatprep.subr.bf16.mxu0 0
  %701 = vmatpush1.bf16.msra.mxu0 %v512
  %702 = vmatprep.subr.bf16.mxu0 0
  %703 = vmatpush1.bf16.msra.mxu0 %v513
  %704 = vmatprep.subr.bf16.mxu0 0
  %705 = vmatpush1.bf16.msra.mxu0 %v514
  %706 = vmatprep.subr.bf16.mxu0 0
  %707 = vmatpush1.bf16.msra.mxu0 %v515
  %708 = vmatprep.subr.bf16.mxu0 0
  %709 = vmatpush1.bf16.msra.mxu0 %v516
  %710 = vmatprep.subr.bf16.mxu0 0
  %711 = vmatpush1.bf16.msra.mxu0 %v517
  %712 = vmatprep.mubr.bf16.mxu0 %v273
  %713 = vmatmul.mubr.bf16.gmra.mrb[0].mxu0 %v272
  %v714 = vpop.f32.mrb[0].mxu0
  %v715 = vadd.f32 %v618, %v714
  %v716 = vpop.f32.mrb[0].mxu0
  %v717 = vpop.f32.mrb[0].mxu0
  %v718 = vadd.f32 %v621, %v717
  %v719 = vpop.f32.mrb[0].mxu0
  %720 = vmatprep.mubr.bf16.mxu0 %v278
  %721 = vmatmul.mubr.bf16.gmra.mrb[0].mxu0 %v277
  %v722 = vpop.f32.mrb[0].mxu0
  %v723 = vadd.f32 %v626, %v722
  %v724 = vpop.f32.mrb[0].mxu0
  %v725 = vpop.f32.mrb[0].mxu0
  %v726 = vadd.f32 %v629, %v725
  %v727 = vpop.f32.mrb[0].mxu0
  %728 = vmatprep.mubr.bf16.mxu0 %v283
  %729 = vmatmul.mubr.bf16.gmra.mrb[0].mxu0 %v282
  %v730 = vpop.f32.mrb[0].mxu0
  %v731 = vadd.f32 %v634, %v730
  %v732 = vpop.f32.mrb[0].mxu0
  %v733 = vpop.f32.mrb[0].mxu0
  %v734 = vadd.f32 %v637, %v733
  %v735 = vpop.f32.mrb[0].mxu0
  %736 = vmatprep.mubr.bf16.mxu0 %v288
  %737 = vmatmul.mubr.bf16.gmra.mrb[0].mxu0 %v287
  %v738 = vpop.f32.mrb[0].mxu0
  %v739 = vadd.f32 %v642, %v738
  %v740 = vpop.f32.mrb[0].mxu0
  %v741 = vpop.f32.mrb[0].mxu0
  %v742 = vadd.f32 %v645, %v741
  %v743 = vpop.f32.mrb[0].mxu0
  %744 = vmatprep.mubr.bf16.mxu0 %v293
  %745 = vmatmul.mubr.bf16.gmra.mrb[0].mxu0 %v292
  %v746 = vpop.f32.mrb[0].mxu0
  %v747 = vadd.f32 %v650, %v746
  %v748 = vpop.f32.mrb[0].mxu0
  %v749 = vpop.f32.mrb[0].mxu0
  %v750 = vadd.f32 %v653, %v749
  %v751 = vpop.f32.mrb[0].mxu0
  %752 = vmatprep.mubr.bf16.mxu0 %v298
  %753 = vmatmul.mubr.bf16.gmra.mrb[0].mxu0 %v297
  %v754 = vpop.f32.mrb[0].mxu0
  %v755 = vadd.f32 %v658, %v754
  %v756 = vpop.f32.mrb[0].mxu0
  %v757 = vpop.f32.mrb[0].mxu0
  %v758 = vadd.f32 %v661, %v757
  %v759 = vpop.f32.mrb[0].mxu0
  %760 = vmatprep.mubr.bf16.mxu0 %v303
  %761 = vmatmul.mubr.bf16.gmra.mrb[0].mxu0 %v302
  %v762 = vpop.f32.mrb[0].mxu0
  %v763 = vadd.f32 %v666, %v762
  %v764 = vpop.f32.mrb[0].mxu0
  %v765 = vpop.f32.mrb[0].mxu0
  %v766 = vadd.f32 %v669, %v765
  %v767 = vpop.f32.mrb[0].mxu0
  %768 = vmatprep.mubr.bf16.mxu0 %v308
  %769 = vmatmul.mubr.bf16.gmra.mrb[0].mxu0 %v307
  %v770 = vpop.f32.mrb[0].mxu0
  %v771 = vadd.f32 %v674, %v770
  %v772 = vpop.f32.mrb[0].mxu0
  %v773 = vpop.f32.mrb[0].mxu0
  %v774 = vadd.f32 %v677, %v773
  %v775 = vpop.f32.mrb[0].mxu0
  %776 = vdwg.mxu0
  %777 = vmatprep.subr.bf16.mxu0 0
  %778 = vmatpush1.bf16.msra.mxu0 %v518
  %779 = vmatprep.subr.bf16.mxu0 0
  %780 = vmatpush1.bf16.msra.mxu0 %v519
  %781 = vmatprep.subr.bf16.mxu0 0
  %782 = vmatpush1.bf16.msra.mxu0 %v520
  %783 = vmatprep.subr.bf16.mxu0 0
  %784 = vmatpush1.bf16.msra.mxu0 %v521
  %785 = vmatprep.subr.bf16.mxu0 0
  %786 = vmatpush1.bf16.msra.mxu0 0
  %787 = vmatprep.subr.bf16.mxu0 0
  %788 = vmatpush1.bf16.msra.mxu0 0
  %789 = vmatprep.subr.bf16.mxu0 0
  %790 = vmatpush1.bf16.msra.mxu0 0
  %791 = vmatprep.subr.bf16.mxu0 0
  %792 = vmatpush1.bf16.msra.mxu0 0
  %793 = vmatprep.subr.bf16.mxu0 0
  %794 = vmatpush1.bf16.msra.mxu0 0
  %795 = vmatprep.subr.bf16.mxu0 0
  %796 = vmatpush1.bf16.msra.mxu0 0
  %797 = vmatprep.subr.bf16.mxu0 0
  %798 = vmatpush1.bf16.msra.mxu0 0
  %799 = vmatprep.subr.bf16.mxu0 0
  %800 = vmatpush1.bf16.msra.mxu0 0
  %801 = vmatprep.subr.bf16.mxu0 0
  %802 = vmatpush1.bf16.msra.mxu0 0
  %803 = vmatprep.subr.bf16.mxu0 0
  %804 = vmatpush1.bf16.msra.mxu0 0
  %805 = vmatprep.subr.bf16.mxu0 0
  %806 = vmatpush1.bf16.msra.mxu0 0
  %807 = vmatprep.subr.bf16.mxu0 0
  %808 = vmatpush1.bf16.msra.mxu0 0
  %809 = vmatprep.mubr.bf16.mxu0 0
  %810 = vmatmul.mubr.bf16.gmra.mrb[0].mxu0 %v560
  %v811 = vpop.f32.mrb[0].mxu0
  %v812 = vadd.f32 %v715, %v811
  %v813 = vpop.f32.mrb[0].mxu0
  %v814 = vpop.f32.mrb[0].mxu0
  %v815 = vadd.f32 %v718, %v814
  %v816 = vpop.f32.mrb[0].mxu0
  %817 = vmatprep.mubr.bf16.mxu0 0
  %818 = vmatmul.mubr.bf16.gmra.mrb[0].mxu0 %v563
  %v819 = vpop.f32.mrb[0].mxu0
  %v820 = vadd.f32 %v723, %v819
  %v821 = vpop.f32.mrb[0].mxu0
  %v822 = vpop.f32.mrb[0].mxu0
  %v823 = vadd.f32 %v726, %v822
  %v824 = vpop.f32.mrb[0].mxu0
  %825 = vmatprep.mubr.bf16.mxu0 0
  %826 = vmatmul.mubr.bf16.gmra.mrb[0].mxu0 %v566
  %v827 = vpop.f32.mrb[0].mxu0
  %v828 = vadd.f32 %v731, %v827
  %v829 = vpop.f32.mrb[0].mxu0
  %v830 = vpop.f32.mrb[0].mxu0
  %v831 = vadd.f32 %v734, %v830
  %v832 = vpop.f32.mrb[0].mxu0
  %833 = vmatprep.mubr.bf16.mxu0 0
  %834 = vmatmul.mubr.bf16.gmra.mrb[0].mxu0 %v569
  %v835 = vpop.f32.mrb[0].mxu0
  %v836 = vadd.f32 %v739, %v835
  %v837 = vpop.f32.mrb[0].mxu0
  %v838 = vpop.f32.mrb[0].mxu0
  %v839 = vadd.f32 %v742, %v838
  %v840 = vpop.f32.mrb[0].mxu0
  %841 = vmatprep.mubr.bf16.mxu0 0
  %842 = vmatmul.mubr.bf16.gmra.mrb[0].mxu0 %v572
  %v843 = vpop.f32.mrb[0].mxu0
  %v844 = vadd.f32 %v747, %v843
  %v845 = vpop.f32.mrb[0].mxu0
  %v846 = vpop.f32.mrb[0].mxu0
  %v847 = vadd.f32 %v750, %v846
  %v848 = vpop.f32.mrb[0].mxu0
  %849 = vmatprep.mubr.bf16.mxu0 0
  %850 = vmatmul.mubr.bf16.gmra.mrb[0].mxu0 %v575
  %v851 = vpop.f32.mrb[0].mxu0
  %v852 = vadd.f32 %v755, %v851
  %v853 = vpop.f32.mrb[0].mxu0
  %v854 = vpop.f32.mrb[0].mxu0
  %v855 = vadd.f32 %v758, %v854
  %v856 = vpop.f32.mrb[0].mxu0
  %857 = vmatprep.mubr.bf16.mxu0 0
  %858 = vmatmul.mubr.bf16.gmra.mrb[0].mxu0 %v578
  %v859 = vpop.f32.mrb[0].mxu0
  %v860 = vadd.f32 %v763, %v859
  %v861 = vpop.f32.mrb[0].mxu0
  %v862 = vpop.f32.mrb[0].mxu0
  %v863 = vadd.f32 %v766, %v862
  %v864 = vpop.f32.mrb[0].mxu0
  %865 = vmatprep.mubr.bf16.mxu0 0
  %866 = vmatmul.mubr.bf16.gmra.mrb[0].mxu0 %v581
  %v867 = vpop.f32.mrb[0].mxu0
  %v868 = vadd.f32 %v771, %v867
  %v869 = vpop.f32.mrb[0].mxu0
  %v870 = vpop.f32.mrb[0].mxu0
  %v871 = vadd.f32 %v774, %v870
  %v872 = vpop.f32.mrb[0].mxu0
  %873 = vdwg.mxu0
  %v874 = vmax.f32 %v812, 0.0
  %v875 = vmax.f32 %v815, 0.0
  %v876 = vmax.f32 %v820, 0.0
  %v877 = vmax.f32 %v823, 0.0
  %v878 = vmax.f32 %v828, 0.0
  %v879 = vmax.f32 %v831, 0.0
  %v880 = vmax.f32 %v836, 0.0
  %v881 = vmax.f32 %v839, 0.0
  %v882 = vmax.f32 %v844, 0.0
  %v883 = vmax.f32 %v847, 0.0
  %v884 = vmax.f32 %v852, 0.0
  %v885 = vmax.f32 %v855, 0.0
  %v886 = vmax.f32 %v860, 0.0
  %v887 = vmax.f32 %v863, 0.0
  %v888 = vmax.f32 %v868, 0.0
  %v889 = vmax.f32 %v871, 0.0
  %v890 = vpack.c.bf16 %v875, %v874
  %v891 = vpack.c.bf16 %v877, %v876
  %v892 = vpack.c.bf16 %v879, %v878
  %v893 = vpack.c.bf16 %v881, %v880
  %v894 = vpack.c.bf16 %v883, %v882
  %v895 = vpack.c.bf16 %v885, %v884
  %v896 = vpack.c.bf16 %v887, %v886
  %v897 = vpack.c.bf16 %v889, %v888
  %v906 = vunpack.c.l.b16 %v890
  %v907 = vunpack.c.h.b16 %v890
  %v908 = vunpack.c.l.b16 %v891
  %v909 = vunpack.c.h.b16 %v891
  %v910 = vunpack.c.l.b16 %v892
  %v911 = vunpack.c.h.b16 %v892
  %v912 = vunpack.c.l.b16 %v893
  %v913 = vunpack.c.h.b16 %v893
  %v914 = vunpack.c.l.b16 %v894
  %v915 = vunpack.c.h.b16 %v894
  %v916 = vunpack.c.l.b16 %v895
  %v917 = vunpack.c.h.b16 %v895
  %v918 = vunpack.c.l.b16 %v896
  %v919 = vunpack.c.h.b16 %v896
  %v920 = vunpack.c.l.b16 %v897
  %v921 = vunpack.c.h.b16 %v897
  %v922 = vpack.c.b16 %v906, %v906
  %v923 = vpack.c.b16 %v907, %v907
  %v924 = vpack.c.b16 %v908, %v908
  %v925 = vpack.c.b16 %v909, %v909
  %v926 = vpack.c.b16 %v910, %v910
  %v927 = vpack.c.b16 %v911, %v911
  %v928 = vpack.c.b16 %v912, %v912
  %v929 = vpack.c.b16 %v913, %v913
  %v930 = vpack.c.b16 %v914, %v914
  %v931 = vpack.c.b16 %v915, %v915
  %v932 = vpack.c.b16 %v916, %v916
  %v933 = vpack.c.b16 %v917, %v917
  %v934 = vpack.c.b16 %v918, %v918
  %v935 = vpack.c.b16 %v919, %v919
  %v936 = vpack.c.b16 %v920, %v920
  %v937 = vpack.c.b16 %v921, %v921
  %vm954 = vcmask 519168
  %955 = vst.msk [vmem:[%s3] sm:$0xf] %vm954, %v922
  %956 = vst.msk [vmem:[%s3 + $0x4] sm:$0xf] %vm954, %v923
  %957 = vst.msk [vmem:[%s3 + $0x8] sm:$0xf] %vm954, %v924
  %958 = vst.msk [vmem:[%s3 + $0xc] sm:$0xf] %vm954, %v925
  %959 = vst.msk [vmem:[%s3 + $0x10] sm:$0xf] %vm954, %v926
  %960 = vst.msk [vmem:[%s3 + $0x14] sm:$0xf] %vm954, %v927
  %961 = vst.msk [vmem:[%s3 + $0x18] sm:$0xf] %vm954, %v928
  %962 = vst.msk [vmem:[%s3 + $0x1c] sm:$0xf] %vm954, %v929
  %963 = vst.msk [vmem:[%s3 + $0x20] sm:$0xf] %vm954, %v930
  %964 = vst.msk [vmem:[%s3 + $0x24] sm:$0xf] %vm954, %v931
  %965 = vst.msk [vmem:[%s3 + $0x28] sm:$0xf] %vm954, %v932
  %966 = vst.msk [vmem:[%s3 + $0x2c] sm:$0xf] %vm954, %v933
  %967 = vst.msk [vmem:[%s3 + $0x30] sm:$0xf] %vm954, %v934
  %968 = vst.msk [vmem:[%s3 + $0x34] sm:$0xf] %vm954, %v935
  %969 = vst.msk [vmem:[%s3 + $0x38] sm:$0xf] %vm954, %v936
  %970 = vst.msk [vmem:[%s3 + $0x3c] sm:$0xf] %vm954, %v937
  // Predicated region
  $region14: #{drqn_forward.8} parent=0 // pred_check
    _
  $region15: #{drqn_forward.8} parent=0 // pred_check_branch
    %972 = sbr.rel (0) target = $region17
  $region16: #{drqn_forward.8} parent=0 // pred_region
    _
  $region17: #{drqn_forward.8} parent=0 // pred_fallthru
    _
  // Predicated region
  $region18: #{drqn_forward.8} parent=0 // pred_check
    _
  $region19: #{drqn_forward.8} parent=0 // pred_check_branch
    %974 = sbr.rel (0) target = $region21
  $region20: #{drqn_forward.8} parent=0 // pred_region
    _
  $region21: #{drqn_forward.8} parent=0 // pred_fallthru
    _

// kernel: drqn_forward.9
$region0: #{drqn_forward.9}
  #allocation0 [shape = 'u32[]', space=smem, size = 0x4, offset = 0x4, fixed_abs, tag = 'smem constant byte address 0x4 - core index']
  #allocation1 [shape = 'u32[144,128]{1,0:T(1,128)}', space=vmem, size = 0x12000, scoped, tag = 'internal scratch']
  %s0 = inlined_call_operand.vmem [shape: bf16[8,1024], index: 0, kind: input, shape index: {}]
  %s1 = inlined_call_operand.vmem [shape: bf16[1024,384], index: 1, kind: input, shape index: {}]
  %s2 = inlined_call_operand.vmem [shape: f32[1,384], index: 2, kind: input, shape index: {}]
  %s3 = inlined_call_operand.vmem [shape: f32[8,384], index: 3, kind: output, shape index: {}]
  %s4 = sld [smem:[#allocation0]]
  $region22: #{drqn_forward.9} parent=0
    _
  %s6 = ssub.s32 1, %s4
  %s7 = scalar_select 0, %s6, %s4
  // Predicated region
  $region2: #{drqn_forward.9} parent=0 // pred_check
    _
  $region3: #{drqn_forward.9} parent=0 // pred_check_branch
    %9 = sbr.rel (0) target = $region5
  $region4: #{drqn_forward.9} parent=0 // pred_region
    _
  $region5: #{drqn_forward.9} parent=0 // pred_fallthru
    _
  // Predicated region
  $region6: #{drqn_forward.9} parent=0 // pred_check
    _
  $region7: #{drqn_forward.9} parent=0 // pred_check_branch
    %11 = sbr.rel (0) target = $region9
  $region8: #{drqn_forward.9} parent=0 // pred_region
    _
  $region9: #{drqn_forward.9} parent=0 // pred_fallthru
    _
  // Predicated region
  $region10: #{drqn_forward.9} parent=0 // pred_check
    _
  $region11: #{drqn_forward.9} parent=0 // pred_check_branch
    %13 = sbr.rel (0) target = $region13
  $region12: #{drqn_forward.9} parent=0 // pred_region
    _
  $region13: #{drqn_forward.9} parent=0 // pred_fallthru
    _
  %v15 = vld [vmem:[%s0] sm:$0xff]
  %v16 = vld [vmem:[%s0 + $0x8] sm:$0xff]
  %v17 = vld [vmem:[%s0 + $0x10] sm:$0xff]
  %v18 = vld [vmem:[%s0 + $0x18] sm:$0xff]
  %v19 = vld [vmem:[%s1] sm:$0xff]
  %v20 = vld [vmem:[%s1 + $0x8] sm:$0xf]
  %v21 = vld [vmem:[%s1 + $0xc] sm:$0xff]
  %v22 = vld [vmem:[%s1 + $0x14] sm:$0xf]
  %v23 = vld [vmem:[%s1 + $0x18] sm:$0xff]
  %v24 = vld [vmem:[%s1 + $0x20] sm:$0xf]
  %v25 = vld [vmem:[%s1 + $0x24] sm:$0xff]
  %v26 = vld [vmem:[%s1 + $0x2c] sm:$0xf]
  %v27 = vld [vmem:[%s1 + $0x30] sm:$0xff]
  %v28 = vld [vmem:[%s1 + $0x38] sm:$0xf]
  %v29 = vld [vmem:[%s1 + $0x3c] sm:$0xff]
  %v30 = vld [vmem:[%s1 + $0x44] sm:$0xf]
  %v31 = vld [vmem:[%s1 + $0x48] sm:$0xff]
  %v32 = vld [vmem:[%s1 + $0x50] sm:$0xf]
  %v33 = vld [vmem:[%s1 + $0x54] sm:$0xff]
  %v34 = vld [vmem:[%s1 + $0x5c] sm:$0xf]
  %v35 = vld [vmem:[%s1 + $0x60] sm:$0xff]
  %v36 = vld [vmem:[%s1 + $0x68] sm:$0xf]
  %v37 = vld [vmem:[%s1 + $0x6c] sm:$0xff]
  %v38 = vld [vmem:[%s1 + $0x74] sm:$0xf]
  %v39 = vld [vmem:[%s1 + $0x78] sm:$0xff]
  %v40 = vld [vmem:[%s1 + $0x80] sm:$0xf]
  %v41 = vld [vmem:[%s1 + $0x84] sm:$0xff]
  %v42 = vld [vmem:[%s1 + $0x8c] sm:$0xf]
  %v43 = vld [vmem:[%s1 + $0x90] sm:$0xff]
  %v44 = vld [vmem:[%s1 + $0x98] sm:$0xf]
  %v45 = vld [vmem:[%s1 + $0x9c] sm:$0xff]
  %v46 = vld [vmem:[%s1 + $0xa4] sm:$0xf]
  %v47 = vld [vmem:[%s1 + $0xa8] sm:$0xff]
  %v48 = vld [vmem:[%s1 + $0xb0] sm:$0xf]
  %v49 = vld [vmem:[%s1 + $0xb4] sm:$0xff]
  %v50 = vld [vmem:[%s1 + $0xbc] sm:$0xf]
  %v51 = vld [vmem:[%s1 + $0xc0] sm:$0xff]
  %v52 = vld [vmem:[%s1 + $0xc8] sm:$0xf]
  %v53 = vld [vmem:[%s1 + $0xcc] sm:$0xff]
  %v54 = vld [vmem:[%s1 + $0xd4] sm:$0xf]
  %v55 = vld [vmem:[%s1 + $0xd8] sm:$0xff]
  %v56 = vld [vmem:[%s1 + $0xe0] sm:$0xf]
  %v57 = vld [vmem:[%s1 + $0xe4] sm:$0xff]
  %v58 = vld [vmem:[%s1 + $0xec] sm:$0xf]
  %v59 = vld [vmem:[%s1 + $0xf0] sm:$0xff]
  %v60 = vld [vmem:[%s1 + $0xf8] sm:$0xf]
  %v61 = vld [vmem:[%s1 + $0xfc] sm:$0xff]
  %v62 = vld [vmem:[%s1 + $0x104] sm:$0xf]
  %v63 = vld [vmem:[%s1 + $0x108] sm:$0xff]
  %v64 = vld [vmem:[%s1 + $0x110] sm:$0xf]
  %v65 = vld [vmem:[%s1 + $0x114] sm:$0xff]
  %v66 = vld [vmem:[%s1 + $0x11c] sm:$0xf]
  %v67 = vld [vmem:[%s1 + $0x120] sm:$0xff]
  %v68 = vld [vmem:[%s1 + $0x128] sm:$0xf]
  %v69 = vld [vmem:[%s1 + $0x12c] sm:$0xff]
  %v70 = vld [vmem:[%s1 + $0x134] sm:$0xf]
  %v71 = vld [vmem:[%s1 + $0x138] sm:$0xff]
  %v72 = vld [vmem:[%s1 + $0x140] sm:$0xf]
  %v73 = vld [vmem:[%s1 + $0x144] sm:$0xff]
  %v74 = vld [vmem:[%s1 + $0x14c] sm:$0xf]
  %v75 = vld [vmem:[%s1 + $0x150] sm:$0xff]
  %v76 = vld [vmem:[%s1 + $0x158] sm:$0xf]
  %v77 = vld [vmem:[%s1 + $0x15c] sm:$0xff]
  %v78 = vld [vmem:[%s1 + $0x164] sm:$0xf]
  %v79 = vld [vmem:[%s1 + $0x168] sm:$0xff]
  %v80 = vld [vmem:[%s1 + $0x170] sm:$0xf]
  %v81 = vld [vmem:[%s1 + $0x174] sm:$0xff]
  %v82 = vld [vmem:[%s1 + $0x17c] sm:$0xf]
  %v83 = vld [vmem:[%s1 + $0x180] sm:$0xff]
  %v84 = vld [vmem:[%s1 + $0x188] sm:$0xf]
  %v85 = vld [vmem:[%s1 + $0x18c] sm:$0xff]
  %v86 = vld [vmem:[%s1 + $0x194] sm:$0xf]
  %v87 = vld [vmem:[%s1 + $0x198] sm:$0xff]
  %v88 = vld [vmem:[%s1 + $0x1a0] sm:$0xf]
  %v89 = vld [vmem:[%s1 + $0x1a4] sm:$0xff]
  %v90 = vld [vmem:[%s1 + $0x1ac] sm:$0xf]
  %v91 = vld [vmem:[%s1 + $0x1b0] sm:$0xff]
  %v92 = vld [vmem:[%s1 + $0x1b8] sm:$0xf]
  %v93 = vld [vmem:[%s1 + $0x1bc] sm:$0xff]
  %v94 = vld [vmem:[%s1 + $0x1c4] sm:$0xf]
  %v95 = vld [vmem:[%s1 + $0x1c8] sm:$0xff]
  %v96 = vld [vmem:[%s1 + $0x1d0] sm:$0xf]
  %v97 = vld [vmem:[%s1 + $0x1d4] sm:$0xff]
  %v98 = vld [vmem:[%s1 + $0x1dc] sm:$0xf]
  %v99 = vld [vmem:[%s1 + $0x1e0] sm:$0xff]
  %v100 = vld [vmem:[%s1 + $0x1e8] sm:$0xf]
  %v101 = vld [vmem:[%s1 + $0x1ec] sm:$0xff]
  %v102 = vld [vmem:[%s1 + $0x1f4] sm:$0xf]
  %v103 = vld [vmem:[%s1 + $0x1f8] sm:$0xff]
  %v104 = vld [vmem:[%s1 + $0x200] sm:$0xf]
  %v105 = vld [vmem:[%s1 + $0x204] sm:$0xff]
  %v106 = vld [vmem:[%s1 + $0x20c] sm:$0xf]
  %v107 = vld [vmem:[%s1 + $0x210] sm:$0xff]
  %v108 = vld [vmem:[%s1 + $0x218] sm:$0xf]
  %v109 = vld [vmem:[%s1 + $0x21c] sm:$0xff]
  %v110 = vld [vmem:[%s1 + $0x224] sm:$0xf]
  %v111 = vld [vmem:[%s1 + $0x228] sm:$0xff]
  %v112 = vld [vmem:[%s1 + $0x230] sm:$0xf]
  %v113 = vld [vmem:[%s1 + $0x234] sm:$0xff]
  %v114 = vld [vmem:[%s1 + $0x23c] sm:$0xf]
  %v115 = vld [vmem:[%s1 + $0x240] sm:$0xff]
  %v116 = vld [vmem:[%s1 + $0x248] sm:$0xf]
  %v117 = vld [vmem:[%s1 + $0x24c] sm:$0xff]
  %v118 = vld [vmem:[%s1 + $0x254] sm:$0xf]
  %v119 = vld [vmem:[%s1 + $0x258] sm:$0xff]
  %v120 = vld [vmem:[%s1 + $0x260] sm:$0xf]
  %v121 = vld [vmem:[%s1 + $0x264] sm:$0xff]
  %v122 = vld [vmem:[%s1 + $0x26c] sm:$0xf]
  %v123 = vld [vmem:[%s1 + $0x270] sm:$0xff]
  %v124 = vld [vmem:[%s1 + $0x278] sm:$0xf]
  %v125 = vld [vmem:[%s1 + $0x27c] sm:$0xff]
  %v126 = vld [vmem:[%s1 + $0x284] sm:$0xf]
  %v127 = vld [vmem:[%s1 + $0x288] sm:$0xff]
  %v128 = vld [vmem:[%s1 + $0x290] sm:$0xf]
  %v129 = vld [vmem:[%s1 + $0x294] sm:$0xff]
  %v130 = vld [vmem:[%s1 + $0x29c] sm:$0xf]
  %v131 = vld [vmem:[%s1 + $0x2a0] sm:$0xff]
  %v132 = vld [vmem:[%s1 + $0x2a8] sm:$0xf]
  %v133 = vld [vmem:[%s1 + $0x2ac] sm:$0xff]
  %v134 = vld [vmem:[%s1 + $0x2b4] sm:$0xf]
  %v135 = vld [vmem:[%s1 + $0x2b8] sm:$0xff]
  %v136 = vld [vmem:[%s1 + $0x2c0] sm:$0xf]
  %v137 = vld [vmem:[%s1 + $0x2c4] sm:$0xff]
  %v138 = vld [vmem:[%s1 + $0x2cc] sm:$0xf]
  %v139 = vld [vmem:[%s1 + $0x2d0] sm:$0xff]
  %v140 = vld [vmem:[%s1 + $0x2d8] sm:$0xf]
  %v141 = vld [vmem:[%s1 + $0x2dc] sm:$0xff]
  %v142 = vld [vmem:[%s1 + $0x2e4] sm:$0xf]
  %v143 = vld [vmem:[%s1 + $0x2e8] sm:$0xff]
  %v144 = vld [vmem:[%s1 + $0x2f0] sm:$0xf]
  %v145 = vld [vmem:[%s1 + $0x2f4] sm:$0xff]
  %v146 = vld [vmem:[%s1 + $0x2fc] sm:$0xf]
  %v147 = vld [vmem:[%s1 + $0x300] sm:$0xff]
  %v148 = vld [vmem:[%s1 + $0x308] sm:$0xf]
  %v149 = vld [vmem:[%s1 + $0x30c] sm:$0xff]
  %v150 = vld [vmem:[%s1 + $0x314] sm:$0xf]
  %v151 = vld [vmem:[%s1 + $0x318] sm:$0xff]
  %v152 = vld [vmem:[%s1 + $0x320] sm:$0xf]
  %v153 = vld [vmem:[%s1 + $0x324] sm:$0xff]
  %v154 = vld [vmem:[%s1 + $0x32c] sm:$0xf]
  %v155 = vld [vmem:[%s1 + $0x330] sm:$0xff]
  %v156 = vld [vmem:[%s1 + $0x338] sm:$0xf]
  %v157 = vld [vmem:[%s1 + $0x33c] sm:$0xff]
  %v158 = vld [vmem:[%s1 + $0x344] sm:$0xf]
  %v159 = vld [vmem:[%s1 + $0x348] sm:$0xff]
  %v160 = vld [vmem:[%s1 + $0x350] sm:$0xf]
  %v161 = vld [vmem:[%s1 + $0x354] sm:$0xff]
  %v162 = vld [vmem:[%s1 + $0x35c] sm:$0xf]
  %v163 = vld [vmem:[%s1 + $0x360] sm:$0xff]
  %v164 = vld [vmem:[%s1 + $0x368] sm:$0xf]
  %v165 = vld [vmem:[%s1 + $0x36c] sm:$0xff]
  %v166 = vld [vmem:[%s1 + $0x374] sm:$0xf]
  %v167 = vld [vmem:[%s1 + $0x378] sm:$0xff]
  %v168 = vld [vmem:[%s1 + $0x380] sm:$0xf]
  %v169 = vld [vmem:[%s1 + $0x384] sm:$0xff]
  %v170 = vld [vmem:[%s1 + $0x38c] sm:$0xf]
  %v171 = vld [vmem:[%s1 + $0x390] sm:$0xff]
  %v172 = vld [vmem:[%s1 + $0x398] sm:$0xf]
  %v173 = vld [vmem:[%s1 + $0x39c] sm:$0xff]
  %v174 = vld [vmem:[%s1 + $0x3a4] sm:$0xf]
  %v175 = vld [vmem:[%s1 + $0x3a8] sm:$0xff]
  %v176 = vld [vmem:[%s1 + $0x3b0] sm:$0xf]
  %v177 = vld [vmem:[%s1 + $0x3b4] sm:$0xff]
  %v178 = vld [vmem:[%s1 + $0x3bc] sm:$0xf]
  %v179 = vld [vmem:[%s1 + $0x3c0] sm:$0xff]
  %v180 = vld [vmem:[%s1 + $0x3c8] sm:$0xf]
  %v181 = vld [vmem:[%s1 + $0x3cc] sm:$0xff]
  %v182 = vld [vmem:[%s1 + $0x3d4] sm:$0xf]
  %v183 = vld [vmem:[%s1 + $0x3d8] sm:$0xff]
  %v184 = vld [vmem:[%s1 + $0x3e0] sm:$0xf]
  %v185 = vld [vmem:[%s1 + $0x3e4] sm:$0xff]
  %v186 = vld [vmem:[%s1 + $0x3ec] sm:$0xf]
  %v187 = vld [vmem:[%s1 + $0x3f0] sm:$0xff]
  %v188 = vld [vmem:[%s1 + $0x3f8] sm:$0xf]
  %v189 = vld [vmem:[%s1 + $0x3fc] sm:$0xff]
  %v190 = vld [vmem:[%s1 + $0x404] sm:$0xf]
  %v191 = vld [vmem:[%s1 + $0x408] sm:$0xff]
  %v192 = vld [vmem:[%s1 + $0x410] sm:$0xf]
  %v193 = vld [vmem:[%s1 + $0x414] sm:$0xff]
  %v194 = vld [vmem:[%s1 + $0x41c] sm:$0xf]
  %v195 = vld [vmem:[%s1 + $0x420] sm:$0xff]
  %v196 = vld [vmem:[%s1 + $0x428] sm:$0xf]
  %v197 = vld [vmem:[%s1 + $0x42c] sm:$0xff]
  %v198 = vld [vmem:[%s1 + $0x434] sm:$0xf]
  %v199 = vld [vmem:[%s1 + $0x438] sm:$0xff]
  %v200 = vld [vmem:[%s1 + $0x440] sm:$0xf]
  %v201 = vld [vmem:[%s1 + $0x444] sm:$0xff]
  %v202 = vld [vmem:[%s1 + $0x44c] sm:$0xf]
  %v203 = vld [vmem:[%s1 + $0x450] sm:$0xff]
  %v204 = vld [vmem:[%s1 + $0x458] sm:$0xf]
  %v205 = vld [vmem:[%s1 + $0x45c] sm:$0xff]
  %v206 = vld [vmem:[%s1 + $0x464] sm:$0xf]
  %v207 = vld [vmem:[%s1 + $0x468] sm:$0xff]
  %v208 = vld [vmem:[%s1 + $0x470] sm:$0xf]
  %v209 = vld [vmem:[%s1 + $0x474] sm:$0xff]
  %v210 = vld [vmem:[%s1 + $0x47c] sm:$0xf]
  %v211 = vld [vmem:[%s1 + $0x480] sm:$0xff]
  %v212 = vld [vmem:[%s1 + $0x488] sm:$0xf]
  %v213 = vld [vmem:[%s1 + $0x48c] sm:$0xff]
  %v214 = vld [vmem:[%s1 + $0x494] sm:$0xf]
  %v215 = vld [vmem:[%s1 + $0x498] sm:$0xff]
  %v216 = vld [vmem:[%s1 + $0x4a0] sm:$0xf]
  %v217 = vld [vmem:[%s1 + $0x4a4] sm:$0xff]
  %v218 = vld [vmem:[%s1 + $0x4ac] sm:$0xf]
  %v219 = vld [vmem:[%s1 + $0x4b0] sm:$0xff]
  %v220 = vld [vmem:[%s1 + $0x4b8] sm:$0xf]
  %v221 = vld [vmem:[%s1 + $0x4bc] sm:$0xff]
  %v222 = vld [vmem:[%s1 + $0x4c4] sm:$0xf]
  %v223 = vld [vmem:[%s1 + $0x4c8] sm:$0xff]
  %v224 = vld [vmem:[%s1 + $0x4d0] sm:$0xf]
  %v225 = vld [vmem:[%s1 + $0x4d4] sm:$0xff]
  %v226 = vld [vmem:[%s1 + $0x4dc] sm:$0xf]
  %v227 = vld [vmem:[%s1 + $0x4e0] sm:$0xff]
  %v228 = vld [vmem:[%s1 + $0x4e8] sm:$0xf]
  %v229 = vld [vmem:[%s1 + $0x4ec] sm:$0xff]
  %v230 = vld [vmem:[%s1 + $0x4f4] sm:$0xf]
  %v231 = vld [vmem:[%s1 + $0x4f8] sm:$0xff]
  %v232 = vld [vmem:[%s1 + $0x500] sm:$0xf]
  %v233 = vld [vmem:[%s1 + $0x504] sm:$0xff]
  %v234 = vld [vmem:[%s1 + $0x50c] sm:$0xf]
  %v235 = vld [vmem:[%s1 + $0x510] sm:$0xff]
  %v236 = vld [vmem:[%s1 + $0x518] sm:$0xf]
  %v237 = vld [vmem:[%s1 + $0x51c] sm:$0xff]
  %v238 = vld [vmem:[%s1 + $0x524] sm:$0xf]
  %v239 = vld [vmem:[%s1 + $0x528] sm:$0xff]
  %v240 = vld [vmem:[%s1 + $0x530] sm:$0xf]
  %v241 = vld [vmem:[%s1 + $0x534] sm:$0xff]
  %v242 = vld [vmem:[%s1 + $0x53c] sm:$0xf]
  %v243 = vld [vmem:[%s1 + $0x540] sm:$0xff]
  %v244 = vld [vmem:[%s1 + $0x548] sm:$0xf]
  %v245 = vld [vmem:[%s1 + $0x54c] sm:$0xff]
  %v246 = vld [vmem:[%s1 + $0x554] sm:$0xf]
  %v247 = vld [vmem:[%s1 + $0x558] sm:$0xff]
  %v248 = vld [vmem:[%s1 + $0x560] sm:$0xf]
  %v249 = vld [vmem:[%s1 + $0x564] sm:$0xff]
  %v250 = vld [vmem:[%s1 + $0x56c] sm:$0xf]
  %v251 = vld [vmem:[%s1 + $0x570] sm:$0xff]
  %v252 = vld [vmem:[%s1 + $0x578] sm:$0xf]
  %v253 = vld [vmem:[%s1 + $0x57c] sm:$0xff]
  %v254 = vld [vmem:[%s1 + $0x584] sm:$0xf]
  %v255 = vld [vmem:[%s1 + $0x588] sm:$0xff]
  %v256 = vld [vmem:[%s1 + $0x590] sm:$0xf]
  %v257 = vld [vmem:[%s1 + $0x594] sm:$0xff]
  %v258 = vld [vmem:[%s1 + $0x59c] sm:$0xf]
  %v259 = vld [vmem:[%s1 + $0x5a0] sm:$0xff]
  %v260 = vld [vmem:[%s1 + $0x5a8] sm:$0xf]
  %v261 = vld [vmem:[%s1 + $0x5ac] sm:$0xff]
  %v262 = vld [vmem:[%s1 + $0x5b4] sm:$0xf]
  %v263 = vld [vmem:[%s1 + $0x5b8] sm:$0xff]
  %v264 = vld [vmem:[%s1 + $0x5c0] sm:$0xf]
  %v265 = vld [vmem:[%s1 + $0x5c4] sm:$0xff]
  %v266 = vld [vmem:[%s1 + $0x5cc] sm:$0xf]
  %v267 = vld [vmem:[%s1 + $0x5d0] sm:$0xff]
  %v268 = vld [vmem:[%s1 + $0x5d8] sm:$0xf]
  %v269 = vld [vmem:[%s1 + $0x5dc] sm:$0xff]
  %v270 = vld [vmem:[%s1 + $0x5e4] sm:$0xf]
  %v271 = vld [vmem:[%s1 + $0x5e8] sm:$0xff]
  %v272 = vld [vmem:[%s1 + $0x5f0] sm:$0xf]
  %v273 = vld [vmem:[%s1 + $0x5f4] sm:$0xff]
  %v274 = vld [vmem:[%s1 + $0x5fc] sm:$0xf]
  %v275 = vld [vmem:[%s2] sm:$0x7]
  %v277 = vlaneseq
  %v278 = vshrl.u32 %v277, 7
  %v279 = vsub.s32 0, %v278
  %v280 = vrot.slane %v275, %v279
  %v281 = vlaneseq
  %v282 = vshrl.u32 %v281, 7
  %v283 = vsub.s32 1, %v282
  %v284 = vrot.slane %v275, %v283
  %v285 = vlaneseq
  %v286 = vshrl.u32 %v285, 7
  %v287 = vsub.s32 2, %v286
  %v288 = vrot.slane %v275, %v287
  %v296 = vunpack.c.l.b16 %v15
  %v297 = vunpack.c.h.b16 %v15
  %v298 = vunpack.c.l.b16 %v16
  %v299 = vunpack.c.h.b16 %v16
  %v300 = vunpack.c.l.b16 %v17
  %v301 = vunpack.c.h.b16 %v17
  %v302 = vunpack.c.l.b16 %v18
  %v303 = vunpack.c.h.b16 %v18
  %v304 = vpack.c.b16 %v296, %v296
  %v305 = vpack.c.b16 %v297, %v297
  %v306 = vpack.c.b16 %v298, %v298
  %v307 = vpack.c.b16 %v299, %v299
  %v308 = vpack.c.b16 %v300, %v300
  %v309 = vpack.c.b16 %v301, %v301
  %v310 = vpack.c.b16 %v302, %v302
  %v311 = vpack.c.b16 %v303, %v303
  %v576 = vunpack.c.l.b16 %v19
  %v577 = vunpack.c.h.b16 %v19
  %v578 = vunpack.c.l.b16 %v20
  %v579 = vunpack.c.l.b16 %v21
  %v580 = vunpack.c.h.b16 %v21
  %v581 = vunpack.c.l.b16 %v22
  %v582 = vunpack.c.l.b16 %v23
  %v583 = vunpack.c.h.b16 %v23
  %v584 = vunpack.c.l.b16 %v24
  %v585 = vunpack.c.l.b16 %v25
  %v586 = vunpack.c.h.b16 %v25
  %v587 = vunpack.c.l.b16 %v26
  %v588 = vunpack.c.l.b16 %v27
  %v589 = vunpack.c.h.b16 %v27
  %v590 = vunpack.c.l.b16 %v28
  %v591 = vunpack.c.l.b16 %v29
  %v592 = vunpack.c.h.b16 %v29
  %v593 = vunpack.c.l.b16 %v30
  %v594 = vunpack.c.l.b16 %v31
  %v595 = vunpack.c.h.b16 %v31
  %v596 = vunpack.c.l.b16 %v32
  %v597 = vunpack.c.l.b16 %v33
  %v598 = vunpack.c.h.b16 %v33
  %v599 = vunpack.c.l.b16 %v34
  %v600 = vunpack.c.l.b16 %v35
  %v601 = vunpack.c.h.b16 %v35
  %v602 = vunpack.c.l.b16 %v36
  %v603 = vunpack.c.l.b16 %v37
  %v604 = vunpack.c.h.b16 %v37
  %v605 = vunpack.c.l.b16 %v38
  %v606 = vunpack.c.l.b16 %v39
  %v607 = vunpack.c.h.b16 %v39
  %v608 = vunpack.c.l.b16 %v40
  %v609 = vunpack.c.l.b16 %v41
  %v610 = vunpack.c.h.b16 %v41
  %v611 = vunpack.c.l.b16 %v42
  %v612 = vunpack.c.l.b16 %v43
  %v613 = vunpack.c.h.b16 %v43
  %v614 = vunpack.c.l.b16 %v44
  %v615 = vunpack.c.l.b16 %v45
  %v616 = vunpack.c.h.b16 %v45
  %v617 = vunpack.c.l.b16 %v46
  %v618 = vunpack.c.l.b16 %v47
  %v619 = vunpack.c.h.b16 %v47
  %v620 = vunpack.c.l.b16 %v48
  %v621 = vunpack.c.l.b16 %v49
  %v622 = vunpack.c.h.b16 %v49
  %v623 = vunpack.c.l.b16 %v50
  %v624 = vunpack.c.l.b16 %v51
  %v625 = vunpack.c.h.b16 %v51
  %v626 = vunpack.c.l.b16 %v52
  %v627 = vunpack.c.l.b16 %v53
  %v628 = vunpack.c.h.b16 %v53
  %v629 = vunpack.c.l.b16 %v54
  %v630 = vunpack.c.l.b16 %v55
  %v631 = vunpack.c.h.b16 %v55
  %v632 = vunpack.c.l.b16 %v56
  %v633 = vunpack.c.l.b16 %v57
  %v634 = vunpack.c.h.b16 %v57
  %v635 = vunpack.c.l.b16 %v58
  %v636 = vunpack.c.l.b16 %v59
  %v637 = vunpack.c.h.b16 %v59
  %v638 = vunpack.c.l.b16 %v60
  %v639 = vunpack.c.l.b16 %v61
  %v640 = vunpack.c.h.b16 %v61
  %v641 = vunpack.c.l.b16 %v62
  %v642 = vunpack.c.l.b16 %v63
  %v643 = vunpack.c.h.b16 %v63
  %v644 = vunpack.c.l.b16 %v64
  %v645 = vunpack.c.l.b16 %v65
  %v646 = vunpack.c.h.b16 %v65
  %v647 = vunpack.c.l.b16 %v66
  %v648 = vunpack.c.l.b16 %v67
  %v649 = vunpack.c.h.b16 %v67
  %v650 = vunpack.c.l.b16 %v68
  %v651 = vunpack.c.l.b16 %v69
  %v652 = vunpack.c.h.b16 %v69
  %v653 = vunpack.c.l.b16 %v70
  %v654 = vunpack.c.l.b16 %v71
  %v655 = vunpack.c.h.b16 %v71
  %v656 = vunpack.c.l.b16 %v72
  %v657 = vunpack.c.l.b16 %v73
  %v658 = vunpack.c.h.b16 %v73
  %v659 = vunpack.c.l.b16 %v74
  %v660 = vunpack.c.l.b16 %v75
  %v661 = vunpack.c.h.b16 %v75
  %v662 = vunpack.c.l.b16 %v76
  %v663 = vunpack.c.l.b16 %v77
  %v664 = vunpack.c.h.b16 %v77
  %v665 = vunpack.c.l.b16 %v78
  %v666 = vunpack.c.l.b16 %v79
  %v667 = vunpack.c.h.b16 %v79
  %v668 = vunpack.c.l.b16 %v80
  %v669 = vunpack.c.l.b16 %v81
  %v670 = vunpack.c.h.b16 %v81
  %v671 = vunpack.c.l.b16 %v82
  %v672 = vunpack.c.l.b16 %v83
  %v673 = vunpack.c.h.b16 %v83
  %v674 = vunpack.c.l.b16 %v84
  %v675 = vunpack.c.l.b16 %v85
  %v676 = vunpack.c.h.b16 %v85
  %v677 = vunpack.c.l.b16 %v86
  %v678 = vunpack.c.l.b16 %v87
  %v679 = vunpack.c.h.b16 %v87
  %v680 = vunpack.c.l.b16 %v88
  %v681 = vunpack.c.l.b16 %v89
  %v682 = vunpack.c.h.b16 %v89
  %v683 = vunpack.c.l.b16 %v90
  %v684 = vunpack.c.l.b16 %v91
  %v685 = vunpack.c.h.b16 %v91
  %v686 = vunpack.c.l.b16 %v92
  %v687 = vunpack.c.l.b16 %v93
  %v688 = vunpack.c.h.b16 %v93
  %v689 = vunpack.c.l.b16 %v94
  %v690 = vunpack.c.l.b16 %v95
  %v691 = vunpack.c.h.b16 %v95
  %v692 = vunpack.c.l.b16 %v96
  %v693 = vunpack.c.l.b16 %v97
  %v694 = vunpack.c.h.b16 %v97
  %v695 = vunpack.c.l.b16 %v98
  %v696 = vunpack.c.l.b16 %v99
  %v697 = vunpack.c.h.b16 %v99
  %v698 = vunpack.c.l.b16 %v100
  %v699 = vunpack.c.l.b16 %v101
  %v700 = vunpack.c.h.b16 %v101
  %v701 = vunpack.c.l.b16 %v102
  %v702 = vunpack.c.l.b16 %v103
  %v703 = vunpack.c.h.b16 %v103
  %v704 = vunpack.c.l.b16 %v104
  %v705 = vunpack.c.l.b16 %v105
  %v706 = vunpack.c.h.b16 %v105
  %v707 = vunpack.c.l.b16 %v106
  %v708 = vunpack.c.l.b16 %v107
  %v709 = vunpack.c.h.b16 %v107
  %v710 = vunpack.c.l.b16 %v108
  %v711 = vunpack.c.l.b16 %v109
  %v712 = vunpack.c.h.b16 %v109
  %v713 = vunpack.c.l.b16 %v110
  %v714 = vunpack.c.l.b16 %v111
  %v715 = vunpack.c.h.b16 %v111
  %v716 = vunpack.c.l.b16 %v112
  %v717 = vunpack.c.l.b16 %v113
  %v718 = vunpack.c.h.b16 %v113
  %v719 = vunpack.c.l.b16 %v114
  %v720 = vunpack.c.l.b16 %v115
  %v721 = vunpack.c.h.b16 %v115
  %v722 = vunpack.c.l.b16 %v116
  %v723 = vunpack.c.l.b16 %v117
  %v724 = vunpack.c.h.b16 %v117
  %v725 = vunpack.c.l.b16 %v118
  %v726 = vunpack.c.l.b16 %v119
  %v727 = vunpack.c.h.b16 %v119
  %v728 = vunpack.c.l.b16 %v120
  %v729 = vunpack.c.l.b16 %v121
  %v730 = vunpack.c.h.b16 %v121
  %v731 = vunpack.c.l.b16 %v122
  %v732 = vunpack.c.l.b16 %v123
  %v733 = vunpack.c.h.b16 %v123
  %v734 = vunpack.c.l.b16 %v124
  %v735 = vunpack.c.l.b16 %v125
  %v736 = vunpack.c.h.b16 %v125
  %v737 = vunpack.c.l.b16 %v126
  %v738 = vunpack.c.l.b16 %v127
  %v739 = vunpack.c.h.b16 %v127
  %v740 = vunpack.c.l.b16 %v128
  %v741 = vunpack.c.l.b16 %v129
  %v742 = vunpack.c.h.b16 %v129
  %v743 = vunpack.c.l.b16 %v130
  %v744 = vunpack.c.l.b16 %v131
  %v745 = vunpack.c.h.b16 %v131
  %v746 = vunpack.c.l.b16 %v132
  %v747 = vunpack.c.l.b16 %v133
  %v748 = vunpack.c.h.b16 %v133
  %v749 = vunpack.c.l.b16 %v134
  %v750 = vunpack.c.l.b16 %v135
  %v751 = vunpack.c.h.b16 %v135
  %v752 = vunpack.c.l.b16 %v136
  %v753 = vunpack.c.l.b16 %v137
  %v754 = vunpack.c.h.b16 %v137
  %v755 = vunpack.c.l.b16 %v138
  %v756 = vunpack.c.l.b16 %v139
  %v757 = vunpack.c.h.b16 %v139
  %v758 = vunpack.c.l.b16 %v140
  %v759 = vunpack.c.l.b16 %v141
  %v760 = vunpack.c.h.b16 %v141
  %v761 = vunpack.c.l.b16 %v142
  %v762 = vunpack.c.l.b16 %v143
  %v763 = vunpack.c.h.b16 %v143
  %v764 = vunpack.c.l.b16 %v144
  %v765 = vunpack.c.l.b16 %v145
  %v766 = vunpack.c.h.b16 %v145
  %v767 = vunpack.c.l.b16 %v146
  %v768 = vunpack.c.l.b16 %v147
  %v769 = vunpack.c.h.b16 %v147
  %v770 = vunpack.c.l.b16 %v148
  %v771 = vunpack.c.l.b16 %v149
  %v772 = vunpack.c.h.b16 %v149
  %v773 = vunpack.c.l.b16 %v150
  %v774 = vunpack.c.l.b16 %v151
  %v775 = vunpack.c.h.b16 %v151
  %v776 = vunpack.c.l.b16 %v152
  %v777 = vunpack.c.l.b16 %v153
  %v778 = vunpack.c.h.b16 %v153
  %v779 = vunpack.c.l.b16 %v154
  %v780 = vunpack.c.l.b16 %v155
  %v781 = vunpack.c.h.b16 %v155
  %v782 = vunpack.c.l.b16 %v156
  %v783 = vunpack.c.l.b16 %v157
  %v784 = vunpack.c.h.b16 %v157
  %v785 = vunpack.c.l.b16 %v158
  %v786 = vunpack.c.l.b16 %v159
  %v787 = vunpack.c.h.b16 %v159
  %v788 = vunpack.c.l.b16 %v160
  %v789 = vunpack.c.l.b16 %v161
  %v790 = vunpack.c.h.b16 %v161
  %v791 = vunpack.c.l.b16 %v162
  %v792 = vunpack.c.l.b16 %v163
  %v793 = vunpack.c.h.b16 %v163
  %v794 = vunpack.c.l.b16 %v164
  %v795 = vunpack.c.l.b16 %v165
  %v796 = vunpack.c.h.b16 %v165
  %v797 = vunpack.c.l.b16 %v166
  %v798 = vunpack.c.l.b16 %v167
  %v799 = vunpack.c.h.b16 %v167
  %v800 = vunpack.c.l.b16 %v168
  %v801 = vunpack.c.l.b16 %v169
  %v802 = vunpack.c.h.b16 %v169
  %v803 = vunpack.c.l.b16 %v170
  %v804 = vunpack.c.l.b16 %v171
  %v805 = vunpack.c.h.b16 %v171
  %v806 = vunpack.c.l.b16 %v172
  %v807 = vunpack.c.l.b16 %v173
  %v808 = vunpack.c.h.b16 %v173
  %v809 = vunpack.c.l.b16 %v174
  %v810 = vunpack.c.l.b16 %v175
  %v811 = vunpack.c.h.b16 %v175
  %v812 = vunpack.c.l.b16 %v176
  %v813 = vunpack.c.l.b16 %v177
  %v814 = vunpack.c.h.b16 %v177
  %v815 = vunpack.c.l.b16 %v178
  %v816 = vunpack.c.l.b16 %v179
  %v817 = vunpack.c.h.b16 %v179
  %v818 = vunpack.c.l.b16 %v180
  %v819 = vunpack.c.l.b16 %v181
  %v820 = vunpack.c.h.b16 %v181
  %v821 = vunpack.c.l.b16 %v182
  %v822 = vunpack.c.l.b16 %v183
  %v823 = vunpack.c.h.b16 %v183
  %v824 = vunpack.c.l.b16 %v184
  %v825 = vunpack.c.l.b16 %v185
  %v826 = vunpack.c.h.b16 %v185
  %v827 = vunpack.c.l.b16 %v186
  %v828 = vunpack.c.l.b16 %v187
  %v829 = vunpack.c.h.b16 %v187
  %v830 = vunpack.c.l.b16 %v188
  %v831 = vunpack.c.l.b16 %v189
  %v832 = vunpack.c.h.b16 %v189
  %v833 = vunpack.c.l.b16 %v190
  %v834 = vunpack.c.l.b16 %v191
  %v835 = vunpack.c.h.b16 %v191
  %v836 = vunpack.c.l.b16 %v192
  %v837 = vunpack.c.l.b16 %v193
  %v838 = vunpack.c.h.b16 %v193
  %v839 = vunpack.c.l.b16 %v194
  %v840 = vunpack.c.l.b16 %v195
  %v841 = vunpack.c.h.b16 %v195
  %v842 = vunpack.c.l.b16 %v196
  %v843 = vunpack.c.l.b16 %v197
  %v844 = vunpack.c.h.b16 %v197
  %v845 = vunpack.c.l.b16 %v198
  %v846 = vunpack.c.l.b16 %v199
  %v847 = vunpack.c.h.b16 %v199
  %v848 = vunpack.c.l.b16 %v200
  %v849 = vunpack.c.l.b16 %v201
  %v850 = vunpack.c.h.b16 %v201
  %v851 = vunpack.c.l.b16 %v202
  %v852 = vunpack.c.l.b16 %v203
  %v853 = vunpack.c.h.b16 %v203
  %v854 = vunpack.c.l.b16 %v204
  %v855 = vunpack.c.l.b16 %v205
  %v856 = vunpack.c.h.b16 %v205
  %v857 = vunpack.c.l.b16 %v206
  %v858 = vunpack.c.l.b16 %v207
  %v859 = vunpack.c.h.b16 %v207
  %v860 = vunpack.c.l.b16 %v208
  %v861 = vunpack.c.l.b16 %v209
  %v862 = vunpack.c.h.b16 %v209
  %v863 = vunpack.c.l.b16 %v210
  %v864 = vunpack.c.l.b16 %v211
  %v865 = vunpack.c.h.b16 %v211
  %v866 = vunpack.c.l.b16 %v212
  %v867 = vunpack.c.l.b16 %v213
  %v868 = vunpack.c.h.b16 %v213
  %v869 = vunpack.c.l.b16 %v214
  %v870 = vunpack.c.l.b16 %v215
  %v871 = vunpack.c.h.b16 %v215
  %v872 = vunpack.c.l.b16 %v216
  %v873 = vunpack.c.l.b16 %v217
  %v874 = vunpack.c.h.b16 %v217
  %v875 = vunpack.c.l.b16 %v218
  %v876 = vunpack.c.l.b16 %v219
  %v877 = vunpack.c.h.b16 %v219
  %v878 = vunpack.c.l.b16 %v220
  %v879 = vunpack.c.l.b16 %v221
  %v880 = vunpack.c.h.b16 %v221
  %v881 = vunpack.c.l.b16 %v222
  %v882 = vunpack.c.l.b16 %v223
  %v883 = vunpack.c.h.b16 %v223
  %v884 = vunpack.c.l.b16 %v224
  %v885 = vunpack.c.l.b16 %v225
  %v886 = vunpack.c.h.b16 %v225
  %v887 = vunpack.c.l.b16 %v226
  %v888 = vunpack.c.l.b16 %v227
  %v889 = vunpack.c.h.b16 %v227
  %v890 = vunpack.c.l.b16 %v228
  %v891 = vunpack.c.l.b16 %v229
  %v892 = vunpack.c.h.b16 %v229
  %v893 = vunpack.c.l.b16 %v230
  %v894 = vunpack.c.l.b16 %v231
  %v895 = vunpack.c.h.b16 %v231
  %v896 = vunpack.c.l.b16 %v232
  %v897 = vunpack.c.l.b16 %v233
  %v898 = vunpack.c.h.b16 %v233
  %v899 = vunpack.c.l.b16 %v234
  %v900 = vunpack.c.l.b16 %v235
  %v901 = vunpack.c.h.b16 %v235
  %v902 = vunpack.c.l.b16 %v236
  %v903 = vunpack.c.l.b16 %v237
  %v904 = vunpack.c.h.b16 %v237
  %v905 = vunpack.c.l.b16 %v238
  %v906 = vunpack.c.l.b16 %v239
  %v907 = vunpack.c.h.b16 %v239
  %v908 = vunpack.c.l.b16 %v240
  %v909 = vunpack.c.l.b16 %v241
  %v910 = vunpack.c.h.b16 %v241
  %v911 = vunpack.c.l.b16 %v242
  %v912 = vunpack.c.l.b16 %v243
  %v913 = vunpack.c.h.b16 %v243
  %v914 = vunpack.c.l.b16 %v244
  %v915 = vunpack.c.l.b16 %v245
  %v916 = vunpack.c.h.b16 %v245
  %v917 = vunpack.c.l.b16 %v246
  %v918 = vunpack.c.l.b16 %v247
  %v919 = vunpack.c.h.b16 %v247
  %v920 = vunpack.c.l.b16 %v248
  %v921 = vunpack.c.l.b16 %v249
  %v922 = vunpack.c.h.b16 %v249
  %v923 = vunpack.c.l.b16 %v250
  %v924 = vunpack.c.l.b16 %v251
  %v925 = vunpack.c.h.b16 %v251
  %v926 = vunpack.c.l.b16 %v252
  %v927 = vunpack.c.l.b16 %v253
  %v928 = vunpack.c.h.b16 %v253
  %v929 = vunpack.c.l.b16 %v254
  %v930 = vunpack.c.l.b16 %v255
  %v931 = vunpack.c.h.b16 %v255
  %v932 = vunpack.c.l.b16 %v256
  %v933 = vunpack.c.l.b16 %v257
  %v934 = vunpack.c.h.b16 %v257
  %v935 = vunpack.c.l.b16 %v258
  %v936 = vunpack.c.l.b16 %v259
  %v937 = vunpack.c.h.b16 %v259
  %v938 = vunpack.c.l.b16 %v260
  %v939 = vunpack.c.l.b16 %v261
  %v940 = vunpack.c.h.b16 %v261
  %v941 = vunpack.c.l.b16 %v262
  %v942 = vunpack.c.l.b16 %v263
  %v943 = vunpack.c.h.b16 %v263
  %v944 = vunpack.c.l.b16 %v264
  %v945 = vunpack.c.l.b16 %v265
  %v946 = vunpack.c.h.b16 %v265
  %v947 = vunpack.c.l.b16 %v266
  %v948 = vunpack.c.l.b16 %v267
  %v949 = vunpack.c.h.b16 %v267
  %v950 = vunpack.c.l.b16 %v268
  %v951 = vunpack.c.l.b16 %v269
  %v952 = vunpack.c.h.b16 %v269
  %v953 = vunpack.c.l.b16 %v270
  %v954 = vunpack.c.l.b16 %v271
  %v955 = vunpack.c.h.b16 %v271
  %v956 = vunpack.c.l.b16 %v272
  %v957 = vunpack.c.l.b16 %v273
  %v958 = vunpack.c.h.b16 %v273
  %v959 = vunpack.c.l.b16 %v274
  %v960 = vpack.c.b16 %v579, %v576
  %v961 = vpack.c.b16 %v580, %v577
  %v962 = vpack.c.b16 %v581, %v578
  %v963 = vpack.c.b16 %v585, %v582
  %v964 = vpack.c.b16 %v586, %v583
  %v965 = vpack.c.b16 %v587, %v584
  %v966 = vpack.c.b16 %v591, %v588
  %v967 = vpack.c.b16 %v592, %v589
  %v968 = vpack.c.b16 %v593, %v590
  %v969 = vpack.c.b16 %v597, %v594
  %v970 = vpack.c.b16 %v598, %v595
  %v971 = vpack.c.b16 %v599, %v596
  %v972 = vpack.c.b16 %v603, %v600
  %v973 = vpack.c.b16 %v604, %v601
  %v974 = vpack.c.b16 %v605, %v602
  %v975 = vpack.c.b16 %v609, %v606
  %v976 = vpack.c.b16 %v610, %v607
  %v977 = vpack.c.b16 %v611, %v608
  %v978 = vpack.c.b16 %v615, %v612
  %v979 = vpack.c.b16 %v616, %v613
  %v980 = vpack.c.b16 %v617, %v614
  %v981 = vpack.c.b16 %v621, %v618
  %v982 = vpack.c.b16 %v622, %v619
  %v983 = vpack.c.b16 %v623, %v620
  %v984 = vpack.c.b16 %v627, %v624
  %v985 = vpack.c.b16 %v628, %v625
  %v986 = vpack.c.b16 %v629, %v626
  %v987 = vpack.c.b16 %v633, %v630
  %v988 = vpack.c.b16 %v634, %v631
  %v989 = vpack.c.b16 %v635, %v632
  %v990 = vpack.c.b16 %v639, %v636
  %v991 = vpack.c.b16 %v640, %v637
  %v992 = vpack.c.b16 %v641, %v638
  %v993 = vpack.c.b16 %v645, %v642
  %v994 = vpack.c.b16 %v646, %v643
  %v995 = vpack.c.b16 %v647, %v644
  %v996 = vpack.c.b16 %v651, %v648
  %v997 = vpack.c.b16 %v652, %v649
  %v998 = vpack.c.b16 %v653, %v650
  %v999 = vpack.c.b16 %v657, %v654
  %v1000 = vpack.c.b16 %v658, %v655
  %v1001 = vpack.c.b16 %v659, %v656
  %v1002 = vpack.c.b16 %v663, %v660
  %v1003 = vpack.c.b16 %v664, %v661
  %v1004 = vpack.c.b16 %v665, %v662
  %v1005 = vpack.c.b16 %v669, %v666
  %v1006 = vpack.c.b16 %v670, %v667
  %v1007 = vpack.c.b16 %v671, %v668
  %v1008 = vpack.c.b16 %v675, %v672
  %v1009 = vpack.c.b16 %v676, %v673
  %v1010 = vpack.c.b16 %v677, %v674
  %v1011 = vpack.c.b16 %v681, %v678
  %v1012 = vpack.c.b16 %v682, %v679
  %v1013 = vpack.c.b16 %v683, %v680
  %v1014 = vpack.c.b16 %v687, %v684
  %v1015 = vpack.c.b16 %v688, %v685
  %v1016 = vpack.c.b16 %v689, %v686
  %v1017 = vpack.c.b16 %v693, %v690
  %v1018 = vpack.c.b16 %v694, %v691
  %v1019 = vpack.c.b16 %v695, %v692
  %v1020 = vpack.c.b16 %v699, %v696
  %v1021 = vpack.c.b16 %v700, %v697
  %v1022 = vpack.c.b16 %v701, %v698
  %v1023 = vpack.c.b16 %v705, %v702
  %v1024 = vpack.c.b16 %v706, %v703
  %v1025 = vpack.c.b16 %v707, %v704
  %v1026 = vpack.c.b16 %v711, %v708
  %v1027 = vpack.c.b16 %v712, %v709
  %v1028 = vpack.c.b16 %v713, %v710
  %v1029 = vpack.c.b16 %v717, %v714
  %v1030 = vpack.c.b16 %v718, %v715
  %v1031 = vpack.c.b16 %v719, %v716
  %v1032 = vpack.c.b16 %v723, %v720
  %v1033 = vpack.c.b16 %v724, %v721
  %v1034 = vpack.c.b16 %v725, %v722
  %v1035 = vpack.c.b16 %v729, %v726
  %v1036 = vpack.c.b16 %v730, %v727
  %v1037 = vpack.c.b16 %v731, %v728
  %v1038 = vpack.c.b16 %v735, %v732
  %v1039 = vpack.c.b16 %v736, %v733
  %v1040 = vpack.c.b16 %v737, %v734
  %v1041 = vpack.c.b16 %v741, %v738
  %v1042 = vpack.c.b16 %v742, %v739
  %v1043 = vpack.c.b16 %v743, %v740
  %v1044 = vpack.c.b16 %v747, %v744
  %v1045 = vpack.c.b16 %v748, %v745
  %v1046 = vpack.c.b16 %v749, %v746
  %v1047 = vpack.c.b16 %v753, %v750
  %v1048 = vpack.c.b16 %v754, %v751
  %v1049 = vpack.c.b16 %v755, %v752
  %v1050 = vpack.c.b16 %v759, %v756
  %v1051 = vpack.c.b16 %v760, %v757
  %v1052 = vpack.c.b16 %v761, %v758
  %v1053 = vpack.c.b16 %v765, %v762
  %v1054 = vpack.c.b16 %v766, %v763
  %v1055 = vpack.c.b16 %v767, %v764
  %v1056 = vpack.c.b16 %v771, %v768
  %v1057 = vpack.c.b16 %v772, %v769
  %v1058 = vpack.c.b16 %v773, %v770
  %v1059 = vpack.c.b16 %v777, %v774
  %v1060 = vpack.c.b16 %v778, %v775
  %v1061 = vpack.c.b16 %v779, %v776
  %v1062 = vpack.c.b16 %v783, %v780
  %v1063 = vpack.c.b16 %v784, %v781
  %v1064 = vpack.c.b16 %v785, %v782
  %v1065 = vpack.c.b16 %v789, %v786
  %v1066 = vpack.c.b16 %v790, %v787
  %v1067 = vpack.c.b16 %v791, %v788
  %v1068 = vpack.c.b16 %v795, %v792
  %v1069 = vpack.c.b16 %v796, %v793
  %v1070 = vpack.c.b16 %v797, %v794
  %v1071 = vpack.c.b16 %v801, %v798
  %v1072 = vpack.c.b16 %v802, %v799
  %v1073 = vpack.c.b16 %v803, %v800
  %v1074 = vpack.c.b16 %v807, %v804
  %v1075 = vpack.c.b16 %v808, %v805
  %v1076 = vpack.c.b16 %v809, %v806
  %v1077 = vpack.c.b16 %v813, %v810
  %v1078 = vpack.c.b16 %v814, %v811
  %v1079 = vpack.c.b16 %v815, %v812
  %v1080 = vpack.c.b16 %v819, %v816
  %v1081 = vpack.c.b16 %v820, %v817
  %v1082 = vpack.c.b16 %v821, %v818
  %v1083 = vpack.c.b16 %v825, %v822
  %v1084 = vpack.c.b16 %v826, %v823
  %v1085 = vpack.c.b16 %v827, %v824
  %v1086 = vpack.c.b16 %v831, %v828
  %v1087 = vpack.c.b16 %v832, %v829
  %v1088 = vpack.c.b16 %v833, %v830
  %v1089 = vpack.c.b16 %v837, %v834
  %v1090 = vpack.c.b16 %v838, %v835
  %v1091 = vpack.c.b16 %v839, %v836
  %v1092 = vpack.c.b16 %v843, %v840
  %v1093 = vpack.c.b16 %v844, %v841
  %v1094 = vpack.c.b16 %v845, %v842
  %v1095 = vpack.c.b16 %v849, %v846
  %v1096 = vpack.c.b16 %v850, %v847
  %v1097 = vpack.c.b16 %v851, %v848
  %v1098 = vpack.c.b16 %v855, %v852
  %v1099 = vpack.c.b16 %v856, %v853
  %v1100 = vpack.c.b16 %v857, %v854
  %v1101 = vpack.c.b16 %v861, %v858
  %v1102 = vpack.c.b16 %v862, %v859
  %v1103 = vpack.c.b16 %v863, %v860
  %v1104 = vpack.c.b16 %v867, %v864
  %v1105 = vpack.c.b16 %v868, %v865
  %v1106 = vpack.c.b16 %v869, %v866
  %v1107 = vpack.c.b16 %v873, %v870
  %v1108 = vpack.c.b16 %v874, %v871
  %v1109 = vpack.c.b16 %v875, %v872
  %v1110 = vpack.c.b16 %v879, %v876
  %v1111 = vpack.c.b16 %v880, %v877
  %v1112 = vpack.c.b16 %v881, %v878
  %v1113 = vpack.c.b16 %v885, %v882
  %v1114 = vpack.c.b16 %v886, %v883
  %v1115 = vpack.c.b16 %v887, %v884
  %v1116 = vpack.c.b16 %v891, %v888
  %v1117 = vpack.c.b16 %v892, %v889
  %v1118 = vpack.c.b16 %v893, %v890
  %v1119 = vpack.c.b16 %v897, %v894
  %v1120 = vpack.c.b16 %v898, %v895
  %v1121 = vpack.c.b16 %v899, %v896
  %v1122 = vpack.c.b16 %v903, %v900
  %v1123 = vpack.c.b16 %v904, %v901
  %v1124 = vpack.c.b16 %v905, %v902
  %v1125 = vpack.c.b16 %v909, %v906
  %v1126 = vpack.c.b16 %v910, %v907
  %v1127 = vpack.c.b16 %v911, %v908
  %v1128 = vpack.c.b16 %v915, %v912
  %v1129 = vpack.c.b16 %v916, %v913
  %v1130 = vpack.c.b16 %v917, %v914
  %v1131 = vpack.c.b16 %v921, %v918
  %v1132 = vpack.c.b16 %v922, %v919
  %v1133 = vpack.c.b16 %v923, %v920
  %v1134 = vpack.c.b16 %v927, %v924
  %v1135 = vpack.c.b16 %v928, %v925
  %v1136 = vpack.c.b16 %v929, %v926
  %v1137 = vpack.c.b16 %v933, %v930
  %v1138 = vpack.c.b16 %v934, %v931
  %v1139 = vpack.c.b16 %v935, %v932
  %v1140 = vpack.c.b16 %v939, %v936
  %v1141 = vpack.c.b16 %v940, %v937
  %v1142 = vpack.c.b16 %v941, %v938
  %v1143 = vpack.c.b16 %v945, %v942
  %v1144 = vpack.c.b16 %v946, %v943
  %v1145 = vpack.c.b16 %v947, %v944
  %v1146 = vpack.c.b16 %v951, %v948
  %v1147 = vpack.c.b16 %v952, %v949
  %v1148 = vpack.c.b16 %v953, %v950
  %v1149 = vpack.c.b16 %v957, %v954
  %v1150 = vpack.c.b16 %v958, %v955
  %v1151 = vpack.c.b16 %v959, %v956
  %1344 = vmatprep.subr.bf16.mxu0 %v961
  %1345 = vmatpush1.bf16.msra.mxu0 %v960
  %1346 = vmatprep.subr.bf16.mxu0 %v964
  %1347 = vmatpush1.bf16.msra.mxu0 %v963
  %1348 = vmatprep.subr.bf16.mxu0 %v967
  %1349 = vmatpush1.bf16.msra.mxu0 %v966
  %1350 = vmatprep.subr.bf16.mxu0 %v970
  %1351 = vmatpush1.bf16.msra.mxu0 %v969
  %1352 = vmatprep.subr.bf16.mxu0 %v973
  %1353 = vmatpush1.bf16.msra.mxu0 %v972
  %1354 = vmatprep.subr.bf16.mxu0 %v976
  %1355 = vmatpush1.bf16.msra.mxu0 %v975
  %1356 = vmatprep.subr.bf16.mxu0 %v979
  %1357 = vmatpush1.bf16.msra.mxu0 %v978
  %1358 = vmatprep.subr.bf16.mxu0 %v982
  %1359 = vmatpush1.bf16.msra.mxu0 %v981
  %1360 = vmatprep.subr.bf16.mxu0 %v985
  %1361 = vmatpush1.bf16.msra.mxu0 %v984
  %1362 = vmatprep.subr.bf16.mxu0 %v988
  %1363 = vmatpush1.bf16.msra.mxu0 %v987
  %1364 = vmatprep.subr.bf16.mxu0 %v991
  %1365 = vmatpush1.bf16.msra.mxu0 %v990
  %1366 = vmatprep.subr.bf16.mxu0 %v994
  %1367 = vmatpush1.bf16.msra.mxu0 %v993
  %1368 = vmatprep.subr.bf16.mxu0 %v997
  %1369 = vmatpush1.bf16.msra.mxu0 %v996
  %1370 = vmatprep.subr.bf16.mxu0 %v1000
  %1371 = vmatpush1.bf16.msra.mxu0 %v999
  %1372 = vmatprep.subr.bf16.mxu0 %v1003
  %1373 = vmatpush1.bf16.msra.mxu0 %v1002
  %1374 = vmatprep.subr.bf16.mxu0 %v1006
  %1375 = vmatpush1.bf16.msra.mxu0 %v1005
  %1376 = vmatprep.mubr.bf16.mxu0 %v305
  %1377 = vmatmul.mubr.bf16.gmra.mrb[0].mxu0 %v304
  %v1378 = vpop.f32.mrb[0].mxu0
  %v1379 = vadd.f32 %v280, %v1378
  %v1380 = vpop.f32.mrb[0].mxu0
  %v1381 = vadd.f32 %v284, %v1380
  %v1382 = vpop.f32.mrb[0].mxu0
  %v1383 = vpop.f32.mrb[0].mxu0
  %1384 = vdwg.mxu0
  %1385 = vmatprep.subr.bf16.mxu0 %v1009
  %1386 = vmatpush1.bf16.msra.mxu0 %v1008
  %1387 = vmatprep.subr.bf16.mxu0 %v1012
  %1388 = vmatpush1.bf16.msra.mxu0 %v1011
  %1389 = vmatprep.subr.bf16.mxu0 %v1015
  %1390 = vmatpush1.bf16.msra.mxu0 %v1014
  %1391 = vmatprep.subr.bf16.mxu0 %v1018
  %1392 = vmatpush1.bf16.msra.mxu0 %v1017
  %1393 = vmatprep.subr.bf16.mxu0 %v1021
  %1394 = vmatpush1.bf16.msra.mxu0 %v1020
  %1395 = vmatprep.subr.bf16.mxu0 %v1024
  %1396 = vmatpush1.bf16.msra.mxu0 %v1023
  %1397 = vmatprep.subr.bf16.mxu0 %v1027
  %1398 = vmatpush1.bf16.msra.mxu0 %v1026
  %1399 = vmatprep.subr.bf16.mxu0 %v1030
  %1400 = vmatpush1.bf16.msra.mxu0 %v1029
  %1401 = vmatprep.subr.bf16.mxu0 %v1033
  %1402 = vmatpush1.bf16.msra.mxu0 %v1032
  %1403 = vmatprep.subr.bf16.mxu0 %v1036
  %1404 = vmatpush1.bf16.msra.mxu0 %v1035
  %1405 = vmatprep.subr.bf16.mxu0 %v1039
  %1406 = vmatpush1.bf16.msra.mxu0 %v1038
  %1407 = vmatprep.subr.bf16.mxu0 %v1042
  %1408 = vmatpush1.bf16.msra.mxu0 %v1041
  %1409 = vmatprep.subr.bf16.mxu0 %v1045
  %1410 = vmatpush1.bf16.msra.mxu0 %v1044
  %1411 = vmatprep.subr.bf16.mxu0 %v1048
  %1412 = vmatpush1.bf16.msra.mxu0 %v1047
  %1413 = vmatprep.subr.bf16.mxu0 %v1051
  %1414 = vmatpush1.bf16.msra.mxu0 %v1050
  %1415 = vmatprep.subr.bf16.mxu0 %v1054
  %1416 = vmatpush1.bf16.msra.mxu0 %v1053
  %1417 = vmatprep.mubr.bf16.mxu0 %v307
  %1418 = vmatmul.mubr.bf16.gmra.mrb[0].mxu0 %v306
  %v1419 = vpop.f32.mrb[0].mxu0
  %v1420 = vadd.f32 %v1379, %v1419
  %v1421 = vpop.f32.mrb[0].mxu0
  %v1422 = vadd.f32 %v1381, %v1421
  %v1423 = vpop.f32.mrb[0].mxu0
  %v1424 = vpop.f32.mrb[0].mxu0
  %1425 = vdwg.mxu0
  %1426 = vmatprep.subr.bf16.mxu0 %v1057
  %1427 = vmatpush1.bf16.msra.mxu0 %v1056
  %1428 = vmatprep.subr.bf16.mxu0 %v1060
  %1429 = vmatpush1.bf16.msra.mxu0 %v1059
  %1430 = vmatprep.subr.bf16.mxu0 %v1063
  %1431 = vmatpush1.bf16.msra.mxu0 %v1062
  %1432 = vmatprep.subr.bf16.mxu0 %v1066
  %1433 = vmatpush1.bf16.msra.mxu0 %v1065
  %1434 = vmatprep.subr.bf16.mxu0 %v1069
  %1435 = vmatpush1.bf16.msra.mxu0 %v1068
  %1436 = vmatprep.subr.bf16.mxu0 %v1072
  %1437 = vmatpush1.bf16.msra.mxu0 %v1071
  %1438 = vmatprep.subr.bf16.mxu0 %v1075
  %1439 = vmatpush1.bf16.msra.mxu0 %v1074
  %1440 = vmatprep.subr.bf16.mxu0 %v1078
  %1441 = vmatpush1.bf16.msra.mxu0 %v1077
  %1442 = vmatprep.subr.bf16.mxu0 %v1081
  %1443 = vmatpush1.bf16.msra.mxu0 %v1080
  %1444 = vmatprep.subr.bf16.mxu0 %v1084
  %1445 = vmatpush1.bf16.msra.mxu0 %v1083
  %1446 = vmatprep.subr.bf16.mxu0 %v1087
  %1447 = vmatpush1.bf16.msra.mxu0 %v1086
  %1448 = vmatprep.subr.bf16.mxu0 %v1090
  %1449 = vmatpush1.bf16.msra.mxu0 %v1089
  %1450 = vmatprep.subr.bf16.mxu0 %v1093
  %1451 = vmatpush1.bf16.msra.mxu0 %v1092
  %1452 = vmatprep.subr.bf16.mxu0 %v1096
  %1453 = vmatpush1.bf16.msra.mxu0 %v1095
  %1454 = vmatprep.subr.bf16.mxu0 %v1099
  %1455 = vmatpush1.bf16.msra.mxu0 %v1098
  %1456 = vmatprep.subr.bf16.mxu0 %v1102
  %1457 = vmatpush1.bf16.msra.mxu0 %v1101
  %1458 = vmatprep.mubr.bf16.mxu0 %v309
  %1459 = vmatmul.mubr.bf16.gmra.mrb[0].mxu0 %v308
  %v1460 = vpop.f32.mrb[0].mxu0
  %v1461 = vadd.f32 %v1420, %v1460
  %v1462 = vpop.f32.mrb[0].mxu0
  %v1463 = vadd.f32 %v1422, %v1462
  %v1464 = vpop.f32.mrb[0].mxu0
  %v1465 = vpop.f32.mrb[0].mxu0
  %1466 = vdwg.mxu0
  %1467 = vmatprep.subr.bf16.mxu0 %v1105
  %1468 = vmatpush1.bf16.msra.mxu0 %v1104
  %1469 = vmatprep.subr.bf16.mxu0 %v1108
  %1470 = vmatpush1.bf16.msra.mxu0 %v1107
  %1471 = vmatprep.subr.bf16.mxu0 %v1111
  %1472 = vmatpush1.bf16.msra.mxu0 %v1110
  %1473 = vmatprep.subr.bf16.mxu0 %v1114
  %1474 = vmatpush1.bf16.msra.mxu0 %v1113
  %1475 = vmatprep.subr.bf16.mxu0 %v1117
  %1476 = vmatpush1.bf16.msra.mxu0 %v1116
  %1477 = vmatprep.subr.bf16.mxu0 %v1120
  %1478 = vmatpush1.bf16.msra.mxu0 %v1119
  %1479 = vmatprep.subr.bf16.mxu0 %v1123
  %1480 = vmatpush1.bf16.msra.mxu0 %v1122
  %1481 = vmatprep.subr.bf16.mxu0 %v1126
  %1482 = vmatpush1.bf16.msra.mxu0 %v1125
  %1483 = vmatprep.subr.bf16.mxu0 %v1129
  %1484 = vmatpush1.bf16.msra.mxu0 %v1128
  %1485 = vmatprep.subr.bf16.mxu0 %v1132
  %1486 = vmatpush1.bf16.msra.mxu0 %v1131
  %1487 = vmatprep.subr.bf16.mxu0 %v1135
  %1488 = vmatpush1.bf16.msra.mxu0 %v1134
  %1489 = vmatprep.subr.bf16.mxu0 %v1138
  %1490 = vmatpush1.bf16.msra.mxu0 %v1137
  %1491 = vmatprep.subr.bf16.mxu0 %v1141
  %1492 = vmatpush1.bf16.msra.mxu0 %v1140
  %1493 = vmatprep.subr.bf16.mxu0 %v1144
  %1494 = vmatpush1.bf16.msra.mxu0 %v1143
  %1495 = vmatprep.subr.bf16.mxu0 %v1147
  %1496 = vmatpush1.bf16.msra.mxu0 %v1146
  %1497 = vmatprep.subr.bf16.mxu0 %v1150
  %1498 = vmatpush1.bf16.msra.mxu0 %v1149
  %1499 = vmatprep.mubr.bf16.mxu0 %v311
  %1500 = vmatmul.mubr.bf16.gmra.mrb[0].mxu0 %v310
  %v1501 = vpop.f32.mrb[0].mxu0
  %v1502 = vadd.f32 %v1461, %v1501
  %v1503 = vpop.f32.mrb[0].mxu0
  %v1504 = vadd.f32 %v1463, %v1503
  %v1505 = vpop.f32.mrb[0].mxu0
  %v1506 = vpop.f32.mrb[0].mxu0
  %1507 = vdwg.mxu0
  %1508 = vmatprep.subr.bf16.mxu0 0
  %1509 = vmatpush1.bf16.msra.mxu0 %v962
  %1510 = vmatprep.subr.bf16.mxu0 0
  %1511 = vmatpush1.bf16.msra.mxu0 %v965
  %1512 = vmatprep.subr.bf16.mxu0 0
  %1513 = vmatpush1.bf16.msra.mxu0 %v968
  %1514 = vmatprep.subr.bf16.mxu0 0
  %1515 = vmatpush1.bf16.msra.mxu0 %v971
  %1516 = vmatprep.subr.bf16.mxu0 0
  %1517 = vmatpush1.bf16.msra.mxu0 %v974
  %1518 = vmatprep.subr.bf16.mxu0 0
  %1519 = vmatpush1.bf16.msra.mxu0 %v977
  %1520 = vmatprep.subr.bf16.mxu0 0
  %1521 = vmatpush1.bf16.msra.mxu0 %v980
  %1522 = vmatprep.subr.bf16.mxu0 0
  %1523 = vmatpush1.bf16.msra.mxu0 %v983
  %1524 = vmatprep.subr.bf16.mxu0 0
  %1525 = vmatpush1.bf16.msra.mxu0 %v986
  %1526 = vmatprep.subr.bf16.mxu0 0
  %1527 = vmatpush1.bf16.msra.mxu0 %v989
  %1528 = vmatprep.subr.bf16.mxu0 0
  %1529 = vmatpush1.bf16.msra.mxu0 %v992
  %1530 = vmatprep.subr.bf16.mxu0 0
  %1531 = vmatpush1.bf16.msra.mxu0 %v995
  %1532 = vmatprep.subr.bf16.mxu0 0
  %1533 = vmatpush1.bf16.msra.mxu0 %v998
  %1534 = vmatprep.subr.bf16.mxu0 0
  %1535 = vmatpush1.bf16.msra.mxu0 %v1001
  %1536 = vmatprep.subr.bf16.mxu0 0
  %1537 = vmatpush1.bf16.msra.mxu0 %v1004
  %1538 = vmatprep.subr.bf16.mxu0 0
  %1539 = vmatpush1.bf16.msra.mxu0 %v1007
  %1540 = vmatprep.mubr.bf16.mxu0 %v305
  %1541 = vmatmul.mubr.bf16.gmra.mrb[0].mxu0 %v304
  %v1542 = vpop.f32.mrb[0].mxu0
  %v1543 = vadd.f32 %v288, %v1542
  %v1544 = vpop.f32.mrb[0].mxu0
  %v1545 = vpop.f32.mrb[0].mxu0
  %v1546 = vpop.f32.mrb[0].mxu0
  %1547 = vdwg.mxu0
  %1548 = vmatprep.subr.bf16.mxu0 0
  %1549 = vmatpush1.bf16.msra.mxu0 %v1010
  %1550 = vmatprep.subr.bf16.mxu0 0
  %1551 = vmatpush1.bf16.msra.mxu0 %v1013
  %1552 = vmatprep.subr.bf16.mxu0 0
  %1553 = vmatpush1.bf16.msra.mxu0 %v1016
  %1554 = vmatprep.subr.bf16.mxu0 0
  %1555 = vmatpush1.bf16.msra.mxu0 %v1019
  %1556 = vmatprep.subr.bf16.mxu0 0
  %1557 = vmatpush1.bf16.msra.mxu0 %v1022
  %1558 = vmatprep.subr.bf16.mxu0 0
  %1559 = vmatpush1.bf16.msra.mxu0 %v1025
  %1560 = vmatprep.subr.bf16.mxu0 0
  %1561 = vmatpush1.bf16.msra.mxu0 %v1028
  %1562 = vmatprep.subr.bf16.mxu0 0
  %1563 = vmatpush1.bf16.msra.mxu0 %v1031
  %1564 = vmatprep.subr.bf16.mxu0 0
  %1565 = vmatpush1.bf16.msra.mxu0 %v1034
  %1566 = vmatprep.subr.bf16.mxu0 0
  %1567 = vmatpush1.bf16.msra.mxu0 %v1037
  %1568 = vmatprep.subr.bf16.mxu0 0
  %1569 = vmatpush1.bf16.msra.mxu0 %v1040
  %1570 = vmatprep.subr.bf16.mxu0 0
  %1571 = vmatpush1.bf16.msra.mxu0 %v1043
  %1572 = vmatprep.subr.bf16.mxu0 0
  %1573 = vmatpush1.bf16.msra.mxu0 %v1046
  %1574 = vmatprep.subr.bf16.mxu0 0
  %1575 = vmatpush1.bf16.msra.mxu0 %v1049
  %1576 = vmatprep.subr.bf16.mxu0 0
  %1577 = vmatpush1.bf16.msra.mxu0 %v1052
  %1578 = vmatprep.subr.bf16.mxu0 0
  %1579 = vmatpush1.bf16.msra.mxu0 %v1055
  %1580 = vmatprep.mubr.bf16.mxu0 %v307
  %1581 = vmatmul.mubr.bf16.gmra.mrb[0].mxu0 %v306
  %v1582 = vpop.f32.mrb[0].mxu0
  %v1583 = vadd.f32 %v1543, %v1582
  %v1584 = vpop.f32.mrb[0].mxu0
  %v1585 = vpop.f32.mrb[0].mxu0
  %v1586 = vpop.f32.mrb[0].mxu0
  %1587 = vdwg.mxu0
  %1588 = vmatprep.subr.bf16.mxu0 0
  %1589 = vmatpush1.bf16.msra.mxu0 %v1058
  %1590 = vmatprep.subr.bf16.mxu0 0
  %1591 = vmatpush1.bf16.msra.mxu0 %v1061
  %1592 = vmatprep.subr.bf16.mxu0 0
  %1593 = vmatpush1.bf16.msra.mxu0 %v1064
  %1594 = vmatprep.subr.bf16.mxu0 0
  %1595 = vmatpush1.bf16.msra.mxu0 %v1067
  %1596 = vmatprep.subr.bf16.mxu0 0
  %1597 = vmatpush1.bf16.msra.mxu0 %v1070
  %1598 = vmatprep.subr.bf16.mxu0 0
  %1599 = vmatpush1.bf16.msra.mxu0 %v1073
  %1600 = vmatprep.subr.bf16.mxu0 0
  %1601 = vmatpush1.bf16.msra.mxu0 %v1076
  %1602 = vmatprep.subr.bf16.mxu0 0
  %1603 = vmatpush1.bf16.msra.mxu0 %v1079
  %1604 = vmatprep.subr.bf16.mxu0 0
  %1605 = vmatpush1.bf16.msra.mxu0 %v1082
  %1606 = vmatprep.subr.bf16.mxu0 0
  %1607 = vmatpush1.bf16.msra.mxu0 %v1085
  %1608 = vmatprep.subr.bf16.mxu0 0
  %1609 = vmatpush1.bf16.msra.mxu0 %v1088
  %1610 = vmatprep.subr.bf16.mxu0 0
  %1611 = vmatpush1.bf16.msra.mxu0 %v1091
  %1612 = vmatprep.subr.bf16.mxu0 0
  %1613 = vmatpush1.bf16.msra.mxu0 %v1094
  %1614 = vmatprep.subr.bf16.mxu0 0
  %1615 = vmatpush1.bf16.msra.mxu0 %v1097
  %1616 = vmatprep.subr.bf16.mxu0 0
  %1617 = vmatpush1.bf16.msra.mxu0 %v1100
  %1618 = vmatprep.subr.bf16.mxu0 0
  %1619 = vmatpush1.bf16.msra.mxu0 %v1103
  %1620 = vmatprep.mubr.bf16.mxu0 %v309
  %1621 = vmatmul.mubr.bf16.gmra.mrb[0].mxu0 %v308
  %v1622 = vpop.f32.mrb[0].mxu0
  %v1623 = vadd.f32 %v1583, %v1622
  %v1624 = vpop.f32.mrb[0].mxu0
  %v1625 = vpop.f32.mrb[0].mxu0
  %v1626 = vpop.f32.mrb[0].mxu0
  %1627 = vdwg.mxu0
  %1628 = vmatprep.subr.bf16.mxu0 0
  %1629 = vmatpush1.bf16.msra.mxu0 %v1106
  %1630 = vmatprep.subr.bf16.mxu0 0
  %1631 = vmatpush1.bf16.msra.mxu0 %v1109
  %1632 = vmatprep.subr.bf16.mxu0 0
  %1633 = vmatpush1.bf16.msra.mxu0 %v1112
  %1634 = vmatprep.subr.bf16.mxu0 0
  %1635 = vmatpush1.bf16.msra.mxu0 %v1115
  %1636 = vmatprep.subr.bf16.mxu0 0
  %1637 = vmatpush1.bf16.msra.mxu0 %v1118
  %1638 = vmatprep.subr.bf16.mxu0 0
  %1639 = vmatpush1.bf16.msra.mxu0 %v1121
  %1640 = vmatprep.subr.bf16.mxu0 0
  %1641 = vmatpush1.bf16.msra.mxu0 %v1124
  %1642 = vmatprep.subr.bf16.mxu0 0
  %1643 = vmatpush1.bf16.msra.mxu0 %v1127
  %1644 = vmatprep.subr.bf16.mxu0 0
  %1645 = vmatpush1.bf16.msra.mxu0 %v1130
  %1646 = vmatprep.subr.bf16.mxu0 0
  %1647 = vmatpush1.bf16.msra.mxu0 %v1133
  %1648 = vmatprep.subr.bf16.mxu0 0
  %1649 = vmatpush1.bf16.msra.mxu0 %v1136
  %1650 = vmatprep.subr.bf16.mxu0 0
  %1651 = vmatpush1.bf16.msra.mxu0 %v1139
  %1652 = vmatprep.subr.bf16.mxu0 0
  %1653 = vmatpush1.bf16.msra.mxu0 %v1142
  %1654 = vmatprep.subr.bf16.mxu0 0
  %1655 = vmatpush1.bf16.msra.mxu0 %v1145
  %1656 = vmatprep.subr.bf16.mxu0 0
  %1657 = vmatpush1.bf16.msra.mxu0 %v1148
  %1658 = vmatprep.subr.bf16.mxu0 0
  %1659 = vmatpush1.bf16.msra.mxu0 %v1151
  %1660 = vmatprep.mubr.bf16.mxu0 %v311
  %1661 = vmatmul.mubr.bf16.gmra.mrb[0].mxu0 %v310
  %v1662 = vpop.f32.mrb[0].mxu0
  %v1663 = vadd.f32 %v1623, %v1662
  %v1664 = vpop.f32.mrb[0].mxu0
  %v1665 = vpop.f32.mrb[0].mxu0
  %v1666 = vpop.f32.mrb[0].mxu0
  %1667 = vdwg.mxu0
  %1668 = vst [vmem:[%s3] sm:$0xff] %v1502
  %1669 = vst [vmem:[%s3 + $0x8] sm:$0xff] %v1504
  %1670 = vst [vmem:[%s3 + $0x10] sm:$0xff] %v1663
  // Predicated region
  $region14: #{drqn_forward.9} parent=0 // pred_check
    _
  $region15: #{drqn_forward.9} parent=0 // pred_check_branch
    %1672 = sbr.rel (0) target = $region17
  $region16: #{drqn_forward.9} parent=0 // pred_region
    _
  $region17: #{drqn_forward.9} parent=0 // pred_fallthru
    _
  // Predicated region
  $region18: #{drqn_forward.9} parent=0 // pred_check
    _
  $region19: #{drqn_forward.9} parent=0 // pred_check_branch
    %1674 = sbr.rel (0) target = $region21
  $region20: #{drqn_forward.9} parent=0 // pred_region
    _
  $region21: #{drqn_forward.9} parent=0 // pred_fallthru
    _

// kernel: drqn_forward.10
$region0: #{drqn_forward.10}
  #allocation0 [shape = 'u32[]', space=smem, size = 0x4, offset = 0x4, fixed_abs, tag = 'smem constant byte address 0x4 - core index']
  #allocation1 [shape = 'u32[144,128]{1,0:T(1,128)}', space=vmem, size = 0x12000, scoped, tag = 'internal scratch']
  #allocation2 [shape = 'f32[2,128]{1,0:T(2,128)}', space=vmem, size = 0x400, scoped, tag = 'scratch operand']
  %s0 = inlined_call_operand.vmem [shape: f32[4,2,384], index: 0, kind: input, shape index: {}]
  %s1 = inlined_call_operand.vmem [shape: f32[2,128], index: 1, kind: input, shape index: {}]
  %s2 = inlined_call_operand.vmem [shape: bf16[128,384], index: 2, kind: input, shape index: {}]
  %s3 = inlined_call_operand.vmem [shape: f32[1,384], index: 3, kind: input, shape index: {}]
  %s4 = inlined_call_operand.vmem [shape: f32[4,2,128], index: 4, kind: output, shape index: {0}]
  %s5 = inlined_call_operand.vmem [shape: f32[2,128], index: 5, kind: output, shape index: {1}]
  %6 = xla_tuple %s4, %s5
  %s7 = sld [smem:[#allocation0]]
  $region38: #{drqn_forward.10} parent=0
    _
  %s9 = ssub.s32 1, %s7
  %s10 = scalar_select 0, %s9, %s7
  // Predicated region
  $region2: #{drqn_forward.10} parent=0 // pred_check
    _
  $region3: #{drqn_forward.10} parent=0 // pred_check_branch
    %12 = sbr.rel (0) target = $region5
  $region4: #{drqn_forward.10} parent=0 // pred_region
    _
  $region5: #{drqn_forward.10} parent=0 // pred_fallthru
    _
  // Predicated region
  $region6: #{drqn_forward.10} parent=0 // pred_check
    _
  $region7: #{drqn_forward.10} parent=0 // pred_check_branch
    %14 = sbr.rel (0) target = $region9
  $region8: #{drqn_forward.10} parent=0 // pred_region
    _
  $region9: #{drqn_forward.10} parent=0 // pred_fallthru
    _
  // Predicated region
  $region10: #{drqn_forward.10} parent=0 // pred_check
    _
  $region11: #{drqn_forward.10} parent=0 // pred_check_branch
    %16 = sbr.rel (0) target = $region13
  $region12: #{drqn_forward.10} parent=0 // pred_region
    _
  $region13: #{drqn_forward.10} parent=0 // pred_fallthru
    _
  // Predicated region
  $region14: #{drqn_forward.10} parent=0 // pred_check
    _
  $region15: #{drqn_forward.10} parent=0 // pred_check_branch
    %18 = sbr.rel (0) target = $region17
  $region16: #{drqn_forward.10} parent=0 // pred_region
    _
  $region17: #{drqn_forward.10} parent=0 // pred_fallthru
    _
  %p20 = scmp.eq.s32.totalorder 0, 0
  // Predicated region
  $region18: #{drqn_forward.10} parent=0 // pred_check
    %p21 = pneg %p20
  $region19: #{drqn_forward.10} parent=0 // pred_check_branch
    %23 = sbr.rel (%p21) target = $region21
  $region20: #{drqn_forward.10} parent=0 // pred_region
    %v24 = vld [vmem:[%s1] sm:$0x3]
    %25 = vst [vmem:[#allocation2] sm:$0x3] %v24
  $region21: #{drqn_forward.10} parent=0 // pred_fallthru
    _
  %v26 = vld [vmem:[%s2] sm:$0xff]
  %v27 = vld [vmem:[%s2 + $0x8] sm:$0xf]
  %v28 = vld [vmem:[%s2 + $0xc] sm:$0xff]
  %v29 = vld [vmem:[%s2 + $0x14] sm:$0xf]
  %v30 = vld [vmem:[%s2 + $0x18] sm:$0xff]
  %v31 = vld [vmem:[%s2 + $0x20] sm:$0xf]
  %v32 = vld [vmem:[%s2 + $0x24] sm:$0xff]
  %v33 = vld [vmem:[%s2 + $0x2c] sm:$0xf]
  %v34 = vld [vmem:[%s2 + $0x30] sm:$0xff]
  %v35 = vld [vmem:[%s2 + $0x38] sm:$0xf]
  %v36 = vld [vmem:[%s2 + $0x3c] sm:$0xff]
  %v37 = vld [vmem:[%s2 + $0x44] sm:$0xf]
  %v38 = vld [vmem:[%s2 + $0x48] sm:$0xff]
  %v39 = vld [vmem:[%s2 + $0x50] sm:$0xf]
  %v40 = vld [vmem:[%s2 + $0x54] sm:$0xff]
  %v41 = vld [vmem:[%s2 + $0x5c] sm:$0xf]
  %v42 = vld [vmem:[%s2 + $0x60] sm:$0xff]
  %v43 = vld [vmem:[%s2 + $0x68] sm:$0xf]
  %v44 = vld [vmem:[%s2 + $0x6c] sm:$0xff]
  %v45 = vld [vmem:[%s2 + $0x74] sm:$0xf]
  %v46 = vld [vmem:[%s2 + $0x78] sm:$0xff]
  %v47 = vld [vmem:[%s2 + $0x80] sm:$0xf]
  %v48 = vld [vmem:[%s2 + $0x84] sm:$0xff]
  %v49 = vld [vmem:[%s2 + $0x8c] sm:$0xf]
  %v50 = vld [vmem:[%s2 + $0x90] sm:$0xff]
  %v51 = vld [vmem:[%s2 + $0x98] sm:$0xf]
  %v52 = vld [vmem:[%s2 + $0x9c] sm:$0xff]
  %v53 = vld [vmem:[%s2 + $0xa4] sm:$0xf]
  %v54 = vld [vmem:[%s2 + $0xa8] sm:$0xff]
  %v55 = vld [vmem:[%s2 + $0xb0] sm:$0xf]
  %v56 = vld [vmem:[%s2 + $0xb4] sm:$0xff]
  %v57 = vld [vmem:[%s2 + $0xbc] sm:$0xf]
  %v58 = vld [vmem:[%s3] sm:$0x7]
  %v59 = vld [vmem:[#allocation2] sm:$0x3]
  %v60 = vpack.c.bf16 %v59, %v59
  %v62 = vlaneseq
  %v63 = vshrl.u32 %v62, 7
  %v64 = vsub.s32 0, %v63
  %v65 = vrot.slane %v58, %v64
  %v66 = vlaneseq
  %v67 = vshrl.u32 %v66, 7
  %v68 = vsub.s32 1, %v67
  %v69 = vrot.slane %v58, %v68
  %v70 = vlaneseq
  %v71 = vshrl.u32 %v70, 7
  %v72 = vsub.s32 2, %v71
  %v73 = vrot.slane %v58, %v72
  %v109 = vunpack.c.l.b16 %v26
  %v110 = vunpack.c.h.b16 %v26
  %v111 = vunpack.c.l.b16 %v27
  %v112 = vunpack.c.l.b16 %v28
  %v113 = vunpack.c.h.b16 %v28
  %v114 = vunpack.c.l.b16 %v29
  %v115 = vunpack.c.l.b16 %v30
  %v116 = vunpack.c.h.b16 %v30
  %v117 = vunpack.c.l.b16 %v31
  %v118 = vunpack.c.l.b16 %v32
  %v119 = vunpack.c.h.b16 %v32
  %v120 = vunpack.c.l.b16 %v33
  %v121 = vunpack.c.l.b16 %v34
  %v122 = vunpack.c.h.b16 %v34
  %v123 = vunpack.c.l.b16 %v35
  %v124 = vunpack.c.l.b16 %v36
  %v125 = vunpack.c.h.b16 %v36
  %v126 = vunpack.c.l.b16 %v37
  %v127 = vunpack.c.l.b16 %v38
  %v128 = vunpack.c.h.b16 %v38
  %v129 = vunpack.c.l.b16 %v39
  %v130 = vunpack.c.l.b16 %v40
  %v131 = vunpack.c.h.b16 %v40
  %v132 = vunpack.c.l.b16 %v41
  %v133 = vunpack.c.l.b16 %v42
  %v134 = vunpack.c.h.b16 %v42
  %v135 = vunpack.c.l.b16 %v43
  %v136 = vunpack.c.l.b16 %v44
  %v137 = vunpack.c.h.b16 %v44
  %v138 = vunpack.c.l.b16 %v45
  %v139 = vunpack.c.l.b16 %v46
  %v140 = vunpack.c.h.b16 %v46
  %v141 = vunpack.c.l.b16 %v47
  %v142 = vunpack.c.l.b16 %v48
  %v143 = vunpack.c.h.b16 %v48
  %v144 = vunpack.c.l.b16 %v49
  %v145 = vunpack.c.l.b16 %v50
  %v146 = vunpack.c.h.b16 %v50
  %v147 = vunpack.c.l.b16 %v51
  %v148 = vunpack.c.l.b16 %v52
  %v149 = vunpack.c.h.b16 %v52
  %v150 = vunpack.c.l.b16 %v53
  %v151 = vunpack.c.l.b16 %v54
  %v152 = vunpack.c.h.b16 %v54
  %v153 = vunpack.c.l.b16 %v55
  %v154 = vunpack.c.l.b16 %v56
  %v155 = vunpack.c.h.b16 %v56
  %v156 = vunpack.c.l.b16 %v57
  %v157 = vpack.c.b16 %v112, %v109
  %v158 = vpack.c.b16 %v113, %v110
  %v159 = vpack.c.b16 %v114, %v111
  %v160 = vpack.c.b16 %v118, %v115
  %v161 = vpack.c.b16 %v119, %v116
  %v162 = vpack.c.b16 %v120, %v117
  %v163 = vpack.c.b16 %v124, %v121
  %v164 = vpack.c.b16 %v125, %v122
  %v165 = vpack.c.b16 %v126, %v123
  %v166 = vpack.c.b16 %v130, %v127
  %v167 = vpack.c.b16 %v131, %v128
  %v168 = vpack.c.b16 %v132, %v129
  %v169 = vpack.c.b16 %v136, %v133
  %v170 = vpack.c.b16 %v137, %v134
  %v171 = vpack.c.b16 %v138, %v135
  %v172 = vpack.c.b16 %v142, %v139
  %v173 = vpack.c.b16 %v143, %v140
  %v174 = vpack.c.b16 %v144, %v141
  %v175 = vpack.c.b16 %v148, %v145
  %v176 = vpack.c.b16 %v149, %v146
  %v177 = vpack.c.b16 %v150, %v147
  %v178 = vpack.c.b16 %v154, %v151
  %v179 = vpack.c.b16 %v155, %v152
  %v180 = vpack.c.b16 %v156, %v153
  %205 = vmatprep.subr.bf16.mxu0 %v158
  %206 = vmatpush1.bf16.msra.mxu0 %v157
  %207 = vmatprep.subr.bf16.mxu0 %v161
  %208 = vmatpush1.bf16.msra.mxu0 %v160
  %209 = vmatprep.subr.bf16.mxu0 %v164
  %210 = vmatpush1.bf16.msra.mxu0 %v163
  %211 = vmatprep.subr.bf16.mxu0 %v167
  %212 = vmatpush1.bf16.msra.mxu0 %v166
  %213 = vmatprep.subr.bf16.mxu0 %v170
  %214 = vmatpush1.bf16.msra.mxu0 %v169
  %215 = vmatprep.subr.bf16.mxu0 %v173
  %216 = vmatpush1.bf16.msra.mxu0 %v172
  %217 = vmatprep.subr.bf16.mxu0 %v176
  %218 = vmatpush1.bf16.msra.mxu0 %v175
  %219 = vmatprep.subr.bf16.mxu0 %v179
  %220 = vmatpush1.bf16.msra.mxu0 %v178
  %221 = vmatprep.subr.bf16.mxu0 0
  %222 = vmatpush1.bf16.msra.mxu0 0
  %223 = vmatprep.subr.bf16.mxu0 0
  %224 = vmatpush1.bf16.msra.mxu0 0
  %225 = vmatprep.subr.bf16.mxu0 0
  %226 = vmatpush1.bf16.msra.mxu0 0
  %227 = vmatprep.subr.bf16.mxu0 0
  %228 = vmatpush1.bf16.msra.mxu0 0
  %229 = vmatprep.subr.bf16.mxu0 0
  %230 = vmatpush1.bf16.msra.mxu0 0
  %231 = vmatprep.subr.bf16.mxu0 0
  %232 = vmatpush1.bf16.msra.mxu0 0
  %233 = vmatprep.subr.bf16.mxu0 0
  %234 = vmatpush1.bf16.msra.mxu0 0
  %235 = vmatprep.subr.bf16.mxu0 0
  %236 = vmatpush1.bf16.msra.mxu0 0
  %237 = vmatprep.mubr.bf16.mxu0 0
  %238 = vmatmul.mubr.bf16.gmra.mrb[0].mxu0 %v60
  %v239 = vpop.f32.mrb[0].mxu0
  %v240 = vadd.f32 %v65, %v239
  %v241 = vpop.f32.mrb[0].mxu0
  %v242 = vadd.f32 %v69, %v241
  %v243 = vpop.f32.mrb[0].mxu0
  %v244 = vpop.f32.mrb[0].mxu0
  %245 = vdwg.mxu0
  %246 = vmatprep.subr.bf16.mxu0 0
  %247 = vmatpush1.bf16.msra.mxu0 %v159
  %248 = vmatprep.subr.bf16.mxu0 0
  %249 = vmatpush1.bf16.msra.mxu0 %v162
  %250 = vmatprep.subr.bf16.mxu0 0
  %251 = vmatpush1.bf16.msra.mxu0 %v165
  %252 = vmatprep.subr.bf16.mxu0 0
  %253 = vmatpush1.bf16.msra.mxu0 %v168
  %254 = vmatprep.subr.bf16.mxu0 0
  %255 = vmatpush1.bf16.msra.mxu0 %v171
  %256 = vmatprep.subr.bf16.mxu0 0
  %257 = vmatpush1.bf16.msra.mxu0 %v174
  %258 = vmatprep.subr.bf16.mxu0 0
  %259 = vmatpush1.bf16.msra.mxu0 %v177
  %260 = vmatprep.subr.bf16.mxu0 0
  %261 = vmatpush1.bf16.msra.mxu0 %v180
  %262 = vmatprep.subr.bf16.mxu0 0
  %263 = vmatpush1.bf16.msra.mxu0 0
  %264 = vmatprep.subr.bf16.mxu0 0
  %265 = vmatpush1.bf16.msra.mxu0 0
  %266 = vmatprep.subr.bf16.mxu0 0
  %267 = vmatpush1.bf16.msra.mxu0 0
  %268 = vmatprep.subr.bf16.mxu0 0
  %269 = vmatpush1.bf16.msra.mxu0 0
  %270 = vmatprep.subr.bf16.mxu0 0
  %271 = vmatpush1.bf16.msra.mxu0 0
  %272 = vmatprep.subr.bf16.mxu0 0
  %273 = vmatpush1.bf16.msra.mxu0 0
  %274 = vmatprep.subr.bf16.mxu0 0
  %275 = vmatpush1.bf16.msra.mxu0 0
  %276 = vmatprep.subr.bf16.mxu0 0
  %277 = vmatpush1.bf16.msra.mxu0 0
  %278 = vmatprep.mubr.bf16.mxu0 0
  %279 = vmatmul.mubr.bf16.gmra.mrb[0].mxu0 %v60
  %v280 = vpop.f32.mrb[0].mxu0
  %v281 = vadd.f32 %v73, %v280
  %v282 = vpop.f32.mrb[0].mxu0
  %v283 = vpop.f32.mrb[0].mxu0
  %v284 = vpop.f32.mrb[0].mxu0
  %285 = vdwg.mxu0
  %v286 = vld [vmem:[%s0] sm:$0x3f]
  %v287 = vadd.f32 %v286, %v240
  %v288 = vxor.u32 %v287, 2147483648
  %v289 = vmul.f32 %v288, 1.442695
  %v290 = vpow.pop %v289
  %v291 = vadd.f32 %v290, 1.0
  %v292 = vrcp.pop %v291
  %v293 = vmul.f32 1.0, %v292
  %v295 = vrot.slane %v286, 2
  %v297 = vadd.f32 %v295, %v242
  %v298 = vxor.u32 %v297, 2147483648
  %v299 = vmul.f32 %v298, 1.442695
  %v300 = vpow.pop %v299
  %v301 = vadd.f32 %v300, 1.0
  %v302 = vrcp.pop %v301
  %v303 = vmul.f32 1.0, %v302
  %v304 = vmul.f32 %v293, %v281
  %v305 = vrot.slane %v286, 4
  %v307 = vadd.f32 %v305, %v304
  %v308 = vtanh.pop %v307
  %v309 = vsub.f32 1.0, %v303
  %v310 = vmul.f32 %v309, %v308
  %v311 = vmul.f32 %v303, %v59
  %v312 = vadd.f32 %v310, %v311
  %313 = vst [vmem:[%s4] sm:$0x3] %v312
  %v314 = vpack.c.bf16 %v312, %v312
  %315 = vmatprep.subr.bf16.mxu0 %v158
  %316 = vmatpush1.bf16.msra.mxu0 %v157
  %317 = vmatprep.subr.bf16.mxu0 %v161
  %318 = vmatpush1.bf16.msra.mxu0 %v160
  %319 = vmatprep.subr.bf16.mxu0 %v164
  %320 = vmatpush1.bf16.msra.mxu0 %v163
  %321 = vmatprep.subr.bf16.mxu0 %v167
  %322 = vmatpush1.bf16.msra.mxu0 %v166
  %323 = vmatprep.subr.bf16.mxu0 %v170
  %324 = vmatpush1.bf16.msra.mxu0 %v169
  %325 = vmatprep.subr.bf16.mxu0 %v173
  %326 = vmatpush1.bf16.msra.mxu0 %v172
  %327 = vmatprep.subr.bf16.mxu0 %v176
  %328 = vmatpush1.bf16.msra.mxu0 %v175
  %329 = vmatprep.subr.bf16.mxu0 %v179
  %330 = vmatpush1.bf16.msra.mxu0 %v178
  %331 = vmatprep.subr.bf16.mxu0 0
  %332 = vmatpush1.bf16.msra.mxu0 0
  %333 = vmatprep.subr.bf16.mxu0 0
  %334 = vmatpush1.bf16.msra.mxu0 0
  %335 = vmatprep.subr.bf16.mxu0 0
  %336 = vmatpush1.bf16.msra.mxu0 0
  %337 = vmatprep.subr.bf16.mxu0 0
  %338 = vmatpush1.bf16.msra.mxu0 0
  %339 = vmatprep.subr.bf16.mxu0 0
  %340 = vmatpush1.bf16.msra.mxu0 0
  %341 = vmatprep.subr.bf16.mxu0 0
  %342 = vmatpush1.bf16.msra.mxu0 0
  %343 = vmatprep.subr.bf16.mxu0 0
  %344 = vmatpush1.bf16.msra.mxu0 0
  %345 = vmatprep.subr.bf16.mxu0 0
  %346 = vmatpush1.bf16.msra.mxu0 0
  %347 = vmatprep.mubr.bf16.mxu0 0
  %348 = vmatmul.mubr.bf16.gmra.mrb[0].mxu0 %v314
  %v349 = vpop.f32.mrb[0].mxu0
  %v350 = vadd.f32 %v65, %v349
  %v351 = vpop.f32.mrb[0].mxu0
  %v352 = vadd.f32 %v69, %v351
  %v353 = vpop.f32.mrb[0].mxu0
  %v354 = vpop.f32.mrb[0].mxu0
  %355 = vdwg.mxu0
  %356 = vmatprep.subr.bf16.mxu0 0
  %357 = vmatpush1.bf16.msra.mxu0 %v159
  %358 = vmatprep.subr.bf16.mxu0 0
  %359 = vmatpush1.bf16.msra.mxu0 %v162
  %360 = vmatprep.subr.bf16.mxu0 0
  %361 = vmatpush1.bf16.msra.mxu0 %v165
  %362 = vmatprep.subr.bf16.mxu0 0
  %363 = vmatpush1.bf16.msra.mxu0 %v168
  %364 = vmatprep.subr.bf16.mxu0 0
  %365 = vmatpush1.bf16.msra.mxu0 %v171
  %366 = vmatprep.subr.bf16.mxu0 0
  %367 = vmatpush1.bf16.msra.mxu0 %v174
  %368 = vmatprep.subr.bf16.mxu0 0
  %369 = vmatpush1.bf16.msra.mxu0 %v177
  %370 = vmatprep.subr.bf16.mxu0 0
  %371 = vmatpush1.bf16.msra.mxu0 %v180
  %372 = vmatprep.subr.bf16.mxu0 0
  %373 = vmatpush1.bf16.msra.mxu0 0
  %374 = vmatprep.subr.bf16.mxu0 0
  %375 = vmatpush1.bf16.msra.mxu0 0
  %376 = vmatprep.subr.bf16.mxu0 0
  %377 = vmatpush1.bf16.msra.mxu0 0
  %378 = vmatprep.subr.bf16.mxu0 0
  %379 = vmatpush1.bf16.msra.mxu0 0
  %380 = vmatprep.subr.bf16.mxu0 0
  %381 = vmatpush1.bf16.msra.mxu0 0
  %382 = vmatprep.subr.bf16.mxu0 0
  %383 = vmatpush1.bf16.msra.mxu0 0
  %384 = vmatprep.subr.bf16.mxu0 0
  %385 = vmatpush1.bf16.msra.mxu0 0
  %386 = vmatprep.subr.bf16.mxu0 0
  %387 = vmatpush1.bf16.msra.mxu0 0
  %388 = vmatprep.mubr.bf16.mxu0 0
  %389 = vmatmul.mubr.bf16.gmra.mrb[0].mxu0 %v314
  %v390 = vpop.f32.mrb[0].mxu0
  %v391 = vadd.f32 %v73, %v390
  %v392 = vpop.f32.mrb[0].mxu0
  %v393 = vpop.f32.mrb[0].mxu0
  %v394 = vpop.f32.mrb[0].mxu0
  %395 = vdwg.mxu0
  %s396 = scalar_lea.vmem %s0, 6
  %v397 = vld [vmem:[%s396] sm:$0x3f]
  %v398 = vadd.f32 %v397, %v350
  %v399 = vxor.u32 %v398, 2147483648
  %v400 = vmul.f32 %v399, 1.442695
  %v401 = vpow.pop %v400
  %v402 = vadd.f32 %v401, 1.0
  %v403 = vrcp.pop %v402
  %v404 = vmul.f32 1.0, %v403
  %v406 = vrot.slane %v397, 2
  %v408 = vadd.f32 %v406, %v352
  %v409 = vxor.u32 %v408, 2147483648
  %v410 = vmul.f32 %v409, 1.442695
  %v411 = vpow.pop %v410
  %v412 = vadd.f32 %v411, 1.0
  %v413 = vrcp.pop %v412
  %v414 = vmul.f32 1.0, %v413
  %v415 = vmul.f32 %v404, %v391
  %v416 = vrot.slane %v397, 4
  %v418 = vadd.f32 %v416, %v415
  %v419 = vtanh.pop %v418
  %v420 = vsub.f32 1.0, %v414
  %v421 = vmul.f32 %v420, %v419
  %v422 = vmul.f32 %v414, %v312
  %v423 = vadd.f32 %v421, %v422
  %s424 = scalar_lea.vmem %s4, 2
  %425 = vst [vmem:[%s424] sm:$0x3] %v423
  %v426 = vpack.c.bf16 %v423, %v423
  %427 = vmatprep.subr.bf16.mxu0 %v158
  %428 = vmatpush1.bf16.msra.mxu0 %v157
  %429 = vmatprep.subr.bf16.mxu0 %v161
  %430 = vmatpush1.bf16.msra.mxu0 %v160
  %431 = vmatprep.subr.bf16.mxu0 %v164
  %432 = vmatpush1.bf16.msra.mxu0 %v163
  %433 = vmatprep.subr.bf16.mxu0 %v167
  %434 = vmatpush1.bf16.msra.mxu0 %v166
  %435 = vmatprep.subr.bf16.mxu0 %v170
  %436 = vmatpush1.bf16.msra.mxu0 %v169
  %437 = vmatprep.subr.bf16.mxu0 %v173
  %438 = vmatpush1.bf16.msra.mxu0 %v172
  %439 = vmatprep.subr.bf16.mxu0 %v176
  %440 = vmatpush1.bf16.msra.mxu0 %v175
  %441 = vmatprep.subr.bf16.mxu0 %v179
  %442 = vmatpush1.bf16.msra.mxu0 %v178
  %443 = vmatprep.subr.bf16.mxu0 0
  %444 = vmatpush1.bf16.msra.mxu0 0
  %445 = vmatprep.subr.bf16.mxu0 0
  %446 = vmatpush1.bf16.msra.mxu0 0
  %447 = vmatprep.subr.bf16.mxu0 0
  %448 = vmatpush1.bf16.msra.mxu0 0
  %449 = vmatprep.subr.bf16.mxu0 0
  %450 = vmatpush1.bf16.msra.mxu0 0
  %451 = vmatprep.subr.bf16.mxu0 0
  %452 = vmatpush1.bf16.msra.mxu0 0
  %453 = vmatprep.subr.bf16.mxu0 0
  %454 = vmatpush1.bf16.msra.mxu0 0
  %455 = vmatprep.subr.bf16.mxu0 0
  %456 = vmatpush1.bf16.msra.mxu0 0
  %457 = vmatprep.subr.bf16.mxu0 0
  %458 = vmatpush1.bf16.msra.mxu0 0
  %459 = vmatprep.mubr.bf16.mxu0 0
  %460 = vmatmul.mubr.bf16.gmra.mrb[0].mxu0 %v426
  %v461 = vpop.f32.mrb[0].mxu0
  %v462 = vadd.f32 %v65, %v461
  %v463 = vpop.f32.mrb[0].mxu0
  %v464 = vadd.f32 %v69, %v463
  %v465 = vpop.f32.mrb[0].mxu0
  %v466 = vpop.f32.mrb[0].mxu0
  %467 = vdwg.mxu0
  %468 = vmatprep.subr.bf16.mxu0 0
  %469 = vmatpush1.bf16.msra.mxu0 %v159
  %470 = vmatprep.subr.bf16.mxu0 0
  %471 = vmatpush1.bf16.msra.mxu0 %v162
  %472 = vmatprep.subr.bf16.mxu0 0
  %473 = vmatpush1.bf16.msra.mxu0 %v165
  %474 = vmatprep.subr.bf16.mxu0 0
  %475 = vmatpush1.bf16.msra.mxu0 %v168
  %476 = vmatprep.subr.bf16.mxu0 0
  %477 = vmatpush1.bf16.msra.mxu0 %v171
  %478 = vmatprep.subr.bf16.mxu0 0
  %479 = vmatpush1.bf16.msra.mxu0 %v174
  %480 = vmatprep.subr.bf16.mxu0 0
  %481 = vmatpush1.bf16.msra.mxu0 %v177
  %482 = vmatprep.subr.bf16.mxu0 0
  %483 = vmatpush1.bf16.msra.mxu0 %v180
  %484 = vmatprep.subr.bf16.mxu0 0
  %485 = vmatpush1.bf16.msra.mxu0 0
  %486 = vmatprep.subr.bf16.mxu0 0
  %487 = vmatpush1.bf16.msra.mxu0 0
  %488 = vmatprep.subr.bf16.mxu0 0
  %489 = vmatpush1.bf16.msra.mxu0 0
  %490 = vmatprep.subr.bf16.mxu0 0
  %491 = vmatpush1.bf16.msra.mxu0 0
  %492 = vmatprep.subr.bf16.mxu0 0
  %493 = vmatpush1.bf16.msra.mxu0 0
  %494 = vmatprep.subr.bf16.mxu0 0
  %495 = vmatpush1.bf16.msra.mxu0 0
  %496 = vmatprep.subr.bf16.mxu0 0
  %497 = vmatpush1.bf16.msra.mxu0 0
  %498 = vmatprep.subr.bf16.mxu0 0
  %499 = vmatpush1.bf16.msra.mxu0 0
  %500 = vmatprep.mubr.bf16.mxu0 0
  %501 = vmatmul.mubr.bf16.gmra.mrb[0].mxu0 %v426
  %v502 = vpop.f32.mrb[0].mxu0
  %v503 = vadd.f32 %v73, %v502
  %v504 = vpop.f32.mrb[0].mxu0
  %v505 = vpop.f32.mrb[0].mxu0
  %v506 = vpop.f32.mrb[0].mxu0
  %507 = vdwg.mxu0
  %s508 = scalar_lea.vmem %s0, 12
  %v509 = vld [vmem:[%s508] sm:$0x3f]
  %v510 = vadd.f32 %v509, %v462
  %v511 = vxor.u32 %v510, 2147483648
  %v512 = vmul.f32 %v511, 1.442695
  %v513 = vpow.pop %v512
  %v514 = vadd.f32 %v513, 1.0
  %v515 = vrcp.pop %v514
  %v516 = vmul.f32 1.0, %v515
  %v518 = vrot.slane %v509, 2
  %v520 = vadd.f32 %v518, %v464
  %v521 = vxor.u32 %v520, 2147483648
  %v522 = vmul.f32 %v521, 1.442695
  %v523 = vpow.pop %v522
  %v524 = vadd.f32 %v523, 1.0
  %v525 = vrcp.pop %v524
  %v526 = vmul.f32 1.0, %v525
  %v527 = vmul.f32 %v516, %v503
  %v528 = vrot.slane %v509, 4
  %v530 = vadd.f32 %v528, %v527
  %v531 = vtanh.pop %v530
  %v532 = vsub.f32 1.0, %v526
  %v533 = vmul.f32 %v532, %v531
  %v534 = vmul.f32 %v526, %v423
  %v535 = vadd.f32 %v533, %v534
  %s536 = scalar_lea.vmem %s4, 4
  %537 = vst [vmem:[%s536] sm:$0x3] %v535
  %v538 = vpack.c.bf16 %v535, %v535
  %539 = vmatprep.subr.bf16.mxu0 %v158
  %540 = vmatpush1.bf16.msra.mxu0 %v157
  %541 = vmatprep.subr.bf16.mxu0 %v161
  %542 = vmatpush1.bf16.msra.mxu0 %v160
  %543 = vmatprep.subr.bf16.mxu0 %v164
  %544 = vmatpush1.bf16.msra.mxu0 %v163
  %545 = vmatprep.subr.bf16.mxu0 %v167
  %546 = vmatpush1.bf16.msra.mxu0 %v166
  %547 = vmatprep.subr.bf16.mxu0 %v170
  %548 = vmatpush1.bf16.msra.mxu0 %v169
  %549 = vmatprep.subr.bf16.mxu0 %v173
  %550 = vmatpush1.bf16.msra.mxu0 %v172
  %551 = vmatprep.subr.bf16.mxu0 %v176
  %552 = vmatpush1.bf16.msra.mxu0 %v175
  %553 = vmatprep.subr.bf16.mxu0 %v179
  %554 = vmatpush1.bf16.msra.mxu0 %v178
  %555 = vmatprep.subr.bf16.mxu0 0
  %556 = vmatpush1.bf16.msra.mxu0 0
  %557 = vmatprep.subr.bf16.mxu0 0
  %558 = vmatpush1.bf16.msra.mxu0 0
  %559 = vmatprep.subr.bf16.mxu0 0
  %560 = vmatpush1.bf16.msra.mxu0 0
  %561 = vmatprep.subr.bf16.mxu0 0
  %562 = vmatpush1.bf16.msra.mxu0 0
  %563 = vmatprep.subr.bf16.mxu0 0
  %564 = vmatpush1.bf16.msra.mxu0 0
  %565 = vmatprep.subr.bf16.mxu0 0
  %566 = vmatpush1.bf16.msra.mxu0 0
  %567 = vmatprep.subr.bf16.mxu0 0
  %568 = vmatpush1.bf16.msra.mxu0 0
  %569 = vmatprep.subr.bf16.mxu0 0
  %570 = vmatpush1.bf16.msra.mxu0 0
  %571 = vmatprep.mubr.bf16.mxu0 0
  %572 = vmatmul.mubr.bf16.gmra.mrb[0].mxu0 %v538
  %v573 = vpop.f32.mrb[0].mxu0
  %v574 = vadd.f32 %v65, %v573
  %v575 = vpop.f32.mrb[0].mxu0
  %v576 = vadd.f32 %v69, %v575
  %v577 = vpop.f32.mrb[0].mxu0
  %v578 = vpop.f32.mrb[0].mxu0
  %579 = vdwg.mxu0
  %580 = vmatprep.subr.bf16.mxu0 0
  %581 = vmatpush1.bf16.msra.mxu0 %v159
  %582 = vmatprep.subr.bf16.mxu0 0
  %583 = vmatpush1.bf16.msra.mxu0 %v162
  %584 = vmatprep.subr.bf16.mxu0 0
  %585 = vmatpush1.bf16.msra.mxu0 %v165
  %586 = vmatprep.subr.bf16.mxu0 0
  %587 = vmatpush1.bf16.msra.mxu0 %v168
  %588 = vmatprep.subr.bf16.mxu0 0
  %589 = vmatpush1.bf16.msra.mxu0 %v171
  %590 = vmatprep.subr.bf16.mxu0 0
  %591 = vmatpush1.bf16.msra.mxu0 %v174
  %592 = vmatprep.subr.bf16.mxu0 0
  %593 = vmatpush1.bf16.msra.mxu0 %v177
  %594 = vmatprep.subr.bf16.mxu0 0
  %595 = vmatpush1.bf16.msra.mxu0 %v180
  %596 = vmatprep.subr.bf16.mxu0 0
  %597 = vmatpush1.bf16.msra.mxu0 0
  %598 = vmatprep.subr.bf16.mxu0 0
  %599 = vmatpush1.bf16.msra.mxu0 0
  %600 = vmatprep.subr.bf16.mxu0 0
  %601 = vmatpush1.bf16.msra.mxu0 0
  %602 = vmatprep.subr.bf16.mxu0 0
  %603 = vmatpush1.bf16.msra.mxu0 0
  %604 = vmatprep.subr.bf16.mxu0 0
  %605 = vmatpush1.bf16.msra.mxu0 0
  %606 = vmatprep.subr.bf16.mxu0 0
  %607 = vmatpush1.bf16.msra.mxu0 0
  %608 = vmatprep.subr.bf16.mxu0 0
  %609 = vmatpush1.bf16.msra.mxu0 0
  %610 = vmatprep.subr.bf16.mxu0 0
  %611 = vmatpush1.bf16.msra.mxu0 0
  %612 = vmatprep.mubr.bf16.mxu0 0
  %613 = vmatmul.mubr.bf16.gmra.mrb[0].mxu0 %v538
  %v614 = vpop.f32.mrb[0].mxu0
  %v615 = vadd.f32 %v73, %v614
  %v616 = vpop.f32.mrb[0].mxu0
  %v617 = vpop.f32.mrb[0].mxu0
  %v618 = vpop.f32.mrb[0].mxu0
  %619 = vdwg.mxu0
  %s620 = scalar_lea.vmem %s0, 18
  %v621 = vld [vmem:[%s620] sm:$0x3f]
  %v622 = vadd.f32 %v621, %v574
  %v623 = vxor.u32 %v622, 2147483648
  %v624 = vmul.f32 %v623, 1.442695
  %v625 = vpow.pop %v624
  %v626 = vadd.f32 %v625, 1.0
  %v627 = vrcp.pop %v626
  %v628 = vmul.f32 1.0, %v627
  %v630 = vrot.slane %v621, 2
  %v632 = vadd.f32 %v630, %v576
  %v633 = vxor.u32 %v632, 2147483648
  %v634 = vmul.f32 %v633, 1.442695
  %v635 = vpow.pop %v634
  %v636 = vadd.f32 %v635, 1.0
  %v637 = vrcp.pop %v636
  %v638 = vmul.f32 1.0, %v637
  %v639 = vmul.f32 %v628, %v615
  %v640 = vrot.slane %v621, 4
  %v642 = vadd.f32 %v640, %v639
  %v643 = vtanh.pop %v642
  %v644 = vsub.f32 1.0, %v638
  %v645 = vmul.f32 %v644, %v643
  %v646 = vmul.f32 %v638, %v535
  %v647 = vadd.f32 %v645, %v646
  %s648 = scalar_lea.vmem %s4, 6
  %649 = vst [vmem:[%s648] sm:$0x3] %v647
  %650 = vst [vmem:[#allocation2] sm:$0x3] %v647
  %651 = vst [vmem:[%s5] sm:$0x3] %v647
  // Predicated region
  $region22: #{drqn_forward.10} parent=0 // pred_check
    _
  $region23: #{drqn_forward.10} parent=0 // pred_check_branch
    %653 = sbr.rel (0) target = $region25
  $region24: #{drqn_forward.10} parent=0 // pred_region
    _
  $region25: #{drqn_forward.10} parent=0 // pred_fallthru
    _
  // Predicated region
  $region26: #{drqn_forward.10} parent=0 // pred_check
    _
  $region27: #{drqn_forward.10} parent=0 // pred_check_branch
    %655 = sbr.rel (0) target = $region29
  $region28: #{drqn_forward.10} parent=0 // pred_region
    _
  $region29: #{drqn_forward.10} parent=0 // pred_fallthru
    _
  // Predicated region
  $region30: #{drqn_forward.10} parent=0 // pred_check
    _
  $region31: #{drqn_forward.10} parent=0 // pred_check_branch
    %657 = sbr.rel (0) target = $region33
  $region32: #{drqn_forward.10} parent=0 // pred_region
    _
  $region33: #{drqn_forward.10} parent=0 // pred_fallthru
    _
  // Predicated region
  $region34: #{drqn_forward.10} parent=0 // pred_check
    _
  $region35: #{drqn_forward.10} parent=0 // pred_check_branch
    %659 = sbr.rel (0) target = $region37
  $region36: #{drqn_forward.10} parent=0 // pred_region
    _
  $region37: #{drqn_forward.10} parent=0 // pred_fallthru
    _

// kernel: drqn_forward.11
$region0: #{drqn_forward.11}
  #allocation0 [shape = 'u32[]', space=smem, size = 0x4, offset = 0x4, fixed_abs, tag = 'smem constant byte address 0x4 - core index']
  #allocation1 [shape = 'u32[144,128]{1,0:T(1,128)}', space=vmem, size = 0x12000, scoped, tag = 'internal scratch']
  %s0 = inlined_call_operand.vmem [shape: bf16[8,128], index: 0, kind: input, shape index: {}]
  %s1 = inlined_call_operand.vmem [shape: bf16[128,128], index: 1, kind: input, shape index: {}]
  %s2 = inlined_call_operand.vmem [shape: f32[1,128], index: 2, kind: input, shape index: {}]
  %s3 = inlined_call_operand.vmem [shape: f32[8,128], index: 3, kind: output, shape index: {}]
  %s4 = sld [smem:[#allocation0]]
  $region22: #{drqn_forward.11} parent=0
    _
  %s6 = ssub.s32 1, %s4
  %s7 = scalar_select 0, %s6, %s4
  // Predicated region
  $region2: #{drqn_forward.11} parent=0 // pred_check
    _
  $region3: #{drqn_forward.11} parent=0 // pred_check_branch
    %9 = sbr.rel (0) target = $region5
  $region4: #{drqn_forward.11} parent=0 // pred_region
    _
  $region5: #{drqn_forward.11} parent=0 // pred_fallthru
    _
  // Predicated region
  $region6: #{drqn_forward.11} parent=0 // pred_check
    _
  $region7: #{drqn_forward.11} parent=0 // pred_check_branch
    %11 = sbr.rel (0) target = $region9
  $region8: #{drqn_forward.11} parent=0 // pred_region
    _
  $region9: #{drqn_forward.11} parent=0 // pred_fallthru
    _
  // Predicated region
  $region10: #{drqn_forward.11} parent=0 // pred_check
    _
  $region11: #{drqn_forward.11} parent=0 // pred_check_branch
    %13 = sbr.rel (0) target = $region13
  $region12: #{drqn_forward.11} parent=0 // pred_region
    _
  $region13: #{drqn_forward.11} parent=0 // pred_fallthru
    _
  %v15 = vld [vmem:[%s0] sm:$0xf]
  %v16 = vld [vmem:[%s1] sm:$0xf]
  %v17 = vld [vmem:[%s1 + $0x4] sm:$0xf]
  %v18 = vld [vmem:[%s1 + $0x8] sm:$0xf]
  %v19 = vld [vmem:[%s1 + $0xc] sm:$0xf]
  %v20 = vld [vmem:[%s1 + $0x10] sm:$0xf]
  %v21 = vld [vmem:[%s1 + $0x14] sm:$0xf]
  %v22 = vld [vmem:[%s1 + $0x18] sm:$0xf]
  %v23 = vld [vmem:[%s1 + $0x1c] sm:$0xf]
  %v24 = vld [vmem:[%s1 + $0x20] sm:$0xf]
  %v25 = vld [vmem:[%s1 + $0x24] sm:$0xf]
  %v26 = vld [vmem:[%s1 + $0x28] sm:$0xf]
  %v27 = vld [vmem:[%s1 + $0x2c] sm:$0xf]
  %v28 = vld [vmem:[%s1 + $0x30] sm:$0xf]
  %v29 = vld [vmem:[%s1 + $0x34] sm:$0xf]
  %v30 = vld [vmem:[%s1 + $0x38] sm:$0xf]
  %v31 = vld [vmem:[%s1 + $0x3c] sm:$0xf]
  %v32 = vld [vmem:[%s2] sm:$0x1]
  %v34 = vlaneseq
  %v35 = vshrl.u32 %v34, 7
  %v36 = vsub.s32 0, %v35
  %v37 = vrot.slane %v32, %v36
  %v55 = vunpack.c.l.b16 %v16
  %v56 = vunpack.c.l.b16 %v17
  %v57 = vunpack.c.l.b16 %v18
  %v58 = vunpack.c.l.b16 %v19
  %v59 = vunpack.c.l.b16 %v20
  %v60 = vunpack.c.l.b16 %v21
  %v61 = vunpack.c.l.b16 %v22
  %v62 = vunpack.c.l.b16 %v23
  %v63 = vunpack.c.l.b16 %v24
  %v64 = vunpack.c.l.b16 %v25
  %v65 = vunpack.c.l.b16 %v26
  %v66 = vunpack.c.l.b16 %v27
  %v67 = vunpack.c.l.b16 %v28
  %v68 = vunpack.c.l.b16 %v29
  %v69 = vunpack.c.l.b16 %v30
  %v70 = vunpack.c.l.b16 %v31
  %v71 = vpack.c.b16 %v56, %v55
  %v72 = vpack.c.b16 %v58, %v57
  %v73 = vpack.c.b16 %v60, %v59
  %v74 = vpack.c.b16 %v62, %v61
  %v75 = vpack.c.b16 %v64, %v63
  %v76 = vpack.c.b16 %v66, %v65
  %v77 = vpack.c.b16 %v68, %v67
  %v78 = vpack.c.b16 %v70, %v69
  %87 = vmatprep.subr.bf16.mxu0 0
  %88 = vmatpush1.bf16.msra.mxu0 %v71
  %89 = vmatprep.subr.bf16.mxu0 0
  %90 = vmatpush1.bf16.msra.mxu0 %v72
  %91 = vmatprep.subr.bf16.mxu0 0
  %92 = vmatpush1.bf16.msra.mxu0 %v73
  %93 = vmatprep.subr.bf16.mxu0 0
  %94 = vmatpush1.bf16.msra.mxu0 %v74
  %95 = vmatprep.subr.bf16.mxu0 0
  %96 = vmatpush1.bf16.msra.mxu0 %v75
  %97 = vmatprep.subr.bf16.mxu0 0
  %98 = vmatpush1.bf16.msra.mxu0 %v76
  %99 = vmatprep.subr.bf16.mxu0 0
  %100 = vmatpush1.bf16.msra.mxu0 %v77
  %101 = vmatprep.subr.bf16.mxu0 0
  %102 = vmatpush1.bf16.msra.mxu0 %v78
  %103 = vmatprep.subr.bf16.mxu0 0
  %104 = vmatpush1.bf16.msra.mxu0 0
  %105 = vmatprep.subr.bf16.mxu0 0
  %106 = vmatpush1.bf16.msra.mxu0 0
  %107 = vmatprep.subr.bf16.mxu0 0
  %108 = vmatpush1.bf16.msra.mxu0 0
  %109 = vmatprep.subr.bf16.mxu0 0
  %110 = vmatpush1.bf16.msra.mxu0 0
  %111 = vmatprep.subr.bf16.mxu0 0
  %112 = vmatpush1.bf16.msra.mxu0 0
  %113 = vmatprep.subr.bf16.mxu0 0
  %114 = vmatpush1.bf16.msra.mxu0 0
  %115 = vmatprep.subr.bf16.mxu0 0
  %116 = vmatpush1.bf16.msra.mxu0 0
  %117 = vmatprep.subr.bf16.mxu0 0
  %118 = vmatpush1.bf16.msra.mxu0 0
  %119 = vmatprep.mubr.bf16.mxu0 0
  %120 = vmatmul.mubr.bf16.gmra.mrb[0].mxu0 %v15
  %v121 = vpop.f32.mrb[0].mxu0
  %v122 = vadd.f32 %v37, %v121
  %v123 = vpop.f32.mrb[0].mxu0
  %v124 = vpop.f32.mrb[0].mxu0
  %v125 = vpop.f32.mrb[0].mxu0
  %126 = vdwg.mxu0
  %127 = vst [vmem:[%s3] sm:$0xff] %v122
  // Predicated region
  $region14: #{drqn_forward.11} parent=0 // pred_check
    _
  $region15: #{drqn_forward.11} parent=0 // pred_check_branch
    %129 = sbr.rel (0) target = $region17
  $region16: #{drqn_forward.11} parent=0 // pred_region
    _
  $region17: #{drqn_forward.11} parent=0 // pred_fallthru
    _
  // Predicated region
  $region18: #{drqn_forward.11} parent=0 // pred_check
    _
  $region19: #{drqn_forward.11} parent=0 // pred_check_branch
    %131 = sbr.rel (0) target = $region21
  $region20: #{drqn_forward.11} parent=0 // pred_region
    _
  $region21: #{drqn_forward.11} parent=0 // pred_fallthru
    _

</llo_original>
